<compile_context>
chip_gen: v6e
topology: v6e:2x2x1
jax: 0.10.0
libtpu: 0.0.40
codegen_flags: <defaults>
</compile_context>

<pallas_src>
import jax
import jax.numpy as jnp
from jax.experimental import pallas as pl
from jax.experimental.pallas import tpu as pltpu


HEAD_CHANNELS = {          # small, deterministic head widths
    "hm": 1,               # heatmap (num_classes = 1)
    "wh": 2,               # box width/height
    "reg": 2,              # center offset
    "seg_feat": 8,         # mask branch features
    "conv_weight": 16,     # dynamic-conv weights (CondInst-style), small
}
HEAD_ORDER = ["hm", "wh", "reg", "seg_feat", "conv_weight"]
TOTAL_OUT = sum(HEAD_CHANNELS[n] for n in HEAD_ORDER)       # 29
C_OUT_PAD = ((TOTAL_OUT + 7) // 8) * 8                      # 32: matmul width


# ----------------------------------------------------------------------------
# In-kernel helpers.
# ----------------------------------------------------------------------------
def _zero_halo(ref):
    """Zero the 1-px border of a (H+2, W+2, C) halo scratch (4 strip stores).
    The interior is fully overwritten every grid step, so this is all the
    re-initialisation needed, and it is safe under megacore grid splitting."""
    Hp, Wp, C = ref.shape
    z_row = jnp.zeros((1, Wp, C), ref.dtype)
    z_col = jnp.zeros((Hp, 1, C), ref.dtype)
    ref[0:1, :, :] = z_row
    ref[Hp - 1:Hp, :, :] = z_row
    ref[:, 0:1, :] = z_col
    ref[:, Wp - 1:Wp, :] = z_col


def _conv3x3(pad_ref, w_ref):
    """3x3 'same' conv of a zero-halo-padded (H+2, W+2, Cin) scratch as nine
    shifted MXU matmuls accumulated in f32 (no materialized im2col patches).
    w_ref is (9*Cin, Cout) bf16 with rows ordered (dy, dx, cin)."""
    Hp, Wp, cin = pad_ref.shape
    H, W = Hp - 2, Wp - 2
    acc = None
    for k in range(9):
        dy, dx = divmod(k, 3)
        lhs = pad_ref[dy:dy + H, dx:dx + W, :].reshape(H * W, cin)
        term = jnp.dot(lhs.astype(jnp.bfloat16),
                       w_ref[k * cin:(k + 1) * cin, :],
                       preferred_element_type=jnp.float32)
        acc = term if acc is None else acc + term
    return acc                                                # (H*W, Cout) f32


# ----------------------------------------------------------------------------
# Fused Pallas kernel: backbone conv + 5 heads + channel concat, per image.
# ----------------------------------------------------------------------------
def _fused_detector_kernel(x_ref, wb_ref, bb_ref, w1_ref, b1_ref,
                           w2_ref, b2_ref, o_ref, xpad_ref, fpad_ref):
    """
    x_ref     : (1, H, W, Cin)     f32   input image (NHWC)
    wb_ref    : (9*Cin, CF)        bf16  backbone 3x3 weights
    bb_ref    : (1, CF)            f32   backbone bias
    w1_ref    : (9*CF, 5*CF)       bf16  all heads' 3x3 weights, head-stacked
    b1_ref    : (1, 5*CF)          f32
    w2_ref    : (5*CF, C_OUT_PAD)  bf16  block-diagonal 1x1 weights
    b2_ref    : (1, C_OUT_PAD)     f32
    o_ref     : (1, TOTAL_OUT, H*W) f32  channel-concatenated outputs (C, HW)
    xpad_ref  : (H+2, W+2, Cin)    f32   VMEM scratch: zero-halo input
    fpad_ref  : (H+2, W+2, CF)     f32   VMEM scratch: zero-halo feature map
    """
    Hp, Wp, CF = fpad_ref.shape
    H, W = Hp - 2, Wp - 2

    _zero_halo(xpad_ref)
    _zero_halo(fpad_ref)

    # ---- backbone 3x3 conv + bias + ReLU (in-kernel halo + shifted matmuls)
    xpad_ref[pl.ds(1, H), pl.ds(1, W), :] = x_ref[0]
    feat = _conv3x3(xpad_ref, wb_ref)                        # (HW, CF) f32
    feat = jnp.maximum(feat + bb_ref[0], 0.0)

    # ---- all 5 heads' 3x3 convs + bias + ReLU as ONE stacked shifted-matmul
    fpad_ref[pl.ds(1, H), pl.ds(1, W), :] = feat.reshape(H, W, CF)
    hidden = _conv3x3(fpad_ref, w1_ref)                      # (HW, 5*CF) f32
    hidden = jnp.maximum(hidden + b1_ref[0], 0.0)

    # ---- all 5 heads' 1x1 convs + channel concat: one block-diagonal matmul
    out = jnp.dot(hidden.astype(jnp.bfloat16), w2_ref[...],
                  preferred_element_type=jnp.float32) + b2_ref[0]  # (HW, Cpad)

    # Emit in (C, HW) layout (HW = 256 lanes, lane-dense) so the wrapper only
    # reshapes to NCHW — no post-kernel slice / transpose passes.
    out_t = jnp.transpose(out)                                # (Cpad, HW)
    o_ref[0] = out_t[:o_ref.shape[1], :]


# ----------------------------------------------------------------------------
# Parameters: init + one-time packing into the fused-kernel layout.
# ----------------------------------------------------------------------------
def init_params(cin, cf, key):
    params = {}
    kb_w, kb_b, key = jax.random.split(key, 3)
    params["backbone_w"] = 0.1 * jax.random.normal(kb_w, (3, 3, cin, cf),
                                                   jnp.float32)
    params["backbone_b"] = 0.1 * jax.random.normal(kb_b, (cf,), jnp.float32)
    for name in HEAD_ORDER:
        cout = HEAD_CHANNELS[name]
        k1, k2, k3, k4, key = jax.random.split(key, 5)
        params[name] = {
            "w1": 0.1 * jax.random.normal(k1, (3, 3, cf, cf), jnp.float32),
            "b1": 0.1 * jax.random.normal(k2, (cf,), jnp.float32),
            "w2": 0.1 * jax.random.normal(k3, (cf, cout), jnp.float32),
            "b2": 0.1 * jax.random.normal(k4, (cout,), jnp.float32),
        }
    return params


def pack_params(params):
    """Reshape / stack / zero-pad all weights once so the fused kernel sees
    dense matmul operands: per-shift backbone rows, stacked-head conv3x3
    rows, and a block-diagonal conv1x1 producing the channel-concat output."""
    kh, kw, cin, cf = params["backbone_w"].shape
    nh = len(HEAD_ORDER)

    wb = params["backbone_w"].reshape(kh * kw * cin, cf).astype(jnp.bfloat16)
    bb = params["backbone_b"].reshape(1, cf).astype(jnp.float32)

    # heads' 3x3 convs: stack out-channels -> (3,3,cf,5*cf) -> (9*cf, 5*cf)
    w1 = jnp.concatenate([params[n]["w1"] for n in HEAD_ORDER], axis=-1)
    w1 = w1.reshape(9 * cf, nh * cf).astype(jnp.bfloat16)
    b1 = jnp.concatenate([params[n]["b1"] for n in HEAD_ORDER]).reshape(
        1, nh * cf).astype(jnp.float32)

    # heads' 1x1 convs: block-diagonal (5*cf, C_OUT_PAD) producing the
    # channel-concatenated output (rows >= TOTAL_OUT stay zero / unstored).
    assert TOTAL_OUT <= C_OUT_PAD
    w2 = jnp.zeros((nh * cf, C_OUT_PAD), jnp.float32)
    b2 = jnp.zeros((1, C_OUT_PAD), jnp.float32)
    off = 0
    for h, name in enumerate(HEAD_ORDER):
        co = HEAD_CHANNELS[name]
        w2 = w2.at[h * cf:(h + 1) * cf, off:off + co].set(params[name]["w2"])
        b2 = b2.at[0, off:off + co].set(params[name]["b2"])
        off += co
    return {"wb": wb, "bb": bb, "w1": w1, "b1": b1,
            "w2": w2.astype(jnp.bfloat16), "b2": b2}


# ----------------------------------------------------------------------------
# Forward (mirrors SimpleModel.forward semantics): NCHW in -> NCHW out.
# ----------------------------------------------------------------------------
@jax.jit
def simple_model_forward(x_nchw, packed):
    N, cin, H, W = x_nchw.shape
    cf = packed["bb"].shape[1]
    x = jnp.transpose(x_nchw, (0, 2, 3, 1)).astype(jnp.float32)   # -> NHWC

    def _const(a):
        return pl.BlockSpec(a.shape, lambda n, nd=a.ndim: (0,) * nd)

    out = pl.pallas_call(
        _fused_detector_kernel,
        out_shape=jax.ShapeDtypeStruct((N, TOTAL_OUT, H * W), jnp.float32),
        grid_spec=pltpu.PrefetchScalarGridSpec(
            num_scalar_prefetch=0,
            grid=(N,),
            in_specs=[
                pl.BlockSpec((1, H, W, cin), lambda n: (n, 0, 0, 0)),
                _const(packed["wb"]), _const(packed["bb"]),
                _const(packed["w1"]), _const(packed["b1"]),
                _const(packed["w2"]), _const(packed["b2"]),
            ],
            out_specs=pl.BlockSpec((1, TOTAL_OUT, H * W),
                                   lambda n: (n, 0, 0)),
            scratch_shapes=[
                pltpu.VMEM((H + 2, W + 2, cin), jnp.float32),
                pltpu.VMEM((H + 2, W + 2, cf), jnp.float32),
            ],
        ),
        compiler_params=pltpu.CompilerParams(
            dimension_semantics=("parallel",)),
    )(x, packed["wb"], packed["bb"], packed["w1"], packed["b1"],
      packed["w2"], packed["b2"])

    # (N, C, H*W) -> (N, C, H, W): a free reshape, no slice / transpose copy.
    return out.reshape(N, TOTAL_OUT, H, W)
# TODO(synk): the real detector backbone (DLA/ResNet from detector_factory)
# downsamples by 4; a single stride-1 conv stands in for it here.
# TODO(synk): at realistic detector resolutions (e.g. 128x128 features) add a
# spatially tiled "parallel" row-band grid axis (1-row halo) so the per-image
# block fits v7x's 64 MiB VMEM and both of its TensorCores get work at N=1,
# and mark the constant-weight specs pipeline_mode=pl.Buffered(1) to reclaim
# the pointless double buffer; unnecessary at H=W=16.


# ----------------------------------------------------------------------------
# Pure-JAX reference (same semantics, f32 XLA convs) for a sanity check.
# ----------------------------------------------------------------------------
def reference_forward(x_nchw, params):
    x = jnp.transpose(x_nchw, (0, 2, 3, 1)).astype(jnp.float32)

    def conv3x3(inp, w, b):
        y = jax.lax.conv_general_dilated(
            inp, w, window_strides=(1, 1), padding=((1, 1), (1, 1)),
            dimension_numbers=("NHWC", "HWIO", "NHWC"))
        return y + b

    feat = jax.nn.relu(conv3x3(x, params["backbone_w"], params["backbone_b"]))
    outs = []
    for name in HEAD_ORDER:
        p = params[name]
        h = jax.nn.relu(conv3x3(feat, p["w1"], p["b1"]))
        outs.append(jnp.einsum("nhwc,co->nhwo", h, p["w2"]) + p["b2"])
    out = jnp.concatenate(outs, axis=-1)
    return jnp.transpose(out, (0, 3, 1, 2))


if __name__ == "__main__":
    N, CIN, H, W = 2, 4, 16, 16
    CF = 32

    key = jax.random.PRNGKey(0)
    kp, kx = jax.random.split(key)
    params = init_params(CIN, CF, kp)
    x = jax.random.normal(kx, (N, CIN, H, W), jnp.float32)

    packed = pack_params(params)
    out = jax.block_until_ready(simple_model_forward(x, packed))

    assert out.shape == (N, TOTAL_OUT, H, W), out.shape
    assert out.dtype == jnp.float32

    # bf16 matmul operands vs f32 reference: loose-but-intentional tolerance.
    ref = reference_forward(x, params)
    max_err = float(jnp.max(jnp.abs(out - ref)))
    assert max_err < 1e-1, f"max abs error vs reference: {max_err}"

    print("KERNEL_OK")
</pallas_src>

<mosaic_0001>
module attributes {stable_mosaic.version = 11 : i64} {
  func.func @_fused_detector_kernel(%arg0: i32, %arg1: memref<1x16x16x4xf32, #tpu.memory_space<vmem>>, %arg2: memref<36x32xbf16, #tpu.memory_space<vmem>>, %arg3: memref<1x32xf32, #tpu.memory_space<vmem>>, %arg4: memref<288x160xbf16, #tpu.memory_space<vmem>>, %arg5: memref<1x160xf32, #tpu.memory_space<vmem>>, %arg6: memref<160x32xbf16, #tpu.memory_space<vmem>>, %arg7: memref<1x32xf32, #tpu.memory_space<vmem>>, %arg8: memref<1x29x256xf32, #tpu.memory_space<vmem>>, %arg9: memref<18x18x4xf32, #tpu.memory_space<vmem>>, %arg10: memref<18x18x32xf32, #tpu.memory_space<vmem>>) attributes {dimension_semantics = [#tpu.dimension_semantics<parallel>], iteration_bounds = array<i64: 2>, scalar_prefetch = 0 : i64, scratch_operands = 2 : i64, tpu.core_type = #tpu.core_type<tc>, window_params = [{transform_indices = @transform_0, window_bounds = array<i64: 1, 16, 16, 4>}, {pipeline_mode = #tpu.pipeline_mode<synchronous>, transform_indices = @transform_1, window_bounds = array<i64: 36, 32>}, {pipeline_mode = #tpu.pipeline_mode<synchronous>, transform_indices = @transform_2, window_bounds = array<i64: 1, 32>}, {pipeline_mode = #tpu.pipeline_mode<synchronous>, transform_indices = @transform_3, window_bounds = array<i64: 288, 160>}, {pipeline_mode = #tpu.pipeline_mode<synchronous>, transform_indices = @transform_4, window_bounds = array<i64: 1, 160>}, {pipeline_mode = #tpu.pipeline_mode<synchronous>, transform_indices = @transform_5, window_bounds = array<i64: 160, 32>}, {pipeline_mode = #tpu.pipeline_mode<synchronous>, transform_indices = @transform_6, window_bounds = array<i64: 1, 32>}, {transform_indices = @transform_7, window_bounds = array<i64: 1, 29, 256>}]} {
    %cst = arith.constant 0.000000e+00 : f32
    %0 = vector.broadcast %cst : f32 to vector<1x18x4xf32>
    %cst_0 = arith.constant 0.000000e+00 : f32
    %1 = vector.broadcast %cst_0 : f32 to vector<18x1x4xf32>
    %c0 = arith.constant 0 : index
    %c0_1 = arith.constant 0 : index
    %c0_2 = arith.constant 0 : index
    %2 = vector.load %arg9[%c0, %c0_1, %c0_2] : memref<18x18x4xf32, #tpu.memory_space<vmem>>, vector<1x18x4xf32>
    tpu.vector_store %arg9[%c0, %c0_1, %c0_2], %0 {strides = array<i32>} : memref<18x18x4xf32, #tpu.memory_space<vmem>>, vector<1x18x4xf32>,
    %c17 = arith.constant 17 : index
    %c0_3 = arith.constant 0 : index
    %c0_4 = arith.constant 0 : index
    %3 = vector.load %arg9[%c17, %c0_3, %c0_4] : memref<18x18x4xf32, #tpu.memory_space<vmem>>, vector<1x18x4xf32>
    tpu.vector_store %arg9[%c17, %c0_3, %c0_4], %0 {strides = array<i32>} : memref<18x18x4xf32, #tpu.memory_space<vmem>>, vector<1x18x4xf32>,
    %c0_5 = arith.constant 0 : index
    %c0_6 = arith.constant 0 : index
    %c0_7 = arith.constant 0 : index
    %4 = vector.load %arg9[%c0_5, %c0_6, %c0_7] : memref<18x18x4xf32, #tpu.memory_space<vmem>>, vector<18x1x4xf32>
    tpu.vector_store %arg9[%c0_5, %c0_6, %c0_7], %1 {strides = array<i32>} : memref<18x18x4xf32, #tpu.memory_space<vmem>>, vector<18x1x4xf32>,
    %c0_8 = arith.constant 0 : index
    %c17_9 = arith.constant 17 : index
    %c0_10 = arith.constant 0 : index
    %5 = vector.load %arg9[%c0_8, %c17_9, %c0_10] : memref<18x18x4xf32, #tpu.memory_space<vmem>>, vector<18x1x4xf32>
    tpu.vector_store %arg9[%c0_8, %c17_9, %c0_10], %1 {strides = array<i32>} : memref<18x18x4xf32, #tpu.memory_space<vmem>>, vector<18x1x4xf32>,
    %cst_11 = arith.constant 0.000000e+00 : f32
    %6 = vector.broadcast %cst_11 : f32 to vector<1x18x32xf32>
    %cst_12 = arith.constant 0.000000e+00 : f32
    %7 = vector.broadcast %cst_12 : f32 to vector<18x1x32xf32>
    %c0_13 = arith.constant 0 : index
    %c0_14 = arith.constant 0 : index
    %c0_15 = arith.constant 0 : index
    %8 = vector.load %arg10[%c0_13, %c0_14, %c0_15] : memref<18x18x32xf32, #tpu.memory_space<vmem>>, vector<1x18x32xf32>
    tpu.vector_store %arg10[%c0_13, %c0_14, %c0_15], %6 {strides = array<i32>} : memref<18x18x32xf32, #tpu.memory_space<vmem>>, vector<1x18x32xf32>,
    %c17_16 = arith.constant 17 : index
    %c0_17 = arith.constant 0 : index
    %c0_18 = arith.constant 0 : index
    %9 = vector.load %arg10[%c17_16, %c0_17, %c0_18] : memref<18x18x32xf32, #tpu.memory_space<vmem>>, vector<1x18x32xf32>
    tpu.vector_store %arg10[%c17_16, %c0_17, %c0_18], %6 {strides = array<i32>} : memref<18x18x32xf32, #tpu.memory_space<vmem>>, vector<1x18x32xf32>,
    %c0_19 = arith.constant 0 : index
    %c0_20 = arith.constant 0 : index
    %c0_21 = arith.constant 0 : index
    %10 = vector.load %arg10[%c0_19, %c0_20, %c0_21] : memref<18x18x32xf32, #tpu.memory_space<vmem>>, vector<18x1x32xf32>
    tpu.vector_store %arg10[%c0_19, %c0_20, %c0_21], %7 {strides = array<i32>} : memref<18x18x32xf32, #tpu.memory_space<vmem>>, vector<18x1x32xf32>,
    %c0_22 = arith.constant 0 : index
    %c17_23 = arith.constant 17 : index
    %c0_24 = arith.constant 0 : index
    %11 = vector.load %arg10[%c0_22, %c17_23, %c0_24] : memref<18x18x32xf32, #tpu.memory_space<vmem>>, vector<18x1x32xf32>
    tpu.vector_store %arg10[%c0_22, %c17_23, %c0_24], %7 {strides = array<i32>} : memref<18x18x32xf32, #tpu.memory_space<vmem>>, vector<18x1x32xf32>,
    %c0_25 = arith.constant 0 : index
    %c0_26 = arith.constant 0 : index
    %c0_27 = arith.constant 0 : index
    %c0_28 = arith.constant 0 : index
    %12 = vector.load %arg1[%c0_25, %c0_26, %c0_27, %c0_28] : memref<1x16x16x4xf32, #tpu.memory_space<vmem>>, vector<1x16x16x4xf32>
    %13 = vector.shape_cast %12 : vector<1x16x16x4xf32> to vector<16x16x4xf32>
    %c1 = arith.constant 1 : index
    %c1_29 = arith.constant 1 : index
    %c0_30 = arith.constant 0 : index
    %14 = vector.load %arg9[%c1, %c1_29, %c0_30] : memref<18x18x4xf32, #tpu.memory_space<vmem>>, vector<16x16x4xf32>
    tpu.vector_store %arg9[%c1, %c1_29, %c0_30], %13 {strides = array<i32>} : memref<18x18x4xf32, #tpu.memory_space<vmem>>, vector<16x16x4xf32>,
    %c0_31 = arith.constant 0 : index
    %c0_32 = arith.constant 0 : index
    %c0_33 = arith.constant 0 : index
    %15 = vector.load %arg9[%c0_31, %c0_32, %c0_33] : memref<18x18x4xf32, #tpu.memory_space<vmem>>, vector<16x16x4xf32>
    %16 = vector.shape_cast %15 : vector<16x16x4xf32> to vector<256x4xf32>
    %17 = arith.truncf %16 : vector<256x4xf32> to vector<256x4xbf16>
    %c0_34 = arith.constant 0 : index
    %c0_35 = arith.constant 0 : index
    %18 = vector.load %arg2[%c0_34, %c0_35] : memref<36x32xbf16, #tpu.memory_space<vmem>>, vector<4x32xbf16>
    %cst_36 = arith.constant dense<0.000000e+00> : vector<256x32xf32>
    %19 = tpu.matmul %17, %18, %cst_36 {dimension_numbers = #tpu.dot_dimension_numbers<[1], [0], [0], [1], [0, 0, 1, 1], [], []>} : vector<256x4xbf16>, vector<4x32xbf16>, vector<256x32xf32> -> vector<256x32xf32>
    %c0_37 = arith.constant 0 : index
    %c1_38 = arith.constant 1 : index
    %c0_39 = arith.constant 0 : index
    %20 = vector.load %arg9[%c0_37, %c1_38, %c0_39] : memref<18x18x4xf32, #tpu.memory_space<vmem>>, vector<16x16x4xf32>
    %21 = vector.shape_cast %20 : vector<16x16x4xf32> to vector<256x4xf32>
    %22 = arith.truncf %21 : vector<256x4xf32> to vector<256x4xbf16>
    %c4 = arith.constant 4 : index
    %c0_40 = arith.constant 0 : index
    %23 = vector.load %arg2[%c4, %c0_40] : memref<36x32xbf16, #tpu.memory_space<vmem>>, vector<4x32xbf16>
    %cst_41 = arith.constant dense<0.000000e+00> : vector<256x32xf32>
    %24 = tpu.matmul %22, %23, %cst_41 {dimension_numbers = #tpu.dot_dimension_numbers<[1], [0], [0], [1], [0, 0, 1, 1], [], []>} : vector<256x4xbf16>, vector<4x32xbf16>, vector<256x32xf32> -> vector<256x32xf32>
    %25 = arith.addf %19, %24 : vector<256x32xf32>
    %c0_42 = arith.constant 0 : index
    %c2 = arith.constant 2 : index
    %c0_43 = arith.constant 0 : index
    %26 = vector.load %arg9[%c0_42, %c2, %c0_43] : memref<18x18x4xf32, #tpu.memory_space<vmem>>, vector<16x16x4xf32>
    %27 = vector.shape_cast %26 : vector<16x16x4xf32> to vector<256x4xf32>
    %28 = arith.truncf %27 : vector<256x4xf32> to vector<256x4xbf16>
    %c8 = arith.constant 8 : index
    %c0_44 = arith.constant 0 : index
    %29 = vector.load %arg2[%c8, %c0_44] : memref<36x32xbf16, #tpu.memory_space<vmem>>, vector<4x32xbf16>
    %cst_45 = arith.constant dense<0.000000e+00> : vector<256x32xf32>
    %30 = tpu.matmul %28, %29, %cst_45 {dimension_numbers = #tpu.dot_dimension_numbers<[1], [0], [0], [1], [0, 0, 1, 1], [], []>} : vector<256x4xbf16>, vector<4x32xbf16>, vector<256x32xf32> -> vector<256x32xf32>
    %31 = arith.addf %25, %30 : vector<256x32xf32>
    %c1_46 = arith.constant 1 : index
    %c0_47 = arith.constant 0 : index
    %c0_48 = arith.constant 0 : index
    %32 = vector.load %arg9[%c1_46, %c0_47, %c0_48] : memref<18x18x4xf32, #tpu.memory_space<vmem>>, vector<16x16x4xf32>
    %33 = vector.shape_cast %32 : vector<16x16x4xf32> to vector<256x4xf32>
    %34 = arith.truncf %33 : vector<256x4xf32> to vector<256x4xbf16>
    %c12 = arith.constant 12 : index
    %c0_49 = arith.constant 0 : index
    %35 = vector.load %arg2[%c12, %c0_49] : memref<36x32xbf16, #tpu.memory_space<vmem>>, vector<4x32xbf16>
    %cst_50 = arith.constant dense<0.000000e+00> : vector<256x32xf32>
    %36 = tpu.matmul %34, %35, %cst_50 {dimension_numbers = #tpu.dot_dimension_numbers<[1], [0], [0], [1], [0, 0, 1, 1], [], []>} : vector<256x4xbf16>, vector<4x32xbf16>, vector<256x32xf32> -> vector<256x32xf32>
    %37 = arith.addf %31, %36 : vector<256x32xf32>
    %c1_51 = arith.constant 1 : index
    %c1_52 = arith.constant 1 : index
    %c0_53 = arith.constant 0 : index
    %38 = vector.load %arg9[%c1_51, %c1_52, %c0_53] : memref<18x18x4xf32, #tpu.memory_space<vmem>>, vector<16x16x4xf32>
    %39 = vector.shape_cast %38 : vector<16x16x4xf32> to vector<256x4xf32>
    %40 = arith.truncf %39 : vector<256x4xf32> to vector<256x4xbf16>
    %c16 = arith.constant 16 : index
    %c0_54 = arith.constant 0 : index
    %41 = vector.load %arg2[%c16, %c0_54] : memref<36x32xbf16, #tpu.memory_space<vmem>>, vector<4x32xbf16>
    %cst_55 = arith.constant dense<0.000000e+00> : vector<256x32xf32>
    %42 = tpu.matmul %40, %41, %cst_55 {dimension_numbers = #tpu.dot_dimension_numbers<[1], [0], [0], [1], [0, 0, 1, 1], [], []>} : vector<256x4xbf16>, vector<4x32xbf16>, vector<256x32xf32> -> vector<256x32xf32>
    %43 = arith.addf %37, %42 : vector<256x32xf32>
    %c1_56 = arith.constant 1 : index
    %c2_57 = arith.constant 2 : index
    %c0_58 = arith.constant 0 : index
    %44 = vector.load %arg9[%c1_56, %c2_57, %c0_58] : memref<18x18x4xf32, #tpu.memory_space<vmem>>, vector<16x16x4xf32>
    %45 = vector.shape_cast %44 : vector<16x16x4xf32> to vector<256x4xf32>
    %46 = arith.truncf %45 : vector<256x4xf32> to vector<256x4xbf16>
    %c20 = arith.constant 20 : index
    %c0_59 = arith.constant 0 : index
    %47 = vector.load %arg2[%c20, %c0_59] : memref<36x32xbf16, #tpu.memory_space<vmem>>, vector<4x32xbf16>
    %cst_60 = arith.constant dense<0.000000e+00> : vector<256x32xf32>
    %48 = tpu.matmul %46, %47, %cst_60 {dimension_numbers = #tpu.dot_dimension_numbers<[1], [0], [0], [1], [0, 0, 1, 1], [], []>} : vector<256x4xbf16>, vector<4x32xbf16>, vector<256x32xf32> -> vector<256x32xf32>
    %49 = arith.addf %43, %48 : vector<256x32xf32>
    %c2_61 = arith.constant 2 : index
    %c0_62 = arith.constant 0 : index
    %c0_63 = arith.constant 0 : index
    %50 = vector.load %arg9[%c2_61, %c0_62, %c0_63] : memref<18x18x4xf32, #tpu.memory_space<vmem>>, vector<16x16x4xf32>
    %51 = vector.shape_cast %50 : vector<16x16x4xf32> to vector<256x4xf32>
    %52 = arith.truncf %51 : vector<256x4xf32> to vector<256x4xbf16>
    %c24 = arith.constant 24 : index
    %c0_64 = arith.constant 0 : index
    %53 = vector.load %arg2[%c24, %c0_64] : memref<36x32xbf16, #tpu.memory_space<vmem>>, vector<4x32xbf16>
    %cst_65 = arith.constant dense<0.000000e+00> : vector<256x32xf32>
    %54 = tpu.matmul %52, %53, %cst_65 {dimension_numbers = #tpu.dot_dimension_numbers<[1], [0], [0], [1], [0, 0, 1, 1], [], []>} : vector<256x4xbf16>, vector<4x32xbf16>, vector<256x32xf32> -> vector<256x32xf32>
    %55 = arith.addf %49, %54 : vector<256x32xf32>
    %c2_66 = arith.constant 2 : index
    %c1_67 = arith.constant 1 : index
    %c0_68 = arith.constant 0 : index
    %56 = vector.load %arg9[%c2_66, %c1_67, %c0_68] : memref<18x18x4xf32, #tpu.memory_space<vmem>>, vector<16x16x4xf32>
    %57 = vector.shape_cast %56 : vector<16x16x4xf32> to vector<256x4xf32>
    %58 = arith.truncf %57 : vector<256x4xf32> to vector<256x4xbf16>
    %c28 = arith.constant 28 : index
    %c0_69 = arith.constant 0 : index
    %59 = vector.load %arg2[%c28, %c0_69] : memref<36x32xbf16, #tpu.memory_space<vmem>>, vector<4x32xbf16>
    %cst_70 = arith.constant dense<0.000000e+00> : vector<256x32xf32>
    %60 = tpu.matmul %58, %59, %cst_70 {dimension_numbers = #tpu.dot_dimension_numbers<[1], [0], [0], [1], [0, 0, 1, 1], [], []>} : vector<256x4xbf16>, vector<4x32xbf16>, vector<256x32xf32> -> vector<256x32xf32>
    %61 = arith.addf %55, %60 : vector<256x32xf32>
    %c2_71 = arith.constant 2 : index
    %c2_72 = arith.constant 2 : index
    %c0_73 = arith.constant 0 : index
    %62 = vector.load %arg9[%c2_71, %c2_72, %c0_73] : memref<18x18x4xf32, #tpu.memory_space<vmem>>, vector<16x16x4xf32>
    %63 = vector.shape_cast %62 : vector<16x16x4xf32> to vector<256x4xf32>
    %64 = arith.truncf %63 : vector<256x4xf32> to vector<256x4xbf16>
    %c32 = arith.constant 32 : index
    %c0_74 = arith.constant 0 : index
    %65 = vector.load %arg2[%c32, %c0_74] : memref<36x32xbf16, #tpu.memory_space<vmem>>, vector<4x32xbf16>
    %cst_75 = arith.constant dense<0.000000e+00> : vector<256x32xf32>
    %66 = tpu.matmul %64, %65, %cst_75 {dimension_numbers = #tpu.dot_dimension_numbers<[1], [0], [0], [1], [0, 0, 1, 1], [], []>} : vector<256x4xbf16>, vector<4x32xbf16>, vector<256x32xf32> -> vector<256x32xf32>
    %67 = arith.addf %61, %66 : vector<256x32xf32>
    %c0_76 = arith.constant 0 : index
    %c0_77 = arith.constant 0 : index
    %68 = vector.load %arg3[%c0_76, %c0_77] : memref<1x32xf32, #tpu.memory_space<vmem>>, vector<1x32xf32>
    %69 = vector.shape_cast %68 : vector<1x32xf32> to vector<32xf32>
    %70 = vector.shape_cast %69 : vector<32xf32> to vector<1x32xf32>
    %71 = vector.broadcast %70 : vector<1x32xf32> to vector<256x32xf32>
    %72 = arith.addf %67, %71 : vector<256x32xf32>
    %cst_78 = arith.constant 0.000000e+00 : f32
    %73 = vector.broadcast %cst_78 : f32 to vector<256x32xf32>
    %74 = arith.maximumf %72, %73 : vector<256x32xf32>
    %75 = vector.shape_cast %74 : vector<256x32xf32> to vector<16x16x32xf32>
    %c1_79 = arith.constant 1 : index
    %c1_80 = arith.constant 1 : index
    %c0_81 = arith.constant 0 : index
    %76 = vector.load %arg10[%c1_79, %c1_80, %c0_81] : memref<18x18x32xf32, #tpu.memory_space<vmem>>, vector<16x16x32xf32>
    tpu.vector_store %arg10[%c1_79, %c1_80, %c0_81], %75 {strides = array<i32>} : memref<18x18x32xf32, #tpu.memory_space<vmem>>, vector<16x16x32xf32>,
    %c0_82 = arith.constant 0 : index
    %c0_83 = arith.constant 0 : index
    %c0_84 = arith.constant 0 : index
    %77 = vector.load %arg10[%c0_82, %c0_83, %c0_84] : memref<18x18x32xf32, #tpu.memory_space<vmem>>, vector<16x16x32xf32>
    %78 = vector.shape_cast %77 : vector<16x16x32xf32> to vector<256x32xf32>
    %79 = arith.truncf %78 : vector<256x32xf32> to vector<256x32xbf16>
    %c0_85 = arith.constant 0 : index
    %c0_86 = arith.constant 0 : index
    %80 = vector.load %arg4[%c0_85, %c0_86] : memref<288x160xbf16, #tpu.memory_space<vmem>>, vector<32x160xbf16>
    %cst_87 = arith.constant dense<0.000000e+00> : vector<256x160xf32>
    %81 = tpu.matmul %79, %80, %cst_87 {dimension_numbers = #tpu.dot_dimension_numbers<[1], [0], [0], [1], [0, 0, 1, 1], [], []>} : vector<256x32xbf16>, vector<32x160xbf16>, vector<256x160xf32> -> vector<256x160xf32>
    %c0_88 = arith.constant 0 : index
    %c1_89 = arith.constant 1 : index
    %c0_90 = arith.constant 0 : index
    %82 = vector.load %arg10[%c0_88, %c1_89, %c0_90] : memref<18x18x32xf32, #tpu.memory_space<vmem>>, vector<16x16x32xf32>
    %83 = vector.shape_cast %82 : vector<16x16x32xf32> to vector<256x32xf32>
    %84 = arith.truncf %83 : vector<256x32xf32> to vector<256x32xbf16>
    %c32_91 = arith.constant 32 : index
    %c0_92 = arith.constant 0 : index
    %85 = vector.load %arg4[%c32_91, %c0_92] : memref<288x160xbf16, #tpu.memory_space<vmem>>, vector<32x160xbf16>
    %cst_93 = arith.constant dense<0.000000e+00> : vector<256x160xf32>
    %86 = tpu.matmul %84, %85, %cst_93 {dimension_numbers = #tpu.dot_dimension_numbers<[1], [0], [0], [1], [0, 0, 1, 1], [], []>} : vector<256x32xbf16>, vector<32x160xbf16>, vector<256x160xf32> -> vector<256x160xf32>
    %87 = arith.addf %81, %86 : vector<256x160xf32>
    %c0_94 = arith.constant 0 : index
    %c2_95 = arith.constant 2 : index
    %c0_96 = arith.constant 0 : index
    %88 = vector.load %arg10[%c0_94, %c2_95, %c0_96] : memref<18x18x32xf32, #tpu.memory_space<vmem>>, vector<16x16x32xf32>
    %89 = vector.shape_cast %88 : vector<16x16x32xf32> to vector<256x32xf32>
    %90 = arith.truncf %89 : vector<256x32xf32> to vector<256x32xbf16>
    %c64 = arith.constant 64 : index
    %c0_97 = arith.constant 0 : index
    %91 = vector.load %arg4[%c64, %c0_97] : memref<288x160xbf16, #tpu.memory_space<vmem>>, vector<32x160xbf16>
    %cst_98 = arith.constant dense<0.000000e+00> : vector<256x160xf32>
    %92 = tpu.matmul %90, %91, %cst_98 {dimension_numbers = #tpu.dot_dimension_numbers<[1], [0], [0], [1], [0, 0, 1, 1], [], []>} : vector<256x32xbf16>, vector<32x160xbf16>, vector<256x160xf32> -> vector<256x160xf32>
    %93 = arith.addf %87, %92 : vector<256x160xf32>
    %c1_99 = arith.constant 1 : index
    %c0_100 = arith.constant 0 : index
    %c0_101 = arith.constant 0 : index
    %94 = vector.load %arg10[%c1_99, %c0_100, %c0_101] : memref<18x18x32xf32, #tpu.memory_space<vmem>>, vector<16x16x32xf32>
    %95 = vector.shape_cast %94 : vector<16x16x32xf32> to vector<256x32xf32>
    %96 = arith.truncf %95 : vector<256x32xf32> to vector<256x32xbf16>
    %c96 = arith.constant 96 : index
    %c0_102 = arith.constant 0 : index
    %97 = vector.load %arg4[%c96, %c0_102] : memref<288x160xbf16, #tpu.memory_space<vmem>>, vector<32x160xbf16>
    %cst_103 = arith.constant dense<0.000000e+00> : vector<256x160xf32>
    %98 = tpu.matmul %96, %97, %cst_103 {dimension_numbers = #tpu.dot_dimension_numbers<[1], [0], [0], [1], [0, 0, 1, 1], [], []>} : vector<256x32xbf16>, vector<32x160xbf16>, vector<256x160xf32> -> vector<256x160xf32>
    %99 = arith.addf %93, %98 : vector<256x160xf32>
    %c1_104 = arith.constant 1 : index
    %c1_105 = arith.constant 1 : index
    %c0_106 = arith.constant 0 : index
    %100 = vector.load %arg10[%c1_104, %c1_105, %c0_106] : memref<18x18x32xf32, #tpu.memory_space<vmem>>, vector<16x16x32xf32>
    %101 = vector.shape_cast %100 : vector<16x16x32xf32> to vector<256x32xf32>
    %102 = arith.truncf %101 : vector<256x32xf32> to vector<256x32xbf16>
    %c128 = arith.constant 128 : index
    %c0_107 = arith.constant 0 : index
    %103 = vector.load %arg4[%c128, %c0_107] : memref<288x160xbf16, #tpu.memory_space<vmem>>, vector<32x160xbf16>
    %cst_108 = arith.constant dense<0.000000e+00> : vector<256x160xf32>
    %104 = tpu.matmul %102, %103, %cst_108 {dimension_numbers = #tpu.dot_dimension_numbers<[1], [0], [0], [1], [0, 0, 1, 1], [], []>} : vector<256x32xbf16>, vector<32x160xbf16>, vector<256x160xf32> -> vector<256x160xf32>
    %105 = arith.addf %99, %104 : vector<256x160xf32>
    %c1_109 = arith.constant 1 : index
    %c2_110 = arith.constant 2 : index
    %c0_111 = arith.constant 0 : index
    %106 = vector.load %arg10[%c1_109, %c2_110, %c0_111] : memref<18x18x32xf32, #tpu.memory_space<vmem>>, vector<16x16x32xf32>
    %107 = vector.shape_cast %106 : vector<16x16x32xf32> to vector<256x32xf32>
    %108 = arith.truncf %107 : vector<256x32xf32> to vector<256x32xbf16>
    %c160 = arith.constant 160 : index
    %c0_112 = arith.constant 0 : index
    %109 = vector.load %arg4[%c160, %c0_112] : memref<288x160xbf16, #tpu.memory_space<vmem>>, vector<32x160xbf16>
    %cst_113 = arith.constant dense<0.000000e+00> : vector<256x160xf32>
    %110 = tpu.matmul %108, %109, %cst_113 {dimension_numbers = #tpu.dot_dimension_numbers<[1], [0], [0], [1], [0, 0, 1, 1], [], []>} : vector<256x32xbf16>, vector<32x160xbf16>, vector<256x160xf32> -> vector<256x160xf32>
    %111 = arith.addf %105, %110 : vector<256x160xf32>
    %c2_114 = arith.constant 2 : index
    %c0_115 = arith.constant 0 : index
    %c0_116 = arith.constant 0 : index
    %112 = vector.load %arg10[%c2_114, %c0_115, %c0_116] : memref<18x18x32xf32, #tpu.memory_space<vmem>>, vector<16x16x32xf32>
    %113 = vector.shape_cast %112 : vector<16x16x32xf32> to vector<256x32xf32>
    %114 = arith.truncf %113 : vector<256x32xf32> to vector<256x32xbf16>
    %c192 = arith.constant 192 : index
    %c0_117 = arith.constant 0 : index
    %115 = vector.load %arg4[%c192, %c0_117] : memref<288x160xbf16, #tpu.memory_space<vmem>>, vector<32x160xbf16>
    %cst_118 = arith.constant dense<0.000000e+00> : vector<256x160xf32>
    %116 = tpu.matmul %114, %115, %cst_118 {dimension_numbers = #tpu.dot_dimension_numbers<[1], [0], [0], [1], [0, 0, 1, 1], [], []>} : vector<256x32xbf16>, vector<32x160xbf16>, vector<256x160xf32> -> vector<256x160xf32>
    %117 = arith.addf %111, %116 : vector<256x160xf32>
    %c2_119 = arith.constant 2 : index
    %c1_120 = arith.constant 1 : index
    %c0_121 = arith.constant 0 : index
    %118 = vector.load %arg10[%c2_119, %c1_120, %c0_121] : memref<18x18x32xf32, #tpu.memory_space<vmem>>, vector<16x16x32xf32>
    %119 = vector.shape_cast %118 : vector<16x16x32xf32> to vector<256x32xf32>
    %120 = arith.truncf %119 : vector<256x32xf32> to vector<256x32xbf16>
    %c224 = arith.constant 224 : index
    %c0_122 = arith.constant 0 : index
    %121 = vector.load %arg4[%c224, %c0_122] : memref<288x160xbf16, #tpu.memory_space<vmem>>, vector<32x160xbf16>
    %cst_123 = arith.constant dense<0.000000e+00> : vector<256x160xf32>
    %122 = tpu.matmul %120, %121, %cst_123 {dimension_numbers = #tpu.dot_dimension_numbers<[1], [0], [0], [1], [0, 0, 1, 1], [], []>} : vector<256x32xbf16>, vector<32x160xbf16>, vector<256x160xf32> -> vector<256x160xf32>
    %123 = arith.addf %117, %122 : vector<256x160xf32>
    %c2_124 = arith.constant 2 : index
    %c2_125 = arith.constant 2 : index
    %c0_126 = arith.constant 0 : index
    %124 = vector.load %arg10[%c2_124, %c2_125, %c0_126] : memref<18x18x32xf32, #tpu.memory_space<vmem>>, vector<16x16x32xf32>
    %125 = vector.shape_cast %124 : vector<16x16x32xf32> to vector<256x32xf32>
    %126 = arith.truncf %125 : vector<256x32xf32> to vector<256x32xbf16>
    %c256 = arith.constant 256 : index
    %c0_127 = arith.constant 0 : index
    %127 = vector.load %arg4[%c256, %c0_127] : memref<288x160xbf16, #tpu.memory_space<vmem>>, vector<32x160xbf16>
    %cst_128 = arith.constant dense<0.000000e+00> : vector<256x160xf32>
    %128 = tpu.matmul %126, %127, %cst_128 {dimension_numbers = #tpu.dot_dimension_numbers<[1], [0], [0], [1], [0, 0, 1, 1], [], []>} : vector<256x32xbf16>, vector<32x160xbf16>, vector<256x160xf32> -> vector<256x160xf32>
    %129 = arith.addf %123, %128 : vector<256x160xf32>
    %c0_129 = arith.constant 0 : index
    %c0_130 = arith.constant 0 : index
    %130 = vector.load %arg5[%c0_129, %c0_130] : memref<1x160xf32, #tpu.memory_space<vmem>>, vector<1x160xf32>
    %131 = vector.shape_cast %130 : vector<1x160xf32> to vector<160xf32>
    %132 = vector.shape_cast %131 : vector<160xf32> to vector<1x160xf32>
    %133 = vector.broadcast %132 : vector<1x160xf32> to vector<256x160xf32>
    %134 = arith.addf %129, %133 : vector<256x160xf32>
    %cst_131 = arith.constant 0.000000e+00 : f32
    %135 = vector.broadcast %cst_131 : f32 to vector<256x160xf32>
    %136 = arith.maximumf %134, %135 : vector<256x160xf32>
    %137 = arith.truncf %136 : vector<256x160xf32> to vector<256x160xbf16>
    %c0_132 = arith.constant 0 : index
    %c0_133 = arith.constant 0 : index
    %138 = vector.load %arg6[%c0_132, %c0_133] : memref<160x32xbf16, #tpu.memory_space<vmem>>, vector<160x32xbf16>
    %cst_134 = arith.constant dense<0.000000e+00> : vector<256x32xf32>
    %139 = tpu.matmul %137, %138, %cst_134 {dimension_numbers = #tpu.dot_dimension_numbers<[1], [0], [0], [1], [0, 0, 1, 1], [], []>} : vector<256x160xbf16>, vector<160x32xbf16>, vector<256x32xf32> -> vector<256x32xf32>
    %c0_135 = arith.constant 0 : index
    %c0_136 = arith.constant 0 : index
    %140 = vector.load %arg7[%c0_135, %c0_136] : memref<1x32xf32, #tpu.memory_space<vmem>>, vector<1x32xf32>
    %141 = vector.shape_cast %140 : vector<1x32xf32> to vector<32xf32>
    %142 = vector.shape_cast %141 : vector<32xf32> to vector<1x32xf32>
    %143 = vector.broadcast %142 : vector<1x32xf32> to vector<256x32xf32>
    %144 = arith.addf %139, %143 : vector<256x32xf32>
    %145 = tpu.transpose %144, [1, 0] : vector<256x32xf32> -> vector<32x256xf32>
    %146 = vector.extract_strided_slice %145 {offsets = [0, 0], sizes = [29, 256], strides = [1, 1]} : vector<32x256xf32> to vector<29x256xf32>
    %c0_137 = arith.constant 0 : index
    %c0_138 = arith.constant 0 : index
    %c0_139 = arith.constant 0 : index
    %147 = vector.load %arg8[%c0_137, %c0_138, %c0_139] : memref<1x29x256xf32, #tpu.memory_space<vmem>>, vector<1x29x256xf32>
    %148 = vector.shape_cast %147 : vector<1x29x256xf32> to vector<29x256xf32>
    %149 = vector.shape_cast %146 : vector<29x256xf32> to vector<1x29x256xf32>
    tpu.vector_store %arg8[%c0_137, %c0_138, %c0_139], %149 {strides = array<i32>} : memref<1x29x256xf32, #tpu.memory_space<vmem>>, vector<1x29x256xf32>,
    return
  }
  func.func @transform_0(%arg0: i32) -> (i32, i32, i32, i32) {
    %c0_i32 = arith.constant 0 : i32
    %c0_i32_0 = arith.constant 0 : i32
    %c0_i32_1 = arith.constant 0 : i32
    %c0_i32_2 = arith.constant 0 : i32
    return %arg0, %c0_i32, %c0_i32_0, %c0_i32_1 : i32, i32, i32, i32
  }
  func.func @transform_1(%arg0: i32) -> (i32, i32) {
    %c0_i32 = arith.constant 0 : i32
    %c0_i32_0 = arith.constant 0 : i32
    %c0_i32_1 = arith.constant 0 : i32
    return %c0_i32, %c0_i32_0 : i32, i32
  }
  func.func @transform_2(%arg0: i32) -> (i32, i32) {
    %c0_i32 = arith.constant 0 : i32
    %c0_i32_0 = arith.constant 0 : i32
    %c0_i32_1 = arith.constant 0 : i32
    return %c0_i32, %c0_i32_0 : i32, i32
  }
  func.func @transform_3(%arg0: i32) -> (i32, i32) {
    %c0_i32 = arith.constant 0 : i32
    %c0_i32_0 = arith.constant 0 : i32
    %c0_i32_1 = arith.constant 0 : i32
    return %c0_i32, %c0_i32_0 : i32, i32
  }
  func.func @transform_4(%arg0: i32) -> (i32, i32) {
    %c0_i32 = arith.constant 0 : i32
    %c0_i32_0 = arith.constant 0 : i32
    %c0_i32_1 = arith.constant 0 : i32
    return %c0_i32, %c0_i32_0 : i32, i32
  }
  func.func @transform_5(%arg0: i32) -> (i32, i32) {
    %c0_i32 = arith.constant 0 : i32
    %c0_i32_0 = arith.constant 0 : i32
    %c0_i32_1 = arith.constant 0 : i32
    return %c0_i32, %c0_i32_0 : i32, i32
  }
  func.func @transform_6(%arg0: i32) -> (i32, i32) {
    %c0_i32 = arith.constant 0 : i32
    %c0_i32_0 = arith.constant 0 : i32
    %c0_i32_1 = arith.constant 0 : i32
    return %c0_i32, %c0_i32_0 : i32, i32
  }
  func.func @transform_7(%arg0: i32) -> (i32, i32, i32) {
    %c0_i32 = arith.constant 0 : i32
    %c0_i32_0 = arith.constant 0 : i32
    %c0_i32_1 = arith.constant 0 : i32
    return %arg0, %c0_i32, %c0_i32_0 : i32, i32, i32
  }
}

</mosaic_0001>

<llo_original>
// kernel: simple_model_forward.1
$region0: #{simple_model_forward.1}
  #allocation0 [shape = 'u32[]', space=smem, size = 0x4, offset = 0x4, fixed_abs, tag = 'smem constant byte address 0x4 - core index']
  #allocation1 [shape = 'u32[144,128]{1,0:T(1,128)}', space=vmem, size = 0x12000, scoped, tag = 'internal scratch']
  #allocation2 [shape = 'f32[18,18,4]{2,1,0:T(8,128)}', space=vmem, size = 0x36000, scoped, tag = 'scratch operand']
  #allocation3 [shape = 'f32[18,18,32]{2,1,0:T(8,128)}', space=vmem, size = 0x36000, scoped, tag = 'scratch operand']
  %s0 = inlined_call_operand.vmem [shape: f32[2,16,16,4], index: 0, kind: input, shape index: {}]
  %s1 = inlined_call_operand.vmem [shape: bf16[36,32], index: 1, kind: input, shape index: {}]
  %s2 = inlined_call_operand.vmem [shape: f32[1,32], index: 2, kind: input, shape index: {}]
  %s3 = inlined_call_operand.vmem [shape: bf16[288,160], index: 3, kind: input, shape index: {}]
  %s4 = inlined_call_operand.vmem [shape: f32[1,160], index: 4, kind: input, shape index: {}]
  %s5 = inlined_call_operand.vmem [shape: bf16[160,32], index: 5, kind: input, shape index: {}]
  %s6 = inlined_call_operand.vmem [shape: f32[1,32], index: 6, kind: input, shape index: {}]
  %s7 = inlined_call_operand.vmem [shape: f32[2,29,256], index: 7, kind: output, shape index: {}]
  %s8 = sld [smem:[#allocation0]]
  $region61: #{simple_model_forward.1} parent=0
    _
  %s10 = ssub.s32 1, %s8
  %s11 = scalar_select 0, %s10, %s8
  loop: start=0, step=1, limit=4
  $region2: #{simple_model_forward.1} parent=0 // loop_pre_header
    _
  $region3: #{simple_model_forward.1} parent=0 // loop_header
    %s13 = sphi 0, %s17
    %p14 = scmp.ge.s32.totalorder %s13, 4
    %s23 = sphi 0, %s25
    %s26 = sphi 0, %s23
    %s27 = sphi 0, %s26
    %s43 = sphi 0, %s27
    %s47 = sphi 0, %s47
    %s49 = sphi 0, %s47
    %s50 = sphi 0, %s49
    %s64 = sphi 0, %s50
    %s68 = sphi 0, %s68
    %s70 = sphi 0, %s68
    %s71 = sphi 0, %s70
    %s85 = sphi 0, %s71
    %s89 = sphi 0, %s89
    %s91 = sphi 0, %s89
    %s92 = sphi 0, %s91
    %s106 = sphi 0, %s92
    %s110 = sphi 0, %s110
    %s112 = sphi 0, %s110
    %s113 = sphi 0, %s112
    %s127 = sphi 0, %s113
    %s131 = sphi 0, %s131
    %s133 = sphi 0, %s131
    %s134 = sphi 0, %s133
    %s148 = sphi 0, %s134
    %s152 = sphi 0, %s152
    %s154 = sphi 0, %s152
    %s155 = sphi 0, %s154
    %s169 = sphi 0, %s155
    %s175 = sphi 0, %s177
    %s178 = sphi 0, %s175
    %s179 = sphi 0, %s178
    %s195 = sphi 0, %s179
  $region4: #{simple_model_forward.1} parent=0 // loop_header_branch
    %16 = sbr.rel (%p14) target = $region8
  $region5: #{simple_model_forward.1} parent=0 // loop_body
    %s18 = ssub.s32 %s13, 1
    %s19 = ssub.s32 %s13, 2
    %s20 = sadd.s32 %s13, 1
    %s21 = ssub.s32 %s13, %s20
    %p22 = scmp.eq.s32.totalorder %s21, 0
    %s24 = sadd.s32 %s23, 1
    %s25 = scalar_select %p22, %s23, %s24
    %p28 = pneg %p22
    %p29 = scmp.eq.s32.totalorder %s13, 1
    %p30 = por %p28, %p29
    %p31 = scmp.ne.s32.totalorder %s23, %s26
    %p32 = scmp.eq.s32.totalorder %s13, 0
    %p33 = por %p31, %p32
    %p34 = scmp.ne.s32.totalorder %s23, %s26
    %p35 = scmp.eq.s32.totalorder %s18, 1
    %p36 = por %p34, %p35
    %p37 = scmp.ne.s32.totalorder %s26, %s27
    %p38 = scmp.eq.s32.totalorder %s18, 0
    %p39 = por %p37, %p38
    %p40 = scmp.ne.s32.totalorder %s26, %s27
    %p41 = scmp.eq.s32.totalorder %s19, 1
    %p42 = por %p40, %p41
    %p44 = scmp.ne.s32.totalorder %s27, %s43
    %p45 = scmp.eq.s32.totalorder %s19, 0
    %p46 = por %p44, %p45
    %s48 = sadd.s32 %s47, 1
    %p51 = scmp.eq.s32.totalorder %s13, 1
    %p52 = scmp.ne.s32.totalorder %s47, %s49
    %p53 = scmp.eq.s32.totalorder %s13, 0
    %p54 = por %p52, %p53
    %p55 = scmp.ne.s32.totalorder %s47, %s49
    %p56 = scmp.eq.s32.totalorder %s18, 1
    %p57 = por %p55, %p56
    %p58 = scmp.ne.s32.totalorder %s49, %s50
    %p59 = scmp.eq.s32.totalorder %s18, 0
    %p60 = por %p58, %p59
    %p61 = scmp.ne.s32.totalorder %s49, %s50
    %p62 = scmp.eq.s32.totalorder %s19, 1
    %p63 = por %p61, %p62
    %p65 = scmp.ne.s32.totalorder %s50, %s64
    %p66 = scmp.eq.s32.totalorder %s19, 0
    %p67 = por %p65, %p66
    %s69 = sadd.s32 %s68, 1
    %p72 = scmp.eq.s32.totalorder %s13, 1
    %p73 = scmp.ne.s32.totalorder %s68, %s70
    %p74 = scmp.eq.s32.totalorder %s13, 0
    %p75 = por %p73, %p74
    %p76 = scmp.ne.s32.totalorder %s68, %s70
    %p77 = scmp.eq.s32.totalorder %s18, 1
    %p78 = por %p76, %p77
    %p79 = scmp.ne.s32.totalorder %s70, %s71
    %p80 = scmp.eq.s32.totalorder %s18, 0
    %p81 = por %p79, %p80
    %p82 = scmp.ne.s32.totalorder %s70, %s71
    %p83 = scmp.eq.s32.totalorder %s19, 1
    %p84 = por %p82, %p83
    %p86 = scmp.ne.s32.totalorder %s71, %s85
    %p87 = scmp.eq.s32.totalorder %s19, 0
    %p88 = por %p86, %p87
    %s90 = sadd.s32 %s89, 1
    %p93 = scmp.eq.s32.totalorder %s13, 1
    %p94 = scmp.ne.s32.totalorder %s89, %s91
    %p95 = scmp.eq.s32.totalorder %s13, 0
    %p96 = por %p94, %p95
    %p97 = scmp.ne.s32.totalorder %s89, %s91
    %p98 = scmp.eq.s32.totalorder %s18, 1
    %p99 = por %p97, %p98
    %p100 = scmp.ne.s32.totalorder %s91, %s92
    %p101 = scmp.eq.s32.totalorder %s18, 0
    %p102 = por %p100, %p101
    %p103 = scmp.ne.s32.totalorder %s91, %s92
    %p104 = scmp.eq.s32.totalorder %s19, 1
    %p105 = por %p103, %p104
    %p107 = scmp.ne.s32.totalorder %s92, %s106
    %p108 = scmp.eq.s32.totalorder %s19, 0
    %p109 = por %p107, %p108
    %s111 = sadd.s32 %s110, 1
    %p114 = scmp.eq.s32.totalorder %s13, 1
    %p115 = scmp.ne.s32.totalorder %s110, %s112
    %p116 = scmp.eq.s32.totalorder %s13, 0
    %p117 = por %p115, %p116
    %p118 = scmp.ne.s32.totalorder %s110, %s112
    %p119 = scmp.eq.s32.totalorder %s18, 1
    %p120 = por %p118, %p119
    %p121 = scmp.ne.s32.totalorder %s112, %s113
    %p122 = scmp.eq.s32.totalorder %s18, 0
    %p123 = por %p121, %p122
    %p124 = scmp.ne.s32.totalorder %s112, %s113
    %p125 = scmp.eq.s32.totalorder %s19, 1
    %p126 = por %p124, %p125
    %p128 = scmp.ne.s32.totalorder %s113, %s127
    %p129 = scmp.eq.s32.totalorder %s19, 0
    %p130 = por %p128, %p129
    %s132 = sadd.s32 %s131, 1
    %p135 = scmp.eq.s32.totalorder %s13, 1
    %p136 = scmp.ne.s32.totalorder %s131, %s133
    %p137 = scmp.eq.s32.totalorder %s13, 0
    %p138 = por %p136, %p137
    %p139 = scmp.ne.s32.totalorder %s131, %s133
    %p140 = scmp.eq.s32.totalorder %s18, 1
    %p141 = por %p139, %p140
    %p142 = scmp.ne.s32.totalorder %s133, %s134
    %p143 = scmp.eq.s32.totalorder %s18, 0
    %p144 = por %p142, %p143
    %p145 = scmp.ne.s32.totalorder %s133, %s134
    %p146 = scmp.eq.s32.totalorder %s19, 1
    %p147 = por %p145, %p146
    %p149 = scmp.ne.s32.totalorder %s134, %s148
    %p150 = scmp.eq.s32.totalorder %s19, 0
    %p151 = por %p149, %p150
    %s153 = sadd.s32 %s152, 1
    %p156 = scmp.eq.s32.totalorder %s13, 1
    %p157 = scmp.ne.s32.totalorder %s152, %s154
    %p158 = scmp.eq.s32.totalorder %s13, 0
    %p159 = por %p157, %p158
    %p160 = scmp.ne.s32.totalorder %s152, %s154
    %p161 = scmp.eq.s32.totalorder %s18, 1
    %p162 = por %p160, %p161
    %p163 = scmp.ne.s32.totalorder %s154, %s155
    %p164 = scmp.eq.s32.totalorder %s18, 0
    %p165 = por %p163, %p164
    %p166 = scmp.ne.s32.totalorder %s154, %s155
    %p167 = scmp.eq.s32.totalorder %s19, 1
    %p168 = por %p166, %p167
    %p170 = scmp.ne.s32.totalorder %s155, %s169
    %p171 = scmp.eq.s32.totalorder %s19, 0
    %p172 = por %p170, %p171
    %s173 = ssub.s32 %s13, %s20
    %p174 = scmp.eq.s32.totalorder %s173, 0
    %s176 = sadd.s32 %s175, 1
    %s177 = scalar_select %p174, %s175, %s176
    %p180 = pneg %p174
    %p181 = scmp.eq.s32.totalorder %s13, 1
    %p182 = por %p180, %p181
    %p183 = scmp.ne.s32.totalorder %s175, %s178
    %p184 = scmp.eq.s32.totalorder %s13, 0
    %p185 = por %p183, %p184
    %p186 = scmp.ne.s32.totalorder %s175, %s178
    %p187 = scmp.eq.s32.totalorder %s18, 1
    %p188 = por %p186, %p187
    %p189 = scmp.ne.s32.totalorder %s178, %s179
    %p190 = scmp.eq.s32.totalorder %s18, 0
    %p191 = por %p189, %p190
    %p192 = scmp.ne.s32.totalorder %s178, %s179
    %p193 = scmp.eq.s32.totalorder %s19, 1
    %p194 = por %p192, %p193
    %p196 = scmp.ne.s32.totalorder %s179, %s195
    %p197 = scmp.eq.s32.totalorder %s19, 0
    %p198 = por %p196, %p197
    %p199 = scmp.le.s32.totalorder 1, %s13
    %p200 = scmp.lt.s32.totalorder %s13, 3
    %p201 = pnand %p199, %p200
    %p202 = pneg %p201
    // Predicated region
    $region9: #{simple_model_forward.1} parent=5 // pred_check
      _
    $region10: #{simple_model_forward.1} parent=5 // pred_check_branch
      %204 = sbr.rel (%p201) target = $region12
    $region11: #{simple_model_forward.1} parent=5 // pred_region
      %s205 = ssub.s32 %s13, 1
      // Predicated region
      $region13: #{simple_model_forward.1} parent=11 // pred_check
        %p206 = pneg %p60
      $region14: #{simple_model_forward.1} parent=11 // pred_check_branch
        %208 = sbr.rel (%p206) target = $region16
      $region15: #{simple_model_forward.1} parent=11 // pred_region
        _
      $region16: #{simple_model_forward.1} parent=11 // pred_fallthru
        _
      // Predicated region
      $region17: #{simple_model_forward.1} parent=11 // pred_check
        %p209 = pneg %p81
      $region18: #{simple_model_forward.1} parent=11 // pred_check_branch
        %211 = sbr.rel (%p209) target = $region20
      $region19: #{simple_model_forward.1} parent=11 // pred_region
        _
      $region20: #{simple_model_forward.1} parent=11 // pred_fallthru
        _
      // Predicated region
      $region21: #{simple_model_forward.1} parent=11 // pred_check
        %p212 = pneg %p102
      $region22: #{simple_model_forward.1} parent=11 // pred_check_branch
        %214 = sbr.rel (%p212) target = $region24
      $region23: #{simple_model_forward.1} parent=11 // pred_region
        _
      $region24: #{simple_model_forward.1} parent=11 // pred_fallthru
        _
      // Predicated region
      $region25: #{simple_model_forward.1} parent=11 // pred_check
        %p215 = pneg %p123
      $region26: #{simple_model_forward.1} parent=11 // pred_check_branch
        %217 = sbr.rel (%p215) target = $region28
      $region27: #{simple_model_forward.1} parent=11 // pred_region
        _
      $region28: #{simple_model_forward.1} parent=11 // pred_fallthru
        _
      // Predicated region
      $region29: #{simple_model_forward.1} parent=11 // pred_check
        %p218 = pneg %p144
      $region30: #{simple_model_forward.1} parent=11 // pred_check_branch
        %220 = sbr.rel (%p218) target = $region32
      $region31: #{simple_model_forward.1} parent=11 // pred_region
        _
      $region32: #{simple_model_forward.1} parent=11 // pred_fallthru
        _
      // Predicated region
      $region33: #{simple_model_forward.1} parent=11 // pred_check
        %p221 = pneg %p165
      $region34: #{simple_model_forward.1} parent=11 // pred_check_branch
        %223 = sbr.rel (%p221) target = $region36
      $region35: #{simple_model_forward.1} parent=11 // pred_region
        _
      $region36: #{simple_model_forward.1} parent=11 // pred_fallthru
        _
    $region12: #{simple_model_forward.1} parent=5 // pred_fallthru
      _
    %p224 = scmp.lt.s32.totalorder %s13, 2
    // Predicated region
    $region37: #{simple_model_forward.1} parent=5 // pred_check
      %p225 = pneg %p224
    $region38: #{simple_model_forward.1} parent=5 // pred_check_branch
      %227 = sbr.rel (%p225) target = $region40
    $region39: #{simple_model_forward.1} parent=5 // pred_region
      // Predicated region
      $region41: #{simple_model_forward.1} parent=39 // pred_check
        %p228 = pneg %p33
      $region42: #{simple_model_forward.1} parent=39 // pred_check_branch
        %230 = sbr.rel (%p228) target = $region44
      $region43: #{simple_model_forward.1} parent=39 // pred_region
        %p231 = scmp.lt.s32.totalorder %s13, 1
        %s232 = scalar_select %p231, %s13, 1
        %s233 = smul.addr %s232, 32
        %s234 = smul.addr %s233, 8
        %s235 = scalar_lea.vmem %s0, %s234
      $region44: #{simple_model_forward.1} parent=39 // pred_fallthru
        _
    $region40: #{simple_model_forward.1} parent=5 // pred_fallthru
      _
    %p236 = scmp.le.s32.totalorder 1, %s13
    %p237 = scmp.lt.s32.totalorder %s13, 3
    %p238 = pnand %p236, %p237
    %p239 = pneg %p238
    // Predicated region
    $region45: #{simple_model_forward.1} parent=5 // pred_check
      _
    $region46: #{simple_model_forward.1} parent=5 // pred_check_branch
      %241 = sbr.rel (%p238) target = $region48
    $region47: #{simple_model_forward.1} parent=5 // pred_region
      %s242 = ssub.s32 %s13, 1
      %p243 = scmp.lt.s32.totalorder %s18, 1
      %s244 = scalar_select %p243, %s18, 1
      %s245 = smul.addr %s244, 32
      %s246 = smul.addr %s245, 8
      %s247 = scalar_lea.vmem %s0, %s246
      %p248 = pneg %p39
      %p249 = pneg %p36
      %p250 = pneg %p60
      %p251 = pneg %p57
      %p252 = pneg %p81
      %p253 = pneg %p78
      %p254 = pneg %p102
      %p255 = pneg %p99
      %p256 = pneg %p123
      %p257 = pneg %p120
      %p258 = pneg %p144
      %p259 = pneg %p141
      %p260 = pneg %p165
      %p261 = pneg %p162
      %p262 = pneg %p191
      %p263 = pneg %p188
      %p264 = scmp.lt.s32.totalorder %s18, 1
      %s265 = scalar_select %p264, %s18, 1
      %s266 = smul.addr %s265, 8
      %s267 = smul.addr %s266, 8
      %s268 = scalar_lea.vmem %s7, %s267
      %p269 = scmp.lt.s32.totalorder %s18, 1
      %s270 = scalar_select %p269, %s18, 1
      %s271 = smul.addr %s270, 32
      %s272 = smul.addr %s271, 8
      %s273 = scalar_lea.vmem %s0, %s272
      %p274 = scmp.lt.s32.totalorder %s18, 1
      %s275 = scalar_select %p274, %s18, 1
      %s276 = smul.addr %s275, 8
      %s277 = smul.addr %s276, 8
      %s278 = scalar_lea.vmem %s7, %s277
      %vm280 = vcmask 31744
      %281 = vst.msk [vmem:[#allocation2] sm:$0xff] %vm280, 0.0
      %282 = vst.msk [vmem:[#allocation2 + $0x8] sm:$0xff] %vm280, 0.0
      %vm283 = vcmask 25600
      %284 = vst.msk [vmem:[#allocation2 + $0x10] sm:$0x3] %vm283, 0.0
      %s285 = scalar_lea.vmem [#allocation2], 408
      %286 = vst.msk [vmem:[%s285] sm:$0xff] %vm280, 0.0
      %287 = vst.msk [vmem:[%s285 + $0x8] sm:$0xff] %vm280, 0.0
      %288 = vst.msk [vmem:[%s285 + $0x10] sm:$0x3] %vm283, 0.0
      %vm289 = vcmask 24576
      %290 = vst.msk [vmem:[#allocation2] sm:$0x1] %vm289, 0.0
      %291 = vst.msk [vmem:[#allocation2 + $0x18] sm:$0x1] %vm289, 0.0
      %292 = vst.msk [vmem:[#allocation2 + $0x30] sm:$0x1] %vm289, 0.0
      %293 = vst.msk [vmem:[#allocation2 + $0x48] sm:$0x1] %vm289, 0.0
      %294 = vst.msk [vmem:[#allocation2 + $0x60] sm:$0x1] %vm289, 0.0
      %295 = vst.msk [vmem:[#allocation2 + $0x78] sm:$0x1] %vm289, 0.0
      %296 = vst.msk [vmem:[#allocation2 + $0x90] sm:$0x1] %vm289, 0.0
      %297 = vst.msk [vmem:[#allocation2 + $0xa8] sm:$0x1] %vm289, 0.0
      %298 = vst.msk [vmem:[#allocation2 + $0xc0] sm:$0x1] %vm289, 0.0
      %299 = vst.msk [vmem:[#allocation2 + $0xd8] sm:$0x1] %vm289, 0.0
      %300 = vst.msk [vmem:[#allocation2 + $0xf0] sm:$0x1] %vm289, 0.0
      %301 = vst.msk [vmem:[#allocation2 + $0x108] sm:$0x1] %vm289, 0.0
      %302 = vst.msk [vmem:[#allocation2 + $0x120] sm:$0x1] %vm289, 0.0
      %303 = vst.msk [vmem:[#allocation2 + $0x138] sm:$0x1] %vm289, 0.0
      %304 = vst.msk [vmem:[#allocation2 + $0x150] sm:$0x1] %vm289, 0.0
      %305 = vst.msk [vmem:[#allocation2 + $0x168] sm:$0x1] %vm289, 0.0
      %306 = vst.msk [vmem:[#allocation2 + $0x180] sm:$0x1] %vm289, 0.0
      %307 = vst.msk [vmem:[#allocation2 + $0x198] sm:$0x1] %vm289, 0.0
      %308 = vst.msk [vmem:[#allocation2 + $0x11] sm:$0x1] %vm289, 0.0
      %309 = vst.msk [vmem:[#allocation2 + $0x29] sm:$0x1] %vm289, 0.0
      %310 = vst.msk [vmem:[#allocation2 + $0x41] sm:$0x1] %vm289, 0.0
      %311 = vst.msk [vmem:[#allocation2 + $0x59] sm:$0x1] %vm289, 0.0
      %312 = vst.msk [vmem:[#allocation2 + $0x71] sm:$0x1] %vm289, 0.0
      %313 = vst.msk [vmem:[#allocation2 + $0x89] sm:$0x1] %vm289, 0.0
      %314 = vst.msk [vmem:[#allocation2 + $0xa1] sm:$0x1] %vm289, 0.0
      %315 = vst.msk [vmem:[#allocation2 + $0xb9] sm:$0x1] %vm289, 0.0
      %316 = vst.msk [vmem:[#allocation2 + $0xd1] sm:$0x1] %vm289, 0.0
      %317 = vst.msk [vmem:[#allocation2 + $0xe9] sm:$0x1] %vm289, 0.0
      %318 = vst.msk [vmem:[#allocation2 + $0x101] sm:$0x1] %vm289, 0.0
      %319 = vst.msk [vmem:[#allocation2 + $0x119] sm:$0x1] %vm289, 0.0
      %320 = vst.msk [vmem:[#allocation2 + $0x131] sm:$0x1] %vm289, 0.0
      %321 = vst.msk [vmem:[#allocation2 + $0x149] sm:$0x1] %vm289, 0.0
      %322 = vst.msk [vmem:[#allocation2 + $0x161] sm:$0x1] %vm289, 0.0
      %323 = vst.msk [vmem:[#allocation2 + $0x179] sm:$0x1] %vm289, 0.0
      %324 = vst.msk [vmem:[#allocation2 + $0x191] sm:$0x1] %vm289, 0.0
      %325 = vst.msk [vmem:[#allocation2 + $0x1a9] sm:$0x1] %vm289, 0.0
      %vm326 = vcmask 261120
      %327 = vst.msk [vmem:[#allocation3] sm:$0xff] %vm326, 0.0
      %328 = vst.msk [vmem:[#allocation3 + $0x8] sm:$0xff] %vm326, 0.0
      %vm329 = vcmask 254976
      %330 = vst.msk [vmem:[#allocation3 + $0x10] sm:$0x3] %vm329, 0.0
      %s331 = scalar_lea.vmem [#allocation3], 408
      %332 = vst.msk [vmem:[%s331] sm:$0xff] %vm326, 0.0
      %333 = vst.msk [vmem:[%s331 + $0x8] sm:$0xff] %vm326, 0.0
      %334 = vst.msk [vmem:[%s331 + $0x10] sm:$0x3] %vm329, 0.0
      %vm335 = vcmask 253952
      %336 = vst.msk [vmem:[#allocation3] sm:$0x1] %vm335, 0.0
      %337 = vst.msk [vmem:[#allocation3 + $0x18] sm:$0x1] %vm335, 0.0
      %338 = vst.msk [vmem:[#allocation3 + $0x30] sm:$0x1] %vm335, 0.0
      %339 = vst.msk [vmem:[#allocation3 + $0x48] sm:$0x1] %vm335, 0.0
      %340 = vst.msk [vmem:[#allocation3 + $0x60] sm:$0x1] %vm335, 0.0
      %341 = vst.msk [vmem:[#allocation3 + $0x78] sm:$0x1] %vm335, 0.0
      %342 = vst.msk [vmem:[#allocation3 + $0x90] sm:$0x1] %vm335, 0.0
      %343 = vst.msk [vmem:[#allocation3 + $0xa8] sm:$0x1] %vm335, 0.0
      %344 = vst.msk [vmem:[#allocation3 + $0xc0] sm:$0x1] %vm335, 0.0
      %345 = vst.msk [vmem:[#allocation3 + $0xd8] sm:$0x1] %vm335, 0.0
      %346 = vst.msk [vmem:[#allocation3 + $0xf0] sm:$0x1] %vm335, 0.0
      %347 = vst.msk [vmem:[#allocation3 + $0x108] sm:$0x1] %vm335, 0.0
      %348 = vst.msk [vmem:[#allocation3 + $0x120] sm:$0x1] %vm335, 0.0
      %349 = vst.msk [vmem:[#allocation3 + $0x138] sm:$0x1] %vm335, 0.0
      %350 = vst.msk [vmem:[#allocation3 + $0x150] sm:$0x1] %vm335, 0.0
      %351 = vst.msk [vmem:[#allocation3 + $0x168] sm:$0x1] %vm335, 0.0
      %352 = vst.msk [vmem:[#allocation3 + $0x180] sm:$0x1] %vm335, 0.0
      %353 = vst.msk [vmem:[#allocation3 + $0x198] sm:$0x1] %vm335, 0.0
      %354 = vst.msk [vmem:[#allocation3 + $0x11] sm:$0x1] %vm335, 0.0
      %355 = vst.msk [vmem:[#allocation3 + $0x29] sm:$0x1] %vm335, 0.0
      %356 = vst.msk [vmem:[#allocation3 + $0x41] sm:$0x1] %vm335, 0.0
      %357 = vst.msk [vmem:[#allocation3 + $0x59] sm:$0x1] %vm335, 0.0
      %358 = vst.msk [vmem:[#allocation3 + $0x71] sm:$0x1] %vm335, 0.0
      %359 = vst.msk [vmem:[#allocation3 + $0x89] sm:$0x1] %vm335, 0.0
      %360 = vst.msk [vmem:[#allocation3 + $0xa1] sm:$0x1] %vm335, 0.0
      %361 = vst.msk [vmem:[#allocation3 + $0xb9] sm:$0x1] %vm335, 0.0
      %362 = vst.msk [vmem:[#allocation3 + $0xd1] sm:$0x1] %vm335, 0.0
      %363 = vst.msk [vmem:[#allocation3 + $0xe9] sm:$0x1] %vm335, 0.0
      %364 = vst.msk [vmem:[#allocation3 + $0x101] sm:$0x1] %vm335, 0.0
      %365 = vst.msk [vmem:[#allocation3 + $0x119] sm:$0x1] %vm335, 0.0
      %366 = vst.msk [vmem:[#allocation3 + $0x131] sm:$0x1] %vm335, 0.0
      %367 = vst.msk [vmem:[#allocation3 + $0x149] sm:$0x1] %vm335, 0.0
      %368 = vst.msk [vmem:[#allocation3 + $0x161] sm:$0x1] %vm335, 0.0
      %369 = vst.msk [vmem:[#allocation3 + $0x179] sm:$0x1] %vm335, 0.0
      %370 = vst.msk [vmem:[#allocation3 + $0x191] sm:$0x1] %vm335, 0.0
      %371 = vst.msk [vmem:[#allocation3 + $0x1a9] sm:$0x1] %vm335, 0.0
      %v372 = vld [vmem:[%s273] sm:$0xff]
      %v373 = vld [vmem:[%s273 + $0x8] sm:$0xff]
      %v374 = vld [vmem:[%s273 + $0x10] sm:$0xff]
      %v375 = vld [vmem:[%s273 + $0x18] sm:$0xff]
      %v376 = vld [vmem:[%s273 + $0x20] sm:$0xff]
      %v377 = vld [vmem:[%s273 + $0x28] sm:$0xff]
      %v378 = vld [vmem:[%s273 + $0x30] sm:$0xff]
      %v379 = vld [vmem:[%s273 + $0x38] sm:$0xff]
      %v380 = vld [vmem:[%s273 + $0x40] sm:$0xff]
      %v381 = vld [vmem:[%s273 + $0x48] sm:$0xff]
      %v382 = vld [vmem:[%s273 + $0x50] sm:$0xff]
      %v383 = vld [vmem:[%s273 + $0x58] sm:$0xff]
      %v384 = vld [vmem:[%s273 + $0x60] sm:$0xff]
      %v385 = vld [vmem:[%s273 + $0x68] sm:$0xff]
      %v386 = vld [vmem:[%s273 + $0x70] sm:$0xff]
      %v387 = vld [vmem:[%s273 + $0x78] sm:$0xff]
      %v388 = vld [vmem:[%s273 + $0x80] sm:$0xff]
      %v389 = vld [vmem:[%s273 + $0x88] sm:$0xff]
      %v390 = vld [vmem:[%s273 + $0x90] sm:$0xff]
      %v391 = vld [vmem:[%s273 + $0x98] sm:$0xff]
      %v392 = vld [vmem:[%s273 + $0xa0] sm:$0xff]
      %v393 = vld [vmem:[%s273 + $0xa8] sm:$0xff]
      %v394 = vld [vmem:[%s273 + $0xb0] sm:$0xff]
      %v395 = vld [vmem:[%s273 + $0xb8] sm:$0xff]
      %v396 = vld [vmem:[%s273 + $0xc0] sm:$0xff]
      %v397 = vld [vmem:[%s273 + $0xc8] sm:$0xff]
      %v398 = vld [vmem:[%s273 + $0xd0] sm:$0xff]
      %v399 = vld [vmem:[%s273 + $0xd8] sm:$0xff]
      %v400 = vld [vmem:[%s273 + $0xe0] sm:$0xff]
      %v401 = vld [vmem:[%s273 + $0xe8] sm:$0xff]
      %v402 = vld [vmem:[%s273 + $0xf0] sm:$0xff]
      %v403 = vld [vmem:[%s273 + $0xf8] sm:$0xff]
      %s404 = scalar_lea.vmem [#allocation2], 24
      %405 = vst.msk [vmem:[%s404 + $0x1] sm:$0xff] %vm280, %v372
      %406 = vst.msk [vmem:[%s404 + $0x9] sm:$0xff] %vm280, %v373
      %407 = vst.msk [vmem:[%s404 + $0x19] sm:$0xff] %vm280, %v374
      %408 = vst.msk [vmem:[%s404 + $0x21] sm:$0xff] %vm280, %v375
      %409 = vst.msk [vmem:[%s404 + $0x31] sm:$0xff] %vm280, %v376
      %410 = vst.msk [vmem:[%s404 + $0x39] sm:$0xff] %vm280, %v377
      %411 = vst.msk [vmem:[%s404 + $0x49] sm:$0xff] %vm280, %v378
      %412 = vst.msk [vmem:[%s404 + $0x51] sm:$0xff] %vm280, %v379
      %413 = vst.msk [vmem:[%s404 + $0x61] sm:$0xff] %vm280, %v380
      %414 = vst.msk [vmem:[%s404 + $0x69] sm:$0xff] %vm280, %v381
      %415 = vst.msk [vmem:[%s404 + $0x79] sm:$0xff] %vm280, %v382
      %416 = vst.msk [vmem:[%s404 + $0x81] sm:$0xff] %vm280, %v383
      %417 = vst.msk [vmem:[%s404 + $0x91] sm:$0xff] %vm280, %v384
      %418 = vst.msk [vmem:[%s404 + $0x99] sm:$0xff] %vm280, %v385
      %419 = vst.msk [vmem:[%s404 + $0xa9] sm:$0xff] %vm280, %v386
      %420 = vst.msk [vmem:[%s404 + $0xb1] sm:$0xff] %vm280, %v387
      %421 = vst.msk [vmem:[%s404 + $0xc1] sm:$0xff] %vm280, %v388
      %422 = vst.msk [vmem:[%s404 + $0xc9] sm:$0xff] %vm280, %v389
      %423 = vst.msk [vmem:[%s404 + $0xd9] sm:$0xff] %vm280, %v390
      %424 = vst.msk [vmem:[%s404 + $0xe1] sm:$0xff] %vm280, %v391
      %425 = vst.msk [vmem:[%s404 + $0xf1] sm:$0xff] %vm280, %v392
      %426 = vst.msk [vmem:[%s404 + $0xf9] sm:$0xff] %vm280, %v393
      %427 = vst.msk [vmem:[%s404 + $0x109] sm:$0xff] %vm280, %v394
      %428 = vst.msk [vmem:[%s404 + $0x111] sm:$0xff] %vm280, %v395
      %429 = vst.msk [vmem:[%s404 + $0x121] sm:$0xff] %vm280, %v396
      %430 = vst.msk [vmem:[%s404 + $0x129] sm:$0xff] %vm280, %v397
      %431 = vst.msk [vmem:[%s404 + $0x139] sm:$0xff] %vm280, %v398
      %432 = vst.msk [vmem:[%s404 + $0x141] sm:$0xff] %vm280, %v399
      %433 = vst.msk [vmem:[%s404 + $0x151] sm:$0xff] %vm280, %v400
      %434 = vst.msk [vmem:[%s404 + $0x159] sm:$0xff] %vm280, %v401
      %435 = vst.msk [vmem:[%s404 + $0x169] sm:$0xff] %vm280, %v402
      %436 = vst.msk [vmem:[%s404 + $0x171] sm:$0xff] %vm280, %v403
      %v437 = vld [vmem:[#allocation2] sm:$0xff]
      %v438 = vld [vmem:[#allocation2 + $0x8] sm:$0xff]
      %v439 = vld [vmem:[#allocation2 + $0x18] sm:$0xff]
      %v440 = vld [vmem:[#allocation2 + $0x20] sm:$0xff]
      %v441 = vld [vmem:[#allocation2 + $0x30] sm:$0xff]
      %v442 = vld [vmem:[#allocation2 + $0x38] sm:$0xff]
      %v443 = vld [vmem:[#allocation2 + $0x48] sm:$0xff]
      %v444 = vld [vmem:[#allocation2 + $0x50] sm:$0xff]
      %v445 = vld [vmem:[#allocation2 + $0x60] sm:$0xff]
      %v446 = vld [vmem:[#allocation2 + $0x68] sm:$0xff]
      %v447 = vld [vmem:[#allocation2 + $0x78] sm:$0xff]
      %v448 = vld [vmem:[#allocation2 + $0x80] sm:$0xff]
      %v449 = vld [vmem:[#allocation2 + $0x90] sm:$0xff]
      %v450 = vld [vmem:[#allocation2 + $0x98] sm:$0xff]
      %v451 = vld [vmem:[#allocation2 + $0xa8] sm:$0xff]
      %v452 = vld [vmem:[#allocation2 + $0xb0] sm:$0xff]
      %v453 = vld [vmem:[#allocation2 + $0xc0] sm:$0xff]
      %v454 = vld [vmem:[#allocation2 + $0xc8] sm:$0xff]
      %v455 = vld [vmem:[#allocation2 + $0xd8] sm:$0xff]
      %v456 = vld [vmem:[#allocation2 + $0xe0] sm:$0xff]
      %v457 = vld [vmem:[#allocation2 + $0xf0] sm:$0xff]
      %v458 = vld [vmem:[#allocation2 + $0xf8] sm:$0xff]
      %v459 = vld [vmem:[#allocation2 + $0x108] sm:$0xff]
      %v460 = vld [vmem:[#allocation2 + $0x110] sm:$0xff]
      %v461 = vld [vmem:[#allocation2 + $0x120] sm:$0xff]
      %v462 = vld [vmem:[#allocation2 + $0x128] sm:$0xff]
      %v463 = vld [vmem:[#allocation2 + $0x138] sm:$0xff]
      %v464 = vld [vmem:[#allocation2 + $0x140] sm:$0xff]
      %v465 = vld [vmem:[#allocation2 + $0x150] sm:$0xff]
      %v466 = vld [vmem:[#allocation2 + $0x158] sm:$0xff]
      %v467 = vld [vmem:[#allocation2 + $0x168] sm:$0xff]
      %v468 = vld [vmem:[#allocation2 + $0x170] sm:$0xff]
      %v469 = vpack.c.bf16 %v438, %v437
      %v470 = vpack.c.bf16 %v440, %v439
      %v471 = vpack.c.bf16 %v442, %v441
      %v472 = vpack.c.bf16 %v444, %v443
      %v473 = vpack.c.bf16 %v446, %v445
      %v474 = vpack.c.bf16 %v448, %v447
      %v475 = vpack.c.bf16 %v450, %v449
      %v476 = vpack.c.bf16 %v452, %v451
      %v477 = vpack.c.bf16 %v454, %v453
      %v478 = vpack.c.bf16 %v456, %v455
      %v479 = vpack.c.bf16 %v458, %v457
      %v480 = vpack.c.bf16 %v460, %v459
      %v481 = vpack.c.bf16 %v462, %v461
      %v482 = vpack.c.bf16 %v464, %v463
      %v483 = vpack.c.bf16 %v466, %v465
      %v484 = vpack.c.bf16 %v468, %v467
      %v485 = vld [vmem:[%s1] sm:$0x3]
      %v486 = vld [vmem:[#allocation2 + $0x1] sm:$0xff]
      %v487 = vld [vmem:[#allocation2 + $0x9] sm:$0xff]
      %v488 = vld [vmem:[#allocation2 + $0x19] sm:$0xff]
      %v489 = vld [vmem:[#allocation2 + $0x21] sm:$0xff]
      %v490 = vld [vmem:[#allocation2 + $0x31] sm:$0xff]
      %v491 = vld [vmem:[#allocation2 + $0x39] sm:$0xff]
      %v492 = vld [vmem:[#allocation2 + $0x49] sm:$0xff]
      %v493 = vld [vmem:[#allocation2 + $0x51] sm:$0xff]
      %v494 = vld [vmem:[#allocation2 + $0x61] sm:$0xff]
      %v495 = vld [vmem:[#allocation2 + $0x69] sm:$0xff]
      %v496 = vld [vmem:[#allocation2 + $0x79] sm:$0xff]
      %v497 = vld [vmem:[#allocation2 + $0x81] sm:$0xff]
      %v498 = vld [vmem:[#allocation2 + $0x91] sm:$0xff]
      %v499 = vld [vmem:[#allocation2 + $0x99] sm:$0xff]
      %v500 = vld [vmem:[#allocation2 + $0xa9] sm:$0xff]
      %v501 = vld [vmem:[#allocation2 + $0xb1] sm:$0xff]
      %v502 = vld [vmem:[#allocation2 + $0xc1] sm:$0xff]
      %v503 = vld [vmem:[#allocation2 + $0xc9] sm:$0xff]
      %v504 = vld [vmem:[#allocation2 + $0xd9] sm:$0xff]
      %v505 = vld [vmem:[#allocation2 + $0xe1] sm:$0xff]
      %v506 = vld [vmem:[#allocation2 + $0xf1] sm:$0xff]
      %v507 = vld [vmem:[#allocation2 + $0xf9] sm:$0xff]
      %v508 = vld [vmem:[#allocation2 + $0x109] sm:$0xff]
      %v509 = vld [vmem:[#allocation2 + $0x111] sm:$0xff]
      %v510 = vld [vmem:[#allocation2 + $0x121] sm:$0xff]
      %v511 = vld [vmem:[#allocation2 + $0x129] sm:$0xff]
      %v512 = vld [vmem:[#allocation2 + $0x139] sm:$0xff]
      %v513 = vld [vmem:[#allocation2 + $0x141] sm:$0xff]
      %v514 = vld [vmem:[#allocation2 + $0x151] sm:$0xff]
      %v515 = vld [vmem:[#allocation2 + $0x159] sm:$0xff]
      %v516 = vld [vmem:[#allocation2 + $0x169] sm:$0xff]
      %v517 = vld [vmem:[#allocation2 + $0x171] sm:$0xff]
      %v518 = vpack.c.bf16 %v487, %v486
      %v519 = vpack.c.bf16 %v489, %v488
      %v520 = vpack.c.bf16 %v491, %v490
      %v521 = vpack.c.bf16 %v493, %v492
      %v522 = vpack.c.bf16 %v495, %v494
      %v523 = vpack.c.bf16 %v497, %v496
      %v524 = vpack.c.bf16 %v499, %v498
      %v525 = vpack.c.bf16 %v501, %v500
      %v526 = vpack.c.bf16 %v503, %v502
      %v527 = vpack.c.bf16 %v505, %v504
      %v528 = vpack.c.bf16 %v507, %v506
      %v529 = vpack.c.bf16 %v509, %v508
      %v530 = vpack.c.bf16 %v511, %v510
      %v531 = vpack.c.bf16 %v513, %v512
      %v532 = vpack.c.bf16 %v515, %v514
      %v533 = vpack.c.bf16 %v517, %v516
      %v534 = vld [vmem:[%s1] sm:$0xc]
      %v536 = vunpack.c.l.b16 %v534
      %v537 = vpack.c.b16 %v536, %v536
      %v538 = vrot.slane %v537, 2
      %v540 = vsel %vm280, %v518, 0
      %v543 = vsel %vm280, %v519, 0
      %v546 = vsel %vm280, %v520, 0
      %v549 = vsel %vm280, %v521, 0
      %v552 = vsel %vm280, %v522, 0
      %v555 = vsel %vm280, %v523, 0
      %v558 = vsel %vm280, %v524, 0
      %v561 = vsel %vm280, %v525, 0
      %v564 = vsel %vm280, %v526, 0
      %v567 = vsel %vm280, %v527, 0
      %v570 = vsel %vm280, %v528, 0
      %v573 = vsel %vm280, %v529, 0
      %v576 = vsel %vm280, %v530, 0
      %v579 = vsel %vm280, %v531, 0
      %v582 = vsel %vm280, %v532, 0
      %v585 = vsel %vm280, %v533, 0
      %vm587 = vcmask 1041408
      %v589 = vsel %vm587, %v538, 0
      %591 = vmatprep.subr.bf16.mxu0 0
      %592 = vmatpush1.bf16.msra.mxu0 0
      %593 = vmatprep.subr.bf16.mxu0 0
      %594 = vmatpush1.bf16.msra.mxu0 0
      %595 = vmatprep.subr.bf16.mxu0 0
      %596 = vmatpush1.bf16.msra.mxu0 0
      %597 = vmatprep.subr.bf16.mxu0 0
      %598 = vmatpush1.bf16.msra.mxu0 0
      %599 = vmatprep.subr.bf16.mxu0 0
      %600 = vmatpush1.bf16.msra.mxu0 0
      %601 = vmatprep.subr.bf16.mxu0 0
      %602 = vmatpush1.bf16.msra.mxu0 0
      %603 = vmatprep.subr.bf16.mxu0 0
      %604 = vmatpush1.bf16.msra.mxu0 0
      %605 = vmatprep.subr.bf16.mxu0 0
      %606 = vmatpush1.bf16.msra.mxu0 %v589
      %607 = vmatprep.subr.bf16.mxu0 0
      %608 = vmatpush2.bf16.msra.mxu0 0
      %609 = vmatprep.subr.bf16.mxu0 0
      %610 = vmatpush2.bf16.msra.mxu0 0
      %611 = vmatprep.subr.bf16.mxu0 0
      %612 = vmatpush2.bf16.msra.mxu0 0
      %613 = vmatprep.subr.bf16.mxu0 0
      %614 = vmatpush2.bf16.msra.mxu0 0
      %615 = vmatprep.subr.bf16.mxu0 0
      %616 = vmatpush2.bf16.msra.mxu0 0
      %617 = vmatprep.subr.bf16.mxu0 0
      %618 = vmatpush2.bf16.msra.mxu0 0
      %619 = vmatprep.subr.bf16.mxu0 0
      %620 = vmatpush2.bf16.msra.mxu0 0
      %621 = vmatprep.subr.bf16.mxu0 0
      %622 = vmatpush2.bf16.msra.mxu0 0
      %623 = vmatprep.mubr.bf16.mxu0 0
      %624 = vmatmul.mubr.bf16.gmra.mxu0 %v540
      %v625 = vpop.f32.mrf.mxu0
      %v626 = vadd.f32 0.0, %v625
      %v627 = vpop.f32.mrf.mxu0
      %v628 = vpop.f32.mrf.mxu0
      %v629 = vadd.f32 0.0, %v628
      %v630 = vpop.f32.mrf.mxu0
      %631 = vmatprep.mubr.bf16.mxu0 0
      %632 = vmatmul.mubr.bf16.gmra.mxu0 %v543
      %v633 = vpop.f32.mrf.mxu0
      %v634 = vadd.f32 0.0, %v633
      %v635 = vpop.f32.mrf.mxu0
      %v636 = vpop.f32.mrf.mxu0
      %v637 = vadd.f32 0.0, %v636
      %v638 = vpop.f32.mrf.mxu0
      %639 = vmatprep.mubr.bf16.mxu0 0
      %640 = vmatmul.mubr.bf16.gmra.mxu0 %v546
      %v641 = vpop.f32.mrf.mxu0
      %v642 = vadd.f32 0.0, %v641
      %v643 = vpop.f32.mrf.mxu0
      %v644 = vpop.f32.mrf.mxu0
      %v645 = vadd.f32 0.0, %v644
      %v646 = vpop.f32.mrf.mxu0
      %647 = vmatprep.mubr.bf16.mxu0 0
      %648 = vmatmul.mubr.bf16.gmra.mxu0 %v549
      %v649 = vpop.f32.mrf.mxu0
      %v650 = vadd.f32 0.0, %v649
      %v651 = vpop.f32.mrf.mxu0
      %v652 = vpop.f32.mrf.mxu0
      %v653 = vadd.f32 0.0, %v652
      %v654 = vpop.f32.mrf.mxu0
      %655 = vmatprep.mubr.bf16.mxu0 0
      %656 = vmatmul.mubr.bf16.gmra.mxu0 %v552
      %v657 = vpop.f32.mrf.mxu0
      %v658 = vadd.f32 0.0, %v657
      %v659 = vpop.f32.mrf.mxu0
      %v660 = vpop.f32.mrf.mxu0
      %v661 = vadd.f32 0.0, %v660
      %v662 = vpop.f32.mrf.mxu0
      %663 = vmatprep.mubr.bf16.mxu0 0
      %664 = vmatmul.mubr.bf16.gmra.mxu0 %v555
      %v665 = vpop.f32.mrf.mxu0
      %v666 = vadd.f32 0.0, %v665
      %v667 = vpop.f32.mrf.mxu0
      %v668 = vpop.f32.mrf.mxu0
      %v669 = vadd.f32 0.0, %v668
      %v670 = vpop.f32.mrf.mxu0
      %671 = vmatprep.mubr.bf16.mxu0 0
      %672 = vmatmul.mubr.bf16.gmra.mxu0 %v558
      %v673 = vpop.f32.mrf.mxu0
      %v674 = vadd.f32 0.0, %v673
      %v675 = vpop.f32.mrf.mxu0
      %v676 = vpop.f32.mrf.mxu0
      %v677 = vadd.f32 0.0, %v676
      %v678 = vpop.f32.mrf.mxu0
      %679 = vmatprep.mubr.bf16.mxu0 0
      %680 = vmatmul.mubr.bf16.gmra.mxu0 %v561
      %v681 = vpop.f32.mrf.mxu0
      %v682 = vadd.f32 0.0, %v681
      %v683 = vpop.f32.mrf.mxu0
      %v684 = vpop.f32.mrf.mxu0
      %v685 = vadd.f32 0.0, %v684
      %v686 = vpop.f32.mrf.mxu0
      %687 = vmatprep.mubr.bf16.mxu0 0
      %688 = vmatmul.mubr.bf16.gmra.mxu0 %v564
      %v689 = vpop.f32.mrf.mxu0
      %v690 = vadd.f32 0.0, %v689
      %v691 = vpop.f32.mrf.mxu0
      %v692 = vpop.f32.mrf.mxu0
      %v693 = vadd.f32 0.0, %v692
      %v694 = vpop.f32.mrf.mxu0
      %695 = vmatprep.mubr.bf16.mxu0 0
      %696 = vmatmul.mubr.bf16.gmra.mxu0 %v567
      %v697 = vpop.f32.mrf.mxu0
      %v698 = vadd.f32 0.0, %v697
      %v699 = vpop.f32.mrf.mxu0
      %v700 = vpop.f32.mrf.mxu0
      %v701 = vadd.f32 0.0, %v700
      %v702 = vpop.f32.mrf.mxu0
      %703 = vmatprep.mubr.bf16.mxu0 0
      %704 = vmatmul.mubr.bf16.gmra.mxu0 %v570
      %v705 = vpop.f32.mrf.mxu0
      %v706 = vadd.f32 0.0, %v705
      %v707 = vpop.f32.mrf.mxu0
      %v708 = vpop.f32.mrf.mxu0
      %v709 = vadd.f32 0.0, %v708
      %v710 = vpop.f32.mrf.mxu0
      %711 = vmatprep.mubr.bf16.mxu0 0
      %712 = vmatmul.mubr.bf16.gmra.mxu0 %v573
      %v713 = vpop.f32.mrf.mxu0
      %v714 = vadd.f32 0.0, %v713
      %v715 = vpop.f32.mrf.mxu0
      %v716 = vpop.f32.mrf.mxu0
      %v717 = vadd.f32 0.0, %v716
      %v718 = vpop.f32.mrf.mxu0
      %719 = vmatprep.mubr.bf16.mxu0 0
      %720 = vmatmul.mubr.bf16.gmra.mxu0 %v576
      %v721 = vpop.f32.mrf.mxu0
      %v722 = vadd.f32 0.0, %v721
      %v723 = vpop.f32.mrf.mxu0
      %v724 = vpop.f32.mrf.mxu0
      %v725 = vadd.f32 0.0, %v724
      %v726 = vpop.f32.mrf.mxu0
      %727 = vmatprep.mubr.bf16.mxu0 0
      %728 = vmatmul.mubr.bf16.gmra.mxu0 %v579
      %v729 = vpop.f32.mrf.mxu0
      %v730 = vadd.f32 0.0, %v729
      %v731 = vpop.f32.mrf.mxu0
      %v732 = vpop.f32.mrf.mxu0
      %v733 = vadd.f32 0.0, %v732
      %v734 = vpop.f32.mrf.mxu0
      %735 = vmatprep.mubr.bf16.mxu0 0
      %736 = vmatmul.mubr.bf16.gmra.mxu0 %v582
      %v737 = vpop.f32.mrf.mxu0
      %v738 = vadd.f32 0.0, %v737
      %v739 = vpop.f32.mrf.mxu0
      %v740 = vpop.f32.mrf.mxu0
      %v741 = vadd.f32 0.0, %v740
      %v742 = vpop.f32.mrf.mxu0
      %743 = vmatprep.mubr.bf16.mxu0 0
      %744 = vmatmul.mubr.bf16.gmra.mxu0 %v585
      %v745 = vpop.f32.mrf.mxu0
      %v746 = vadd.f32 0.0, %v745
      %v747 = vpop.f32.mrf.mxu0
      %v748 = vpop.f32.mrf.mxu0
      %v749 = vadd.f32 0.0, %v748
      %v750 = vpop.f32.mrf.mxu0
      %751 = vdwg.mxu0
      %v753 = vsel %vm280, %v469, 0
      %v756 = vsel %vm280, %v470, 0
      %v759 = vsel %vm280, %v471, 0
      %v762 = vsel %vm280, %v472, 0
      %v765 = vsel %vm280, %v473, 0
      %v768 = vsel %vm280, %v474, 0
      %v771 = vsel %vm280, %v475, 0
      %v774 = vsel %vm280, %v476, 0
      %v777 = vsel %vm280, %v477, 0
      %v780 = vsel %vm280, %v478, 0
      %v783 = vsel %vm280, %v479, 0
      %v786 = vsel %vm280, %v480, 0
      %v789 = vsel %vm280, %v481, 0
      %v792 = vsel %vm280, %v482, 0
      %v795 = vsel %vm280, %v483, 0
      %v798 = vsel %vm280, %v484, 0
      %v801 = vsel %vm587, %v485, 0
      %803 = vmatprep.subr.bf16.mxu0 0
      %804 = vmatpush1.bf16.msra.mxu0 0
      %805 = vmatprep.subr.bf16.mxu0 0
      %806 = vmatpush1.bf16.msra.mxu0 0
      %807 = vmatprep.subr.bf16.mxu0 0
      %808 = vmatpush1.bf16.msra.mxu0 0
      %809 = vmatprep.subr.bf16.mxu0 0
      %810 = vmatpush1.bf16.msra.mxu0 0
      %811 = vmatprep.subr.bf16.mxu0 0
      %812 = vmatpush1.bf16.msra.mxu0 0
      %813 = vmatprep.subr.bf16.mxu0 0
      %814 = vmatpush1.bf16.msra.mxu0 0
      %815 = vmatprep.subr.bf16.mxu0 0
      %816 = vmatpush1.bf16.msra.mxu0 0
      %817 = vmatprep.subr.bf16.mxu0 0
      %818 = vmatpush1.bf16.msra.mxu0 %v801
      %819 = vmatprep.subr.bf16.mxu0 0
      %820 = vmatpush2.bf16.msra.mxu0 0
      %821 = vmatprep.subr.bf16.mxu0 0
      %822 = vmatpush2.bf16.msra.mxu0 0
      %823 = vmatprep.subr.bf16.mxu0 0
      %824 = vmatpush2.bf16.msra.mxu0 0
      %825 = vmatprep.subr.bf16.mxu0 0
      %826 = vmatpush2.bf16.msra.mxu0 0
      %827 = vmatprep.subr.bf16.mxu0 0
      %828 = vmatpush2.bf16.msra.mxu0 0
      %829 = vmatprep.subr.bf16.mxu0 0
      %830 = vmatpush2.bf16.msra.mxu0 0
      %831 = vmatprep.subr.bf16.mxu0 0
      %832 = vmatpush2.bf16.msra.mxu0 0
      %833 = vmatprep.subr.bf16.mxu0 0
      %834 = vmatpush2.bf16.msra.mxu0 0
      %835 = vmatprep.mubr.bf16.mxu0 0
      %836 = vmatmul.mubr.bf16.gmra.mxu0 %v753
      %v837 = vpop.f32.mrf.mxu0
      %v838 = vadd.f32 %v626, %v837
      %v839 = vpop.f32.mrf.mxu0
      %v840 = vpop.f32.mrf.mxu0
      %v841 = vadd.f32 %v629, %v840
      %v842 = vpop.f32.mrf.mxu0
      %843 = vmatprep.mubr.bf16.mxu0 0
      %844 = vmatmul.mubr.bf16.gmra.mxu0 %v756
      %v845 = vpop.f32.mrf.mxu0
      %v846 = vadd.f32 %v634, %v845
      %v847 = vpop.f32.mrf.mxu0
      %v848 = vpop.f32.mrf.mxu0
      %v849 = vadd.f32 %v637, %v848
      %v850 = vpop.f32.mrf.mxu0
      %851 = vmatprep.mubr.bf16.mxu0 0
      %852 = vmatmul.mubr.bf16.gmra.mxu0 %v759
      %v853 = vpop.f32.mrf.mxu0
      %v854 = vadd.f32 %v642, %v853
      %v855 = vpop.f32.mrf.mxu0
      %v856 = vpop.f32.mrf.mxu0
      %v857 = vadd.f32 %v645, %v856
      %v858 = vpop.f32.mrf.mxu0
      %859 = vmatprep.mubr.bf16.mxu0 0
      %860 = vmatmul.mubr.bf16.gmra.mxu0 %v762
      %v861 = vpop.f32.mrf.mxu0
      %v862 = vadd.f32 %v650, %v861
      %v863 = vpop.f32.mrf.mxu0
      %v864 = vpop.f32.mrf.mxu0
      %v865 = vadd.f32 %v653, %v864
      %v866 = vpop.f32.mrf.mxu0
      %867 = vmatprep.mubr.bf16.mxu0 0
      %868 = vmatmul.mubr.bf16.gmra.mxu0 %v765
      %v869 = vpop.f32.mrf.mxu0
      %v870 = vadd.f32 %v658, %v869
      %v871 = vpop.f32.mrf.mxu0
      %v872 = vpop.f32.mrf.mxu0
      %v873 = vadd.f32 %v661, %v872
      %v874 = vpop.f32.mrf.mxu0
      %875 = vmatprep.mubr.bf16.mxu0 0
      %876 = vmatmul.mubr.bf16.gmra.mxu0 %v768
      %v877 = vpop.f32.mrf.mxu0
      %v878 = vadd.f32 %v666, %v877
      %v879 = vpop.f32.mrf.mxu0
      %v880 = vpop.f32.mrf.mxu0
      %v881 = vadd.f32 %v669, %v880
      %v882 = vpop.f32.mrf.mxu0
      %883 = vmatprep.mubr.bf16.mxu0 0
      %884 = vmatmul.mubr.bf16.gmra.mxu0 %v771
      %v885 = vpop.f32.mrf.mxu0
      %v886 = vadd.f32 %v674, %v885
      %v887 = vpop.f32.mrf.mxu0
      %v888 = vpop.f32.mrf.mxu0
      %v889 = vadd.f32 %v677, %v888
      %v890 = vpop.f32.mrf.mxu0
      %891 = vmatprep.mubr.bf16.mxu0 0
      %892 = vmatmul.mubr.bf16.gmra.mxu0 %v774
      %v893 = vpop.f32.mrf.mxu0
      %v894 = vadd.f32 %v682, %v893
      %v895 = vpop.f32.mrf.mxu0
      %v896 = vpop.f32.mrf.mxu0
      %v897 = vadd.f32 %v685, %v896
      %v898 = vpop.f32.mrf.mxu0
      %899 = vmatprep.mubr.bf16.mxu0 0
      %900 = vmatmul.mubr.bf16.gmra.mxu0 %v777
      %v901 = vpop.f32.mrf.mxu0
      %v902 = vadd.f32 %v690, %v901
      %v903 = vpop.f32.mrf.mxu0
      %v904 = vpop.f32.mrf.mxu0
      %v905 = vadd.f32 %v693, %v904
      %v906 = vpop.f32.mrf.mxu0
      %907 = vmatprep.mubr.bf16.mxu0 0
      %908 = vmatmul.mubr.bf16.gmra.mxu0 %v780
      %v909 = vpop.f32.mrf.mxu0
      %v910 = vadd.f32 %v698, %v909
      %v911 = vpop.f32.mrf.mxu0
      %v912 = vpop.f32.mrf.mxu0
      %v913 = vadd.f32 %v701, %v912
      %v914 = vpop.f32.mrf.mxu0
      %915 = vmatprep.mubr.bf16.mxu0 0
      %916 = vmatmul.mubr.bf16.gmra.mxu0 %v783
      %v917 = vpop.f32.mrf.mxu0
      %v918 = vadd.f32 %v706, %v917
      %v919 = vpop.f32.mrf.mxu0
      %v920 = vpop.f32.mrf.mxu0
      %v921 = vadd.f32 %v709, %v920
      %v922 = vpop.f32.mrf.mxu0
      %923 = vmatprep.mubr.bf16.mxu0 0
      %924 = vmatmul.mubr.bf16.gmra.mxu0 %v786
      %v925 = vpop.f32.mrf.mxu0
      %v926 = vadd.f32 %v714, %v925
      %v927 = vpop.f32.mrf.mxu0
      %v928 = vpop.f32.mrf.mxu0
      %v929 = vadd.f32 %v717, %v928
      %v930 = vpop.f32.mrf.mxu0
      %931 = vmatprep.mubr.bf16.mxu0 0
      %932 = vmatmul.mubr.bf16.gmra.mxu0 %v789
      %v933 = vpop.f32.mrf.mxu0
      %v934 = vadd.f32 %v722, %v933
      %v935 = vpop.f32.mrf.mxu0
      %v936 = vpop.f32.mrf.mxu0
      %v937 = vadd.f32 %v725, %v936
      %v938 = vpop.f32.mrf.mxu0
      %939 = vmatprep.mubr.bf16.mxu0 0
      %940 = vmatmul.mubr.bf16.gmra.mxu0 %v792
      %v941 = vpop.f32.mrf.mxu0
      %v942 = vadd.f32 %v730, %v941
      %v943 = vpop.f32.mrf.mxu0
      %v944 = vpop.f32.mrf.mxu0
      %v945 = vadd.f32 %v733, %v944
      %v946 = vpop.f32.mrf.mxu0
      %947 = vmatprep.mubr.bf16.mxu0 0
      %948 = vmatmul.mubr.bf16.gmra.mxu0 %v795
      %v949 = vpop.f32.mrf.mxu0
      %v950 = vadd.f32 %v738, %v949
      %v951 = vpop.f32.mrf.mxu0
      %v952 = vpop.f32.mrf.mxu0
      %v953 = vadd.f32 %v741, %v952
      %v954 = vpop.f32.mrf.mxu0
      %955 = vmatprep.mubr.bf16.mxu0 0
      %956 = vmatmul.mubr.bf16.gmra.mxu0 %v798
      %v957 = vpop.f32.mrf.mxu0
      %v958 = vadd.f32 %v746, %v957
      %v959 = vpop.f32.mrf.mxu0
      %v960 = vpop.f32.mrf.mxu0
      %v961 = vadd.f32 %v749, %v960
      %v962 = vpop.f32.mrf.mxu0
      %963 = vdwg.mxu0
      %v964 = vld [vmem:[#allocation2 + $0x2] sm:$0xff]
      %v965 = vld [vmem:[#allocation2 + $0xa] sm:$0xff]
      %v966 = vld [vmem:[#allocation2 + $0x1a] sm:$0xff]
      %v967 = vld [vmem:[#allocation2 + $0x22] sm:$0xff]
      %v968 = vld [vmem:[#allocation2 + $0x32] sm:$0xff]
      %v969 = vld [vmem:[#allocation2 + $0x3a] sm:$0xff]
      %v970 = vld [vmem:[#allocation2 + $0x4a] sm:$0xff]
      %v971 = vld [vmem:[#allocation2 + $0x52] sm:$0xff]
      %v972 = vld [vmem:[#allocation2 + $0x62] sm:$0xff]
      %v973 = vld [vmem:[#allocation2 + $0x6a] sm:$0xff]
      %v974 = vld [vmem:[#allocation2 + $0x7a] sm:$0xff]
      %v975 = vld [vmem:[#allocation2 + $0x82] sm:$0xff]
      %v976 = vld [vmem:[#allocation2 + $0x92] sm:$0xff]
      %v977 = vld [vmem:[#allocation2 + $0x9a] sm:$0xff]
      %v978 = vld [vmem:[#allocation2 + $0xaa] sm:$0xff]
      %v979 = vld [vmem:[#allocation2 + $0xb2] sm:$0xff]
      %v980 = vld [vmem:[#allocation2 + $0xc2] sm:$0xff]
      %v981 = vld [vmem:[#allocation2 + $0xca] sm:$0xff]
      %v982 = vld [vmem:[#allocation2 + $0xda] sm:$0xff]
      %v983 = vld [vmem:[#allocation2 + $0xe2] sm:$0xff]
      %v984 = vld [vmem:[#allocation2 + $0xf2] sm:$0xff]
      %v985 = vld [vmem:[#allocation2 + $0xfa] sm:$0xff]
      %v986 = vld [vmem:[#allocation2 + $0x10a] sm:$0xff]
      %v987 = vld [vmem:[#allocation2 + $0x112] sm:$0xff]
      %v988 = vld [vmem:[#allocation2 + $0x122] sm:$0xff]
      %v989 = vld [vmem:[#allocation2 + $0x12a] sm:$0xff]
      %v990 = vld [vmem:[#allocation2 + $0x13a] sm:$0xff]
      %v991 = vld [vmem:[#allocation2 + $0x142] sm:$0xff]
      %v992 = vld [vmem:[#allocation2 + $0x152] sm:$0xff]
      %v993 = vld [vmem:[#allocation2 + $0x15a] sm:$0xff]
      %v994 = vld [vmem:[#allocation2 + $0x16a] sm:$0xff]
      %v995 = vld [vmem:[#allocation2 + $0x172] sm:$0xff]
      %v996 = vpack.c.bf16 %v965, %v964
      %v997 = vpack.c.bf16 %v967, %v966
      %v998 = vpack.c.bf16 %v969, %v968
      %v999 = vpack.c.bf16 %v971, %v970
      %v1000 = vpack.c.bf16 %v973, %v972
      %v1001 = vpack.c.bf16 %v975, %v974
      %v1002 = vpack.c.bf16 %v977, %v976
      %v1003 = vpack.c.bf16 %v979, %v978
      %v1004 = vpack.c.bf16 %v981, %v980
      %v1005 = vpack.c.bf16 %v983, %v982
      %v1006 = vpack.c.bf16 %v985, %v984
      %v1007 = vpack.c.bf16 %v987, %v986
      %v1008 = vpack.c.bf16 %v989, %v988
      %v1009 = vpack.c.bf16 %v991, %v990
      %v1010 = vpack.c.bf16 %v993, %v992
      %v1011 = vpack.c.bf16 %v995, %v994
      %v1012 = vld [vmem:[%s1 + $0x4] sm:$0x3]
      %v1014 = vsel %vm280, %v996, 0
      %v1017 = vsel %vm280, %v997, 0
      %v1020 = vsel %vm280, %v998, 0
      %v1023 = vsel %vm280, %v999, 0
      %v1026 = vsel %vm280, %v1000, 0
      %v1029 = vsel %vm280, %v1001, 0
      %v1032 = vsel %vm280, %v1002, 0
      %v1035 = vsel %vm280, %v1003, 0
      %v1038 = vsel %vm280, %v1004, 0
      %v1041 = vsel %vm280, %v1005, 0
      %v1044 = vsel %vm280, %v1006, 0
      %v1047 = vsel %vm280, %v1007, 0
      %v1050 = vsel %vm280, %v1008, 0
      %v1053 = vsel %vm280, %v1009, 0
      %v1056 = vsel %vm280, %v1010, 0
      %v1059 = vsel %vm280, %v1011, 0
      %v1062 = vsel %vm587, %v1012, 0
      %1064 = vmatprep.subr.bf16.mxu0 0
      %1065 = vmatpush1.bf16.msra.mxu0 0
      %1066 = vmatprep.subr.bf16.mxu0 0
      %1067 = vmatpush1.bf16.msra.mxu0 0
      %1068 = vmatprep.subr.bf16.mxu0 0
      %1069 = vmatpush1.bf16.msra.mxu0 0
      %1070 = vmatprep.subr.bf16.mxu0 0
      %1071 = vmatpush1.bf16.msra.mxu0 0
      %1072 = vmatprep.subr.bf16.mxu0 0
      %1073 = vmatpush1.bf16.msra.mxu0 0
      %1074 = vmatprep.subr.bf16.mxu0 0
      %1075 = vmatpush1.bf16.msra.mxu0 0
      %1076 = vmatprep.subr.bf16.mxu0 0
      %1077 = vmatpush1.bf16.msra.mxu0 0
      %1078 = vmatprep.subr.bf16.mxu0 0
      %1079 = vmatpush1.bf16.msra.mxu0 %v1062
      %1080 = vmatprep.subr.bf16.mxu0 0
      %1081 = vmatpush2.bf16.msra.mxu0 0
      %1082 = vmatprep.subr.bf16.mxu0 0
      %1083 = vmatpush2.bf16.msra.mxu0 0
      %1084 = vmatprep.subr.bf16.mxu0 0
      %1085 = vmatpush2.bf16.msra.mxu0 0
      %1086 = vmatprep.subr.bf16.mxu0 0
      %1087 = vmatpush2.bf16.msra.mxu0 0
      %1088 = vmatprep.subr.bf16.mxu0 0
      %1089 = vmatpush2.bf16.msra.mxu0 0
      %1090 = vmatprep.subr.bf16.mxu0 0
      %1091 = vmatpush2.bf16.msra.mxu0 0
      %1092 = vmatprep.subr.bf16.mxu0 0
      %1093 = vmatpush2.bf16.msra.mxu0 0
      %1094 = vmatprep.subr.bf16.mxu0 0
      %1095 = vmatpush2.bf16.msra.mxu0 0
      %1096 = vmatprep.mubr.bf16.mxu0 0
      %1097 = vmatmul.mubr.bf16.gmra.mxu0 %v1014
      %v1098 = vpop.f32.mrf.mxu0
      %v1099 = vadd.f32 0.0, %v1098
      %v1100 = vpop.f32.mrf.mxu0
      %v1101 = vpop.f32.mrf.mxu0
      %v1102 = vadd.f32 0.0, %v1101
      %v1103 = vpop.f32.mrf.mxu0
      %1104 = vmatprep.mubr.bf16.mxu0 0
      %1105 = vmatmul.mubr.bf16.gmra.mxu0 %v1017
      %v1106 = vpop.f32.mrf.mxu0
      %v1107 = vadd.f32 0.0, %v1106
      %v1108 = vpop.f32.mrf.mxu0
      %v1109 = vpop.f32.mrf.mxu0
      %v1110 = vadd.f32 0.0, %v1109
      %v1111 = vpop.f32.mrf.mxu0
      %1112 = vmatprep.mubr.bf16.mxu0 0
      %1113 = vmatmul.mubr.bf16.gmra.mxu0 %v1020
      %v1114 = vpop.f32.mrf.mxu0
      %v1115 = vadd.f32 0.0, %v1114
      %v1116 = vpop.f32.mrf.mxu0
      %v1117 = vpop.f32.mrf.mxu0
      %v1118 = vadd.f32 0.0, %v1117
      %v1119 = vpop.f32.mrf.mxu0
      %1120 = vmatprep.mubr.bf16.mxu0 0
      %1121 = vmatmul.mubr.bf16.gmra.mxu0 %v1023
      %v1122 = vpop.f32.mrf.mxu0
      %v1123 = vadd.f32 0.0, %v1122
      %v1124 = vpop.f32.mrf.mxu0
      %v1125 = vpop.f32.mrf.mxu0
      %v1126 = vadd.f32 0.0, %v1125
      %v1127 = vpop.f32.mrf.mxu0
      %1128 = vmatprep.mubr.bf16.mxu0 0
      %1129 = vmatmul.mubr.bf16.gmra.mxu0 %v1026
      %v1130 = vpop.f32.mrf.mxu0
      %v1131 = vadd.f32 0.0, %v1130
      %v1132 = vpop.f32.mrf.mxu0
      %v1133 = vpop.f32.mrf.mxu0
      %v1134 = vadd.f32 0.0, %v1133
      %v1135 = vpop.f32.mrf.mxu0
      %1136 = vmatprep.mubr.bf16.mxu0 0
      %1137 = vmatmul.mubr.bf16.gmra.mxu0 %v1029
      %v1138 = vpop.f32.mrf.mxu0
      %v1139 = vadd.f32 0.0, %v1138
      %v1140 = vpop.f32.mrf.mxu0
      %v1141 = vpop.f32.mrf.mxu0
      %v1142 = vadd.f32 0.0, %v1141
      %v1143 = vpop.f32.mrf.mxu0
      %1144 = vmatprep.mubr.bf16.mxu0 0
      %1145 = vmatmul.mubr.bf16.gmra.mxu0 %v1032
      %v1146 = vpop.f32.mrf.mxu0
      %v1147 = vadd.f32 0.0, %v1146
      %v1148 = vpop.f32.mrf.mxu0
      %v1149 = vpop.f32.mrf.mxu0
      %v1150 = vadd.f32 0.0, %v1149
      %v1151 = vpop.f32.mrf.mxu0
      %1152 = vmatprep.mubr.bf16.mxu0 0
      %1153 = vmatmul.mubr.bf16.gmra.mxu0 %v1035
      %v1154 = vpop.f32.mrf.mxu0
      %v1155 = vadd.f32 0.0, %v1154
      %v1156 = vpop.f32.mrf.mxu0
      %v1157 = vpop.f32.mrf.mxu0
      %v1158 = vadd.f32 0.0, %v1157
      %v1159 = vpop.f32.mrf.mxu0
      %1160 = vmatprep.mubr.bf16.mxu0 0
      %1161 = vmatmul.mubr.bf16.gmra.mxu0 %v1038
      %v1162 = vpop.f32.mrf.mxu0
      %v1163 = vadd.f32 0.0, %v1162
      %v1164 = vpop.f32.mrf.mxu0
      %v1165 = vpop.f32.mrf.mxu0
      %v1166 = vadd.f32 0.0, %v1165
      %v1167 = vpop.f32.mrf.mxu0
      %1168 = vmatprep.mubr.bf16.mxu0 0
      %1169 = vmatmul.mubr.bf16.gmra.mxu0 %v1041
      %v1170 = vpop.f32.mrf.mxu0
      %v1171 = vadd.f32 0.0, %v1170
      %v1172 = vpop.f32.mrf.mxu0
      %v1173 = vpop.f32.mrf.mxu0
      %v1174 = vadd.f32 0.0, %v1173
      %v1175 = vpop.f32.mrf.mxu0
      %1176 = vmatprep.mubr.bf16.mxu0 0
      %1177 = vmatmul.mubr.bf16.gmra.mxu0 %v1044
      %v1178 = vpop.f32.mrf.mxu0
      %v1179 = vadd.f32 0.0, %v1178
      %v1180 = vpop.f32.mrf.mxu0
      %v1181 = vpop.f32.mrf.mxu0
      %v1182 = vadd.f32 0.0, %v1181
      %v1183 = vpop.f32.mrf.mxu0
      %1184 = vmatprep.mubr.bf16.mxu0 0
      %1185 = vmatmul.mubr.bf16.gmra.mxu0 %v1047
      %v1186 = vpop.f32.mrf.mxu0
      %v1187 = vadd.f32 0.0, %v1186
      %v1188 = vpop.f32.mrf.mxu0
      %v1189 = vpop.f32.mrf.mxu0
      %v1190 = vadd.f32 0.0, %v1189
      %v1191 = vpop.f32.mrf.mxu0
      %1192 = vmatprep.mubr.bf16.mxu0 0
      %1193 = vmatmul.mubr.bf16.gmra.mxu0 %v1050
      %v1194 = vpop.f32.mrf.mxu0
      %v1195 = vadd.f32 0.0, %v1194
      %v1196 = vpop.f32.mrf.mxu0
      %v1197 = vpop.f32.mrf.mxu0
      %v1198 = vadd.f32 0.0, %v1197
      %v1199 = vpop.f32.mrf.mxu0
      %1200 = vmatprep.mubr.bf16.mxu0 0
      %1201 = vmatmul.mubr.bf16.gmra.mxu0 %v1053
      %v1202 = vpop.f32.mrf.mxu0
      %v1203 = vadd.f32 0.0, %v1202
      %v1204 = vpop.f32.mrf.mxu0
      %v1205 = vpop.f32.mrf.mxu0
      %v1206 = vadd.f32 0.0, %v1205
      %v1207 = vpop.f32.mrf.mxu0
      %1208 = vmatprep.mubr.bf16.mxu0 0
      %1209 = vmatmul.mubr.bf16.gmra.mxu0 %v1056
      %v1210 = vpop.f32.mrf.mxu0
      %v1211 = vadd.f32 0.0, %v1210
      %v1212 = vpop.f32.mrf.mxu0
      %v1213 = vpop.f32.mrf.mxu0
      %v1214 = vadd.f32 0.0, %v1213
      %v1215 = vpop.f32.mrf.mxu0
      %1216 = vmatprep.mubr.bf16.mxu0 0
      %1217 = vmatmul.mubr.bf16.gmra.mxu0 %v1059
      %v1218 = vpop.f32.mrf.mxu0
      %v1219 = vadd.f32 0.0, %v1218
      %v1220 = vpop.f32.mrf.mxu0
      %v1221 = vpop.f32.mrf.mxu0
      %v1222 = vadd.f32 0.0, %v1221
      %v1223 = vpop.f32.mrf.mxu0
      %1224 = vdwg.mxu0
      %v1225 = vadd.f32 %v838, %v1099
      %v1226 = vadd.f32 %v841, %v1102
      %v1227 = vadd.f32 %v846, %v1107
      %v1228 = vadd.f32 %v849, %v1110
      %v1229 = vadd.f32 %v854, %v1115
      %v1230 = vadd.f32 %v857, %v1118
      %v1231 = vadd.f32 %v862, %v1123
      %v1232 = vadd.f32 %v865, %v1126
      %v1233 = vadd.f32 %v870, %v1131
      %v1234 = vadd.f32 %v873, %v1134
      %v1235 = vadd.f32 %v878, %v1139
      %v1236 = vadd.f32 %v881, %v1142
      %v1237 = vadd.f32 %v886, %v1147
      %v1238 = vadd.f32 %v889, %v1150
      %v1239 = vadd.f32 %v894, %v1155
      %v1240 = vadd.f32 %v897, %v1158
      %v1241 = vadd.f32 %v902, %v1163
      %v1242 = vadd.f32 %v905, %v1166
      %v1243 = vadd.f32 %v910, %v1171
      %v1244 = vadd.f32 %v913, %v1174
      %v1245 = vadd.f32 %v918, %v1179
      %v1246 = vadd.f32 %v921, %v1182
      %v1247 = vadd.f32 %v926, %v1187
      %v1248 = vadd.f32 %v929, %v1190
      %v1249 = vadd.f32 %v934, %v1195
      %v1250 = vadd.f32 %v937, %v1198
      %v1251 = vadd.f32 %v942, %v1203
      %v1252 = vadd.f32 %v945, %v1206
      %v1253 = vadd.f32 %v950, %v1211
      %v1254 = vadd.f32 %v953, %v1214
      %v1255 = vadd.f32 %v958, %v1219
      %v1256 = vadd.f32 %v961, %v1222
      %v1257 = vld [vmem:[%s404] sm:$0xff]
      %v1258 = vld [vmem:[%s404 + $0x8] sm:$0xff]
      %v1259 = vld [vmem:[%s404 + $0x18] sm:$0xff]
      %v1260 = vld [vmem:[%s404 + $0x20] sm:$0xff]
      %v1261 = vld [vmem:[%s404 + $0x30] sm:$0xff]
      %v1262 = vld [vmem:[%s404 + $0x38] sm:$0xff]
      %v1263 = vld [vmem:[%s404 + $0x48] sm:$0xff]
      %v1264 = vld [vmem:[%s404 + $0x50] sm:$0xff]
      %v1265 = vld [vmem:[%s404 + $0x60] sm:$0xff]
      %v1266 = vld [vmem:[%s404 + $0x68] sm:$0xff]
      %v1267 = vld [vmem:[%s404 + $0x78] sm:$0xff]
      %v1268 = vld [vmem:[%s404 + $0x80] sm:$0xff]
      %v1269 = vld [vmem:[%s404 + $0x90] sm:$0xff]
      %v1270 = vld [vmem:[%s404 + $0x98] sm:$0xff]
      %v1271 = vld [vmem:[%s404 + $0xa8] sm:$0xff]
      %v1272 = vld [vmem:[%s404 + $0xb0] sm:$0xff]
      %v1273 = vld [vmem:[%s404 + $0xc0] sm:$0xff]
      %v1274 = vld [vmem:[%s404 + $0xc8] sm:$0xff]
      %v1275 = vld [vmem:[%s404 + $0xd8] sm:$0xff]
      %v1276 = vld [vmem:[%s404 + $0xe0] sm:$0xff]
      %v1277 = vld [vmem:[%s404 + $0xf0] sm:$0xff]
      %v1278 = vld [vmem:[%s404 + $0xf8] sm:$0xff]
      %v1279 = vld [vmem:[%s404 + $0x108] sm:$0xff]
      %v1280 = vld [vmem:[%s404 + $0x110] sm:$0xff]
      %v1281 = vld [vmem:[%s404 + $0x120] sm:$0xff]
      %v1282 = vld [vmem:[%s404 + $0x128] sm:$0xff]
      %v1283 = vld [vmem:[%s404 + $0x138] sm:$0xff]
      %v1284 = vld [vmem:[%s404 + $0x140] sm:$0xff]
      %v1285 = vld [vmem:[%s404 + $0x150] sm:$0xff]
      %v1286 = vld [vmem:[%s404 + $0x158] sm:$0xff]
      %v1287 = vld [vmem:[%s404 + $0x168] sm:$0xff]
      %v1288 = vld [vmem:[%s404 + $0x170] sm:$0xff]
      %v1289 = vpack.c.bf16 %v1258, %v1257
      %v1290 = vpack.c.bf16 %v1260, %v1259
      %v1291 = vpack.c.bf16 %v1262, %v1261
      %v1292 = vpack.c.bf16 %v1264, %v1263
      %v1293 = vpack.c.bf16 %v1266, %v1265
      %v1294 = vpack.c.bf16 %v1268, %v1267
      %v1295 = vpack.c.bf16 %v1270, %v1269
      %v1296 = vpack.c.bf16 %v1272, %v1271
      %v1297 = vpack.c.bf16 %v1274, %v1273
      %v1298 = vpack.c.bf16 %v1276, %v1275
      %v1299 = vpack.c.bf16 %v1278, %v1277
      %v1300 = vpack.c.bf16 %v1280, %v1279
      %v1301 = vpack.c.bf16 %v1282, %v1281
      %v1302 = vpack.c.bf16 %v1284, %v1283
      %v1303 = vpack.c.bf16 %v1286, %v1285
      %v1304 = vpack.c.bf16 %v1288, %v1287
      %v1305 = vld [vmem:[%s1 + $0x4] sm:$0xc]
      %v1307 = vunpack.c.l.b16 %v1305
      %v1308 = vpack.c.b16 %v1307, %v1307
      %v1309 = vrot.slane %v1308, 2
      %v1311 = vsel %vm280, %v1289, 0
      %v1314 = vsel %vm280, %v1290, 0
      %v1317 = vsel %vm280, %v1291, 0
      %v1320 = vsel %vm280, %v1292, 0
      %v1323 = vsel %vm280, %v1293, 0
      %v1326 = vsel %vm280, %v1294, 0
      %v1329 = vsel %vm280, %v1295, 0
      %v1332 = vsel %vm280, %v1296, 0
      %v1335 = vsel %vm280, %v1297, 0
      %v1338 = vsel %vm280, %v1298, 0
      %v1341 = vsel %vm280, %v1299, 0
      %v1344 = vsel %vm280, %v1300, 0
      %v1347 = vsel %vm280, %v1301, 0
      %v1350 = vsel %vm280, %v1302, 0
      %v1353 = vsel %vm280, %v1303, 0
      %v1356 = vsel %vm280, %v1304, 0
      %v1359 = vsel %vm587, %v1309, 0
      %1361 = vmatprep.subr.bf16.mxu0 0
      %1362 = vmatpush1.bf16.msra.mxu0 0
      %1363 = vmatprep.subr.bf16.mxu0 0
      %1364 = vmatpush1.bf16.msra.mxu0 0
      %1365 = vmatprep.subr.bf16.mxu0 0
      %1366 = vmatpush1.bf16.msra.mxu0 0
      %1367 = vmatprep.subr.bf16.mxu0 0
      %1368 = vmatpush1.bf16.msra.mxu0 0
      %1369 = vmatprep.subr.bf16.mxu0 0
      %1370 = vmatpush1.bf16.msra.mxu0 0
      %1371 = vmatprep.subr.bf16.mxu0 0
      %1372 = vmatpush1.bf16.msra.mxu0 0
      %1373 = vmatprep.subr.bf16.mxu0 0
      %1374 = vmatpush1.bf16.msra.mxu0 0
      %1375 = vmatprep.subr.bf16.mxu0 0
      %1376 = vmatpush1.bf16.msra.mxu0 %v1359
      %1377 = vmatprep.subr.bf16.mxu0 0
      %1378 = vmatpush2.bf16.msra.mxu0 0
      %1379 = vmatprep.subr.bf16.mxu0 0
      %1380 = vmatpush2.bf16.msra.mxu0 0
      %1381 = vmatprep.subr.bf16.mxu0 0
      %1382 = vmatpush2.bf16.msra.mxu0 0
      %1383 = vmatprep.subr.bf16.mxu0 0
      %1384 = vmatpush2.bf16.msra.mxu0 0
      %1385 = vmatprep.subr.bf16.mxu0 0
      %1386 = vmatpush2.bf16.msra.mxu0 0
      %1387 = vmatprep.subr.bf16.mxu0 0
      %1388 = vmatpush2.bf16.msra.mxu0 0
      %1389 = vmatprep.subr.bf16.mxu0 0
      %1390 = vmatpush2.bf16.msra.mxu0 0
      %1391 = vmatprep.subr.bf16.mxu0 0
      %1392 = vmatpush2.bf16.msra.mxu0 0
      %1393 = vmatprep.mubr.bf16.mxu0 0
      %1394 = vmatmul.mubr.bf16.gmra.mxu0 %v1311
      %v1395 = vpop.f32.mrf.mxu0
      %v1396 = vadd.f32 0.0, %v1395
      %v1397 = vpop.f32.mrf.mxu0
      %v1398 = vpop.f32.mrf.mxu0
      %v1399 = vadd.f32 0.0, %v1398
      %v1400 = vpop.f32.mrf.mxu0
      %1401 = vmatprep.mubr.bf16.mxu0 0
      %1402 = vmatmul.mubr.bf16.gmra.mxu0 %v1314
      %v1403 = vpop.f32.mrf.mxu0
      %v1404 = vadd.f32 0.0, %v1403
      %v1405 = vpop.f32.mrf.mxu0
      %v1406 = vpop.f32.mrf.mxu0
      %v1407 = vadd.f32 0.0, %v1406
      %v1408 = vpop.f32.mrf.mxu0
      %1409 = vmatprep.mubr.bf16.mxu0 0
      %1410 = vmatmul.mubr.bf16.gmra.mxu0 %v1317
      %v1411 = vpop.f32.mrf.mxu0
      %v1412 = vadd.f32 0.0, %v1411
      %v1413 = vpop.f32.mrf.mxu0
      %v1414 = vpop.f32.mrf.mxu0
      %v1415 = vadd.f32 0.0, %v1414
      %v1416 = vpop.f32.mrf.mxu0
      %1417 = vmatprep.mubr.bf16.mxu0 0
      %1418 = vmatmul.mubr.bf16.gmra.mxu0 %v1320
      %v1419 = vpop.f32.mrf.mxu0
      %v1420 = vadd.f32 0.0, %v1419
      %v1421 = vpop.f32.mrf.mxu0
      %v1422 = vpop.f32.mrf.mxu0
      %v1423 = vadd.f32 0.0, %v1422
      %v1424 = vpop.f32.mrf.mxu0
      %1425 = vmatprep.mubr.bf16.mxu0 0
      %1426 = vmatmul.mubr.bf16.gmra.mxu0 %v1323
      %v1427 = vpop.f32.mrf.mxu0
      %v1428 = vadd.f32 0.0, %v1427
      %v1429 = vpop.f32.mrf.mxu0
      %v1430 = vpop.f32.mrf.mxu0
      %v1431 = vadd.f32 0.0, %v1430
      %v1432 = vpop.f32.mrf.mxu0
      %1433 = vmatprep.mubr.bf16.mxu0 0
      %1434 = vmatmul.mubr.bf16.gmra.mxu0 %v1326
      %v1435 = vpop.f32.mrf.mxu0
      %v1436 = vadd.f32 0.0, %v1435
      %v1437 = vpop.f32.mrf.mxu0
      %v1438 = vpop.f32.mrf.mxu0
      %v1439 = vadd.f32 0.0, %v1438
      %v1440 = vpop.f32.mrf.mxu0
      %1441 = vmatprep.mubr.bf16.mxu0 0
      %1442 = vmatmul.mubr.bf16.gmra.mxu0 %v1329
      %v1443 = vpop.f32.mrf.mxu0
      %v1444 = vadd.f32 0.0, %v1443
      %v1445 = vpop.f32.mrf.mxu0
      %v1446 = vpop.f32.mrf.mxu0
      %v1447 = vadd.f32 0.0, %v1446
      %v1448 = vpop.f32.mrf.mxu0
      %1449 = vmatprep.mubr.bf16.mxu0 0
      %1450 = vmatmul.mubr.bf16.gmra.mxu0 %v1332
      %v1451 = vpop.f32.mrf.mxu0
      %v1452 = vadd.f32 0.0, %v1451
      %v1453 = vpop.f32.mrf.mxu0
      %v1454 = vpop.f32.mrf.mxu0
      %v1455 = vadd.f32 0.0, %v1454
      %v1456 = vpop.f32.mrf.mxu0
      %1457 = vmatprep.mubr.bf16.mxu0 0
      %1458 = vmatmul.mubr.bf16.gmra.mxu0 %v1335
      %v1459 = vpop.f32.mrf.mxu0
      %v1460 = vadd.f32 0.0, %v1459
      %v1461 = vpop.f32.mrf.mxu0
      %v1462 = vpop.f32.mrf.mxu0
      %v1463 = vadd.f32 0.0, %v1462
      %v1464 = vpop.f32.mrf.mxu0
      %1465 = vmatprep.mubr.bf16.mxu0 0
      %1466 = vmatmul.mubr.bf16.gmra.mxu0 %v1338
      %v1467 = vpop.f32.mrf.mxu0
      %v1468 = vadd.f32 0.0, %v1467
      %v1469 = vpop.f32.mrf.mxu0
      %v1470 = vpop.f32.mrf.mxu0
      %v1471 = vadd.f32 0.0, %v1470
      %v1472 = vpop.f32.mrf.mxu0
      %1473 = vmatprep.mubr.bf16.mxu0 0
      %1474 = vmatmul.mubr.bf16.gmra.mxu0 %v1341
      %v1475 = vpop.f32.mrf.mxu0
      %v1476 = vadd.f32 0.0, %v1475
      %v1477 = vpop.f32.mrf.mxu0
      %v1478 = vpop.f32.mrf.mxu0
      %v1479 = vadd.f32 0.0, %v1478
      %v1480 = vpop.f32.mrf.mxu0
      %1481 = vmatprep.mubr.bf16.mxu0 0
      %1482 = vmatmul.mubr.bf16.gmra.mxu0 %v1344
      %v1483 = vpop.f32.mrf.mxu0
      %v1484 = vadd.f32 0.0, %v1483
      %v1485 = vpop.f32.mrf.mxu0
      %v1486 = vpop.f32.mrf.mxu0
      %v1487 = vadd.f32 0.0, %v1486
      %v1488 = vpop.f32.mrf.mxu0
      %1489 = vmatprep.mubr.bf16.mxu0 0
      %1490 = vmatmul.mubr.bf16.gmra.mxu0 %v1347
      %v1491 = vpop.f32.mrf.mxu0
      %v1492 = vadd.f32 0.0, %v1491
      %v1493 = vpop.f32.mrf.mxu0
      %v1494 = vpop.f32.mrf.mxu0
      %v1495 = vadd.f32 0.0, %v1494
      %v1496 = vpop.f32.mrf.mxu0
      %1497 = vmatprep.mubr.bf16.mxu0 0
      %1498 = vmatmul.mubr.bf16.gmra.mxu0 %v1350
      %v1499 = vpop.f32.mrf.mxu0
      %v1500 = vadd.f32 0.0, %v1499
      %v1501 = vpop.f32.mrf.mxu0
      %v1502 = vpop.f32.mrf.mxu0
      %v1503 = vadd.f32 0.0, %v1502
      %v1504 = vpop.f32.mrf.mxu0
      %1505 = vmatprep.mubr.bf16.mxu0 0
      %1506 = vmatmul.mubr.bf16.gmra.mxu0 %v1353
      %v1507 = vpop.f32.mrf.mxu0
      %v1508 = vadd.f32 0.0, %v1507
      %v1509 = vpop.f32.mrf.mxu0
      %v1510 = vpop.f32.mrf.mxu0
      %v1511 = vadd.f32 0.0, %v1510
      %v1512 = vpop.f32.mrf.mxu0
      %1513 = vmatprep.mubr.bf16.mxu0 0
      %1514 = vmatmul.mubr.bf16.gmra.mxu0 %v1356
      %v1515 = vpop.f32.mrf.mxu0
      %v1516 = vadd.f32 0.0, %v1515
      %v1517 = vpop.f32.mrf.mxu0
      %v1518 = vpop.f32.mrf.mxu0
      %v1519 = vadd.f32 0.0, %v1518
      %v1520 = vpop.f32.mrf.mxu0
      %1521 = vdwg.mxu0
      %v1522 = vadd.f32 %v1225, %v1396
      %v1523 = vadd.f32 %v1226, %v1399
      %v1524 = vadd.f32 %v1227, %v1404
      %v1525 = vadd.f32 %v1228, %v1407
      %v1526 = vadd.f32 %v1229, %v1412
      %v1527 = vadd.f32 %v1230, %v1415
      %v1528 = vadd.f32 %v1231, %v1420
      %v1529 = vadd.f32 %v1232, %v1423
      %v1530 = vadd.f32 %v1233, %v1428
      %v1531 = vadd.f32 %v1234, %v1431
      %v1532 = vadd.f32 %v1235, %v1436
      %v1533 = vadd.f32 %v1236, %v1439
      %v1534 = vadd.f32 %v1237, %v1444
      %v1535 = vadd.f32 %v1238, %v1447
      %v1536 = vadd.f32 %v1239, %v1452
      %v1537 = vadd.f32 %v1240, %v1455
      %v1538 = vadd.f32 %v1241, %v1460
      %v1539 = vadd.f32 %v1242, %v1463
      %v1540 = vadd.f32 %v1243, %v1468
      %v1541 = vadd.f32 %v1244, %v1471
      %v1542 = vadd.f32 %v1245, %v1476
      %v1543 = vadd.f32 %v1246, %v1479
      %v1544 = vadd.f32 %v1247, %v1484
      %v1545 = vadd.f32 %v1248, %v1487
      %v1546 = vadd.f32 %v1249, %v1492
      %v1547 = vadd.f32 %v1250, %v1495
      %v1548 = vadd.f32 %v1251, %v1500
      %v1549 = vadd.f32 %v1252, %v1503
      %v1550 = vadd.f32 %v1253, %v1508
      %v1551 = vadd.f32 %v1254, %v1511
      %v1552 = vadd.f32 %v1255, %v1516
      %v1553 = vadd.f32 %v1256, %v1519
      %v1554 = vld [vmem:[%s404 + $0x1] sm:$0xff]
      %v1555 = vld [vmem:[%s404 + $0x9] sm:$0xff]
      %v1556 = vld [vmem:[%s404 + $0x19] sm:$0xff]
      %v1557 = vld [vmem:[%s404 + $0x21] sm:$0xff]
      %v1558 = vld [vmem:[%s404 + $0x31] sm:$0xff]
      %v1559 = vld [vmem:[%s404 + $0x39] sm:$0xff]
      %v1560 = vld [vmem:[%s404 + $0x49] sm:$0xff]
      %v1561 = vld [vmem:[%s404 + $0x51] sm:$0xff]
      %v1562 = vld [vmem:[%s404 + $0x61] sm:$0xff]
      %v1563 = vld [vmem:[%s404 + $0x69] sm:$0xff]
      %v1564 = vld [vmem:[%s404 + $0x79] sm:$0xff]
      %v1565 = vld [vmem:[%s404 + $0x81] sm:$0xff]
      %v1566 = vld [vmem:[%s404 + $0x91] sm:$0xff]
      %v1567 = vld [vmem:[%s404 + $0x99] sm:$0xff]
      %v1568 = vld [vmem:[%s404 + $0xa9] sm:$0xff]
      %v1569 = vld [vmem:[%s404 + $0xb1] sm:$0xff]
      %v1570 = vld [vmem:[%s404 + $0xc1] sm:$0xff]
      %v1571 = vld [vmem:[%s404 + $0xc9] sm:$0xff]
      %v1572 = vld [vmem:[%s404 + $0xd9] sm:$0xff]
      %v1573 = vld [vmem:[%s404 + $0xe1] sm:$0xff]
      %v1574 = vld [vmem:[%s404 + $0xf1] sm:$0xff]
      %v1575 = vld [vmem:[%s404 + $0xf9] sm:$0xff]
      %v1576 = vld [vmem:[%s404 + $0x109] sm:$0xff]
      %v1577 = vld [vmem:[%s404 + $0x111] sm:$0xff]
      %v1578 = vld [vmem:[%s404 + $0x121] sm:$0xff]
      %v1579 = vld [vmem:[%s404 + $0x129] sm:$0xff]
      %v1580 = vld [vmem:[%s404 + $0x139] sm:$0xff]
      %v1581 = vld [vmem:[%s404 + $0x141] sm:$0xff]
      %v1582 = vld [vmem:[%s404 + $0x151] sm:$0xff]
      %v1583 = vld [vmem:[%s404 + $0x159] sm:$0xff]
      %v1584 = vld [vmem:[%s404 + $0x169] sm:$0xff]
      %v1585 = vld [vmem:[%s404 + $0x171] sm:$0xff]
      %v1586 = vpack.c.bf16 %v1555, %v1554
      %v1587 = vpack.c.bf16 %v1557, %v1556
      %v1588 = vpack.c.bf16 %v1559, %v1558
      %v1589 = vpack.c.bf16 %v1561, %v1560
      %v1590 = vpack.c.bf16 %v1563, %v1562
      %v1591 = vpack.c.bf16 %v1565, %v1564
      %v1592 = vpack.c.bf16 %v1567, %v1566
      %v1593 = vpack.c.bf16 %v1569, %v1568
      %v1594 = vpack.c.bf16 %v1571, %v1570
      %v1595 = vpack.c.bf16 %v1573, %v1572
      %v1596 = vpack.c.bf16 %v1575, %v1574
      %v1597 = vpack.c.bf16 %v1577, %v1576
      %v1598 = vpack.c.bf16 %v1579, %v1578
      %v1599 = vpack.c.bf16 %v1581, %v1580
      %v1600 = vpack.c.bf16 %v1583, %v1582
      %v1601 = vpack.c.bf16 %v1585, %v1584
      %v1602 = vld [vmem:[%s1 + $0x8] sm:$0x3]
      %v1604 = vsel %vm280, %v1586, 0
      %v1607 = vsel %vm280, %v1587, 0
      %v1610 = vsel %vm280, %v1588, 0
      %v1613 = vsel %vm280, %v1589, 0
      %v1616 = vsel %vm280, %v1590, 0
      %v1619 = vsel %vm280, %v1591, 0
      %v1622 = vsel %vm280, %v1592, 0
      %v1625 = vsel %vm280, %v1593, 0
      %v1628 = vsel %vm280, %v1594, 0
      %v1631 = vsel %vm280, %v1595, 0
      %v1634 = vsel %vm280, %v1596, 0
      %v1637 = vsel %vm280, %v1597, 0
      %v1640 = vsel %vm280, %v1598, 0
      %v1643 = vsel %vm280, %v1599, 0
      %v1646 = vsel %vm280, %v1600, 0
      %v1649 = vsel %vm280, %v1601, 0
      %v1652 = vsel %vm587, %v1602, 0
      %1654 = vmatprep.subr.bf16.mxu0 0
      %1655 = vmatpush1.bf16.msra.mxu0 0
      %1656 = vmatprep.subr.bf16.mxu0 0
      %1657 = vmatpush1.bf16.msra.mxu0 0
      %1658 = vmatprep.subr.bf16.mxu0 0
      %1659 = vmatpush1.bf16.msra.mxu0 0
      %1660 = vmatprep.subr.bf16.mxu0 0
      %1661 = vmatpush1.bf16.msra.mxu0 0
      %1662 = vmatprep.subr.bf16.mxu0 0
      %1663 = vmatpush1.bf16.msra.mxu0 0
      %1664 = vmatprep.subr.bf16.mxu0 0
      %1665 = vmatpush1.bf16.msra.mxu0 0
      %1666 = vmatprep.subr.bf16.mxu0 0
      %1667 = vmatpush1.bf16.msra.mxu0 0
      %1668 = vmatprep.subr.bf16.mxu0 0
      %1669 = vmatpush1.bf16.msra.mxu0 %v1652
      %1670 = vmatprep.subr.bf16.mxu0 0
      %1671 = vmatpush2.bf16.msra.mxu0 0
      %1672 = vmatprep.subr.bf16.mxu0 0
      %1673 = vmatpush2.bf16.msra.mxu0 0
      %1674 = vmatprep.subr.bf16.mxu0 0
      %1675 = vmatpush2.bf16.msra.mxu0 0
      %1676 = vmatprep.subr.bf16.mxu0 0
      %1677 = vmatpush2.bf16.msra.mxu0 0
      %1678 = vmatprep.subr.bf16.mxu0 0
      %1679 = vmatpush2.bf16.msra.mxu0 0
      %1680 = vmatprep.subr.bf16.mxu0 0
      %1681 = vmatpush2.bf16.msra.mxu0 0
      %1682 = vmatprep.subr.bf16.mxu0 0
      %1683 = vmatpush2.bf16.msra.mxu0 0
      %1684 = vmatprep.subr.bf16.mxu0 0
      %1685 = vmatpush2.bf16.msra.mxu0 0
      %1686 = vmatprep.mubr.bf16.mxu0 0
      %1687 = vmatmul.mubr.bf16.gmra.mxu0 %v1604
      %v1688 = vpop.f32.mrf.mxu0
      %v1689 = vadd.f32 0.0, %v1688
      %v1690 = vpop.f32.mrf.mxu0
      %v1691 = vpop.f32.mrf.mxu0
      %v1692 = vadd.f32 0.0, %v1691
      %v1693 = vpop.f32.mrf.mxu0
      %1694 = vmatprep.mubr.bf16.mxu0 0
      %1695 = vmatmul.mubr.bf16.gmra.mxu0 %v1607
      %v1696 = vpop.f32.mrf.mxu0
      %v1697 = vadd.f32 0.0, %v1696
      %v1698 = vpop.f32.mrf.mxu0
      %v1699 = vpop.f32.mrf.mxu0
      %v1700 = vadd.f32 0.0, %v1699
      %v1701 = vpop.f32.mrf.mxu0
      %1702 = vmatprep.mubr.bf16.mxu0 0
      %1703 = vmatmul.mubr.bf16.gmra.mxu0 %v1610
      %v1704 = vpop.f32.mrf.mxu0
      %v1705 = vadd.f32 0.0, %v1704
      %v1706 = vpop.f32.mrf.mxu0
      %v1707 = vpop.f32.mrf.mxu0
      %v1708 = vadd.f32 0.0, %v1707
      %v1709 = vpop.f32.mrf.mxu0
      %1710 = vmatprep.mubr.bf16.mxu0 0
      %1711 = vmatmul.mubr.bf16.gmra.mxu0 %v1613
      %v1712 = vpop.f32.mrf.mxu0
      %v1713 = vadd.f32 0.0, %v1712
      %v1714 = vpop.f32.mrf.mxu0
      %v1715 = vpop.f32.mrf.mxu0
      %v1716 = vadd.f32 0.0, %v1715
      %v1717 = vpop.f32.mrf.mxu0
      %1718 = vmatprep.mubr.bf16.mxu0 0
      %1719 = vmatmul.mubr.bf16.gmra.mxu0 %v1616
      %v1720 = vpop.f32.mrf.mxu0
      %v1721 = vadd.f32 0.0, %v1720
      %v1722 = vpop.f32.mrf.mxu0
      %v1723 = vpop.f32.mrf.mxu0
      %v1724 = vadd.f32 0.0, %v1723
      %v1725 = vpop.f32.mrf.mxu0
      %1726 = vmatprep.mubr.bf16.mxu0 0
      %1727 = vmatmul.mubr.bf16.gmra.mxu0 %v1619
      %v1728 = vpop.f32.mrf.mxu0
      %v1729 = vadd.f32 0.0, %v1728
      %v1730 = vpop.f32.mrf.mxu0
      %v1731 = vpop.f32.mrf.mxu0
      %v1732 = vadd.f32 0.0, %v1731
      %v1733 = vpop.f32.mrf.mxu0
      %1734 = vmatprep.mubr.bf16.mxu0 0
      %1735 = vmatmul.mubr.bf16.gmra.mxu0 %v1622
      %v1736 = vpop.f32.mrf.mxu0
      %v1737 = vadd.f32 0.0, %v1736
      %v1738 = vpop.f32.mrf.mxu0
      %v1739 = vpop.f32.mrf.mxu0
      %v1740 = vadd.f32 0.0, %v1739
      %v1741 = vpop.f32.mrf.mxu0
      %1742 = vmatprep.mubr.bf16.mxu0 0
      %1743 = vmatmul.mubr.bf16.gmra.mxu0 %v1625
      %v1744 = vpop.f32.mrf.mxu0
      %v1745 = vadd.f32 0.0, %v1744
      %v1746 = vpop.f32.mrf.mxu0
      %v1747 = vpop.f32.mrf.mxu0
      %v1748 = vadd.f32 0.0, %v1747
      %v1749 = vpop.f32.mrf.mxu0
      %1750 = vmatprep.mubr.bf16.mxu0 0
      %1751 = vmatmul.mubr.bf16.gmra.mxu0 %v1628
      %v1752 = vpop.f32.mrf.mxu0
      %v1753 = vadd.f32 0.0, %v1752
      %v1754 = vpop.f32.mrf.mxu0
      %v1755 = vpop.f32.mrf.mxu0
      %v1756 = vadd.f32 0.0, %v1755
      %v1757 = vpop.f32.mrf.mxu0
      %1758 = vmatprep.mubr.bf16.mxu0 0
      %1759 = vmatmul.mubr.bf16.gmra.mxu0 %v1631
      %v1760 = vpop.f32.mrf.mxu0
      %v1761 = vadd.f32 0.0, %v1760
      %v1762 = vpop.f32.mrf.mxu0
      %v1763 = vpop.f32.mrf.mxu0
      %v1764 = vadd.f32 0.0, %v1763
      %v1765 = vpop.f32.mrf.mxu0
      %1766 = vmatprep.mubr.bf16.mxu0 0
      %1767 = vmatmul.mubr.bf16.gmra.mxu0 %v1634
      %v1768 = vpop.f32.mrf.mxu0
      %v1769 = vadd.f32 0.0, %v1768
      %v1770 = vpop.f32.mrf.mxu0
      %v1771 = vpop.f32.mrf.mxu0
      %v1772 = vadd.f32 0.0, %v1771
      %v1773 = vpop.f32.mrf.mxu0
      %1774 = vmatprep.mubr.bf16.mxu0 0
      %1775 = vmatmul.mubr.bf16.gmra.mxu0 %v1637
      %v1776 = vpop.f32.mrf.mxu0
      %v1777 = vadd.f32 0.0, %v1776
      %v1778 = vpop.f32.mrf.mxu0
      %v1779 = vpop.f32.mrf.mxu0
      %v1780 = vadd.f32 0.0, %v1779
      %v1781 = vpop.f32.mrf.mxu0
      %1782 = vmatprep.mubr.bf16.mxu0 0
      %1783 = vmatmul.mubr.bf16.gmra.mxu0 %v1640
      %v1784 = vpop.f32.mrf.mxu0
      %v1785 = vadd.f32 0.0, %v1784
      %v1786 = vpop.f32.mrf.mxu0
      %v1787 = vpop.f32.mrf.mxu0
      %v1788 = vadd.f32 0.0, %v1787
      %v1789 = vpop.f32.mrf.mxu0
      %1790 = vmatprep.mubr.bf16.mxu0 0
      %1791 = vmatmul.mubr.bf16.gmra.mxu0 %v1643
      %v1792 = vpop.f32.mrf.mxu0
      %v1793 = vadd.f32 0.0, %v1792
      %v1794 = vpop.f32.mrf.mxu0
      %v1795 = vpop.f32.mrf.mxu0
      %v1796 = vadd.f32 0.0, %v1795
      %v1797 = vpop.f32.mrf.mxu0
      %1798 = vmatprep.mubr.bf16.mxu0 0
      %1799 = vmatmul.mubr.bf16.gmra.mxu0 %v1646
      %v1800 = vpop.f32.mrf.mxu0
      %v1801 = vadd.f32 0.0, %v1800
      %v1802 = vpop.f32.mrf.mxu0
      %v1803 = vpop.f32.mrf.mxu0
      %v1804 = vadd.f32 0.0, %v1803
      %v1805 = vpop.f32.mrf.mxu0
      %1806 = vmatprep.mubr.bf16.mxu0 0
      %1807 = vmatmul.mubr.bf16.gmra.mxu0 %v1649
      %v1808 = vpop.f32.mrf.mxu0
      %v1809 = vadd.f32 0.0, %v1808
      %v1810 = vpop.f32.mrf.mxu0
      %v1811 = vpop.f32.mrf.mxu0
      %v1812 = vadd.f32 0.0, %v1811
      %v1813 = vpop.f32.mrf.mxu0
      %1814 = vdwg.mxu0
      %v1815 = vadd.f32 %v1522, %v1689
      %v1816 = vadd.f32 %v1523, %v1692
      %v1817 = vadd.f32 %v1524, %v1697
      %v1818 = vadd.f32 %v1525, %v1700
      %v1819 = vadd.f32 %v1526, %v1705
      %v1820 = vadd.f32 %v1527, %v1708
      %v1821 = vadd.f32 %v1528, %v1713
      %v1822 = vadd.f32 %v1529, %v1716
      %v1823 = vadd.f32 %v1530, %v1721
      %v1824 = vadd.f32 %v1531, %v1724
      %v1825 = vadd.f32 %v1532, %v1729
      %v1826 = vadd.f32 %v1533, %v1732
      %v1827 = vadd.f32 %v1534, %v1737
      %v1828 = vadd.f32 %v1535, %v1740
      %v1829 = vadd.f32 %v1536, %v1745
      %v1830 = vadd.f32 %v1537, %v1748
      %v1831 = vadd.f32 %v1538, %v1753
      %v1832 = vadd.f32 %v1539, %v1756
      %v1833 = vadd.f32 %v1540, %v1761
      %v1834 = vadd.f32 %v1541, %v1764
      %v1835 = vadd.f32 %v1542, %v1769
      %v1836 = vadd.f32 %v1543, %v1772
      %v1837 = vadd.f32 %v1544, %v1777
      %v1838 = vadd.f32 %v1545, %v1780
      %v1839 = vadd.f32 %v1546, %v1785
      %v1840 = vadd.f32 %v1547, %v1788
      %v1841 = vadd.f32 %v1548, %v1793
      %v1842 = vadd.f32 %v1549, %v1796
      %v1843 = vadd.f32 %v1550, %v1801
      %v1844 = vadd.f32 %v1551, %v1804
      %v1845 = vadd.f32 %v1552, %v1809
      %v1846 = vadd.f32 %v1553, %v1812
      %v1847 = vld [vmem:[%s404 + $0x2] sm:$0xff]
      %v1848 = vld [vmem:[%s404 + $0xa] sm:$0xff]
      %v1849 = vld [vmem:[%s404 + $0x1a] sm:$0xff]
      %v1850 = vld [vmem:[%s404 + $0x22] sm:$0xff]
      %v1851 = vld [vmem:[%s404 + $0x32] sm:$0xff]
      %v1852 = vld [vmem:[%s404 + $0x3a] sm:$0xff]
      %v1853 = vld [vmem:[%s404 + $0x4a] sm:$0xff]
      %v1854 = vld [vmem:[%s404 + $0x52] sm:$0xff]
      %v1855 = vld [vmem:[%s404 + $0x62] sm:$0xff]
      %v1856 = vld [vmem:[%s404 + $0x6a] sm:$0xff]
      %v1857 = vld [vmem:[%s404 + $0x7a] sm:$0xff]
      %v1858 = vld [vmem:[%s404 + $0x82] sm:$0xff]
      %v1859 = vld [vmem:[%s404 + $0x92] sm:$0xff]
      %v1860 = vld [vmem:[%s404 + $0x9a] sm:$0xff]
      %v1861 = vld [vmem:[%s404 + $0xaa] sm:$0xff]
      %v1862 = vld [vmem:[%s404 + $0xb2] sm:$0xff]
      %v1863 = vld [vmem:[%s404 + $0xc2] sm:$0xff]
      %v1864 = vld [vmem:[%s404 + $0xca] sm:$0xff]
      %v1865 = vld [vmem:[%s404 + $0xda] sm:$0xff]
      %v1866 = vld [vmem:[%s404 + $0xe2] sm:$0xff]
      %v1867 = vld [vmem:[%s404 + $0xf2] sm:$0xff]
      %v1868 = vld [vmem:[%s404 + $0xfa] sm:$0xff]
      %v1869 = vld [vmem:[%s404 + $0x10a] sm:$0xff]
      %v1870 = vld [vmem:[%s404 + $0x112] sm:$0xff]
      %v1871 = vld [vmem:[%s404 + $0x122] sm:$0xff]
      %v1872 = vld [vmem:[%s404 + $0x12a] sm:$0xff]
      %v1873 = vld [vmem:[%s404 + $0x13a] sm:$0xff]
      %v1874 = vld [vmem:[%s404 + $0x142] sm:$0xff]
      %v1875 = vld [vmem:[%s404 + $0x152] sm:$0xff]
      %v1876 = vld [vmem:[%s404 + $0x15a] sm:$0xff]
      %v1877 = vld [vmem:[%s404 + $0x16a] sm:$0xff]
      %v1878 = vld [vmem:[%s404 + $0x172] sm:$0xff]
      %v1879 = vpack.c.bf16 %v1848, %v1847
      %v1880 = vpack.c.bf16 %v1850, %v1849
      %v1881 = vpack.c.bf16 %v1852, %v1851
      %v1882 = vpack.c.bf16 %v1854, %v1853
      %v1883 = vpack.c.bf16 %v1856, %v1855
      %v1884 = vpack.c.bf16 %v1858, %v1857
      %v1885 = vpack.c.bf16 %v1860, %v1859
      %v1886 = vpack.c.bf16 %v1862, %v1861
      %v1887 = vpack.c.bf16 %v1864, %v1863
      %v1888 = vpack.c.bf16 %v1866, %v1865
      %v1889 = vpack.c.bf16 %v1868, %v1867
      %v1890 = vpack.c.bf16 %v1870, %v1869
      %v1891 = vpack.c.bf16 %v1872, %v1871
      %v1892 = vpack.c.bf16 %v1874, %v1873
      %v1893 = vpack.c.bf16 %v1876, %v1875
      %v1894 = vpack.c.bf16 %v1878, %v1877
      %v1895 = vld [vmem:[%s1 + $0x8] sm:$0xc]
      %v1897 = vunpack.c.l.b16 %v1895
      %v1898 = vpack.c.b16 %v1897, %v1897
      %v1899 = vrot.slane %v1898, 2
      %v1901 = vsel %vm280, %v1879, 0
      %v1904 = vsel %vm280, %v1880, 0
      %v1907 = vsel %vm280, %v1881, 0
      %v1910 = vsel %vm280, %v1882, 0
      %v1913 = vsel %vm280, %v1883, 0
      %v1916 = vsel %vm280, %v1884, 0
      %v1919 = vsel %vm280, %v1885, 0
      %v1922 = vsel %vm280, %v1886, 0
      %v1925 = vsel %vm280, %v1887, 0
      %v1928 = vsel %vm280, %v1888, 0
      %v1931 = vsel %vm280, %v1889, 0
      %v1934 = vsel %vm280, %v1890, 0
      %v1937 = vsel %vm280, %v1891, 0
      %v1940 = vsel %vm280, %v1892, 0
      %v1943 = vsel %vm280, %v1893, 0
      %v1946 = vsel %vm280, %v1894, 0
      %v1949 = vsel %vm587, %v1899, 0
      %1951 = vmatprep.subr.bf16.mxu0 0
      %1952 = vmatpush1.bf16.msra.mxu0 0
      %1953 = vmatprep.subr.bf16.mxu0 0
      %1954 = vmatpush1.bf16.msra.mxu0 0
      %1955 = vmatprep.subr.bf16.mxu0 0
      %1956 = vmatpush1.bf16.msra.mxu0 0
      %1957 = vmatprep.subr.bf16.mxu0 0
      %1958 = vmatpush1.bf16.msra.mxu0 0
      %1959 = vmatprep.subr.bf16.mxu0 0
      %1960 = vmatpush1.bf16.msra.mxu0 0
      %1961 = vmatprep.subr.bf16.mxu0 0
      %1962 = vmatpush1.bf16.msra.mxu0 0
      %1963 = vmatprep.subr.bf16.mxu0 0
      %1964 = vmatpush1.bf16.msra.mxu0 0
      %1965 = vmatprep.subr.bf16.mxu0 0
      %1966 = vmatpush1.bf16.msra.mxu0 %v1949
      %1967 = vmatprep.subr.bf16.mxu0 0
      %1968 = vmatpush2.bf16.msra.mxu0 0
      %1969 = vmatprep.subr.bf16.mxu0 0
      %1970 = vmatpush2.bf16.msra.mxu0 0
      %1971 = vmatprep.subr.bf16.mxu0 0
      %1972 = vmatpush2.bf16.msra.mxu0 0
      %1973 = vmatprep.subr.bf16.mxu0 0
      %1974 = vmatpush2.bf16.msra.mxu0 0
      %1975 = vmatprep.subr.bf16.mxu0 0
      %1976 = vmatpush2.bf16.msra.mxu0 0
      %1977 = vmatprep.subr.bf16.mxu0 0
      %1978 = vmatpush2.bf16.msra.mxu0 0
      %1979 = vmatprep.subr.bf16.mxu0 0
      %1980 = vmatpush2.bf16.msra.mxu0 0
      %1981 = vmatprep.subr.bf16.mxu0 0
      %1982 = vmatpush2.bf16.msra.mxu0 0
      %1983 = vmatprep.mubr.bf16.mxu0 0
      %1984 = vmatmul.mubr.bf16.gmra.mxu0 %v1901
      %v1985 = vpop.f32.mrf.mxu0
      %v1986 = vadd.f32 0.0, %v1985
      %v1987 = vpop.f32.mrf.mxu0
      %v1988 = vpop.f32.mrf.mxu0
      %v1989 = vadd.f32 0.0, %v1988
      %v1990 = vpop.f32.mrf.mxu0
      %1991 = vmatprep.mubr.bf16.mxu0 0
      %1992 = vmatmul.mubr.bf16.gmra.mxu0 %v1904
      %v1993 = vpop.f32.mrf.mxu0
      %v1994 = vadd.f32 0.0, %v1993
      %v1995 = vpop.f32.mrf.mxu0
      %v1996 = vpop.f32.mrf.mxu0
      %v1997 = vadd.f32 0.0, %v1996
      %v1998 = vpop.f32.mrf.mxu0
      %1999 = vmatprep.mubr.bf16.mxu0 0
      %2000 = vmatmul.mubr.bf16.gmra.mxu0 %v1907
      %v2001 = vpop.f32.mrf.mxu0
      %v2002 = vadd.f32 0.0, %v2001
      %v2003 = vpop.f32.mrf.mxu0
      %v2004 = vpop.f32.mrf.mxu0
      %v2005 = vadd.f32 0.0, %v2004
      %v2006 = vpop.f32.mrf.mxu0
      %2007 = vmatprep.mubr.bf16.mxu0 0
      %2008 = vmatmul.mubr.bf16.gmra.mxu0 %v1910
      %v2009 = vpop.f32.mrf.mxu0
      %v2010 = vadd.f32 0.0, %v2009
      %v2011 = vpop.f32.mrf.mxu0
      %v2012 = vpop.f32.mrf.mxu0
      %v2013 = vadd.f32 0.0, %v2012
      %v2014 = vpop.f32.mrf.mxu0
      %2015 = vmatprep.mubr.bf16.mxu0 0
      %2016 = vmatmul.mubr.bf16.gmra.mxu0 %v1913
      %v2017 = vpop.f32.mrf.mxu0
      %v2018 = vadd.f32 0.0, %v2017
      %v2019 = vpop.f32.mrf.mxu0
      %v2020 = vpop.f32.mrf.mxu0
      %v2021 = vadd.f32 0.0, %v2020
      %v2022 = vpop.f32.mrf.mxu0
      %2023 = vmatprep.mubr.bf16.mxu0 0
      %2024 = vmatmul.mubr.bf16.gmra.mxu0 %v1916
      %v2025 = vpop.f32.mrf.mxu0
      %v2026 = vadd.f32 0.0, %v2025
      %v2027 = vpop.f32.mrf.mxu0
      %v2028 = vpop.f32.mrf.mxu0
      %v2029 = vadd.f32 0.0, %v2028
      %v2030 = vpop.f32.mrf.mxu0
      %2031 = vmatprep.mubr.bf16.mxu0 0
      %2032 = vmatmul.mubr.bf16.gmra.mxu0 %v1919
      %v2033 = vpop.f32.mrf.mxu0
      %v2034 = vadd.f32 0.0, %v2033
      %v2035 = vpop.f32.mrf.mxu0
      %v2036 = vpop.f32.mrf.mxu0
      %v2037 = vadd.f32 0.0, %v2036
      %v2038 = vpop.f32.mrf.mxu0
      %2039 = vmatprep.mubr.bf16.mxu0 0
      %2040 = vmatmul.mubr.bf16.gmra.mxu0 %v1922
      %v2041 = vpop.f32.mrf.mxu0
      %v2042 = vadd.f32 0.0, %v2041
      %v2043 = vpop.f32.mrf.mxu0
      %v2044 = vpop.f32.mrf.mxu0
      %v2045 = vadd.f32 0.0, %v2044
      %v2046 = vpop.f32.mrf.mxu0
      %2047 = vmatprep.mubr.bf16.mxu0 0
      %2048 = vmatmul.mubr.bf16.gmra.mxu0 %v1925
      %v2049 = vpop.f32.mrf.mxu0
      %v2050 = vadd.f32 0.0, %v2049
      %v2051 = vpop.f32.mrf.mxu0
      %v2052 = vpop.f32.mrf.mxu0
      %v2053 = vadd.f32 0.0, %v2052
      %v2054 = vpop.f32.mrf.mxu0
      %2055 = vmatprep.mubr.bf16.mxu0 0
      %2056 = vmatmul.mubr.bf16.gmra.mxu0 %v1928
      %v2057 = vpop.f32.mrf.mxu0
      %v2058 = vadd.f32 0.0, %v2057
      %v2059 = vpop.f32.mrf.mxu0
      %v2060 = vpop.f32.mrf.mxu0
      %v2061 = vadd.f32 0.0, %v2060
      %v2062 = vpop.f32.mrf.mxu0
      %2063 = vmatprep.mubr.bf16.mxu0 0
      %2064 = vmatmul.mubr.bf16.gmra.mxu0 %v1931
      %v2065 = vpop.f32.mrf.mxu0
      %v2066 = vadd.f32 0.0, %v2065
      %v2067 = vpop.f32.mrf.mxu0
      %v2068 = vpop.f32.mrf.mxu0
      %v2069 = vadd.f32 0.0, %v2068
      %v2070 = vpop.f32.mrf.mxu0
      %2071 = vmatprep.mubr.bf16.mxu0 0
      %2072 = vmatmul.mubr.bf16.gmra.mxu0 %v1934
      %v2073 = vpop.f32.mrf.mxu0
      %v2074 = vadd.f32 0.0, %v2073
      %v2075 = vpop.f32.mrf.mxu0
      %v2076 = vpop.f32.mrf.mxu0
      %v2077 = vadd.f32 0.0, %v2076
      %v2078 = vpop.f32.mrf.mxu0
      %2079 = vmatprep.mubr.bf16.mxu0 0
      %2080 = vmatmul.mubr.bf16.gmra.mxu0 %v1937
      %v2081 = vpop.f32.mrf.mxu0
      %v2082 = vadd.f32 0.0, %v2081
      %v2083 = vpop.f32.mrf.mxu0
      %v2084 = vpop.f32.mrf.mxu0
      %v2085 = vadd.f32 0.0, %v2084
      %v2086 = vpop.f32.mrf.mxu0
      %2087 = vmatprep.mubr.bf16.mxu0 0
      %2088 = vmatmul.mubr.bf16.gmra.mxu0 %v1940
      %v2089 = vpop.f32.mrf.mxu0
      %v2090 = vadd.f32 0.0, %v2089
      %v2091 = vpop.f32.mrf.mxu0
      %v2092 = vpop.f32.mrf.mxu0
      %v2093 = vadd.f32 0.0, %v2092
      %v2094 = vpop.f32.mrf.mxu0
      %2095 = vmatprep.mubr.bf16.mxu0 0
      %2096 = vmatmul.mubr.bf16.gmra.mxu0 %v1943
      %v2097 = vpop.f32.mrf.mxu0
      %v2098 = vadd.f32 0.0, %v2097
      %v2099 = vpop.f32.mrf.mxu0
      %v2100 = vpop.f32.mrf.mxu0
      %v2101 = vadd.f32 0.0, %v2100
      %v2102 = vpop.f32.mrf.mxu0
      %2103 = vmatprep.mubr.bf16.mxu0 0
      %2104 = vmatmul.mubr.bf16.gmra.mxu0 %v1946
      %v2105 = vpop.f32.mrf.mxu0
      %v2106 = vadd.f32 0.0, %v2105
      %v2107 = vpop.f32.mrf.mxu0
      %v2108 = vpop.f32.mrf.mxu0
      %v2109 = vadd.f32 0.0, %v2108
      %v2110 = vpop.f32.mrf.mxu0
      %2111 = vdwg.mxu0
      %v2112 = vadd.f32 %v1815, %v1986
      %v2113 = vadd.f32 %v1816, %v1989
      %v2114 = vadd.f32 %v1817, %v1994
      %v2115 = vadd.f32 %v1818, %v1997
      %v2116 = vadd.f32 %v1819, %v2002
      %v2117 = vadd.f32 %v1820, %v2005
      %v2118 = vadd.f32 %v1821, %v2010
      %v2119 = vadd.f32 %v1822, %v2013
      %v2120 = vadd.f32 %v1823, %v2018
      %v2121 = vadd.f32 %v1824, %v2021
      %v2122 = vadd.f32 %v1825, %v2026
      %v2123 = vadd.f32 %v1826, %v2029
      %v2124 = vadd.f32 %v1827, %v2034
      %v2125 = vadd.f32 %v1828, %v2037
      %v2126 = vadd.f32 %v1829, %v2042
      %v2127 = vadd.f32 %v1830, %v2045
      %v2128 = vadd.f32 %v1831, %v2050
      %v2129 = vadd.f32 %v1832, %v2053
      %v2130 = vadd.f32 %v1833, %v2058
      %v2131 = vadd.f32 %v1834, %v2061
      %v2132 = vadd.f32 %v1835, %v2066
      %v2133 = vadd.f32 %v1836, %v2069
      %v2134 = vadd.f32 %v1837, %v2074
      %v2135 = vadd.f32 %v1838, %v2077
      %v2136 = vadd.f32 %v1839, %v2082
      %v2137 = vadd.f32 %v1840, %v2085
      %v2138 = vadd.f32 %v1841, %v2090
      %v2139 = vadd.f32 %v1842, %v2093
      %v2140 = vadd.f32 %v1843, %v2098
      %v2141 = vadd.f32 %v1844, %v2101
      %v2142 = vadd.f32 %v1845, %v2106
      %v2143 = vadd.f32 %v1846, %v2109
      %s2144 = scalar_lea.vmem [#allocation2], 48
      %v2145 = vld [vmem:[%s2144] sm:$0xff]
      %v2146 = vld [vmem:[%s2144 + $0x8] sm:$0xff]
      %v2147 = vld [vmem:[%s2144 + $0x18] sm:$0xff]
      %v2148 = vld [vmem:[%s2144 + $0x20] sm:$0xff]
      %v2149 = vld [vmem:[%s2144 + $0x30] sm:$0xff]
      %v2150 = vld [vmem:[%s2144 + $0x38] sm:$0xff]
      %v2151 = vld [vmem:[%s2144 + $0x48] sm:$0xff]
      %v2152 = vld [vmem:[%s2144 + $0x50] sm:$0xff]
      %v2153 = vld [vmem:[%s2144 + $0x60] sm:$0xff]
      %v2154 = vld [vmem:[%s2144 + $0x68] sm:$0xff]
      %v2155 = vld [vmem:[%s2144 + $0x78] sm:$0xff]
      %v2156 = vld [vmem:[%s2144 + $0x80] sm:$0xff]
      %v2157 = vld [vmem:[%s2144 + $0x90] sm:$0xff]
      %v2158 = vld [vmem:[%s2144 + $0x98] sm:$0xff]
      %v2159 = vld [vmem:[%s2144 + $0xa8] sm:$0xff]
      %v2160 = vld [vmem:[%s2144 + $0xb0] sm:$0xff]
      %v2161 = vld [vmem:[%s2144 + $0xc0] sm:$0xff]
      %v2162 = vld [vmem:[%s2144 + $0xc8] sm:$0xff]
      %v2163 = vld [vmem:[%s2144 + $0xd8] sm:$0xff]
      %v2164 = vld [vmem:[%s2144 + $0xe0] sm:$0xff]
      %v2165 = vld [vmem:[%s2144 + $0xf0] sm:$0xff]
      %v2166 = vld [vmem:[%s2144 + $0xf8] sm:$0xff]
      %v2167 = vld [vmem:[%s2144 + $0x108] sm:$0xff]
      %v2168 = vld [vmem:[%s2144 + $0x110] sm:$0xff]
      %v2169 = vld [vmem:[%s2144 + $0x120] sm:$0xff]
      %v2170 = vld [vmem:[%s2144 + $0x128] sm:$0xff]
      %v2171 = vld [vmem:[%s2144 + $0x138] sm:$0xff]
      %v2172 = vld [vmem:[%s2144 + $0x140] sm:$0xff]
      %v2173 = vld [vmem:[%s2144 + $0x150] sm:$0xff]
      %v2174 = vld [vmem:[%s2144 + $0x158] sm:$0xff]
      %v2175 = vld [vmem:[%s2144 + $0x168] sm:$0xff]
      %v2176 = vld [vmem:[%s2144 + $0x170] sm:$0xff]
      %v2177 = vpack.c.bf16 %v2146, %v2145
      %v2178 = vpack.c.bf16 %v2148, %v2147
      %v2179 = vpack.c.bf16 %v2150, %v2149
      %v2180 = vpack.c.bf16 %v2152, %v2151
      %v2181 = vpack.c.bf16 %v2154, %v2153
      %v2182 = vpack.c.bf16 %v2156, %v2155
      %v2183 = vpack.c.bf16 %v2158, %v2157
      %v2184 = vpack.c.bf16 %v2160, %v2159
      %v2185 = vpack.c.bf16 %v2162, %v2161
      %v2186 = vpack.c.bf16 %v2164, %v2163
      %v2187 = vpack.c.bf16 %v2166, %v2165
      %v2188 = vpack.c.bf16 %v2168, %v2167
      %v2189 = vpack.c.bf16 %v2170, %v2169
      %v2190 = vpack.c.bf16 %v2172, %v2171
      %v2191 = vpack.c.bf16 %v2174, %v2173
      %v2192 = vpack.c.bf16 %v2176, %v2175
      %v2193 = vld [vmem:[%s1 + $0xc] sm:$0x3]
      %v2195 = vsel %vm280, %v2177, 0
      %v2198 = vsel %vm280, %v2178, 0
      %v2201 = vsel %vm280, %v2179, 0
      %v2204 = vsel %vm280, %v2180, 0
      %v2207 = vsel %vm280, %v2181, 0
      %v2210 = vsel %vm280, %v2182, 0
      %v2213 = vsel %vm280, %v2183, 0
      %v2216 = vsel %vm280, %v2184, 0
      %v2219 = vsel %vm280, %v2185, 0
      %v2222 = vsel %vm280, %v2186, 0
      %v2225 = vsel %vm280, %v2187, 0
      %v2228 = vsel %vm280, %v2188, 0
      %v2231 = vsel %vm280, %v2189, 0
      %v2234 = vsel %vm280, %v2190, 0
      %v2237 = vsel %vm280, %v2191, 0
      %v2240 = vsel %vm280, %v2192, 0
      %v2243 = vsel %vm587, %v2193, 0
      %2245 = vmatprep.subr.bf16.mxu0 0
      %2246 = vmatpush1.bf16.msra.mxu0 0
      %2247 = vmatprep.subr.bf16.mxu0 0
      %2248 = vmatpush1.bf16.msra.mxu0 0
      %2249 = vmatprep.subr.bf16.mxu0 0
      %2250 = vmatpush1.bf16.msra.mxu0 0
      %2251 = vmatprep.subr.bf16.mxu0 0
      %2252 = vmatpush1.bf16.msra.mxu0 0
      %2253 = vmatprep.subr.bf16.mxu0 0
      %2254 = vmatpush1.bf16.msra.mxu0 0
      %2255 = vmatprep.subr.bf16.mxu0 0
      %2256 = vmatpush1.bf16.msra.mxu0 0
      %2257 = vmatprep.subr.bf16.mxu0 0
      %2258 = vmatpush1.bf16.msra.mxu0 0
      %2259 = vmatprep.subr.bf16.mxu0 0
      %2260 = vmatpush1.bf16.msra.mxu0 %v2243
      %2261 = vmatprep.subr.bf16.mxu0 0
      %2262 = vmatpush2.bf16.msra.mxu0 0
      %2263 = vmatprep.subr.bf16.mxu0 0
      %2264 = vmatpush2.bf16.msra.mxu0 0
      %2265 = vmatprep.subr.bf16.mxu0 0
      %2266 = vmatpush2.bf16.msra.mxu0 0
      %2267 = vmatprep.subr.bf16.mxu0 0
      %2268 = vmatpush2.bf16.msra.mxu0 0
      %2269 = vmatprep.subr.bf16.mxu0 0
      %2270 = vmatpush2.bf16.msra.mxu0 0
      %2271 = vmatprep.subr.bf16.mxu0 0
      %2272 = vmatpush2.bf16.msra.mxu0 0
      %2273 = vmatprep.subr.bf16.mxu0 0
      %2274 = vmatpush2.bf16.msra.mxu0 0
      %2275 = vmatprep.subr.bf16.mxu0 0
      %2276 = vmatpush2.bf16.msra.mxu0 0
      %2277 = vmatprep.mubr.bf16.mxu0 0
      %2278 = vmatmul.mubr.bf16.gmra.mxu0 %v2195
      %v2279 = vpop.f32.mrf.mxu0
      %v2280 = vadd.f32 0.0, %v2279
      %v2281 = vpop.f32.mrf.mxu0
      %v2282 = vpop.f32.mrf.mxu0
      %v2283 = vadd.f32 0.0, %v2282
      %v2284 = vpop.f32.mrf.mxu0
      %2285 = vmatprep.mubr.bf16.mxu0 0
      %2286 = vmatmul.mubr.bf16.gmra.mxu0 %v2198
      %v2287 = vpop.f32.mrf.mxu0
      %v2288 = vadd.f32 0.0, %v2287
      %v2289 = vpop.f32.mrf.mxu0
      %v2290 = vpop.f32.mrf.mxu0
      %v2291 = vadd.f32 0.0, %v2290
      %v2292 = vpop.f32.mrf.mxu0
      %2293 = vmatprep.mubr.bf16.mxu0 0
      %2294 = vmatmul.mubr.bf16.gmra.mxu0 %v2201
      %v2295 = vpop.f32.mrf.mxu0
      %v2296 = vadd.f32 0.0, %v2295
      %v2297 = vpop.f32.mrf.mxu0
      %v2298 = vpop.f32.mrf.mxu0
      %v2299 = vadd.f32 0.0, %v2298
      %v2300 = vpop.f32.mrf.mxu0
      %2301 = vmatprep.mubr.bf16.mxu0 0
      %2302 = vmatmul.mubr.bf16.gmra.mxu0 %v2204
      %v2303 = vpop.f32.mrf.mxu0
      %v2304 = vadd.f32 0.0, %v2303
      %v2305 = vpop.f32.mrf.mxu0
      %v2306 = vpop.f32.mrf.mxu0
      %v2307 = vadd.f32 0.0, %v2306
      %v2308 = vpop.f32.mrf.mxu0
      %2309 = vmatprep.mubr.bf16.mxu0 0
      %2310 = vmatmul.mubr.bf16.gmra.mxu0 %v2207
      %v2311 = vpop.f32.mrf.mxu0
      %v2312 = vadd.f32 0.0, %v2311
      %v2313 = vpop.f32.mrf.mxu0
      %v2314 = vpop.f32.mrf.mxu0
      %v2315 = vadd.f32 0.0, %v2314
      %v2316 = vpop.f32.mrf.mxu0
      %2317 = vmatprep.mubr.bf16.mxu0 0
      %2318 = vmatmul.mubr.bf16.gmra.mxu0 %v2210
      %v2319 = vpop.f32.mrf.mxu0
      %v2320 = vadd.f32 0.0, %v2319
      %v2321 = vpop.f32.mrf.mxu0
      %v2322 = vpop.f32.mrf.mxu0
      %v2323 = vadd.f32 0.0, %v2322
      %v2324 = vpop.f32.mrf.mxu0
      %2325 = vmatprep.mubr.bf16.mxu0 0
      %2326 = vmatmul.mubr.bf16.gmra.mxu0 %v2213
      %v2327 = vpop.f32.mrf.mxu0
      %v2328 = vadd.f32 0.0, %v2327
      %v2329 = vpop.f32.mrf.mxu0
      %v2330 = vpop.f32.mrf.mxu0
      %v2331 = vadd.f32 0.0, %v2330
      %v2332 = vpop.f32.mrf.mxu0
      %2333 = vmatprep.mubr.bf16.mxu0 0
      %2334 = vmatmul.mubr.bf16.gmra.mxu0 %v2216
      %v2335 = vpop.f32.mrf.mxu0
      %v2336 = vadd.f32 0.0, %v2335
      %v2337 = vpop.f32.mrf.mxu0
      %v2338 = vpop.f32.mrf.mxu0
      %v2339 = vadd.f32 0.0, %v2338
      %v2340 = vpop.f32.mrf.mxu0
      %2341 = vmatprep.mubr.bf16.mxu0 0
      %2342 = vmatmul.mubr.bf16.gmra.mxu0 %v2219
      %v2343 = vpop.f32.mrf.mxu0
      %v2344 = vadd.f32 0.0, %v2343
      %v2345 = vpop.f32.mrf.mxu0
      %v2346 = vpop.f32.mrf.mxu0
      %v2347 = vadd.f32 0.0, %v2346
      %v2348 = vpop.f32.mrf.mxu0
      %2349 = vmatprep.mubr.bf16.mxu0 0
      %2350 = vmatmul.mubr.bf16.gmra.mxu0 %v2222
      %v2351 = vpop.f32.mrf.mxu0
      %v2352 = vadd.f32 0.0, %v2351
      %v2353 = vpop.f32.mrf.mxu0
      %v2354 = vpop.f32.mrf.mxu0
      %v2355 = vadd.f32 0.0, %v2354
      %v2356 = vpop.f32.mrf.mxu0
      %2357 = vmatprep.mubr.bf16.mxu0 0
      %2358 = vmatmul.mubr.bf16.gmra.mxu0 %v2225
      %v2359 = vpop.f32.mrf.mxu0
      %v2360 = vadd.f32 0.0, %v2359
      %v2361 = vpop.f32.mrf.mxu0
      %v2362 = vpop.f32.mrf.mxu0
      %v2363 = vadd.f32 0.0, %v2362
      %v2364 = vpop.f32.mrf.mxu0
      %2365 = vmatprep.mubr.bf16.mxu0 0
      %2366 = vmatmul.mubr.bf16.gmra.mxu0 %v2228
      %v2367 = vpop.f32.mrf.mxu0
      %v2368 = vadd.f32 0.0, %v2367
      %v2369 = vpop.f32.mrf.mxu0
      %v2370 = vpop.f32.mrf.mxu0
      %v2371 = vadd.f32 0.0, %v2370
      %v2372 = vpop.f32.mrf.mxu0
      %2373 = vmatprep.mubr.bf16.mxu0 0
      %2374 = vmatmul.mubr.bf16.gmra.mxu0 %v2231
      %v2375 = vpop.f32.mrf.mxu0
      %v2376 = vadd.f32 0.0, %v2375
      %v2377 = vpop.f32.mrf.mxu0
      %v2378 = vpop.f32.mrf.mxu0
      %v2379 = vadd.f32 0.0, %v2378
      %v2380 = vpop.f32.mrf.mxu0
      %2381 = vmatprep.mubr.bf16.mxu0 0
      %2382 = vmatmul.mubr.bf16.gmra.mxu0 %v2234
      %v2383 = vpop.f32.mrf.mxu0
      %v2384 = vadd.f32 0.0, %v2383
      %v2385 = vpop.f32.mrf.mxu0
      %v2386 = vpop.f32.mrf.mxu0
      %v2387 = vadd.f32 0.0, %v2386
      %v2388 = vpop.f32.mrf.mxu0
      %2389 = vmatprep.mubr.bf16.mxu0 0
      %2390 = vmatmul.mubr.bf16.gmra.mxu0 %v2237
      %v2391 = vpop.f32.mrf.mxu0
      %v2392 = vadd.f32 0.0, %v2391
      %v2393 = vpop.f32.mrf.mxu0
      %v2394 = vpop.f32.mrf.mxu0
      %v2395 = vadd.f32 0.0, %v2394
      %v2396 = vpop.f32.mrf.mxu0
      %2397 = vmatprep.mubr.bf16.mxu0 0
      %2398 = vmatmul.mubr.bf16.gmra.mxu0 %v2240
      %v2399 = vpop.f32.mrf.mxu0
      %v2400 = vadd.f32 0.0, %v2399
      %v2401 = vpop.f32.mrf.mxu0
      %v2402 = vpop.f32.mrf.mxu0
      %v2403 = vadd.f32 0.0, %v2402
      %v2404 = vpop.f32.mrf.mxu0
      %2405 = vdwg.mxu0
      %v2406 = vadd.f32 %v2112, %v2280
      %v2407 = vadd.f32 %v2113, %v2283
      %v2408 = vadd.f32 %v2114, %v2288
      %v2409 = vadd.f32 %v2115, %v2291
      %v2410 = vadd.f32 %v2116, %v2296
      %v2411 = vadd.f32 %v2117, %v2299
      %v2412 = vadd.f32 %v2118, %v2304
      %v2413 = vadd.f32 %v2119, %v2307
      %v2414 = vadd.f32 %v2120, %v2312
      %v2415 = vadd.f32 %v2121, %v2315
      %v2416 = vadd.f32 %v2122, %v2320
      %v2417 = vadd.f32 %v2123, %v2323
      %v2418 = vadd.f32 %v2124, %v2328
      %v2419 = vadd.f32 %v2125, %v2331
      %v2420 = vadd.f32 %v2126, %v2336
      %v2421 = vadd.f32 %v2127, %v2339
      %v2422 = vadd.f32 %v2128, %v2344
      %v2423 = vadd.f32 %v2129, %v2347
      %v2424 = vadd.f32 %v2130, %v2352
      %v2425 = vadd.f32 %v2131, %v2355
      %v2426 = vadd.f32 %v2132, %v2360
      %v2427 = vadd.f32 %v2133, %v2363
      %v2428 = vadd.f32 %v2134, %v2368
      %v2429 = vadd.f32 %v2135, %v2371
      %v2430 = vadd.f32 %v2136, %v2376
      %v2431 = vadd.f32 %v2137, %v2379
      %v2432 = vadd.f32 %v2138, %v2384
      %v2433 = vadd.f32 %v2139, %v2387
      %v2434 = vadd.f32 %v2140, %v2392
      %v2435 = vadd.f32 %v2141, %v2395
      %v2436 = vadd.f32 %v2142, %v2400
      %v2437 = vadd.f32 %v2143, %v2403
      %v2438 = vld [vmem:[%s2144 + $0x1] sm:$0xff]
      %v2439 = vld [vmem:[%s2144 + $0x9] sm:$0xff]
      %v2440 = vld [vmem:[%s2144 + $0x19] sm:$0xff]
      %v2441 = vld [vmem:[%s2144 + $0x21] sm:$0xff]
      %v2442 = vld [vmem:[%s2144 + $0x31] sm:$0xff]
      %v2443 = vld [vmem:[%s2144 + $0x39] sm:$0xff]
      %v2444 = vld [vmem:[%s2144 + $0x49] sm:$0xff]
      %v2445 = vld [vmem:[%s2144 + $0x51] sm:$0xff]
      %v2446 = vld [vmem:[%s2144 + $0x61] sm:$0xff]
      %v2447 = vld [vmem:[%s2144 + $0x69] sm:$0xff]
      %v2448 = vld [vmem:[%s2144 + $0x79] sm:$0xff]
      %v2449 = vld [vmem:[%s2144 + $0x81] sm:$0xff]
      %v2450 = vld [vmem:[%s2144 + $0x91] sm:$0xff]
      %v2451 = vld [vmem:[%s2144 + $0x99] sm:$0xff]
      %v2452 = vld [vmem:[%s2144 + $0xa9] sm:$0xff]
      %v2453 = vld [vmem:[%s2144 + $0xb1] sm:$0xff]
      %v2454 = vld [vmem:[%s2144 + $0xc1] sm:$0xff]
      %v2455 = vld [vmem:[%s2144 + $0xc9] sm:$0xff]
      %v2456 = vld [vmem:[%s2144 + $0xd9] sm:$0xff]
      %v2457 = vld [vmem:[%s2144 + $0xe1] sm:$0xff]
      %v2458 = vld [vmem:[%s2144 + $0xf1] sm:$0xff]
      %v2459 = vld [vmem:[%s2144 + $0xf9] sm:$0xff]
      %v2460 = vld [vmem:[%s2144 + $0x109] sm:$0xff]
      %v2461 = vld [vmem:[%s2144 + $0x111] sm:$0xff]
      %v2462 = vld [vmem:[%s2144 + $0x121] sm:$0xff]
      %v2463 = vld [vmem:[%s2144 + $0x129] sm:$0xff]
      %v2464 = vld [vmem:[%s2144 + $0x139] sm:$0xff]
      %v2465 = vld [vmem:[%s2144 + $0x141] sm:$0xff]
      %v2466 = vld [vmem:[%s2144 + $0x151] sm:$0xff]
      %v2467 = vld [vmem:[%s2144 + $0x159] sm:$0xff]
      %v2468 = vld [vmem:[%s2144 + $0x169] sm:$0xff]
      %v2469 = vld [vmem:[%s2144 + $0x171] sm:$0xff]
      %v2470 = vpack.c.bf16 %v2439, %v2438
      %v2471 = vpack.c.bf16 %v2441, %v2440
      %v2472 = vpack.c.bf16 %v2443, %v2442
      %v2473 = vpack.c.bf16 %v2445, %v2444
      %v2474 = vpack.c.bf16 %v2447, %v2446
      %v2475 = vpack.c.bf16 %v2449, %v2448
      %v2476 = vpack.c.bf16 %v2451, %v2450
      %v2477 = vpack.c.bf16 %v2453, %v2452
      %v2478 = vpack.c.bf16 %v2455, %v2454
      %v2479 = vpack.c.bf16 %v2457, %v2456
      %v2480 = vpack.c.bf16 %v2459, %v2458
      %v2481 = vpack.c.bf16 %v2461, %v2460
      %v2482 = vpack.c.bf16 %v2463, %v2462
      %v2483 = vpack.c.bf16 %v2465, %v2464
      %v2484 = vpack.c.bf16 %v2467, %v2466
      %v2485 = vpack.c.bf16 %v2469, %v2468
      %v2486 = vld [vmem:[%s1 + $0xc] sm:$0xc]
      %v2488 = vunpack.c.l.b16 %v2486
      %v2489 = vpack.c.b16 %v2488, %v2488
      %v2490 = vrot.slane %v2489, 2
      %v2492 = vsel %vm280, %v2470, 0
      %v2495 = vsel %vm280, %v2471, 0
      %v2498 = vsel %vm280, %v2472, 0
      %v2501 = vsel %vm280, %v2473, 0
      %v2504 = vsel %vm280, %v2474, 0
      %v2507 = vsel %vm280, %v2475, 0
      %v2510 = vsel %vm280, %v2476, 0
      %v2513 = vsel %vm280, %v2477, 0
      %v2516 = vsel %vm280, %v2478, 0
      %v2519 = vsel %vm280, %v2479, 0
      %v2522 = vsel %vm280, %v2480, 0
      %v2525 = vsel %vm280, %v2481, 0
      %v2528 = vsel %vm280, %v2482, 0
      %v2531 = vsel %vm280, %v2483, 0
      %v2534 = vsel %vm280, %v2484, 0
      %v2537 = vsel %vm280, %v2485, 0
      %v2540 = vsel %vm587, %v2490, 0
      %2542 = vmatprep.subr.bf16.mxu0 0
      %2543 = vmatpush1.bf16.msra.mxu0 0
      %2544 = vmatprep.subr.bf16.mxu0 0
      %2545 = vmatpush1.bf16.msra.mxu0 0
      %2546 = vmatprep.subr.bf16.mxu0 0
      %2547 = vmatpush1.bf16.msra.mxu0 0
      %2548 = vmatprep.subr.bf16.mxu0 0
      %2549 = vmatpush1.bf16.msra.mxu0 0
      %2550 = vmatprep.subr.bf16.mxu0 0
      %2551 = vmatpush1.bf16.msra.mxu0 0
      %2552 = vmatprep.subr.bf16.mxu0 0
      %2553 = vmatpush1.bf16.msra.mxu0 0
      %2554 = vmatprep.subr.bf16.mxu0 0
      %2555 = vmatpush1.bf16.msra.mxu0 0
      %2556 = vmatprep.subr.bf16.mxu0 0
      %2557 = vmatpush1.bf16.msra.mxu0 %v2540
      %2558 = vmatprep.subr.bf16.mxu0 0
      %2559 = vmatpush2.bf16.msra.mxu0 0
      %2560 = vmatprep.subr.bf16.mxu0 0
      %2561 = vmatpush2.bf16.msra.mxu0 0
      %2562 = vmatprep.subr.bf16.mxu0 0
      %2563 = vmatpush2.bf16.msra.mxu0 0
      %2564 = vmatprep.subr.bf16.mxu0 0
      %2565 = vmatpush2.bf16.msra.mxu0 0
      %2566 = vmatprep.subr.bf16.mxu0 0
      %2567 = vmatpush2.bf16.msra.mxu0 0
      %2568 = vmatprep.subr.bf16.mxu0 0
      %2569 = vmatpush2.bf16.msra.mxu0 0
      %2570 = vmatprep.subr.bf16.mxu0 0
      %2571 = vmatpush2.bf16.msra.mxu0 0
      %2572 = vmatprep.subr.bf16.mxu0 0
      %2573 = vmatpush2.bf16.msra.mxu0 0
      %2574 = vmatprep.mubr.bf16.mxu0 0
      %2575 = vmatmul.mubr.bf16.gmra.mxu0 %v2492
      %v2576 = vpop.f32.mrf.mxu0
      %v2577 = vadd.f32 0.0, %v2576
      %v2578 = vpop.f32.mrf.mxu0
      %v2579 = vpop.f32.mrf.mxu0
      %v2580 = vadd.f32 0.0, %v2579
      %v2581 = vpop.f32.mrf.mxu0
      %2582 = vmatprep.mubr.bf16.mxu0 0
      %2583 = vmatmul.mubr.bf16.gmra.mxu0 %v2495
      %v2584 = vpop.f32.mrf.mxu0
      %v2585 = vadd.f32 0.0, %v2584
      %v2586 = vpop.f32.mrf.mxu0
      %v2587 = vpop.f32.mrf.mxu0
      %v2588 = vadd.f32 0.0, %v2587
      %v2589 = vpop.f32.mrf.mxu0
      %2590 = vmatprep.mubr.bf16.mxu0 0
      %2591 = vmatmul.mubr.bf16.gmra.mxu0 %v2498
      %v2592 = vpop.f32.mrf.mxu0
      %v2593 = vadd.f32 0.0, %v2592
      %v2594 = vpop.f32.mrf.mxu0
      %v2595 = vpop.f32.mrf.mxu0
      %v2596 = vadd.f32 0.0, %v2595
      %v2597 = vpop.f32.mrf.mxu0
      %2598 = vmatprep.mubr.bf16.mxu0 0
      %2599 = vmatmul.mubr.bf16.gmra.mxu0 %v2501
      %v2600 = vpop.f32.mrf.mxu0
      %v2601 = vadd.f32 0.0, %v2600
      %v2602 = vpop.f32.mrf.mxu0
      %v2603 = vpop.f32.mrf.mxu0
      %v2604 = vadd.f32 0.0, %v2603
      %v2605 = vpop.f32.mrf.mxu0
      %2606 = vmatprep.mubr.bf16.mxu0 0
      %2607 = vmatmul.mubr.bf16.gmra.mxu0 %v2504
      %v2608 = vpop.f32.mrf.mxu0
      %v2609 = vadd.f32 0.0, %v2608
      %v2610 = vpop.f32.mrf.mxu0
      %v2611 = vpop.f32.mrf.mxu0
      %v2612 = vadd.f32 0.0, %v2611
      %v2613 = vpop.f32.mrf.mxu0
      %2614 = vmatprep.mubr.bf16.mxu0 0
      %2615 = vmatmul.mubr.bf16.gmra.mxu0 %v2507
      %v2616 = vpop.f32.mrf.mxu0
      %v2617 = vadd.f32 0.0, %v2616
      %v2618 = vpop.f32.mrf.mxu0
      %v2619 = vpop.f32.mrf.mxu0
      %v2620 = vadd.f32 0.0, %v2619
      %v2621 = vpop.f32.mrf.mxu0
      %2622 = vmatprep.mubr.bf16.mxu0 0
      %2623 = vmatmul.mubr.bf16.gmra.mxu0 %v2510
      %v2624 = vpop.f32.mrf.mxu0
      %v2625 = vadd.f32 0.0, %v2624
      %v2626 = vpop.f32.mrf.mxu0
      %v2627 = vpop.f32.mrf.mxu0
      %v2628 = vadd.f32 0.0, %v2627
      %v2629 = vpop.f32.mrf.mxu0
      %2630 = vmatprep.mubr.bf16.mxu0 0
      %2631 = vmatmul.mubr.bf16.gmra.mxu0 %v2513
      %v2632 = vpop.f32.mrf.mxu0
      %v2633 = vadd.f32 0.0, %v2632
      %v2634 = vpop.f32.mrf.mxu0
      %v2635 = vpop.f32.mrf.mxu0
      %v2636 = vadd.f32 0.0, %v2635
      %v2637 = vpop.f32.mrf.mxu0
      %2638 = vmatprep.mubr.bf16.mxu0 0
      %2639 = vmatmul.mubr.bf16.gmra.mxu0 %v2516
      %v2640 = vpop.f32.mrf.mxu0
      %v2641 = vadd.f32 0.0, %v2640
      %v2642 = vpop.f32.mrf.mxu0
      %v2643 = vpop.f32.mrf.mxu0
      %v2644 = vadd.f32 0.0, %v2643
      %v2645 = vpop.f32.mrf.mxu0
      %2646 = vmatprep.mubr.bf16.mxu0 0
      %2647 = vmatmul.mubr.bf16.gmra.mxu0 %v2519
      %v2648 = vpop.f32.mrf.mxu0
      %v2649 = vadd.f32 0.0, %v2648
      %v2650 = vpop.f32.mrf.mxu0
      %v2651 = vpop.f32.mrf.mxu0
      %v2652 = vadd.f32 0.0, %v2651
      %v2653 = vpop.f32.mrf.mxu0
      %2654 = vmatprep.mubr.bf16.mxu0 0
      %2655 = vmatmul.mubr.bf16.gmra.mxu0 %v2522
      %v2656 = vpop.f32.mrf.mxu0
      %v2657 = vadd.f32 0.0, %v2656
      %v2658 = vpop.f32.mrf.mxu0
      %v2659 = vpop.f32.mrf.mxu0
      %v2660 = vadd.f32 0.0, %v2659
      %v2661 = vpop.f32.mrf.mxu0
      %2662 = vmatprep.mubr.bf16.mxu0 0
      %2663 = vmatmul.mubr.bf16.gmra.mxu0 %v2525
      %v2664 = vpop.f32.mrf.mxu0
      %v2665 = vadd.f32 0.0, %v2664
      %v2666 = vpop.f32.mrf.mxu0
      %v2667 = vpop.f32.mrf.mxu0
      %v2668 = vadd.f32 0.0, %v2667
      %v2669 = vpop.f32.mrf.mxu0
      %2670 = vmatprep.mubr.bf16.mxu0 0
      %2671 = vmatmul.mubr.bf16.gmra.mxu0 %v2528
      %v2672 = vpop.f32.mrf.mxu0
      %v2673 = vadd.f32 0.0, %v2672
      %v2674 = vpop.f32.mrf.mxu0
      %v2675 = vpop.f32.mrf.mxu0
      %v2676 = vadd.f32 0.0, %v2675
      %v2677 = vpop.f32.mrf.mxu0
      %2678 = vmatprep.mubr.bf16.mxu0 0
      %2679 = vmatmul.mubr.bf16.gmra.mxu0 %v2531
      %v2680 = vpop.f32.mrf.mxu0
      %v2681 = vadd.f32 0.0, %v2680
      %v2682 = vpop.f32.mrf.mxu0
      %v2683 = vpop.f32.mrf.mxu0
      %v2684 = vadd.f32 0.0, %v2683
      %v2685 = vpop.f32.mrf.mxu0
      %2686 = vmatprep.mubr.bf16.mxu0 0
      %2687 = vmatmul.mubr.bf16.gmra.mxu0 %v2534
      %v2688 = vpop.f32.mrf.mxu0
      %v2689 = vadd.f32 0.0, %v2688
      %v2690 = vpop.f32.mrf.mxu0
      %v2691 = vpop.f32.mrf.mxu0
      %v2692 = vadd.f32 0.0, %v2691
      %v2693 = vpop.f32.mrf.mxu0
      %2694 = vmatprep.mubr.bf16.mxu0 0
      %2695 = vmatmul.mubr.bf16.gmra.mxu0 %v2537
      %v2696 = vpop.f32.mrf.mxu0
      %v2697 = vadd.f32 0.0, %v2696
      %v2698 = vpop.f32.mrf.mxu0
      %v2699 = vpop.f32.mrf.mxu0
      %v2700 = vadd.f32 0.0, %v2699
      %v2701 = vpop.f32.mrf.mxu0
      %2702 = vdwg.mxu0
      %v2703 = vadd.f32 %v2406, %v2577
      %v2704 = vadd.f32 %v2407, %v2580
      %v2705 = vadd.f32 %v2408, %v2585
      %v2706 = vadd.f32 %v2409, %v2588
      %v2707 = vadd.f32 %v2410, %v2593
      %v2708 = vadd.f32 %v2411, %v2596
      %v2709 = vadd.f32 %v2412, %v2601
      %v2710 = vadd.f32 %v2413, %v2604
      %v2711 = vadd.f32 %v2414, %v2609
      %v2712 = vadd.f32 %v2415, %v2612
      %v2713 = vadd.f32 %v2416, %v2617
      %v2714 = vadd.f32 %v2417, %v2620
      %v2715 = vadd.f32 %v2418, %v2625
      %v2716 = vadd.f32 %v2419, %v2628
      %v2717 = vadd.f32 %v2420, %v2633
      %v2718 = vadd.f32 %v2421, %v2636
      %v2719 = vadd.f32 %v2422, %v2641
      %v2720 = vadd.f32 %v2423, %v2644
      %v2721 = vadd.f32 %v2424, %v2649
      %v2722 = vadd.f32 %v2425, %v2652
      %v2723 = vadd.f32 %v2426, %v2657
      %v2724 = vadd.f32 %v2427, %v2660
      %v2725 = vadd.f32 %v2428, %v2665
      %v2726 = vadd.f32 %v2429, %v2668
      %v2727 = vadd.f32 %v2430, %v2673
      %v2728 = vadd.f32 %v2431, %v2676
      %v2729 = vadd.f32 %v2432, %v2681
      %v2730 = vadd.f32 %v2433, %v2684
      %v2731 = vadd.f32 %v2434, %v2689
      %v2732 = vadd.f32 %v2435, %v2692
      %v2733 = vadd.f32 %v2436, %v2697
      %v2734 = vadd.f32 %v2437, %v2700
      %v2735 = vld [vmem:[%s2144 + $0x2] sm:$0xff]
      %v2736 = vld [vmem:[%s2144 + $0xa] sm:$0xff]
      %v2737 = vld [vmem:[%s2144 + $0x1a] sm:$0xff]
      %v2738 = vld [vmem:[%s2144 + $0x22] sm:$0xff]
      %v2739 = vld [vmem:[%s2144 + $0x32] sm:$0xff]
      %v2740 = vld [vmem:[%s2144 + $0x3a] sm:$0xff]
      %v2741 = vld [vmem:[%s2144 + $0x4a] sm:$0xff]
      %v2742 = vld [vmem:[%s2144 + $0x52] sm:$0xff]
      %v2743 = vld [vmem:[%s2144 + $0x62] sm:$0xff]
      %v2744 = vld [vmem:[%s2144 + $0x6a] sm:$0xff]
      %v2745 = vld [vmem:[%s2144 + $0x7a] sm:$0xff]
      %v2746 = vld [vmem:[%s2144 + $0x82] sm:$0xff]
      %v2747 = vld [vmem:[%s2144 + $0x92] sm:$0xff]
      %v2748 = vld [vmem:[%s2144 + $0x9a] sm:$0xff]
      %v2749 = vld [vmem:[%s2144 + $0xaa] sm:$0xff]
      %v2750 = vld [vmem:[%s2144 + $0xb2] sm:$0xff]
      %v2751 = vld [vmem:[%s2144 + $0xc2] sm:$0xff]
      %v2752 = vld [vmem:[%s2144 + $0xca] sm:$0xff]
      %v2753 = vld [vmem:[%s2144 + $0xda] sm:$0xff]
      %v2754 = vld [vmem:[%s2144 + $0xe2] sm:$0xff]
      %v2755 = vld [vmem:[%s2144 + $0xf2] sm:$0xff]
      %v2756 = vld [vmem:[%s2144 + $0xfa] sm:$0xff]
      %v2757 = vld [vmem:[%s2144 + $0x10a] sm:$0xff]
      %v2758 = vld [vmem:[%s2144 + $0x112] sm:$0xff]
      %v2759 = vld [vmem:[%s2144 + $0x122] sm:$0xff]
      %v2760 = vld [vmem:[%s2144 + $0x12a] sm:$0xff]
      %v2761 = vld [vmem:[%s2144 + $0x13a] sm:$0xff]
      %v2762 = vld [vmem:[%s2144 + $0x142] sm:$0xff]
      %v2763 = vld [vmem:[%s2144 + $0x152] sm:$0xff]
      %v2764 = vld [vmem:[%s2144 + $0x15a] sm:$0xff]
      %v2765 = vld [vmem:[%s2144 + $0x16a] sm:$0xff]
      %v2766 = vld [vmem:[%s2144 + $0x172] sm:$0xff]
      %v2767 = vpack.c.bf16 %v2736, %v2735
      %v2768 = vpack.c.bf16 %v2738, %v2737
      %v2769 = vpack.c.bf16 %v2740, %v2739
      %v2770 = vpack.c.bf16 %v2742, %v2741
      %v2771 = vpack.c.bf16 %v2744, %v2743
      %v2772 = vpack.c.bf16 %v2746, %v2745
      %v2773 = vpack.c.bf16 %v2748, %v2747
      %v2774 = vpack.c.bf16 %v2750, %v2749
      %v2775 = vpack.c.bf16 %v2752, %v2751
      %v2776 = vpack.c.bf16 %v2754, %v2753
      %v2777 = vpack.c.bf16 %v2756, %v2755
      %v2778 = vpack.c.bf16 %v2758, %v2757
      %v2779 = vpack.c.bf16 %v2760, %v2759
      %v2780 = vpack.c.bf16 %v2762, %v2761
      %v2781 = vpack.c.bf16 %v2764, %v2763
      %v2782 = vpack.c.bf16 %v2766, %v2765
      %v2783 = vld [vmem:[%s1 + $0x10] sm:$0x3]
      %v2785 = vsel %vm280, %v2767, 0
      %v2788 = vsel %vm280, %v2768, 0
      %v2791 = vsel %vm280, %v2769, 0
      %v2794 = vsel %vm280, %v2770, 0
      %v2797 = vsel %vm280, %v2771, 0
      %v2800 = vsel %vm280, %v2772, 0
      %v2803 = vsel %vm280, %v2773, 0
      %v2806 = vsel %vm280, %v2774, 0
      %v2809 = vsel %vm280, %v2775, 0
      %v2812 = vsel %vm280, %v2776, 0
      %v2815 = vsel %vm280, %v2777, 0
      %v2818 = vsel %vm280, %v2778, 0
      %v2821 = vsel %vm280, %v2779, 0
      %v2824 = vsel %vm280, %v2780, 0
      %v2827 = vsel %vm280, %v2781, 0
      %v2830 = vsel %vm280, %v2782, 0
      %v2833 = vsel %vm587, %v2783, 0
      %2835 = vmatprep.subr.bf16.mxu0 0
      %2836 = vmatpush1.bf16.msra.mxu0 0
      %2837 = vmatprep.subr.bf16.mxu0 0
      %2838 = vmatpush1.bf16.msra.mxu0 0
      %2839 = vmatprep.subr.bf16.mxu0 0
      %2840 = vmatpush1.bf16.msra.mxu0 0
      %2841 = vmatprep.subr.bf16.mxu0 0
      %2842 = vmatpush1.bf16.msra.mxu0 0
      %2843 = vmatprep.subr.bf16.mxu0 0
      %2844 = vmatpush1.bf16.msra.mxu0 0
      %2845 = vmatprep.subr.bf16.mxu0 0
      %2846 = vmatpush1.bf16.msra.mxu0 0
      %2847 = vmatprep.subr.bf16.mxu0 0
      %2848 = vmatpush1.bf16.msra.mxu0 0
      %2849 = vmatprep.subr.bf16.mxu0 0
      %2850 = vmatpush1.bf16.msra.mxu0 %v2833
      %2851 = vmatprep.subr.bf16.mxu0 0
      %2852 = vmatpush2.bf16.msra.mxu0 0
      %2853 = vmatprep.subr.bf16.mxu0 0
      %2854 = vmatpush2.bf16.msra.mxu0 0
      %2855 = vmatprep.subr.bf16.mxu0 0
      %2856 = vmatpush2.bf16.msra.mxu0 0
      %2857 = vmatprep.subr.bf16.mxu0 0
      %2858 = vmatpush2.bf16.msra.mxu0 0
      %2859 = vmatprep.subr.bf16.mxu0 0
      %2860 = vmatpush2.bf16.msra.mxu0 0
      %2861 = vmatprep.subr.bf16.mxu0 0
      %2862 = vmatpush2.bf16.msra.mxu0 0
      %2863 = vmatprep.subr.bf16.mxu0 0
      %2864 = vmatpush2.bf16.msra.mxu0 0
      %2865 = vmatprep.subr.bf16.mxu0 0
      %2866 = vmatpush2.bf16.msra.mxu0 0
      %2867 = vmatprep.mubr.bf16.mxu0 0
      %2868 = vmatmul.mubr.bf16.gmra.mxu0 %v2785
      %v2869 = vpop.f32.mrf.mxu0
      %v2870 = vadd.f32 0.0, %v2869
      %v2871 = vpop.f32.mrf.mxu0
      %v2872 = vpop.f32.mrf.mxu0
      %v2873 = vadd.f32 0.0, %v2872
      %v2874 = vpop.f32.mrf.mxu0
      %2875 = vmatprep.mubr.bf16.mxu0 0
      %2876 = vmatmul.mubr.bf16.gmra.mxu0 %v2788
      %v2877 = vpop.f32.mrf.mxu0
      %v2878 = vadd.f32 0.0, %v2877
      %v2879 = vpop.f32.mrf.mxu0
      %v2880 = vpop.f32.mrf.mxu0
      %v2881 = vadd.f32 0.0, %v2880
      %v2882 = vpop.f32.mrf.mxu0
      %2883 = vmatprep.mubr.bf16.mxu0 0
      %2884 = vmatmul.mubr.bf16.gmra.mxu0 %v2791
      %v2885 = vpop.f32.mrf.mxu0
      %v2886 = vadd.f32 0.0, %v2885
      %v2887 = vpop.f32.mrf.mxu0
      %v2888 = vpop.f32.mrf.mxu0
      %v2889 = vadd.f32 0.0, %v2888
      %v2890 = vpop.f32.mrf.mxu0
      %2891 = vmatprep.mubr.bf16.mxu0 0
      %2892 = vmatmul.mubr.bf16.gmra.mxu0 %v2794
      %v2893 = vpop.f32.mrf.mxu0
      %v2894 = vadd.f32 0.0, %v2893
      %v2895 = vpop.f32.mrf.mxu0
      %v2896 = vpop.f32.mrf.mxu0
      %v2897 = vadd.f32 0.0, %v2896
      %v2898 = vpop.f32.mrf.mxu0
      %2899 = vmatprep.mubr.bf16.mxu0 0
      %2900 = vmatmul.mubr.bf16.gmra.mxu0 %v2797
      %v2901 = vpop.f32.mrf.mxu0
      %v2902 = vadd.f32 0.0, %v2901
      %v2903 = vpop.f32.mrf.mxu0
      %v2904 = vpop.f32.mrf.mxu0
      %v2905 = vadd.f32 0.0, %v2904
      %v2906 = vpop.f32.mrf.mxu0
      %2907 = vmatprep.mubr.bf16.mxu0 0
      %2908 = vmatmul.mubr.bf16.gmra.mxu0 %v2800
      %v2909 = vpop.f32.mrf.mxu0
      %v2910 = vadd.f32 0.0, %v2909
      %v2911 = vpop.f32.mrf.mxu0
      %v2912 = vpop.f32.mrf.mxu0
      %v2913 = vadd.f32 0.0, %v2912
      %v2914 = vpop.f32.mrf.mxu0
      %2915 = vmatprep.mubr.bf16.mxu0 0
      %2916 = vmatmul.mubr.bf16.gmra.mxu0 %v2803
      %v2917 = vpop.f32.mrf.mxu0
      %v2918 = vadd.f32 0.0, %v2917
      %v2919 = vpop.f32.mrf.mxu0
      %v2920 = vpop.f32.mrf.mxu0
      %v2921 = vadd.f32 0.0, %v2920
      %v2922 = vpop.f32.mrf.mxu0
      %2923 = vmatprep.mubr.bf16.mxu0 0
      %2924 = vmatmul.mubr.bf16.gmra.mxu0 %v2806
      %v2925 = vpop.f32.mrf.mxu0
      %v2926 = vadd.f32 0.0, %v2925
      %v2927 = vpop.f32.mrf.mxu0
      %v2928 = vpop.f32.mrf.mxu0
      %v2929 = vadd.f32 0.0, %v2928
      %v2930 = vpop.f32.mrf.mxu0
      %2931 = vmatprep.mubr.bf16.mxu0 0
      %2932 = vmatmul.mubr.bf16.gmra.mxu0 %v2809
      %v2933 = vpop.f32.mrf.mxu0
      %v2934 = vadd.f32 0.0, %v2933
      %v2935 = vpop.f32.mrf.mxu0
      %v2936 = vpop.f32.mrf.mxu0
      %v2937 = vadd.f32 0.0, %v2936
      %v2938 = vpop.f32.mrf.mxu0
      %2939 = vmatprep.mubr.bf16.mxu0 0
      %2940 = vmatmul.mubr.bf16.gmra.mxu0 %v2812
      %v2941 = vpop.f32.mrf.mxu0
      %v2942 = vadd.f32 0.0, %v2941
      %v2943 = vpop.f32.mrf.mxu0
      %v2944 = vpop.f32.mrf.mxu0
      %v2945 = vadd.f32 0.0, %v2944
      %v2946 = vpop.f32.mrf.mxu0
      %2947 = vmatprep.mubr.bf16.mxu0 0
      %2948 = vmatmul.mubr.bf16.gmra.mxu0 %v2815
      %v2949 = vpop.f32.mrf.mxu0
      %v2950 = vadd.f32 0.0, %v2949
      %v2951 = vpop.f32.mrf.mxu0
      %v2952 = vpop.f32.mrf.mxu0
      %v2953 = vadd.f32 0.0, %v2952
      %v2954 = vpop.f32.mrf.mxu0
      %2955 = vmatprep.mubr.bf16.mxu0 0
      %2956 = vmatmul.mubr.bf16.gmra.mxu0 %v2818
      %v2957 = vpop.f32.mrf.mxu0
      %v2958 = vadd.f32 0.0, %v2957
      %v2959 = vpop.f32.mrf.mxu0
      %v2960 = vpop.f32.mrf.mxu0
      %v2961 = vadd.f32 0.0, %v2960
      %v2962 = vpop.f32.mrf.mxu0
      %2963 = vmatprep.mubr.bf16.mxu0 0
      %2964 = vmatmul.mubr.bf16.gmra.mxu0 %v2821
      %v2965 = vpop.f32.mrf.mxu0
      %v2966 = vadd.f32 0.0, %v2965
      %v2967 = vpop.f32.mrf.mxu0
      %v2968 = vpop.f32.mrf.mxu0
      %v2969 = vadd.f32 0.0, %v2968
      %v2970 = vpop.f32.mrf.mxu0
      %2971 = vmatprep.mubr.bf16.mxu0 0
      %2972 = vmatmul.mubr.bf16.gmra.mxu0 %v2824
      %v2973 = vpop.f32.mrf.mxu0
      %v2974 = vadd.f32 0.0, %v2973
      %v2975 = vpop.f32.mrf.mxu0
      %v2976 = vpop.f32.mrf.mxu0
      %v2977 = vadd.f32 0.0, %v2976
      %v2978 = vpop.f32.mrf.mxu0
      %2979 = vmatprep.mubr.bf16.mxu0 0
      %2980 = vmatmul.mubr.bf16.gmra.mxu0 %v2827
      %v2981 = vpop.f32.mrf.mxu0
      %v2982 = vadd.f32 0.0, %v2981
      %v2983 = vpop.f32.mrf.mxu0
      %v2984 = vpop.f32.mrf.mxu0
      %v2985 = vadd.f32 0.0, %v2984
      %v2986 = vpop.f32.mrf.mxu0
      %2987 = vmatprep.mubr.bf16.mxu0 0
      %2988 = vmatmul.mubr.bf16.gmra.mxu0 %v2830
      %v2989 = vpop.f32.mrf.mxu0
      %v2990 = vadd.f32 0.0, %v2989
      %v2991 = vpop.f32.mrf.mxu0
      %v2992 = vpop.f32.mrf.mxu0
      %v2993 = vadd.f32 0.0, %v2992
      %v2994 = vpop.f32.mrf.mxu0
      %2995 = vdwg.mxu0
      %v2996 = vadd.f32 %v2703, %v2870
      %v2997 = vadd.f32 %v2704, %v2873
      %v2998 = vadd.f32 %v2705, %v2878
      %v2999 = vadd.f32 %v2706, %v2881
      %v3000 = vadd.f32 %v2707, %v2886
      %v3001 = vadd.f32 %v2708, %v2889
      %v3002 = vadd.f32 %v2709, %v2894
      %v3003 = vadd.f32 %v2710, %v2897
      %v3004 = vadd.f32 %v2711, %v2902
      %v3005 = vadd.f32 %v2712, %v2905
      %v3006 = vadd.f32 %v2713, %v2910
      %v3007 = vadd.f32 %v2714, %v2913
      %v3008 = vadd.f32 %v2715, %v2918
      %v3009 = vadd.f32 %v2716, %v2921
      %v3010 = vadd.f32 %v2717, %v2926
      %v3011 = vadd.f32 %v2718, %v2929
      %v3012 = vadd.f32 %v2719, %v2934
      %v3013 = vadd.f32 %v2720, %v2937
      %v3014 = vadd.f32 %v2721, %v2942
      %v3015 = vadd.f32 %v2722, %v2945
      %v3016 = vadd.f32 %v2723, %v2950
      %v3017 = vadd.f32 %v2724, %v2953
      %v3018 = vadd.f32 %v2725, %v2958
      %v3019 = vadd.f32 %v2726, %v2961
      %v3020 = vadd.f32 %v2727, %v2966
      %v3021 = vadd.f32 %v2728, %v2969
      %v3022 = vadd.f32 %v2729, %v2974
      %v3023 = vadd.f32 %v2730, %v2977
      %v3024 = vadd.f32 %v2731, %v2982
      %v3025 = vadd.f32 %v2732, %v2985
      %v3026 = vadd.f32 %v2733, %v2990
      %v3027 = vadd.f32 %v2734, %v2993
      %v3028 = vld [vmem:[%s2] sm:$0x1]
      %v3030 = vlaneseq
      %v3031 = vshrl.u32 %v3030, 7
      %v3032 = vsub.s32 0, %v3031
      %v3033 = vrot.slane %v3028, %v3032
      %v3035 = vadd.f32 %v2996, %v3033
      %v3036 = vadd.f32 %v2997, %v3033
      %v3037 = vadd.f32 %v2998, %v3033
      %v3038 = vadd.f32 %v2999, %v3033
      %v3039 = vadd.f32 %v3000, %v3033
      %v3040 = vadd.f32 %v3001, %v3033
      %v3041 = vadd.f32 %v3002, %v3033
      %v3042 = vadd.f32 %v3003, %v3033
      %v3043 = vadd.f32 %v3004, %v3033
      %v3044 = vadd.f32 %v3005, %v3033
      %v3045 = vadd.f32 %v3006, %v3033
      %v3046 = vadd.f32 %v3007, %v3033
      %v3047 = vadd.f32 %v3008, %v3033
      %v3048 = vadd.f32 %v3009, %v3033
      %v3049 = vadd.f32 %v3010, %v3033
      %v3050 = vadd.f32 %v3011, %v3033
      %v3051 = vadd.f32 %v3012, %v3033
      %v3052 = vadd.f32 %v3013, %v3033
      %v3053 = vadd.f32 %v3014, %v3033
      %v3054 = vadd.f32 %v3015, %v3033
      %v3055 = vadd.f32 %v3016, %v3033
      %v3056 = vadd.f32 %v3017, %v3033
      %v3057 = vadd.f32 %v3018, %v3033
      %v3058 = vadd.f32 %v3019, %v3033
      %v3059 = vadd.f32 %v3020, %v3033
      %v3060 = vadd.f32 %v3021, %v3033
      %v3061 = vadd.f32 %v3022, %v3033
      %v3062 = vadd.f32 %v3023, %v3033
      %v3063 = vadd.f32 %v3024, %v3033
      %v3064 = vadd.f32 %v3025, %v3033
      %v3065 = vadd.f32 %v3026, %v3033
      %v3066 = vadd.f32 %v3027, %v3033
      %v3067 = vmax.f32 %v3035, 0.0
      %v3068 = vmax.f32 %v3036, 0.0
      %v3069 = vmax.f32 %v3037, 0.0
      %v3070 = vmax.f32 %v3038, 0.0
      %v3071 = vmax.f32 %v3039, 0.0
      %v3072 = vmax.f32 %v3040, 0.0
      %v3073 = vmax.f32 %v3041, 0.0
      %v3074 = vmax.f32 %v3042, 0.0
      %v3075 = vmax.f32 %v3043, 0.0
      %v3076 = vmax.f32 %v3044, 0.0
      %v3077 = vmax.f32 %v3045, 0.0
      %v3078 = vmax.f32 %v3046, 0.0
      %v3079 = vmax.f32 %v3047, 0.0
      %v3080 = vmax.f32 %v3048, 0.0
      %v3081 = vmax.f32 %v3049, 0.0
      %v3082 = vmax.f32 %v3050, 0.0
      %v3083 = vmax.f32 %v3051, 0.0
      %v3084 = vmax.f32 %v3052, 0.0
      %v3085 = vmax.f32 %v3053, 0.0
      %v3086 = vmax.f32 %v3054, 0.0
      %v3087 = vmax.f32 %v3055, 0.0
      %v3088 = vmax.f32 %v3056, 0.0
      %v3089 = vmax.f32 %v3057, 0.0
      %v3090 = vmax.f32 %v3058, 0.0
      %v3091 = vmax.f32 %v3059, 0.0
      %v3092 = vmax.f32 %v3060, 0.0
      %v3093 = vmax.f32 %v3061, 0.0
      %v3094 = vmax.f32 %v3062, 0.0
      %v3095 = vmax.f32 %v3063, 0.0
      %v3096 = vmax.f32 %v3064, 0.0
      %v3097 = vmax.f32 %v3065, 0.0
      %v3098 = vmax.f32 %v3066, 0.0
      %s3099 = scalar_lea.vmem [#allocation3], 24
      %3100 = vst.msk [vmem:[%s3099 + $0x1] sm:$0xff] %vm326, %v3067
      %3101 = vst.msk [vmem:[%s3099 + $0x9] sm:$0xff] %vm326, %v3068
      %3102 = vst.msk [vmem:[%s3099 + $0x19] sm:$0xff] %vm326, %v3069
      %3103 = vst.msk [vmem:[%s3099 + $0x21] sm:$0xff] %vm326, %v3070
      %3104 = vst.msk [vmem:[%s3099 + $0x31] sm:$0xff] %vm326, %v3071
      %3105 = vst.msk [vmem:[%s3099 + $0x39] sm:$0xff] %vm326, %v3072
      %3106 = vst.msk [vmem:[%s3099 + $0x49] sm:$0xff] %vm326, %v3073
      %3107 = vst.msk [vmem:[%s3099 + $0x51] sm:$0xff] %vm326, %v3074
      %3108 = vst.msk [vmem:[%s3099 + $0x61] sm:$0xff] %vm326, %v3075
      %3109 = vst.msk [vmem:[%s3099 + $0x69] sm:$0xff] %vm326, %v3076
      %3110 = vst.msk [vmem:[%s3099 + $0x79] sm:$0xff] %vm326, %v3077
      %3111 = vst.msk [vmem:[%s3099 + $0x81] sm:$0xff] %vm326, %v3078
      %3112 = vst.msk [vmem:[%s3099 + $0x91] sm:$0xff] %vm326, %v3079
      %3113 = vst.msk [vmem:[%s3099 + $0x99] sm:$0xff] %vm326, %v3080
      %3114 = vst.msk [vmem:[%s3099 + $0xa9] sm:$0xff] %vm326, %v3081
      %3115 = vst.msk [vmem:[%s3099 + $0xb1] sm:$0xff] %vm326, %v3082
      %3116 = vst.msk [vmem:[%s3099 + $0xc1] sm:$0xff] %vm326, %v3083
      %3117 = vst.msk [vmem:[%s3099 + $0xc9] sm:$0xff] %vm326, %v3084
      %3118 = vst.msk [vmem:[%s3099 + $0xd9] sm:$0xff] %vm326, %v3085
      %3119 = vst.msk [vmem:[%s3099 + $0xe1] sm:$0xff] %vm326, %v3086
      %3120 = vst.msk [vmem:[%s3099 + $0xf1] sm:$0xff] %vm326, %v3087
      %3121 = vst.msk [vmem:[%s3099 + $0xf9] sm:$0xff] %vm326, %v3088
      %3122 = vst.msk [vmem:[%s3099 + $0x109] sm:$0xff] %vm326, %v3089
      %3123 = vst.msk [vmem:[%s3099 + $0x111] sm:$0xff] %vm326, %v3090
      %3124 = vst.msk [vmem:[%s3099 + $0x121] sm:$0xff] %vm326, %v3091
      %3125 = vst.msk [vmem:[%s3099 + $0x129] sm:$0xff] %vm326, %v3092
      %3126 = vst.msk [vmem:[%s3099 + $0x139] sm:$0xff] %vm326, %v3093
      %3127 = vst.msk [vmem:[%s3099 + $0x141] sm:$0xff] %vm326, %v3094
      %3128 = vst.msk [vmem:[%s3099 + $0x151] sm:$0xff] %vm326, %v3095
      %3129 = vst.msk [vmem:[%s3099 + $0x159] sm:$0xff] %vm326, %v3096
      %3130 = vst.msk [vmem:[%s3099 + $0x169] sm:$0xff] %vm326, %v3097
      %3131 = vst.msk [vmem:[%s3099 + $0x171] sm:$0xff] %vm326, %v3098
      %v3132 = vld [vmem:[#allocation3] sm:$0xff]
      %v3133 = vld [vmem:[#allocation3 + $0x8] sm:$0xff]
      %v3134 = vld [vmem:[#allocation3 + $0x18] sm:$0xff]
      %v3135 = vld [vmem:[#allocation3 + $0x20] sm:$0xff]
      %v3136 = vld [vmem:[#allocation3 + $0x30] sm:$0xff]
      %v3137 = vld [vmem:[#allocation3 + $0x38] sm:$0xff]
      %v3138 = vld [vmem:[#allocation3 + $0x48] sm:$0xff]
      %v3139 = vld [vmem:[#allocation3 + $0x50] sm:$0xff]
      %v3140 = vld [vmem:[#allocation3 + $0x60] sm:$0xff]
      %v3141 = vld [vmem:[#allocation3 + $0x68] sm:$0xff]
      %v3142 = vld [vmem:[#allocation3 + $0x78] sm:$0xff]
      %v3143 = vld [vmem:[#allocation3 + $0x80] sm:$0xff]
      %v3144 = vld [vmem:[#allocation3 + $0x90] sm:$0xff]
      %v3145 = vld [vmem:[#allocation3 + $0x98] sm:$0xff]
      %v3146 = vld [vmem:[#allocation3 + $0xa8] sm:$0xff]
      %v3147 = vld [vmem:[#allocation3 + $0xb0] sm:$0xff]
      %v3148 = vld [vmem:[#allocation3 + $0xc0] sm:$0xff]
      %v3149 = vld [vmem:[#allocation3 + $0xc8] sm:$0xff]
      %v3150 = vld [vmem:[#allocation3 + $0xd8] sm:$0xff]
      %v3151 = vld [vmem:[#allocation3 + $0xe0] sm:$0xff]
      %v3152 = vld [vmem:[#allocation3 + $0xf0] sm:$0xff]
      %v3153 = vld [vmem:[#allocation3 + $0xf8] sm:$0xff]
      %v3154 = vld [vmem:[#allocation3 + $0x108] sm:$0xff]
      %v3155 = vld [vmem:[#allocation3 + $0x110] sm:$0xff]
      %v3156 = vld [vmem:[#allocation3 + $0x120] sm:$0xff]
      %v3157 = vld [vmem:[#allocation3 + $0x128] sm:$0xff]
      %v3158 = vld [vmem:[#allocation3 + $0x138] sm:$0xff]
      %v3159 = vld [vmem:[#allocation3 + $0x140] sm:$0xff]
      %v3160 = vld [vmem:[#allocation3 + $0x150] sm:$0xff]
      %v3161 = vld [vmem:[#allocation3 + $0x158] sm:$0xff]
      %v3162 = vld [vmem:[#allocation3 + $0x168] sm:$0xff]
      %v3163 = vld [vmem:[#allocation3 + $0x170] sm:$0xff]
      %v3164 = vpack.c.bf16 %v3133, %v3132
      %v3165 = vpack.c.bf16 %v3135, %v3134
      %v3166 = vpack.c.bf16 %v3137, %v3136
      %v3167 = vpack.c.bf16 %v3139, %v3138
      %v3168 = vpack.c.bf16 %v3141, %v3140
      %v3169 = vpack.c.bf16 %v3143, %v3142
      %v3170 = vpack.c.bf16 %v3145, %v3144
      %v3171 = vpack.c.bf16 %v3147, %v3146
      %v3172 = vpack.c.bf16 %v3149, %v3148
      %v3173 = vpack.c.bf16 %v3151, %v3150
      %v3174 = vpack.c.bf16 %v3153, %v3152
      %v3175 = vpack.c.bf16 %v3155, %v3154
      %v3176 = vpack.c.bf16 %v3157, %v3156
      %v3177 = vpack.c.bf16 %v3159, %v3158
      %v3178 = vpack.c.bf16 %v3161, %v3160
      %v3179 = vpack.c.bf16 %v3163, %v3162
      %v3180 = vld [vmem:[%s3] sm:$0xff]
      %v3181 = vld [vmem:[%s3 + $0x8] sm:$0xff]
      %v3182 = vld [vmem:[%s3 + $0x10] sm:$0xff]
      %v3183 = vld [vmem:[%s3 + $0x18] sm:$0xff]
      %v3184 = vld [vmem:[#allocation3 + $0x1] sm:$0xff]
      %v3185 = vld [vmem:[#allocation3 + $0x9] sm:$0xff]
      %v3186 = vld [vmem:[#allocation3 + $0x19] sm:$0xff]
      %v3187 = vld [vmem:[#allocation3 + $0x21] sm:$0xff]
      %v3188 = vld [vmem:[#allocation3 + $0x31] sm:$0xff]
      %v3189 = vld [vmem:[#allocation3 + $0x39] sm:$0xff]
      %v3190 = vld [vmem:[#allocation3 + $0x49] sm:$0xff]
      %v3191 = vld [vmem:[#allocation3 + $0x51] sm:$0xff]
      %v3192 = vld [vmem:[#allocation3 + $0x61] sm:$0xff]
      %v3193 = vld [vmem:[#allocation3 + $0x69] sm:$0xff]
      %v3194 = vld [vmem:[#allocation3 + $0x79] sm:$0xff]
      %v3195 = vld [vmem:[#allocation3 + $0x81] sm:$0xff]
      %v3196 = vld [vmem:[#allocation3 + $0x91] sm:$0xff]
      %v3197 = vld [vmem:[#allocation3 + $0x99] sm:$0xff]
      %v3198 = vld [vmem:[#allocation3 + $0xa9] sm:$0xff]
      %v3199 = vld [vmem:[#allocation3 + $0xb1] sm:$0xff]
      %v3200 = vld [vmem:[#allocation3 + $0xc1] sm:$0xff]
      %v3201 = vld [vmem:[#allocation3 + $0xc9] sm:$0xff]
      %v3202 = vld [vmem:[#allocation3 + $0xd9] sm:$0xff]
      %v3203 = vld [vmem:[#allocation3 + $0xe1] sm:$0xff]
      %v3204 = vld [vmem:[#allocation3 + $0xf1] sm:$0xff]
      %v3205 = vld [vmem:[#allocation3 + $0xf9] sm:$0xff]
      %v3206 = vld [vmem:[#allocation3 + $0x109] sm:$0xff]
      %v3207 = vld [vmem:[#allocation3 + $0x111] sm:$0xff]
      %v3208 = vld [vmem:[#allocation3 + $0x121] sm:$0xff]
      %v3209 = vld [vmem:[#allocation3 + $0x129] sm:$0xff]
      %v3210 = vld [vmem:[#allocation3 + $0x139] sm:$0xff]
      %v3211 = vld [vmem:[#allocation3 + $0x141] sm:$0xff]
      %v3212 = vld [vmem:[#allocation3 + $0x151] sm:$0xff]
      %v3213 = vld [vmem:[#allocation3 + $0x159] sm:$0xff]
      %v3214 = vld [vmem:[#allocation3 + $0x169] sm:$0xff]
      %v3215 = vld [vmem:[#allocation3 + $0x171] sm:$0xff]
      %v3216 = vpack.c.bf16 %v3185, %v3184
      %v3217 = vpack.c.bf16 %v3187, %v3186
      %v3218 = vpack.c.bf16 %v3189, %v3188
      %v3219 = vpack.c.bf16 %v3191, %v3190
      %v3220 = vpack.c.bf16 %v3193, %v3192
      %v3221 = vpack.c.bf16 %v3195, %v3194
      %v3222 = vpack.c.bf16 %v3197, %v3196
      %v3223 = vpack.c.bf16 %v3199, %v3198
      %v3224 = vpack.c.bf16 %v3201, %v3200
      %v3225 = vpack.c.bf16 %v3203, %v3202
      %v3226 = vpack.c.bf16 %v3205, %v3204
      %v3227 = vpack.c.bf16 %v3207, %v3206
      %v3228 = vpack.c.bf16 %v3209, %v3208
      %v3229 = vpack.c.bf16 %v3211, %v3210
      %v3230 = vpack.c.bf16 %v3213, %v3212
      %v3231 = vpack.c.bf16 %v3215, %v3214
      %v3232 = vld [vmem:[%s3 + $0x20] sm:$0xff]
      %v3233 = vld [vmem:[%s3 + $0x28] sm:$0xff]
      %v3234 = vld [vmem:[%s3 + $0x30] sm:$0xff]
      %v3235 = vld [vmem:[%s3 + $0x38] sm:$0xff]
      %v3240 = vunpack.c.l.b16 %v3232
      %v3241 = vunpack.c.h.b16 %v3232
      %v3242 = vunpack.c.l.b16 %v3233
      %v3243 = vunpack.c.h.b16 %v3233
      %v3244 = vunpack.c.l.b16 %v3234
      %v3245 = vunpack.c.h.b16 %v3234
      %v3246 = vunpack.c.l.b16 %v3235
      %v3247 = vunpack.c.h.b16 %v3235
      %v3248 = vpack.c.b16 %v3242, %v3240
      %v3249 = vpack.c.b16 %v3243, %v3241
      %v3250 = vpack.c.b16 %v3246, %v3244
      %v3251 = vpack.c.b16 %v3247, %v3245
      %v3257 = vsel %vm326, %v3216, 0
      %v3260 = vsel %vm326, %v3217, 0
      %v3263 = vsel %vm326, %v3218, 0
      %v3266 = vsel %vm326, %v3219, 0
      %v3269 = vsel %vm326, %v3220, 0
      %v3272 = vsel %vm326, %v3221, 0
      %v3275 = vsel %vm326, %v3222, 0
      %v3278 = vsel %vm326, %v3223, 0
      %v3281 = vsel %vm326, %v3224, 0
      %v3284 = vsel %vm326, %v3225, 0
      %v3287 = vsel %vm326, %v3226, 0
      %v3290 = vsel %vm326, %v3227, 0
      %v3293 = vsel %vm326, %v3228, 0
      %v3296 = vsel %vm326, %v3229, 0
      %v3299 = vsel %vm326, %v3230, 0
      %v3302 = vsel %vm326, %v3231, 0
      %3304 = vmatprep.subr.bf16.mxu0 0
      %3305 = vmatpush1.bf16.msra.mxu0 0
      %3306 = vmatprep.subr.bf16.mxu0 0
      %3307 = vmatpush1.bf16.msra.mxu0 0
      %3308 = vmatprep.subr.bf16.mxu0 0
      %3309 = vmatpush1.bf16.msra.mxu0 0
      %3310 = vmatprep.subr.bf16.mxu0 0
      %3311 = vmatpush1.bf16.msra.mxu0 0
      %3312 = vmatprep.subr.bf16.mxu0 0
      %3313 = vmatpush1.bf16.msra.mxu0 0
      %3314 = vmatprep.subr.bf16.mxu0 0
      %3315 = vmatpush1.bf16.msra.mxu0 0
      %3316 = vmatprep.subr.bf16.mxu0 %v3251
      %3317 = vmatpush1.bf16.msra.mxu0 %v3250
      %3318 = vmatprep.subr.bf16.mxu0 %v3249
      %3319 = vmatpush1.bf16.msra.mxu0 %v3248
      %3320 = vmatprep.subr.bf16.mxu0 0
      %3321 = vmatpush2.bf16.msra.mxu0 0
      %3322 = vmatprep.subr.bf16.mxu0 0
      %3323 = vmatpush2.bf16.msra.mxu0 0
      %3324 = vmatprep.subr.bf16.mxu0 0
      %3325 = vmatpush2.bf16.msra.mxu0 0
      %3326 = vmatprep.subr.bf16.mxu0 0
      %3327 = vmatpush2.bf16.msra.mxu0 0
      %3328 = vmatprep.subr.bf16.mxu0 0
      %3329 = vmatpush2.bf16.msra.mxu0 0
      %3330 = vmatprep.subr.bf16.mxu0 0
      %3331 = vmatpush2.bf16.msra.mxu0 0
      %3332 = vmatprep.subr.bf16.mxu0 0
      %3333 = vmatpush2.bf16.msra.mxu0 0
      %3334 = vmatprep.subr.bf16.mxu0 0
      %3335 = vmatpush2.bf16.msra.mxu0 0
      %3336 = vmatprep.mubr.bf16.mxu0 0
      %3337 = vmatmul.mubr.bf16.gmra.mxu0 %v3257
      %v3338 = vpop.f32.mrf.mxu0
      %v3339 = vadd.f32 0.0, %v3338
      %v3340 = vpop.f32.mrf.mxu0
      %v3341 = vadd.f32 0.0, %v3340
      %v3342 = vpop.f32.mrf.mxu0
      %v3343 = vadd.f32 0.0, %v3342
      %v3344 = vpop.f32.mrf.mxu0
      %v3345 = vadd.f32 0.0, %v3344
      %3346 = vmatprep.mubr.bf16.mxu0 0
      %3347 = vmatmul.mubr.bf16.gmra.mxu0 %v3260
      %v3348 = vpop.f32.mrf.mxu0
      %v3349 = vadd.f32 0.0, %v3348
      %v3350 = vpop.f32.mrf.mxu0
      %v3351 = vadd.f32 0.0, %v3350
      %v3352 = vpop.f32.mrf.mxu0
      %v3353 = vadd.f32 0.0, %v3352
      %v3354 = vpop.f32.mrf.mxu0
      %v3355 = vadd.f32 0.0, %v3354
      %3356 = vmatprep.mubr.bf16.mxu0 0
      %3357 = vmatmul.mubr.bf16.gmra.mxu0 %v3263
      %v3358 = vpop.f32.mrf.mxu0
      %v3359 = vadd.f32 0.0, %v3358
      %v3360 = vpop.f32.mrf.mxu0
      %v3361 = vadd.f32 0.0, %v3360
      %v3362 = vpop.f32.mrf.mxu0
      %v3363 = vadd.f32 0.0, %v3362
      %v3364 = vpop.f32.mrf.mxu0
      %v3365 = vadd.f32 0.0, %v3364
      %3366 = vmatprep.mubr.bf16.mxu0 0
      %3367 = vmatmul.mubr.bf16.gmra.mxu0 %v3266
      %v3368 = vpop.f32.mrf.mxu0
      %v3369 = vadd.f32 0.0, %v3368
      %v3370 = vpop.f32.mrf.mxu0
      %v3371 = vadd.f32 0.0, %v3370
      %v3372 = vpop.f32.mrf.mxu0
      %v3373 = vadd.f32 0.0, %v3372
      %v3374 = vpop.f32.mrf.mxu0
      %v3375 = vadd.f32 0.0, %v3374
      %3376 = vmatprep.mubr.bf16.mxu0 0
      %3377 = vmatmul.mubr.bf16.gmra.mxu0 %v3269
      %v3378 = vpop.f32.mrf.mxu0
      %v3379 = vadd.f32 0.0, %v3378
      %v3380 = vpop.f32.mrf.mxu0
      %v3381 = vadd.f32 0.0, %v3380
      %v3382 = vpop.f32.mrf.mxu0
      %v3383 = vadd.f32 0.0, %v3382
      %v3384 = vpop.f32.mrf.mxu0
      %v3385 = vadd.f32 0.0, %v3384
      %3386 = vmatprep.mubr.bf16.mxu0 0
      %3387 = vmatmul.mubr.bf16.gmra.mxu0 %v3272
      %v3388 = vpop.f32.mrf.mxu0
      %v3389 = vadd.f32 0.0, %v3388
      %v3390 = vpop.f32.mrf.mxu0
      %v3391 = vadd.f32 0.0, %v3390
      %v3392 = vpop.f32.mrf.mxu0
      %v3393 = vadd.f32 0.0, %v3392
      %v3394 = vpop.f32.mrf.mxu0
      %v3395 = vadd.f32 0.0, %v3394
      %3396 = vmatprep.mubr.bf16.mxu0 0
      %3397 = vmatmul.mubr.bf16.gmra.mxu0 %v3275
      %v3398 = vpop.f32.mrf.mxu0
      %v3399 = vadd.f32 0.0, %v3398
      %v3400 = vpop.f32.mrf.mxu0
      %v3401 = vadd.f32 0.0, %v3400
      %v3402 = vpop.f32.mrf.mxu0
      %v3403 = vadd.f32 0.0, %v3402
      %v3404 = vpop.f32.mrf.mxu0
      %v3405 = vadd.f32 0.0, %v3404
      %3406 = vmatprep.mubr.bf16.mxu0 0
      %3407 = vmatmul.mubr.bf16.gmra.mxu0 %v3278
      %v3408 = vpop.f32.mrf.mxu0
      %v3409 = vadd.f32 0.0, %v3408
      %v3410 = vpop.f32.mrf.mxu0
      %v3411 = vadd.f32 0.0, %v3410
      %v3412 = vpop.f32.mrf.mxu0
      %v3413 = vadd.f32 0.0, %v3412
      %v3414 = vpop.f32.mrf.mxu0
      %v3415 = vadd.f32 0.0, %v3414
      %3416 = vmatprep.mubr.bf16.mxu0 0
      %3417 = vmatmul.mubr.bf16.gmra.mxu0 %v3281
      %v3418 = vpop.f32.mrf.mxu0
      %v3419 = vadd.f32 0.0, %v3418
      %v3420 = vpop.f32.mrf.mxu0
      %v3421 = vadd.f32 0.0, %v3420
      %v3422 = vpop.f32.mrf.mxu0
      %v3423 = vadd.f32 0.0, %v3422
      %v3424 = vpop.f32.mrf.mxu0
      %v3425 = vadd.f32 0.0, %v3424
      %3426 = vmatprep.mubr.bf16.mxu0 0
      %3427 = vmatmul.mubr.bf16.gmra.mxu0 %v3284
      %v3428 = vpop.f32.mrf.mxu0
      %v3429 = vadd.f32 0.0, %v3428
      %v3430 = vpop.f32.mrf.mxu0
      %v3431 = vadd.f32 0.0, %v3430
      %v3432 = vpop.f32.mrf.mxu0
      %v3433 = vadd.f32 0.0, %v3432
      %v3434 = vpop.f32.mrf.mxu0
      %v3435 = vadd.f32 0.0, %v3434
      %3436 = vmatprep.mubr.bf16.mxu0 0
      %3437 = vmatmul.mubr.bf16.gmra.mxu0 %v3287
      %v3438 = vpop.f32.mrf.mxu0
      %v3439 = vadd.f32 0.0, %v3438
      %v3440 = vpop.f32.mrf.mxu0
      %v3441 = vadd.f32 0.0, %v3440
      %v3442 = vpop.f32.mrf.mxu0
      %v3443 = vadd.f32 0.0, %v3442
      %v3444 = vpop.f32.mrf.mxu0
      %v3445 = vadd.f32 0.0, %v3444
      %3446 = vmatprep.mubr.bf16.mxu0 0
      %3447 = vmatmul.mubr.bf16.gmra.mxu0 %v3290
      %v3448 = vpop.f32.mrf.mxu0
      %v3449 = vadd.f32 0.0, %v3448
      %v3450 = vpop.f32.mrf.mxu0
      %v3451 = vadd.f32 0.0, %v3450
      %v3452 = vpop.f32.mrf.mxu0
      %v3453 = vadd.f32 0.0, %v3452
      %v3454 = vpop.f32.mrf.mxu0
      %v3455 = vadd.f32 0.0, %v3454
      %3456 = vmatprep.mubr.bf16.mxu0 0
      %3457 = vmatmul.mubr.bf16.gmra.mxu0 %v3293
      %v3458 = vpop.f32.mrf.mxu0
      %v3459 = vadd.f32 0.0, %v3458
      %v3460 = vpop.f32.mrf.mxu0
      %v3461 = vadd.f32 0.0, %v3460
      %v3462 = vpop.f32.mrf.mxu0
      %v3463 = vadd.f32 0.0, %v3462
      %v3464 = vpop.f32.mrf.mxu0
      %v3465 = vadd.f32 0.0, %v3464
      %3466 = vmatprep.mubr.bf16.mxu0 0
      %3467 = vmatmul.mubr.bf16.gmra.mxu0 %v3296
      %v3468 = vpop.f32.mrf.mxu0
      %v3469 = vadd.f32 0.0, %v3468
      %v3470 = vpop.f32.mrf.mxu0
      %v3471 = vadd.f32 0.0, %v3470
      %v3472 = vpop.f32.mrf.mxu0
      %v3473 = vadd.f32 0.0, %v3472
      %v3474 = vpop.f32.mrf.mxu0
      %v3475 = vadd.f32 0.0, %v3474
      %3476 = vmatprep.mubr.bf16.mxu0 0
      %3477 = vmatmul.mubr.bf16.gmra.mxu0 %v3299
      %v3478 = vpop.f32.mrf.mxu0
      %v3479 = vadd.f32 0.0, %v3478
      %v3480 = vpop.f32.mrf.mxu0
      %v3481 = vadd.f32 0.0, %v3480
      %v3482 = vpop.f32.mrf.mxu0
      %v3483 = vadd.f32 0.0, %v3482
      %v3484 = vpop.f32.mrf.mxu0
      %v3485 = vadd.f32 0.0, %v3484
      %3486 = vmatprep.mubr.bf16.mxu0 0
      %3487 = vmatmul.mubr.bf16.gmra.mxu0 %v3302
      %v3488 = vpop.f32.mrf.mxu0
      %v3489 = vadd.f32 0.0, %v3488
      %v3490 = vpop.f32.mrf.mxu0
      %v3491 = vadd.f32 0.0, %v3490
      %v3492 = vpop.f32.mrf.mxu0
      %v3493 = vadd.f32 0.0, %v3492
      %v3494 = vpop.f32.mrf.mxu0
      %v3495 = vadd.f32 0.0, %v3494
      %3496 = vdwg.mxu0
      %v3501 = vunpack.c.l.b16 %v3180
      %v3502 = vunpack.c.h.b16 %v3180
      %v3503 = vunpack.c.l.b16 %v3181
      %v3504 = vunpack.c.h.b16 %v3181
      %v3505 = vunpack.c.l.b16 %v3182
      %v3506 = vunpack.c.h.b16 %v3182
      %v3507 = vunpack.c.l.b16 %v3183
      %v3508 = vunpack.c.h.b16 %v3183
      %v3509 = vpack.c.b16 %v3503, %v3501
      %v3510 = vpack.c.b16 %v3504, %v3502
      %v3511 = vpack.c.b16 %v3507, %v3505
      %v3512 = vpack.c.b16 %v3508, %v3506
      %v3518 = vsel %vm326, %v3164, 0
      %v3521 = vsel %vm326, %v3165, 0
      %v3524 = vsel %vm326, %v3166, 0
      %v3527 = vsel %vm326, %v3167, 0
      %v3530 = vsel %vm326, %v3168, 0
      %v3533 = vsel %vm326, %v3169, 0
      %v3536 = vsel %vm326, %v3170, 0
      %v3539 = vsel %vm326, %v3171, 0
      %v3542 = vsel %vm326, %v3172, 0
      %v3545 = vsel %vm326, %v3173, 0
      %v3548 = vsel %vm326, %v3174, 0
      %v3551 = vsel %vm326, %v3175, 0
      %v3554 = vsel %vm326, %v3176, 0
      %v3557 = vsel %vm326, %v3177, 0
      %v3560 = vsel %vm326, %v3178, 0
      %v3563 = vsel %vm326, %v3179, 0
      %3565 = vmatprep.subr.bf16.mxu0 0
      %3566 = vmatpush1.bf16.msra.mxu0 0
      %3567 = vmatprep.subr.bf16.mxu0 0
      %3568 = vmatpush1.bf16.msra.mxu0 0
      %3569 = vmatprep.subr.bf16.mxu0 0
      %3570 = vmatpush1.bf16.msra.mxu0 0
      %3571 = vmatprep.subr.bf16.mxu0 0
      %3572 = vmatpush1.bf16.msra.mxu0 0
      %3573 = vmatprep.subr.bf16.mxu0 0
      %3574 = vmatpush1.bf16.msra.mxu0 0
      %3575 = vmatprep.subr.bf16.mxu0 0
      %3576 = vmatpush1.bf16.msra.mxu0 0
      %3577 = vmatprep.subr.bf16.mxu0 %v3512
      %3578 = vmatpush1.bf16.msra.mxu0 %v3511
      %3579 = vmatprep.subr.bf16.mxu0 %v3510
      %3580 = vmatpush1.bf16.msra.mxu0 %v3509
      %3581 = vmatprep.subr.bf16.mxu0 0
      %3582 = vmatpush2.bf16.msra.mxu0 0
      %3583 = vmatprep.subr.bf16.mxu0 0
      %3584 = vmatpush2.bf16.msra.mxu0 0
      %3585 = vmatprep.subr.bf16.mxu0 0
      %3586 = vmatpush2.bf16.msra.mxu0 0
      %3587 = vmatprep.subr.bf16.mxu0 0
      %3588 = vmatpush2.bf16.msra.mxu0 0
      %3589 = vmatprep.subr.bf16.mxu0 0
      %3590 = vmatpush2.bf16.msra.mxu0 0
      %3591 = vmatprep.subr.bf16.mxu0 0
      %3592 = vmatpush2.bf16.msra.mxu0 0
      %3593 = vmatprep.subr.bf16.mxu0 0
      %3594 = vmatpush2.bf16.msra.mxu0 0
      %3595 = vmatprep.subr.bf16.mxu0 0
      %3596 = vmatpush2.bf16.msra.mxu0 0
      %3597 = vmatprep.mubr.bf16.mxu0 0
      %3598 = vmatmul.mubr.bf16.gmra.mxu0 %v3518
      %v3599 = vpop.f32.mrf.mxu0
      %v3600 = vadd.f32 %v3339, %v3599
      %v3601 = vpop.f32.mrf.mxu0
      %v3602 = vadd.f32 %v3341, %v3601
      %v3603 = vpop.f32.mrf.mxu0
      %v3604 = vadd.f32 %v3343, %v3603
      %v3605 = vpop.f32.mrf.mxu0
      %v3606 = vadd.f32 %v3345, %v3605
      %3607 = vmatprep.mubr.bf16.mxu0 0
      %3608 = vmatmul.mubr.bf16.gmra.mxu0 %v3521
      %v3609 = vpop.f32.mrf.mxu0
      %v3610 = vadd.f32 %v3349, %v3609
      %v3611 = vpop.f32.mrf.mxu0
      %v3612 = vadd.f32 %v3351, %v3611
      %v3613 = vpop.f32.mrf.mxu0
      %v3614 = vadd.f32 %v3353, %v3613
      %v3615 = vpop.f32.mrf.mxu0
      %v3616 = vadd.f32 %v3355, %v3615
      %3617 = vmatprep.mubr.bf16.mxu0 0
      %3618 = vmatmul.mubr.bf16.gmra.mxu0 %v3524
      %v3619 = vpop.f32.mrf.mxu0
      %v3620 = vadd.f32 %v3359, %v3619
      %v3621 = vpop.f32.mrf.mxu0
      %v3622 = vadd.f32 %v3361, %v3621
      %v3623 = vpop.f32.mrf.mxu0
      %v3624 = vadd.f32 %v3363, %v3623
      %v3625 = vpop.f32.mrf.mxu0
      %v3626 = vadd.f32 %v3365, %v3625
      %3627 = vmatprep.mubr.bf16.mxu0 0
      %3628 = vmatmul.mubr.bf16.gmra.mxu0 %v3527
      %v3629 = vpop.f32.mrf.mxu0
      %v3630 = vadd.f32 %v3369, %v3629
      %v3631 = vpop.f32.mrf.mxu0
      %v3632 = vadd.f32 %v3371, %v3631
      %v3633 = vpop.f32.mrf.mxu0
      %v3634 = vadd.f32 %v3373, %v3633
      %v3635 = vpop.f32.mrf.mxu0
      %v3636 = vadd.f32 %v3375, %v3635
      %3637 = vmatprep.mubr.bf16.mxu0 0
      %3638 = vmatmul.mubr.bf16.gmra.mxu0 %v3530
      %v3639 = vpop.f32.mrf.mxu0
      %v3640 = vadd.f32 %v3379, %v3639
      %v3641 = vpop.f32.mrf.mxu0
      %v3642 = vadd.f32 %v3381, %v3641
      %v3643 = vpop.f32.mrf.mxu0
      %v3644 = vadd.f32 %v3383, %v3643
      %v3645 = vpop.f32.mrf.mxu0
      %v3646 = vadd.f32 %v3385, %v3645
      %3647 = vmatprep.mubr.bf16.mxu0 0
      %3648 = vmatmul.mubr.bf16.gmra.mxu0 %v3533
      %v3649 = vpop.f32.mrf.mxu0
      %v3650 = vadd.f32 %v3389, %v3649
      %v3651 = vpop.f32.mrf.mxu0
      %v3652 = vadd.f32 %v3391, %v3651
      %v3653 = vpop.f32.mrf.mxu0
      %v3654 = vadd.f32 %v3393, %v3653
      %v3655 = vpop.f32.mrf.mxu0
      %v3656 = vadd.f32 %v3395, %v3655
      %3657 = vmatprep.mubr.bf16.mxu0 0
      %3658 = vmatmul.mubr.bf16.gmra.mxu0 %v3536
      %v3659 = vpop.f32.mrf.mxu0
      %v3660 = vadd.f32 %v3399, %v3659
      %v3661 = vpop.f32.mrf.mxu0
      %v3662 = vadd.f32 %v3401, %v3661
      %v3663 = vpop.f32.mrf.mxu0
      %v3664 = vadd.f32 %v3403, %v3663
      %v3665 = vpop.f32.mrf.mxu0
      %v3666 = vadd.f32 %v3405, %v3665
      %3667 = vmatprep.mubr.bf16.mxu0 0
      %3668 = vmatmul.mubr.bf16.gmra.mxu0 %v3539
      %v3669 = vpop.f32.mrf.mxu0
      %v3670 = vadd.f32 %v3409, %v3669
      %v3671 = vpop.f32.mrf.mxu0
      %v3672 = vadd.f32 %v3411, %v3671
      %v3673 = vpop.f32.mrf.mxu0
      %v3674 = vadd.f32 %v3413, %v3673
      %v3675 = vpop.f32.mrf.mxu0
      %v3676 = vadd.f32 %v3415, %v3675
      %3677 = vmatprep.mubr.bf16.mxu0 0
      %3678 = vmatmul.mubr.bf16.gmra.mxu0 %v3542
      %v3679 = vpop.f32.mrf.mxu0
      %v3680 = vadd.f32 %v3419, %v3679
      %v3681 = vpop.f32.mrf.mxu0
      %v3682 = vadd.f32 %v3421, %v3681
      %v3683 = vpop.f32.mrf.mxu0
      %v3684 = vadd.f32 %v3423, %v3683
      %v3685 = vpop.f32.mrf.mxu0
      %v3686 = vadd.f32 %v3425, %v3685
      %3687 = vmatprep.mubr.bf16.mxu0 0
      %3688 = vmatmul.mubr.bf16.gmra.mxu0 %v3545
      %v3689 = vpop.f32.mrf.mxu0
      %v3690 = vadd.f32 %v3429, %v3689
      %v3691 = vpop.f32.mrf.mxu0
      %v3692 = vadd.f32 %v3431, %v3691
      %v3693 = vpop.f32.mrf.mxu0
      %v3694 = vadd.f32 %v3433, %v3693
      %v3695 = vpop.f32.mrf.mxu0
      %v3696 = vadd.f32 %v3435, %v3695
      %3697 = vmatprep.mubr.bf16.mxu0 0
      %3698 = vmatmul.mubr.bf16.gmra.mxu0 %v3548
      %v3699 = vpop.f32.mrf.mxu0
      %v3700 = vadd.f32 %v3439, %v3699
      %v3701 = vpop.f32.mrf.mxu0
      %v3702 = vadd.f32 %v3441, %v3701
      %v3703 = vpop.f32.mrf.mxu0
      %v3704 = vadd.f32 %v3443, %v3703
      %v3705 = vpop.f32.mrf.mxu0
      %v3706 = vadd.f32 %v3445, %v3705
      %3707 = vmatprep.mubr.bf16.mxu0 0
      %3708 = vmatmul.mubr.bf16.gmra.mxu0 %v3551
      %v3709 = vpop.f32.mrf.mxu0
      %v3710 = vadd.f32 %v3449, %v3709
      %v3711 = vpop.f32.mrf.mxu0
      %v3712 = vadd.f32 %v3451, %v3711
      %v3713 = vpop.f32.mrf.mxu0
      %v3714 = vadd.f32 %v3453, %v3713
      %v3715 = vpop.f32.mrf.mxu0
      %v3716 = vadd.f32 %v3455, %v3715
      %3717 = vmatprep.mubr.bf16.mxu0 0
      %3718 = vmatmul.mubr.bf16.gmra.mxu0 %v3554
      %v3719 = vpop.f32.mrf.mxu0
      %v3720 = vadd.f32 %v3459, %v3719
      %v3721 = vpop.f32.mrf.mxu0
      %v3722 = vadd.f32 %v3461, %v3721
      %v3723 = vpop.f32.mrf.mxu0
      %v3724 = vadd.f32 %v3463, %v3723
      %v3725 = vpop.f32.mrf.mxu0
      %v3726 = vadd.f32 %v3465, %v3725
      %3727 = vmatprep.mubr.bf16.mxu0 0
      %3728 = vmatmul.mubr.bf16.gmra.mxu0 %v3557
      %v3729 = vpop.f32.mrf.mxu0
      %v3730 = vadd.f32 %v3469, %v3729
      %v3731 = vpop.f32.mrf.mxu0
      %v3732 = vadd.f32 %v3471, %v3731
      %v3733 = vpop.f32.mrf.mxu0
      %v3734 = vadd.f32 %v3473, %v3733
      %v3735 = vpop.f32.mrf.mxu0
      %v3736 = vadd.f32 %v3475, %v3735
      %3737 = vmatprep.mubr.bf16.mxu0 0
      %3738 = vmatmul.mubr.bf16.gmra.mxu0 %v3560
      %v3739 = vpop.f32.mrf.mxu0
      %v3740 = vadd.f32 %v3479, %v3739
      %v3741 = vpop.f32.mrf.mxu0
      %v3742 = vadd.f32 %v3481, %v3741
      %v3743 = vpop.f32.mrf.mxu0
      %v3744 = vadd.f32 %v3483, %v3743
      %v3745 = vpop.f32.mrf.mxu0
      %v3746 = vadd.f32 %v3485, %v3745
      %3747 = vmatprep.mubr.bf16.mxu0 0
      %3748 = vmatmul.mubr.bf16.gmra.mxu0 %v3563
      %v3749 = vpop.f32.mrf.mxu0
      %v3750 = vadd.f32 %v3489, %v3749
      %v3751 = vpop.f32.mrf.mxu0
      %v3752 = vadd.f32 %v3491, %v3751
      %v3753 = vpop.f32.mrf.mxu0
      %v3754 = vadd.f32 %v3493, %v3753
      %v3755 = vpop.f32.mrf.mxu0
      %v3756 = vadd.f32 %v3495, %v3755
      %3757 = vdwg.mxu0
      %v3758 = vld [vmem:[#allocation3 + $0x2] sm:$0xff]
      %v3759 = vld [vmem:[#allocation3 + $0xa] sm:$0xff]
      %v3760 = vld [vmem:[#allocation3 + $0x1a] sm:$0xff]
      %v3761 = vld [vmem:[#allocation3 + $0x22] sm:$0xff]
      %v3762 = vld [vmem:[#allocation3 + $0x32] sm:$0xff]
      %v3763 = vld [vmem:[#allocation3 + $0x3a] sm:$0xff]
      %v3764 = vld [vmem:[#allocation3 + $0x4a] sm:$0xff]
      %v3765 = vld [vmem:[#allocation3 + $0x52] sm:$0xff]
      %v3766 = vld [vmem:[#allocation3 + $0x62] sm:$0xff]
      %v3767 = vld [vmem:[#allocation3 + $0x6a] sm:$0xff]
      %v3768 = vld [vmem:[#allocation3 + $0x7a] sm:$0xff]
      %v3769 = vld [vmem:[#allocation3 + $0x82] sm:$0xff]
      %v3770 = vld [vmem:[#allocation3 + $0x92] sm:$0xff]
      %v3771 = vld [vmem:[#allocation3 + $0x9a] sm:$0xff]
      %v3772 = vld [vmem:[#allocation3 + $0xaa] sm:$0xff]
      %v3773 = vld [vmem:[#allocation3 + $0xb2] sm:$0xff]
      %v3774 = vld [vmem:[#allocation3 + $0xc2] sm:$0xff]
      %v3775 = vld [vmem:[#allocation3 + $0xca] sm:$0xff]
      %v3776 = vld [vmem:[#allocation3 + $0xda] sm:$0xff]
      %v3777 = vld [vmem:[#allocation3 + $0xe2] sm:$0xff]
      %v3778 = vld [vmem:[#allocation3 + $0xf2] sm:$0xff]
      %v3779 = vld [vmem:[#allocation3 + $0xfa] sm:$0xff]
      %v3780 = vld [vmem:[#allocation3 + $0x10a] sm:$0xff]
      %v3781 = vld [vmem:[#allocation3 + $0x112] sm:$0xff]
      %v3782 = vld [vmem:[#allocation3 + $0x122] sm:$0xff]
      %v3783 = vld [vmem:[#allocation3 + $0x12a] sm:$0xff]
      %v3784 = vld [vmem:[#allocation3 + $0x13a] sm:$0xff]
      %v3785 = vld [vmem:[#allocation3 + $0x142] sm:$0xff]
      %v3786 = vld [vmem:[#allocation3 + $0x152] sm:$0xff]
      %v3787 = vld [vmem:[#allocation3 + $0x15a] sm:$0xff]
      %v3788 = vld [vmem:[#allocation3 + $0x16a] sm:$0xff]
      %v3789 = vld [vmem:[#allocation3 + $0x172] sm:$0xff]
      %v3790 = vpack.c.bf16 %v3759, %v3758
      %v3791 = vpack.c.bf16 %v3761, %v3760
      %v3792 = vpack.c.bf16 %v3763, %v3762
      %v3793 = vpack.c.bf16 %v3765, %v3764
      %v3794 = vpack.c.bf16 %v3767, %v3766
      %v3795 = vpack.c.bf16 %v3769, %v3768
      %v3796 = vpack.c.bf16 %v3771, %v3770
      %v3797 = vpack.c.bf16 %v3773, %v3772
      %v3798 = vpack.c.bf16 %v3775, %v3774
      %v3799 = vpack.c.bf16 %v3777, %v3776
      %v3800 = vpack.c.bf16 %v3779, %v3778
      %v3801 = vpack.c.bf16 %v3781, %v3780
      %v3802 = vpack.c.bf16 %v3783, %v3782
      %v3803 = vpack.c.bf16 %v3785, %v3784
      %v3804 = vpack.c.bf16 %v3787, %v3786
      %v3805 = vpack.c.bf16 %v3789, %v3788
      %v3806 = vld [vmem:[%s3 + $0x40] sm:$0xff]
      %v3807 = vld [vmem:[%s3 + $0x48] sm:$0xff]
      %v3808 = vld [vmem:[%s3 + $0x50] sm:$0xff]
      %v3809 = vld [vmem:[%s3 + $0x58] sm:$0xff]
      %v3814 = vunpack.c.l.b16 %v3806
      %v3815 = vunpack.c.h.b16 %v3806
      %v3816 = vunpack.c.l.b16 %v3807
      %v3817 = vunpack.c.h.b16 %v3807
      %v3818 = vunpack.c.l.b16 %v3808
      %v3819 = vunpack.c.h.b16 %v3808
      %v3820 = vunpack.c.l.b16 %v3809
      %v3821 = vunpack.c.h.b16 %v3809
      %v3822 = vpack.c.b16 %v3816, %v3814
      %v3823 = vpack.c.b16 %v3817, %v3815
      %v3824 = vpack.c.b16 %v3820, %v3818
      %v3825 = vpack.c.b16 %v3821, %v3819
      %v3831 = vsel %vm326, %v3790, 0
      %v3834 = vsel %vm326, %v3791, 0
      %v3837 = vsel %vm326, %v3792, 0
      %v3840 = vsel %vm326, %v3793, 0
      %v3843 = vsel %vm326, %v3794, 0
      %v3846 = vsel %vm326, %v3795, 0
      %v3849 = vsel %vm326, %v3796, 0
      %v3852 = vsel %vm326, %v3797, 0
      %v3855 = vsel %vm326, %v3798, 0
      %v3858 = vsel %vm326, %v3799, 0
      %v3861 = vsel %vm326, %v3800, 0
      %v3864 = vsel %vm326, %v3801, 0
      %v3867 = vsel %vm326, %v3802, 0
      %v3870 = vsel %vm326, %v3803, 0
      %v3873 = vsel %vm326, %v3804, 0
      %v3876 = vsel %vm326, %v3805, 0
      %3878 = vmatprep.subr.bf16.mxu0 0
      %3879 = vmatpush1.bf16.msra.mxu0 0
      %3880 = vmatprep.subr.bf16.mxu0 0
      %3881 = vmatpush1.bf16.msra.mxu0 0
      %3882 = vmatprep.subr.bf16.mxu0 0
      %3883 = vmatpush1.bf16.msra.mxu0 0
      %3884 = vmatprep.subr.bf16.mxu0 0
      %3885 = vmatpush1.bf16.msra.mxu0 0
      %3886 = vmatprep.subr.bf16.mxu0 0
      %3887 = vmatpush1.bf16.msra.mxu0 0
      %3888 = vmatprep.subr.bf16.mxu0 0
      %3889 = vmatpush1.bf16.msra.mxu0 0
      %3890 = vmatprep.subr.bf16.mxu0 %v3825
      %3891 = vmatpush1.bf16.msra.mxu0 %v3824
      %3892 = vmatprep.subr.bf16.mxu0 %v3823
      %3893 = vmatpush1.bf16.msra.mxu0 %v3822
      %3894 = vmatprep.subr.bf16.mxu0 0
      %3895 = vmatpush2.bf16.msra.mxu0 0
      %3896 = vmatprep.subr.bf16.mxu0 0
      %3897 = vmatpush2.bf16.msra.mxu0 0
      %3898 = vmatprep.subr.bf16.mxu0 0
      %3899 = vmatpush2.bf16.msra.mxu0 0
      %3900 = vmatprep.subr.bf16.mxu0 0
      %3901 = vmatpush2.bf16.msra.mxu0 0
      %3902 = vmatprep.subr.bf16.mxu0 0
      %3903 = vmatpush2.bf16.msra.mxu0 0
      %3904 = vmatprep.subr.bf16.mxu0 0
      %3905 = vmatpush2.bf16.msra.mxu0 0
      %3906 = vmatprep.subr.bf16.mxu0 0
      %3907 = vmatpush2.bf16.msra.mxu0 0
      %3908 = vmatprep.subr.bf16.mxu0 0
      %3909 = vmatpush2.bf16.msra.mxu0 0
      %3910 = vmatprep.mubr.bf16.mxu0 0
      %3911 = vmatmul.mubr.bf16.gmra.mxu0 %v3831
      %v3912 = vpop.f32.mrf.mxu0
      %v3913 = vadd.f32 0.0, %v3912
      %v3914 = vpop.f32.mrf.mxu0
      %v3915 = vadd.f32 0.0, %v3914
      %v3916 = vpop.f32.mrf.mxu0
      %v3917 = vadd.f32 0.0, %v3916
      %v3918 = vpop.f32.mrf.mxu0
      %v3919 = vadd.f32 0.0, %v3918
      %3920 = vmatprep.mubr.bf16.mxu0 0
      %3921 = vmatmul.mubr.bf16.gmra.mxu0 %v3834
      %v3922 = vpop.f32.mrf.mxu0
      %v3923 = vadd.f32 0.0, %v3922
      %v3924 = vpop.f32.mrf.mxu0
      %v3925 = vadd.f32 0.0, %v3924
      %v3926 = vpop.f32.mrf.mxu0
      %v3927 = vadd.f32 0.0, %v3926
      %v3928 = vpop.f32.mrf.mxu0
      %v3929 = vadd.f32 0.0, %v3928
      %3930 = vmatprep.mubr.bf16.mxu0 0
      %3931 = vmatmul.mubr.bf16.gmra.mxu0 %v3837
      %v3932 = vpop.f32.mrf.mxu0
      %v3933 = vadd.f32 0.0, %v3932
      %v3934 = vpop.f32.mrf.mxu0
      %v3935 = vadd.f32 0.0, %v3934
      %v3936 = vpop.f32.mrf.mxu0
      %v3937 = vadd.f32 0.0, %v3936
      %v3938 = vpop.f32.mrf.mxu0
      %v3939 = vadd.f32 0.0, %v3938
      %3940 = vmatprep.mubr.bf16.mxu0 0
      %3941 = vmatmul.mubr.bf16.gmra.mxu0 %v3840
      %v3942 = vpop.f32.mrf.mxu0
      %v3943 = vadd.f32 0.0, %v3942
      %v3944 = vpop.f32.mrf.mxu0
      %v3945 = vadd.f32 0.0, %v3944
      %v3946 = vpop.f32.mrf.mxu0
      %v3947 = vadd.f32 0.0, %v3946
      %v3948 = vpop.f32.mrf.mxu0
      %v3949 = vadd.f32 0.0, %v3948
      %3950 = vmatprep.mubr.bf16.mxu0 0
      %3951 = vmatmul.mubr.bf16.gmra.mxu0 %v3843
      %v3952 = vpop.f32.mrf.mxu0
      %v3953 = vadd.f32 0.0, %v3952
      %v3954 = vpop.f32.mrf.mxu0
      %v3955 = vadd.f32 0.0, %v3954
      %v3956 = vpop.f32.mrf.mxu0
      %v3957 = vadd.f32 0.0, %v3956
      %v3958 = vpop.f32.mrf.mxu0
      %v3959 = vadd.f32 0.0, %v3958
      %3960 = vmatprep.mubr.bf16.mxu0 0
      %3961 = vmatmul.mubr.bf16.gmra.mxu0 %v3846
      %v3962 = vpop.f32.mrf.mxu0
      %v3963 = vadd.f32 0.0, %v3962
      %v3964 = vpop.f32.mrf.mxu0
      %v3965 = vadd.f32 0.0, %v3964
      %v3966 = vpop.f32.mrf.mxu0
      %v3967 = vadd.f32 0.0, %v3966
      %v3968 = vpop.f32.mrf.mxu0
      %v3969 = vadd.f32 0.0, %v3968
      %3970 = vmatprep.mubr.bf16.mxu0 0
      %3971 = vmatmul.mubr.bf16.gmra.mxu0 %v3849
      %v3972 = vpop.f32.mrf.mxu0
      %v3973 = vadd.f32 0.0, %v3972
      %v3974 = vpop.f32.mrf.mxu0
      %v3975 = vadd.f32 0.0, %v3974
      %v3976 = vpop.f32.mrf.mxu0
      %v3977 = vadd.f32 0.0, %v3976
      %v3978 = vpop.f32.mrf.mxu0
      %v3979 = vadd.f32 0.0, %v3978
      %3980 = vmatprep.mubr.bf16.mxu0 0
      %3981 = vmatmul.mubr.bf16.gmra.mxu0 %v3852
      %v3982 = vpop.f32.mrf.mxu0
      %v3983 = vadd.f32 0.0, %v3982
      %v3984 = vpop.f32.mrf.mxu0
      %v3985 = vadd.f32 0.0, %v3984
      %v3986 = vpop.f32.mrf.mxu0
      %v3987 = vadd.f32 0.0, %v3986
      %v3988 = vpop.f32.mrf.mxu0
      %v3989 = vadd.f32 0.0, %v3988
      %3990 = vmatprep.mubr.bf16.mxu0 0
      %3991 = vmatmul.mubr.bf16.gmra.mxu0 %v3855
      %v3992 = vpop.f32.mrf.mxu0
      %v3993 = vadd.f32 0.0, %v3992
      %v3994 = vpop.f32.mrf.mxu0
      %v3995 = vadd.f32 0.0, %v3994
      %v3996 = vpop.f32.mrf.mxu0
      %v3997 = vadd.f32 0.0, %v3996
      %v3998 = vpop.f32.mrf.mxu0
      %v3999 = vadd.f32 0.0, %v3998
      %4000 = vmatprep.mubr.bf16.mxu0 0
      %4001 = vmatmul.mubr.bf16.gmra.mxu0 %v3858
      %v4002 = vpop.f32.mrf.mxu0
      %v4003 = vadd.f32 0.0, %v4002
      %v4004 = vpop.f32.mrf.mxu0
      %v4005 = vadd.f32 0.0, %v4004
      %v4006 = vpop.f32.mrf.mxu0
      %v4007 = vadd.f32 0.0, %v4006
      %v4008 = vpop.f32.mrf.mxu0
      %v4009 = vadd.f32 0.0, %v4008
      %4010 = vmatprep.mubr.bf16.mxu0 0
      %4011 = vmatmul.mubr.bf16.gmra.mxu0 %v3861
      %v4012 = vpop.f32.mrf.mxu0
      %v4013 = vadd.f32 0.0, %v4012
      %v4014 = vpop.f32.mrf.mxu0
      %v4015 = vadd.f32 0.0, %v4014
      %v4016 = vpop.f32.mrf.mxu0
      %v4017 = vadd.f32 0.0, %v4016
      %v4018 = vpop.f32.mrf.mxu0
      %v4019 = vadd.f32 0.0, %v4018
      %4020 = vmatprep.mubr.bf16.mxu0 0
      %4021 = vmatmul.mubr.bf16.gmra.mxu0 %v3864
      %v4022 = vpop.f32.mrf.mxu0
      %v4023 = vadd.f32 0.0, %v4022
      %v4024 = vpop.f32.mrf.mxu0
      %v4025 = vadd.f32 0.0, %v4024
      %v4026 = vpop.f32.mrf.mxu0
      %v4027 = vadd.f32 0.0, %v4026
      %v4028 = vpop.f32.mrf.mxu0
      %v4029 = vadd.f32 0.0, %v4028
      %4030 = vmatprep.mubr.bf16.mxu0 0
      %4031 = vmatmul.mubr.bf16.gmra.mxu0 %v3867
      %v4032 = vpop.f32.mrf.mxu0
      %v4033 = vadd.f32 0.0, %v4032
      %v4034 = vpop.f32.mrf.mxu0
      %v4035 = vadd.f32 0.0, %v4034
      %v4036 = vpop.f32.mrf.mxu0
      %v4037 = vadd.f32 0.0, %v4036
      %v4038 = vpop.f32.mrf.mxu0
      %v4039 = vadd.f32 0.0, %v4038
      %4040 = vmatprep.mubr.bf16.mxu0 0
      %4041 = vmatmul.mubr.bf16.gmra.mxu0 %v3870
      %v4042 = vpop.f32.mrf.mxu0
      %v4043 = vadd.f32 0.0, %v4042
      %v4044 = vpop.f32.mrf.mxu0
      %v4045 = vadd.f32 0.0, %v4044
      %v4046 = vpop.f32.mrf.mxu0
      %v4047 = vadd.f32 0.0, %v4046
      %v4048 = vpop.f32.mrf.mxu0
      %v4049 = vadd.f32 0.0, %v4048
      %4050 = vmatprep.mubr.bf16.mxu0 0
      %4051 = vmatmul.mubr.bf16.gmra.mxu0 %v3873
      %v4052 = vpop.f32.mrf.mxu0
      %v4053 = vadd.f32 0.0, %v4052
      %v4054 = vpop.f32.mrf.mxu0
      %v4055 = vadd.f32 0.0, %v4054
      %v4056 = vpop.f32.mrf.mxu0
      %v4057 = vadd.f32 0.0, %v4056
      %v4058 = vpop.f32.mrf.mxu0
      %v4059 = vadd.f32 0.0, %v4058
      %4060 = vmatprep.mubr.bf16.mxu0 0
      %4061 = vmatmul.mubr.bf16.gmra.mxu0 %v3876
      %v4062 = vpop.f32.mrf.mxu0
      %v4063 = vadd.f32 0.0, %v4062
      %v4064 = vpop.f32.mrf.mxu0
      %v4065 = vadd.f32 0.0, %v4064
      %v4066 = vpop.f32.mrf.mxu0
      %v4067 = vadd.f32 0.0, %v4066
      %v4068 = vpop.f32.mrf.mxu0
      %v4069 = vadd.f32 0.0, %v4068
      %4070 = vdwg.mxu0
      %v4071 = vadd.f32 %v3600, %v3913
      %v4072 = vadd.f32 %v3602, %v3915
      %v4073 = vadd.f32 %v3604, %v3917
      %v4074 = vadd.f32 %v3606, %v3919
      %v4075 = vadd.f32 %v3610, %v3923
      %v4076 = vadd.f32 %v3612, %v3925
      %v4077 = vadd.f32 %v3614, %v3927
      %v4078 = vadd.f32 %v3616, %v3929
      %v4079 = vadd.f32 %v3620, %v3933
      %v4080 = vadd.f32 %v3622, %v3935
      %v4081 = vadd.f32 %v3624, %v3937
      %v4082 = vadd.f32 %v3626, %v3939
      %v4083 = vadd.f32 %v3630, %v3943
      %v4084 = vadd.f32 %v3632, %v3945
      %v4085 = vadd.f32 %v3634, %v3947
      %v4086 = vadd.f32 %v3636, %v3949
      %v4087 = vadd.f32 %v3640, %v3953
      %v4088 = vadd.f32 %v3642, %v3955
      %v4089 = vadd.f32 %v3644, %v3957
      %v4090 = vadd.f32 %v3646, %v3959
      %v4091 = vadd.f32 %v3650, %v3963
      %v4092 = vadd.f32 %v3652, %v3965
      %v4093 = vadd.f32 %v3654, %v3967
      %v4094 = vadd.f32 %v3656, %v3969
      %v4095 = vadd.f32 %v3660, %v3973
      %v4096 = vadd.f32 %v3662, %v3975
      %v4097 = vadd.f32 %v3664, %v3977
      %v4098 = vadd.f32 %v3666, %v3979
      %v4099 = vadd.f32 %v3670, %v3983
      %v4100 = vadd.f32 %v3672, %v3985
      %v4101 = vadd.f32 %v3674, %v3987
      %v4102 = vadd.f32 %v3676, %v3989
      %v4103 = vadd.f32 %v3680, %v3993
      %v4104 = vadd.f32 %v3682, %v3995
      %v4105 = vadd.f32 %v3684, %v3997
      %v4106 = vadd.f32 %v3686, %v3999
      %v4107 = vadd.f32 %v3690, %v4003
      %v4108 = vadd.f32 %v3692, %v4005
      %v4109 = vadd.f32 %v3694, %v4007
      %v4110 = vadd.f32 %v3696, %v4009
      %v4111 = vadd.f32 %v3700, %v4013
      %v4112 = vadd.f32 %v3702, %v4015
      %v4113 = vadd.f32 %v3704, %v4017
      %v4114 = vadd.f32 %v3706, %v4019
      %v4115 = vadd.f32 %v3710, %v4023
      %v4116 = vadd.f32 %v3712, %v4025
      %v4117 = vadd.f32 %v3714, %v4027
      %v4118 = vadd.f32 %v3716, %v4029
      %v4119 = vadd.f32 %v3720, %v4033
      %v4120 = vadd.f32 %v3722, %v4035
      %v4121 = vadd.f32 %v3724, %v4037
      %v4122 = vadd.f32 %v3726, %v4039
      %v4123 = vadd.f32 %v3730, %v4043
      %v4124 = vadd.f32 %v3732, %v4045
      %v4125 = vadd.f32 %v3734, %v4047
      %v4126 = vadd.f32 %v3736, %v4049
      %v4127 = vadd.f32 %v3740, %v4053
      %v4128 = vadd.f32 %v3742, %v4055
      %v4129 = vadd.f32 %v3744, %v4057
      %v4130 = vadd.f32 %v3746, %v4059
      %v4131 = vadd.f32 %v3750, %v4063
      %v4132 = vadd.f32 %v3752, %v4065
      %v4133 = vadd.f32 %v3754, %v4067
      %v4134 = vadd.f32 %v3756, %v4069
      %v4135 = vld [vmem:[%s3099] sm:$0xff]
      %v4136 = vld [vmem:[%s3099 + $0x8] sm:$0xff]
      %v4137 = vld [vmem:[%s3099 + $0x18] sm:$0xff]
      %v4138 = vld [vmem:[%s3099 + $0x20] sm:$0xff]
      %v4139 = vld [vmem:[%s3099 + $0x30] sm:$0xff]
      %v4140 = vld [vmem:[%s3099 + $0x38] sm:$0xff]
      %v4141 = vld [vmem:[%s3099 + $0x48] sm:$0xff]
      %v4142 = vld [vmem:[%s3099 + $0x50] sm:$0xff]
      %v4143 = vld [vmem:[%s3099 + $0x60] sm:$0xff]
      %v4144 = vld [vmem:[%s3099 + $0x68] sm:$0xff]
      %v4145 = vld [vmem:[%s3099 + $0x78] sm:$0xff]
      %v4146 = vld [vmem:[%s3099 + $0x80] sm:$0xff]
      %v4147 = vld [vmem:[%s3099 + $0x90] sm:$0xff]
      %v4148 = vld [vmem:[%s3099 + $0x98] sm:$0xff]
      %v4149 = vld [vmem:[%s3099 + $0xa8] sm:$0xff]
      %v4150 = vld [vmem:[%s3099 + $0xb0] sm:$0xff]
      %v4151 = vld [vmem:[%s3099 + $0xc0] sm:$0xff]
      %v4152 = vld [vmem:[%s3099 + $0xc8] sm:$0xff]
      %v4153 = vld [vmem:[%s3099 + $0xd8] sm:$0xff]
      %v4154 = vld [vmem:[%s3099 + $0xe0] sm:$0xff]
      %v4155 = vld [vmem:[%s3099 + $0xf0] sm:$0xff]
      %v4156 = vld [vmem:[%s3099 + $0xf8] sm:$0xff]
      %v4157 = vld [vmem:[%s3099 + $0x108] sm:$0xff]
      %v4158 = vld [vmem:[%s3099 + $0x110] sm:$0xff]
      %v4159 = vld [vmem:[%s3099 + $0x120] sm:$0xff]
      %v4160 = vld [vmem:[%s3099 + $0x128] sm:$0xff]
      %v4161 = vld [vmem:[%s3099 + $0x138] sm:$0xff]
      %v4162 = vld [vmem:[%s3099 + $0x140] sm:$0xff]
      %v4163 = vld [vmem:[%s3099 + $0x150] sm:$0xff]
      %v4164 = vld [vmem:[%s3099 + $0x158] sm:$0xff]
      %v4165 = vld [vmem:[%s3099 + $0x168] sm:$0xff]
      %v4166 = vld [vmem:[%s3099 + $0x170] sm:$0xff]
      %v4167 = vpack.c.bf16 %v4136, %v4135
      %v4168 = vpack.c.bf16 %v4138, %v4137
      %v4169 = vpack.c.bf16 %v4140, %v4139
      %v4170 = vpack.c.bf16 %v4142, %v4141
      %v4171 = vpack.c.bf16 %v4144, %v4143
      %v4172 = vpack.c.bf16 %v4146, %v4145
      %v4173 = vpack.c.bf16 %v4148, %v4147
      %v4174 = vpack.c.bf16 %v4150, %v4149
      %v4175 = vpack.c.bf16 %v4152, %v4151
      %v4176 = vpack.c.bf16 %v4154, %v4153
      %v4177 = vpack.c.bf16 %v4156, %v4155
      %v4178 = vpack.c.bf16 %v4158, %v4157
      %v4179 = vpack.c.bf16 %v4160, %v4159
      %v4180 = vpack.c.bf16 %v4162, %v4161
      %v4181 = vpack.c.bf16 %v4164, %v4163
      %v4182 = vpack.c.bf16 %v4166, %v4165
      %v4183 = vld [vmem:[%s3 + $0x60] sm:$0xff]
      %v4184 = vld [vmem:[%s3 + $0x68] sm:$0xff]
      %v4185 = vld [vmem:[%s3 + $0x70] sm:$0xff]
      %v4186 = vld [vmem:[%s3 + $0x78] sm:$0xff]
      %v4191 = vunpack.c.l.b16 %v4183
      %v4192 = vunpack.c.h.b16 %v4183
      %v4193 = vunpack.c.l.b16 %v4184
      %v4194 = vunpack.c.h.b16 %v4184
      %v4195 = vunpack.c.l.b16 %v4185
      %v4196 = vunpack.c.h.b16 %v4185
      %v4197 = vunpack.c.l.b16 %v4186
      %v4198 = vunpack.c.h.b16 %v4186
      %v4199 = vpack.c.b16 %v4193, %v4191
      %v4200 = vpack.c.b16 %v4194, %v4192
      %v4201 = vpack.c.b16 %v4197, %v4195
      %v4202 = vpack.c.b16 %v4198, %v4196
      %v4208 = vsel %vm326, %v4167, 0
      %v4211 = vsel %vm326, %v4168, 0
      %v4214 = vsel %vm326, %v4169, 0
      %v4217 = vsel %vm326, %v4170, 0
      %v4220 = vsel %vm326, %v4171, 0
      %v4223 = vsel %vm326, %v4172, 0
      %v4226 = vsel %vm326, %v4173, 0
      %v4229 = vsel %vm326, %v4174, 0
      %v4232 = vsel %vm326, %v4175, 0
      %v4235 = vsel %vm326, %v4176, 0
      %v4238 = vsel %vm326, %v4177, 0
      %v4241 = vsel %vm326, %v4178, 0
      %v4244 = vsel %vm326, %v4179, 0
      %v4247 = vsel %vm326, %v4180, 0
      %v4250 = vsel %vm326, %v4181, 0
      %v4253 = vsel %vm326, %v4182, 0
      %4255 = vmatprep.subr.bf16.mxu0 0
      %4256 = vmatpush1.bf16.msra.mxu0 0
      %4257 = vmatprep.subr.bf16.mxu0 0
      %4258 = vmatpush1.bf16.msra.mxu0 0
      %4259 = vmatprep.subr.bf16.mxu0 0
      %4260 = vmatpush1.bf16.msra.mxu0 0
      %4261 = vmatprep.subr.bf16.mxu0 0
      %4262 = vmatpush1.bf16.msra.mxu0 0
      %4263 = vmatprep.subr.bf16.mxu0 0
      %4264 = vmatpush1.bf16.msra.mxu0 0
      %4265 = vmatprep.subr.bf16.mxu0 0
      %4266 = vmatpush1.bf16.msra.mxu0 0
      %4267 = vmatprep.subr.bf16.mxu0 %v4202
      %4268 = vmatpush1.bf16.msra.mxu0 %v4201
      %4269 = vmatprep.subr.bf16.mxu0 %v4200
      %4270 = vmatpush1.bf16.msra.mxu0 %v4199
      %4271 = vmatprep.subr.bf16.mxu0 0
      %4272 = vmatpush2.bf16.msra.mxu0 0
      %4273 = vmatprep.subr.bf16.mxu0 0
      %4274 = vmatpush2.bf16.msra.mxu0 0
      %4275 = vmatprep.subr.bf16.mxu0 0
      %4276 = vmatpush2.bf16.msra.mxu0 0
      %4277 = vmatprep.subr.bf16.mxu0 0
      %4278 = vmatpush2.bf16.msra.mxu0 0
      %4279 = vmatprep.subr.bf16.mxu0 0
      %4280 = vmatpush2.bf16.msra.mxu0 0
      %4281 = vmatprep.subr.bf16.mxu0 0
      %4282 = vmatpush2.bf16.msra.mxu0 0
      %4283 = vmatprep.subr.bf16.mxu0 0
      %4284 = vmatpush2.bf16.msra.mxu0 0
      %4285 = vmatprep.subr.bf16.mxu0 0
      %4286 = vmatpush2.bf16.msra.mxu0 0
      %4287 = vmatprep.mubr.bf16.mxu0 0
      %4288 = vmatmul.mubr.bf16.gmra.mxu0 %v4208
      %v4289 = vpop.f32.mrf.mxu0
      %v4290 = vadd.f32 0.0, %v4289
      %v4291 = vpop.f32.mrf.mxu0
      %v4292 = vadd.f32 0.0, %v4291
      %v4293 = vpop.f32.mrf.mxu0
      %v4294 = vadd.f32 0.0, %v4293
      %v4295 = vpop.f32.mrf.mxu0
      %v4296 = vadd.f32 0.0, %v4295
      %4297 = vmatprep.mubr.bf16.mxu0 0
      %4298 = vmatmul.mubr.bf16.gmra.mxu0 %v4211
      %v4299 = vpop.f32.mrf.mxu0
      %v4300 = vadd.f32 0.0, %v4299
      %v4301 = vpop.f32.mrf.mxu0
      %v4302 = vadd.f32 0.0, %v4301
      %v4303 = vpop.f32.mrf.mxu0
      %v4304 = vadd.f32 0.0, %v4303
      %v4305 = vpop.f32.mrf.mxu0
      %v4306 = vadd.f32 0.0, %v4305
      %4307 = vmatprep.mubr.bf16.mxu0 0
      %4308 = vmatmul.mubr.bf16.gmra.mxu0 %v4214
      %v4309 = vpop.f32.mrf.mxu0
      %v4310 = vadd.f32 0.0, %v4309
      %v4311 = vpop.f32.mrf.mxu0
      %v4312 = vadd.f32 0.0, %v4311
      %v4313 = vpop.f32.mrf.mxu0
      %v4314 = vadd.f32 0.0, %v4313
      %v4315 = vpop.f32.mrf.mxu0
      %v4316 = vadd.f32 0.0, %v4315
      %4317 = vmatprep.mubr.bf16.mxu0 0
      %4318 = vmatmul.mubr.bf16.gmra.mxu0 %v4217
      %v4319 = vpop.f32.mrf.mxu0
      %v4320 = vadd.f32 0.0, %v4319
      %v4321 = vpop.f32.mrf.mxu0
      %v4322 = vadd.f32 0.0, %v4321
      %v4323 = vpop.f32.mrf.mxu0
      %v4324 = vadd.f32 0.0, %v4323
      %v4325 = vpop.f32.mrf.mxu0
      %v4326 = vadd.f32 0.0, %v4325
      %4327 = vmatprep.mubr.bf16.mxu0 0
      %4328 = vmatmul.mubr.bf16.gmra.mxu0 %v4220
      %v4329 = vpop.f32.mrf.mxu0
      %v4330 = vadd.f32 0.0, %v4329
      %v4331 = vpop.f32.mrf.mxu0
      %v4332 = vadd.f32 0.0, %v4331
      %v4333 = vpop.f32.mrf.mxu0
      %v4334 = vadd.f32 0.0, %v4333
      %v4335 = vpop.f32.mrf.mxu0
      %v4336 = vadd.f32 0.0, %v4335
      %4337 = vmatprep.mubr.bf16.mxu0 0
      %4338 = vmatmul.mubr.bf16.gmra.mxu0 %v4223
      %v4339 = vpop.f32.mrf.mxu0
      %v4340 = vadd.f32 0.0, %v4339
      %v4341 = vpop.f32.mrf.mxu0
      %v4342 = vadd.f32 0.0, %v4341
      %v4343 = vpop.f32.mrf.mxu0
      %v4344 = vadd.f32 0.0, %v4343
      %v4345 = vpop.f32.mrf.mxu0
      %v4346 = vadd.f32 0.0, %v4345
      %4347 = vmatprep.mubr.bf16.mxu0 0
      %4348 = vmatmul.mubr.bf16.gmra.mxu0 %v4226
      %v4349 = vpop.f32.mrf.mxu0
      %v4350 = vadd.f32 0.0, %v4349
      %v4351 = vpop.f32.mrf.mxu0
      %v4352 = vadd.f32 0.0, %v4351
      %v4353 = vpop.f32.mrf.mxu0
      %v4354 = vadd.f32 0.0, %v4353
      %v4355 = vpop.f32.mrf.mxu0
      %v4356 = vadd.f32 0.0, %v4355
      %4357 = vmatprep.mubr.bf16.mxu0 0
      %4358 = vmatmul.mubr.bf16.gmra.mxu0 %v4229
      %v4359 = vpop.f32.mrf.mxu0
      %v4360 = vadd.f32 0.0, %v4359
      %v4361 = vpop.f32.mrf.mxu0
      %v4362 = vadd.f32 0.0, %v4361
      %v4363 = vpop.f32.mrf.mxu0
      %v4364 = vadd.f32 0.0, %v4363
      %v4365 = vpop.f32.mrf.mxu0
      %v4366 = vadd.f32 0.0, %v4365
      %4367 = vmatprep.mubr.bf16.mxu0 0
      %4368 = vmatmul.mubr.bf16.gmra.mxu0 %v4232
      %v4369 = vpop.f32.mrf.mxu0
      %v4370 = vadd.f32 0.0, %v4369
      %v4371 = vpop.f32.mrf.mxu0
      %v4372 = vadd.f32 0.0, %v4371
      %v4373 = vpop.f32.mrf.mxu0
      %v4374 = vadd.f32 0.0, %v4373
      %v4375 = vpop.f32.mrf.mxu0
      %v4376 = vadd.f32 0.0, %v4375
      %4377 = vmatprep.mubr.bf16.mxu0 0
      %4378 = vmatmul.mubr.bf16.gmra.mxu0 %v4235
      %v4379 = vpop.f32.mrf.mxu0
      %v4380 = vadd.f32 0.0, %v4379
      %v4381 = vpop.f32.mrf.mxu0
      %v4382 = vadd.f32 0.0, %v4381
      %v4383 = vpop.f32.mrf.mxu0
      %v4384 = vadd.f32 0.0, %v4383
      %v4385 = vpop.f32.mrf.mxu0
      %v4386 = vadd.f32 0.0, %v4385
      %4387 = vmatprep.mubr.bf16.mxu0 0
      %4388 = vmatmul.mubr.bf16.gmra.mxu0 %v4238
      %v4389 = vpop.f32.mrf.mxu0
      %v4390 = vadd.f32 0.0, %v4389
      %v4391 = vpop.f32.mrf.mxu0
      %v4392 = vadd.f32 0.0, %v4391
      %v4393 = vpop.f32.mrf.mxu0
      %v4394 = vadd.f32 0.0, %v4393
      %v4395 = vpop.f32.mrf.mxu0
      %v4396 = vadd.f32 0.0, %v4395
      %4397 = vmatprep.mubr.bf16.mxu0 0
      %4398 = vmatmul.mubr.bf16.gmra.mxu0 %v4241
      %v4399 = vpop.f32.mrf.mxu0
      %v4400 = vadd.f32 0.0, %v4399
      %v4401 = vpop.f32.mrf.mxu0
      %v4402 = vadd.f32 0.0, %v4401
      %v4403 = vpop.f32.mrf.mxu0
      %v4404 = vadd.f32 0.0, %v4403
      %v4405 = vpop.f32.mrf.mxu0
      %v4406 = vadd.f32 0.0, %v4405
      %4407 = vmatprep.mubr.bf16.mxu0 0
      %4408 = vmatmul.mubr.bf16.gmra.mxu0 %v4244
      %v4409 = vpop.f32.mrf.mxu0
      %v4410 = vadd.f32 0.0, %v4409
      %v4411 = vpop.f32.mrf.mxu0
      %v4412 = vadd.f32 0.0, %v4411
      %v4413 = vpop.f32.mrf.mxu0
      %v4414 = vadd.f32 0.0, %v4413
      %v4415 = vpop.f32.mrf.mxu0
      %v4416 = vadd.f32 0.0, %v4415
      %4417 = vmatprep.mubr.bf16.mxu0 0
      %4418 = vmatmul.mubr.bf16.gmra.mxu0 %v4247
      %v4419 = vpop.f32.mrf.mxu0
      %v4420 = vadd.f32 0.0, %v4419
      %v4421 = vpop.f32.mrf.mxu0
      %v4422 = vadd.f32 0.0, %v4421
      %v4423 = vpop.f32.mrf.mxu0
      %v4424 = vadd.f32 0.0, %v4423
      %v4425 = vpop.f32.mrf.mxu0
      %v4426 = vadd.f32 0.0, %v4425
      %4427 = vmatprep.mubr.bf16.mxu0 0
      %4428 = vmatmul.mubr.bf16.gmra.mxu0 %v4250
      %v4429 = vpop.f32.mrf.mxu0
      %v4430 = vadd.f32 0.0, %v4429
      %v4431 = vpop.f32.mrf.mxu0
      %v4432 = vadd.f32 0.0, %v4431
      %v4433 = vpop.f32.mrf.mxu0
      %v4434 = vadd.f32 0.0, %v4433
      %v4435 = vpop.f32.mrf.mxu0
      %v4436 = vadd.f32 0.0, %v4435
      %4437 = vmatprep.mubr.bf16.mxu0 0
      %4438 = vmatmul.mubr.bf16.gmra.mxu0 %v4253
      %v4439 = vpop.f32.mrf.mxu0
      %v4440 = vadd.f32 0.0, %v4439
      %v4441 = vpop.f32.mrf.mxu0
      %v4442 = vadd.f32 0.0, %v4441
      %v4443 = vpop.f32.mrf.mxu0
      %v4444 = vadd.f32 0.0, %v4443
      %v4445 = vpop.f32.mrf.mxu0
      %v4446 = vadd.f32 0.0, %v4445
      %4447 = vdwg.mxu0
      %v4448 = vadd.f32 %v4071, %v4290
      %v4449 = vadd.f32 %v4072, %v4292
      %v4450 = vadd.f32 %v4073, %v4294
      %v4451 = vadd.f32 %v4074, %v4296
      %v4452 = vadd.f32 %v4075, %v4300
      %v4453 = vadd.f32 %v4076, %v4302
      %v4454 = vadd.f32 %v4077, %v4304
      %v4455 = vadd.f32 %v4078, %v4306
      %v4456 = vadd.f32 %v4079, %v4310
      %v4457 = vadd.f32 %v4080, %v4312
      %v4458 = vadd.f32 %v4081, %v4314
      %v4459 = vadd.f32 %v4082, %v4316
      %v4460 = vadd.f32 %v4083, %v4320
      %v4461 = vadd.f32 %v4084, %v4322
      %v4462 = vadd.f32 %v4085, %v4324
      %v4463 = vadd.f32 %v4086, %v4326
      %v4464 = vadd.f32 %v4087, %v4330
      %v4465 = vadd.f32 %v4088, %v4332
      %v4466 = vadd.f32 %v4089, %v4334
      %v4467 = vadd.f32 %v4090, %v4336
      %v4468 = vadd.f32 %v4091, %v4340
      %v4469 = vadd.f32 %v4092, %v4342
      %v4470 = vadd.f32 %v4093, %v4344
      %v4471 = vadd.f32 %v4094, %v4346
      %v4472 = vadd.f32 %v4095, %v4350
      %v4473 = vadd.f32 %v4096, %v4352
      %v4474 = vadd.f32 %v4097, %v4354
      %v4475 = vadd.f32 %v4098, %v4356
      %v4476 = vadd.f32 %v4099, %v4360
      %v4477 = vadd.f32 %v4100, %v4362
      %v4478 = vadd.f32 %v4101, %v4364
      %v4479 = vadd.f32 %v4102, %v4366
      %v4480 = vadd.f32 %v4103, %v4370
      %v4481 = vadd.f32 %v4104, %v4372
      %v4482 = vadd.f32 %v4105, %v4374
      %v4483 = vadd.f32 %v4106, %v4376
      %v4484 = vadd.f32 %v4107, %v4380
      %v4485 = vadd.f32 %v4108, %v4382
      %v4486 = vadd.f32 %v4109, %v4384
      %v4487 = vadd.f32 %v4110, %v4386
      %v4488 = vadd.f32 %v4111, %v4390
      %v4489 = vadd.f32 %v4112, %v4392
      %v4490 = vadd.f32 %v4113, %v4394
      %v4491 = vadd.f32 %v4114, %v4396
      %v4492 = vadd.f32 %v4115, %v4400
      %v4493 = vadd.f32 %v4116, %v4402
      %v4494 = vadd.f32 %v4117, %v4404
      %v4495 = vadd.f32 %v4118, %v4406
      %v4496 = vadd.f32 %v4119, %v4410
      %v4497 = vadd.f32 %v4120, %v4412
      %v4498 = vadd.f32 %v4121, %v4414
      %v4499 = vadd.f32 %v4122, %v4416
      %v4500 = vadd.f32 %v4123, %v4420
      %v4501 = vadd.f32 %v4124, %v4422
      %v4502 = vadd.f32 %v4125, %v4424
      %v4503 = vadd.f32 %v4126, %v4426
      %v4504 = vadd.f32 %v4127, %v4430
      %v4505 = vadd.f32 %v4128, %v4432
      %v4506 = vadd.f32 %v4129, %v4434
      %v4507 = vadd.f32 %v4130, %v4436
      %v4508 = vadd.f32 %v4131, %v4440
      %v4509 = vadd.f32 %v4132, %v4442
      %v4510 = vadd.f32 %v4133, %v4444
      %v4511 = vadd.f32 %v4134, %v4446
      %v4512 = vld [vmem:[%s3099 + $0x1] sm:$0xff]
      %v4513 = vld [vmem:[%s3099 + $0x9] sm:$0xff]
      %v4514 = vld [vmem:[%s3099 + $0x19] sm:$0xff]
      %v4515 = vld [vmem:[%s3099 + $0x21] sm:$0xff]
      %v4516 = vld [vmem:[%s3099 + $0x31] sm:$0xff]
      %v4517 = vld [vmem:[%s3099 + $0x39] sm:$0xff]
      %v4518 = vld [vmem:[%s3099 + $0x49] sm:$0xff]
      %v4519 = vld [vmem:[%s3099 + $0x51] sm:$0xff]
      %v4520 = vld [vmem:[%s3099 + $0x61] sm:$0xff]
      %v4521 = vld [vmem:[%s3099 + $0x69] sm:$0xff]
      %v4522 = vld [vmem:[%s3099 + $0x79] sm:$0xff]
      %v4523 = vld [vmem:[%s3099 + $0x81] sm:$0xff]
      %v4524 = vld [vmem:[%s3099 + $0x91] sm:$0xff]
      %v4525 = vld [vmem:[%s3099 + $0x99] sm:$0xff]
      %v4526 = vld [vmem:[%s3099 + $0xa9] sm:$0xff]
      %v4527 = vld [vmem:[%s3099 + $0xb1] sm:$0xff]
      %v4528 = vld [vmem:[%s3099 + $0xc1] sm:$0xff]
      %v4529 = vld [vmem:[%s3099 + $0xc9] sm:$0xff]
      %v4530 = vld [vmem:[%s3099 + $0xd9] sm:$0xff]
      %v4531 = vld [vmem:[%s3099 + $0xe1] sm:$0xff]
      %v4532 = vld [vmem:[%s3099 + $0xf1] sm:$0xff]
      %v4533 = vld [vmem:[%s3099 + $0xf9] sm:$0xff]
      %v4534 = vld [vmem:[%s3099 + $0x109] sm:$0xff]
      %v4535 = vld [vmem:[%s3099 + $0x111] sm:$0xff]
      %v4536 = vld [vmem:[%s3099 + $0x121] sm:$0xff]
      %v4537 = vld [vmem:[%s3099 + $0x129] sm:$0xff]
      %v4538 = vld [vmem:[%s3099 + $0x139] sm:$0xff]
      %v4539 = vld [vmem:[%s3099 + $0x141] sm:$0xff]
      %v4540 = vld [vmem:[%s3099 + $0x151] sm:$0xff]
      %v4541 = vld [vmem:[%s3099 + $0x159] sm:$0xff]
      %v4542 = vld [vmem:[%s3099 + $0x169] sm:$0xff]
      %v4543 = vld [vmem:[%s3099 + $0x171] sm:$0xff]
      %v4544 = vpack.c.bf16 %v4513, %v4512
      %v4545 = vpack.c.bf16 %v4515, %v4514
      %v4546 = vpack.c.bf16 %v4517, %v4516
      %v4547 = vpack.c.bf16 %v4519, %v4518
      %v4548 = vpack.c.bf16 %v4521, %v4520
      %v4549 = vpack.c.bf16 %v4523, %v4522
      %v4550 = vpack.c.bf16 %v4525, %v4524
      %v4551 = vpack.c.bf16 %v4527, %v4526
      %v4552 = vpack.c.bf16 %v4529, %v4528
      %v4553 = vpack.c.bf16 %v4531, %v4530
      %v4554 = vpack.c.bf16 %v4533, %v4532
      %v4555 = vpack.c.bf16 %v4535, %v4534
      %v4556 = vpack.c.bf16 %v4537, %v4536
      %v4557 = vpack.c.bf16 %v4539, %v4538
      %v4558 = vpack.c.bf16 %v4541, %v4540
      %v4559 = vpack.c.bf16 %v4543, %v4542
      %v4560 = vld [vmem:[%s3 + $0x80] sm:$0xff]
      %v4561 = vld [vmem:[%s3 + $0x88] sm:$0xff]
      %v4562 = vld [vmem:[%s3 + $0x90] sm:$0xff]
      %v4563 = vld [vmem:[%s3 + $0x98] sm:$0xff]
      %v4568 = vunpack.c.l.b16 %v4560
      %v4569 = vunpack.c.h.b16 %v4560
      %v4570 = vunpack.c.l.b16 %v4561
      %v4571 = vunpack.c.h.b16 %v4561
      %v4572 = vunpack.c.l.b16 %v4562
      %v4573 = vunpack.c.h.b16 %v4562
      %v4574 = vunpack.c.l.b16 %v4563
      %v4575 = vunpack.c.h.b16 %v4563
      %v4576 = vpack.c.b16 %v4570, %v4568
      %v4577 = vpack.c.b16 %v4571, %v4569
      %v4578 = vpack.c.b16 %v4574, %v4572
      %v4579 = vpack.c.b16 %v4575, %v4573
      %v4585 = vsel %vm326, %v4544, 0
      %v4588 = vsel %vm326, %v4545, 0
      %v4591 = vsel %vm326, %v4546, 0
      %v4594 = vsel %vm326, %v4547, 0
      %v4597 = vsel %vm326, %v4548, 0
      %v4600 = vsel %vm326, %v4549, 0
      %v4603 = vsel %vm326, %v4550, 0
      %v4606 = vsel %vm326, %v4551, 0
      %v4609 = vsel %vm326, %v4552, 0
      %v4612 = vsel %vm326, %v4553, 0
      %v4615 = vsel %vm326, %v4554, 0
      %v4618 = vsel %vm326, %v4555, 0
      %v4621 = vsel %vm326, %v4556, 0
      %v4624 = vsel %vm326, %v4557, 0
      %v4627 = vsel %vm326, %v4558, 0
      %v4630 = vsel %vm326, %v4559, 0
      %4632 = vmatprep.subr.bf16.mxu0 0
      %4633 = vmatpush1.bf16.msra.mxu0 0
      %4634 = vmatprep.subr.bf16.mxu0 0
      %4635 = vmatpush1.bf16.msra.mxu0 0
      %4636 = vmatprep.subr.bf16.mxu0 0
      %4637 = vmatpush1.bf16.msra.mxu0 0
      %4638 = vmatprep.subr.bf16.mxu0 0
      %4639 = vmatpush1.bf16.msra.mxu0 0
      %4640 = vmatprep.subr.bf16.mxu0 0
      %4641 = vmatpush1.bf16.msra.mxu0 0
      %4642 = vmatprep.subr.bf16.mxu0 0
      %4643 = vmatpush1.bf16.msra.mxu0 0
      %4644 = vmatprep.subr.bf16.mxu0 %v4579
      %4645 = vmatpush1.bf16.msra.mxu0 %v4578
      %4646 = vmatprep.subr.bf16.mxu0 %v4577
      %4647 = vmatpush1.bf16.msra.mxu0 %v4576
      %4648 = vmatprep.subr.bf16.mxu0 0
      %4649 = vmatpush2.bf16.msra.mxu0 0
      %4650 = vmatprep.subr.bf16.mxu0 0
      %4651 = vmatpush2.bf16.msra.mxu0 0
      %4652 = vmatprep.subr.bf16.mxu0 0
      %4653 = vmatpush2.bf16.msra.mxu0 0
      %4654 = vmatprep.subr.bf16.mxu0 0
      %4655 = vmatpush2.bf16.msra.mxu0 0
      %4656 = vmatprep.subr.bf16.mxu0 0
      %4657 = vmatpush2.bf16.msra.mxu0 0
      %4658 = vmatprep.subr.bf16.mxu0 0
      %4659 = vmatpush2.bf16.msra.mxu0 0
      %4660 = vmatprep.subr.bf16.mxu0 0
      %4661 = vmatpush2.bf16.msra.mxu0 0
      %4662 = vmatprep.subr.bf16.mxu0 0
      %4663 = vmatpush2.bf16.msra.mxu0 0
      %4664 = vmatprep.mubr.bf16.mxu0 0
      %4665 = vmatmul.mubr.bf16.gmra.mxu0 %v4585
      %v4666 = vpop.f32.mrf.mxu0
      %v4667 = vadd.f32 0.0, %v4666
      %v4668 = vpop.f32.mrf.mxu0
      %v4669 = vadd.f32 0.0, %v4668
      %v4670 = vpop.f32.mrf.mxu0
      %v4671 = vadd.f32 0.0, %v4670
      %v4672 = vpop.f32.mrf.mxu0
      %v4673 = vadd.f32 0.0, %v4672
      %4674 = vmatprep.mubr.bf16.mxu0 0
      %4675 = vmatmul.mubr.bf16.gmra.mxu0 %v4588
      %v4676 = vpop.f32.mrf.mxu0
      %v4677 = vadd.f32 0.0, %v4676
      %v4678 = vpop.f32.mrf.mxu0
      %v4679 = vadd.f32 0.0, %v4678
      %v4680 = vpop.f32.mrf.mxu0
      %v4681 = vadd.f32 0.0, %v4680
      %v4682 = vpop.f32.mrf.mxu0
      %v4683 = vadd.f32 0.0, %v4682
      %4684 = vmatprep.mubr.bf16.mxu0 0
      %4685 = vmatmul.mubr.bf16.gmra.mxu0 %v4591
      %v4686 = vpop.f32.mrf.mxu0
      %v4687 = vadd.f32 0.0, %v4686
      %v4688 = vpop.f32.mrf.mxu0
      %v4689 = vadd.f32 0.0, %v4688
      %v4690 = vpop.f32.mrf.mxu0
      %v4691 = vadd.f32 0.0, %v4690
      %v4692 = vpop.f32.mrf.mxu0
      %v4693 = vadd.f32 0.0, %v4692
      %4694 = vmatprep.mubr.bf16.mxu0 0
      %4695 = vmatmul.mubr.bf16.gmra.mxu0 %v4594
      %v4696 = vpop.f32.mrf.mxu0
      %v4697 = vadd.f32 0.0, %v4696
      %v4698 = vpop.f32.mrf.mxu0
      %v4699 = vadd.f32 0.0, %v4698
      %v4700 = vpop.f32.mrf.mxu0
      %v4701 = vadd.f32 0.0, %v4700
      %v4702 = vpop.f32.mrf.mxu0
      %v4703 = vadd.f32 0.0, %v4702
      %4704 = vmatprep.mubr.bf16.mxu0 0
      %4705 = vmatmul.mubr.bf16.gmra.mxu0 %v4597
      %v4706 = vpop.f32.mrf.mxu0
      %v4707 = vadd.f32 0.0, %v4706
      %v4708 = vpop.f32.mrf.mxu0
      %v4709 = vadd.f32 0.0, %v4708
      %v4710 = vpop.f32.mrf.mxu0
      %v4711 = vadd.f32 0.0, %v4710
      %v4712 = vpop.f32.mrf.mxu0
      %v4713 = vadd.f32 0.0, %v4712
      %4714 = vmatprep.mubr.bf16.mxu0 0
      %4715 = vmatmul.mubr.bf16.gmra.mxu0 %v4600
      %v4716 = vpop.f32.mrf.mxu0
      %v4717 = vadd.f32 0.0, %v4716
      %v4718 = vpop.f32.mrf.mxu0
      %v4719 = vadd.f32 0.0, %v4718
      %v4720 = vpop.f32.mrf.mxu0
      %v4721 = vadd.f32 0.0, %v4720
      %v4722 = vpop.f32.mrf.mxu0
      %v4723 = vadd.f32 0.0, %v4722
      %4724 = vmatprep.mubr.bf16.mxu0 0
      %4725 = vmatmul.mubr.bf16.gmra.mxu0 %v4603
      %v4726 = vpop.f32.mrf.mxu0
      %v4727 = vadd.f32 0.0, %v4726
      %v4728 = vpop.f32.mrf.mxu0
      %v4729 = vadd.f32 0.0, %v4728
      %v4730 = vpop.f32.mrf.mxu0
      %v4731 = vadd.f32 0.0, %v4730
      %v4732 = vpop.f32.mrf.mxu0
      %v4733 = vadd.f32 0.0, %v4732
      %4734 = vmatprep.mubr.bf16.mxu0 0
      %4735 = vmatmul.mubr.bf16.gmra.mxu0 %v4606
      %v4736 = vpop.f32.mrf.mxu0
      %v4737 = vadd.f32 0.0, %v4736
      %v4738 = vpop.f32.mrf.mxu0
      %v4739 = vadd.f32 0.0, %v4738
      %v4740 = vpop.f32.mrf.mxu0
      %v4741 = vadd.f32 0.0, %v4740
      %v4742 = vpop.f32.mrf.mxu0
      %v4743 = vadd.f32 0.0, %v4742
      %4744 = vmatprep.mubr.bf16.mxu0 0
      %4745 = vmatmul.mubr.bf16.gmra.mxu0 %v4609
      %v4746 = vpop.f32.mrf.mxu0
      %v4747 = vadd.f32 0.0, %v4746
      %v4748 = vpop.f32.mrf.mxu0
      %v4749 = vadd.f32 0.0, %v4748
      %v4750 = vpop.f32.mrf.mxu0
      %v4751 = vadd.f32 0.0, %v4750
      %v4752 = vpop.f32.mrf.mxu0
      %v4753 = vadd.f32 0.0, %v4752
      %4754 = vmatprep.mubr.bf16.mxu0 0
      %4755 = vmatmul.mubr.bf16.gmra.mxu0 %v4612
      %v4756 = vpop.f32.mrf.mxu0
      %v4757 = vadd.f32 0.0, %v4756
      %v4758 = vpop.f32.mrf.mxu0
      %v4759 = vadd.f32 0.0, %v4758
      %v4760 = vpop.f32.mrf.mxu0
      %v4761 = vadd.f32 0.0, %v4760
      %v4762 = vpop.f32.mrf.mxu0
      %v4763 = vadd.f32 0.0, %v4762
      %4764 = vmatprep.mubr.bf16.mxu0 0
      %4765 = vmatmul.mubr.bf16.gmra.mxu0 %v4615
      %v4766 = vpop.f32.mrf.mxu0
      %v4767 = vadd.f32 0.0, %v4766
      %v4768 = vpop.f32.mrf.mxu0
      %v4769 = vadd.f32 0.0, %v4768
      %v4770 = vpop.f32.mrf.mxu0
      %v4771 = vadd.f32 0.0, %v4770
      %v4772 = vpop.f32.mrf.mxu0
      %v4773 = vadd.f32 0.0, %v4772
      %4774 = vmatprep.mubr.bf16.mxu0 0
      %4775 = vmatmul.mubr.bf16.gmra.mxu0 %v4618
      %v4776 = vpop.f32.mrf.mxu0
      %v4777 = vadd.f32 0.0, %v4776
      %v4778 = vpop.f32.mrf.mxu0
      %v4779 = vadd.f32 0.0, %v4778
      %v4780 = vpop.f32.mrf.mxu0
      %v4781 = vadd.f32 0.0, %v4780
      %v4782 = vpop.f32.mrf.mxu0
      %v4783 = vadd.f32 0.0, %v4782
      %4784 = vmatprep.mubr.bf16.mxu0 0
      %4785 = vmatmul.mubr.bf16.gmra.mxu0 %v4621
      %v4786 = vpop.f32.mrf.mxu0
      %v4787 = vadd.f32 0.0, %v4786
      %v4788 = vpop.f32.mrf.mxu0
      %v4789 = vadd.f32 0.0, %v4788
      %v4790 = vpop.f32.mrf.mxu0
      %v4791 = vadd.f32 0.0, %v4790
      %v4792 = vpop.f32.mrf.mxu0
      %v4793 = vadd.f32 0.0, %v4792
      %4794 = vmatprep.mubr.bf16.mxu0 0
      %4795 = vmatmul.mubr.bf16.gmra.mxu0 %v4624
      %v4796 = vpop.f32.mrf.mxu0
      %v4797 = vadd.f32 0.0, %v4796
      %v4798 = vpop.f32.mrf.mxu0
      %v4799 = vadd.f32 0.0, %v4798
      %v4800 = vpop.f32.mrf.mxu0
      %v4801 = vadd.f32 0.0, %v4800
      %v4802 = vpop.f32.mrf.mxu0
      %v4803 = vadd.f32 0.0, %v4802
      %4804 = vmatprep.mubr.bf16.mxu0 0
      %4805 = vmatmul.mubr.bf16.gmra.mxu0 %v4627
      %v4806 = vpop.f32.mrf.mxu0
      %v4807 = vadd.f32 0.0, %v4806
      %v4808 = vpop.f32.mrf.mxu0
      %v4809 = vadd.f32 0.0, %v4808
      %v4810 = vpop.f32.mrf.mxu0
      %v4811 = vadd.f32 0.0, %v4810
      %v4812 = vpop.f32.mrf.mxu0
      %v4813 = vadd.f32 0.0, %v4812
      %4814 = vmatprep.mubr.bf16.mxu0 0
      %4815 = vmatmul.mubr.bf16.gmra.mxu0 %v4630
      %v4816 = vpop.f32.mrf.mxu0
      %v4817 = vadd.f32 0.0, %v4816
      %v4818 = vpop.f32.mrf.mxu0
      %v4819 = vadd.f32 0.0, %v4818
      %v4820 = vpop.f32.mrf.mxu0
      %v4821 = vadd.f32 0.0, %v4820
      %v4822 = vpop.f32.mrf.mxu0
      %v4823 = vadd.f32 0.0, %v4822
      %4824 = vdwg.mxu0
      %v4825 = vadd.f32 %v4448, %v4667
      %v4826 = vadd.f32 %v4449, %v4669
      %v4827 = vadd.f32 %v4450, %v4671
      %v4828 = vadd.f32 %v4451, %v4673
      %v4829 = vadd.f32 %v4452, %v4677
      %v4830 = vadd.f32 %v4453, %v4679
      %v4831 = vadd.f32 %v4454, %v4681
      %v4832 = vadd.f32 %v4455, %v4683
      %v4833 = vadd.f32 %v4456, %v4687
      %v4834 = vadd.f32 %v4457, %v4689
      %v4835 = vadd.f32 %v4458, %v4691
      %v4836 = vadd.f32 %v4459, %v4693
      %v4837 = vadd.f32 %v4460, %v4697
      %v4838 = vadd.f32 %v4461, %v4699
      %v4839 = vadd.f32 %v4462, %v4701
      %v4840 = vadd.f32 %v4463, %v4703
      %v4841 = vadd.f32 %v4464, %v4707
      %v4842 = vadd.f32 %v4465, %v4709
      %v4843 = vadd.f32 %v4466, %v4711
      %v4844 = vadd.f32 %v4467, %v4713
      %v4845 = vadd.f32 %v4468, %v4717
      %v4846 = vadd.f32 %v4469, %v4719
      %v4847 = vadd.f32 %v4470, %v4721
      %v4848 = vadd.f32 %v4471, %v4723
      %v4849 = vadd.f32 %v4472, %v4727
      %v4850 = vadd.f32 %v4473, %v4729
      %v4851 = vadd.f32 %v4474, %v4731
      %v4852 = vadd.f32 %v4475, %v4733
      %v4853 = vadd.f32 %v4476, %v4737
      %v4854 = vadd.f32 %v4477, %v4739
      %v4855 = vadd.f32 %v4478, %v4741
      %v4856 = vadd.f32 %v4479, %v4743
      %v4857 = vadd.f32 %v4480, %v4747
      %v4858 = vadd.f32 %v4481, %v4749
      %v4859 = vadd.f32 %v4482, %v4751
      %v4860 = vadd.f32 %v4483, %v4753
      %v4861 = vadd.f32 %v4484, %v4757
      %v4862 = vadd.f32 %v4485, %v4759
      %v4863 = vadd.f32 %v4486, %v4761
      %v4864 = vadd.f32 %v4487, %v4763
      %v4865 = vadd.f32 %v4488, %v4767
      %v4866 = vadd.f32 %v4489, %v4769
      %v4867 = vadd.f32 %v4490, %v4771
      %v4868 = vadd.f32 %v4491, %v4773
      %v4869 = vadd.f32 %v4492, %v4777
      %v4870 = vadd.f32 %v4493, %v4779
      %v4871 = vadd.f32 %v4494, %v4781
      %v4872 = vadd.f32 %v4495, %v4783
      %v4873 = vadd.f32 %v4496, %v4787
      %v4874 = vadd.f32 %v4497, %v4789
      %v4875 = vadd.f32 %v4498, %v4791
      %v4876 = vadd.f32 %v4499, %v4793
      %v4877 = vadd.f32 %v4500, %v4797
      %v4878 = vadd.f32 %v4501, %v4799
      %v4879 = vadd.f32 %v4502, %v4801
      %v4880 = vadd.f32 %v4503, %v4803
      %v4881 = vadd.f32 %v4504, %v4807
      %v4882 = vadd.f32 %v4505, %v4809
      %v4883 = vadd.f32 %v4506, %v4811
      %v4884 = vadd.f32 %v4507, %v4813
      %v4885 = vadd.f32 %v4508, %v4817
      %v4886 = vadd.f32 %v4509, %v4819
      %v4887 = vadd.f32 %v4510, %v4821
      %v4888 = vadd.f32 %v4511, %v4823
      %v4889 = vld [vmem:[%s3099 + $0x2] sm:$0xff]
      %v4890 = vld [vmem:[%s3099 + $0xa] sm:$0xff]
      %v4891 = vld [vmem:[%s3099 + $0x1a] sm:$0xff]
      %v4892 = vld [vmem:[%s3099 + $0x22] sm:$0xff]
      %v4893 = vld [vmem:[%s3099 + $0x32] sm:$0xff]
      %v4894 = vld [vmem:[%s3099 + $0x3a] sm:$0xff]
      %v4895 = vld [vmem:[%s3099 + $0x4a] sm:$0xff]
      %v4896 = vld [vmem:[%s3099 + $0x52] sm:$0xff]
      %v4897 = vld [vmem:[%s3099 + $0x62] sm:$0xff]
      %v4898 = vld [vmem:[%s3099 + $0x6a] sm:$0xff]
      %v4899 = vld [vmem:[%s3099 + $0x7a] sm:$0xff]
      %v4900 = vld [vmem:[%s3099 + $0x82] sm:$0xff]
      %v4901 = vld [vmem:[%s3099 + $0x92] sm:$0xff]
      %v4902 = vld [vmem:[%s3099 + $0x9a] sm:$0xff]
      %v4903 = vld [vmem:[%s3099 + $0xaa] sm:$0xff]
      %v4904 = vld [vmem:[%s3099 + $0xb2] sm:$0xff]
      %v4905 = vld [vmem:[%s3099 + $0xc2] sm:$0xff]
      %v4906 = vld [vmem:[%s3099 + $0xca] sm:$0xff]
      %v4907 = vld [vmem:[%s3099 + $0xda] sm:$0xff]
      %v4908 = vld [vmem:[%s3099 + $0xe2] sm:$0xff]
      %v4909 = vld [vmem:[%s3099 + $0xf2] sm:$0xff]
      %v4910 = vld [vmem:[%s3099 + $0xfa] sm:$0xff]
      %v4911 = vld [vmem:[%s3099 + $0x10a] sm:$0xff]
      %v4912 = vld [vmem:[%s3099 + $0x112] sm:$0xff]
      %v4913 = vld [vmem:[%s3099 + $0x122] sm:$0xff]
      %v4914 = vld [vmem:[%s3099 + $0x12a] sm:$0xff]
      %v4915 = vld [vmem:[%s3099 + $0x13a] sm:$0xff]
      %v4916 = vld [vmem:[%s3099 + $0x142] sm:$0xff]
      %v4917 = vld [vmem:[%s3099 + $0x152] sm:$0xff]
      %v4918 = vld [vmem:[%s3099 + $0x15a] sm:$0xff]
      %v4919 = vld [vmem:[%s3099 + $0x16a] sm:$0xff]
      %v4920 = vld [vmem:[%s3099 + $0x172] sm:$0xff]
      %v4921 = vpack.c.bf16 %v4890, %v4889
      %v4922 = vpack.c.bf16 %v4892, %v4891
      %v4923 = vpack.c.bf16 %v4894, %v4893
      %v4924 = vpack.c.bf16 %v4896, %v4895
      %v4925 = vpack.c.bf16 %v4898, %v4897
      %v4926 = vpack.c.bf16 %v4900, %v4899
      %v4927 = vpack.c.bf16 %v4902, %v4901
      %v4928 = vpack.c.bf16 %v4904, %v4903
      %v4929 = vpack.c.bf16 %v4906, %v4905
      %v4930 = vpack.c.bf16 %v4908, %v4907
      %v4931 = vpack.c.bf16 %v4910, %v4909
      %v4932 = vpack.c.bf16 %v4912, %v4911
      %v4933 = vpack.c.bf16 %v4914, %v4913
      %v4934 = vpack.c.bf16 %v4916, %v4915
      %v4935 = vpack.c.bf16 %v4918, %v4917
      %v4936 = vpack.c.bf16 %v4920, %v4919
      %v4937 = vld [vmem:[%s3 + $0xa0] sm:$0xff]
      %v4938 = vld [vmem:[%s3 + $0xa8] sm:$0xff]
      %v4939 = vld [vmem:[%s3 + $0xb0] sm:$0xff]
      %v4940 = vld [vmem:[%s3 + $0xb8] sm:$0xff]
      %v4945 = vunpack.c.l.b16 %v4937
      %v4946 = vunpack.c.h.b16 %v4937
      %v4947 = vunpack.c.l.b16 %v4938
      %v4948 = vunpack.c.h.b16 %v4938
      %v4949 = vunpack.c.l.b16 %v4939
      %v4950 = vunpack.c.h.b16 %v4939
      %v4951 = vunpack.c.l.b16 %v4940
      %v4952 = vunpack.c.h.b16 %v4940
      %v4953 = vpack.c.b16 %v4947, %v4945
      %v4954 = vpack.c.b16 %v4948, %v4946
      %v4955 = vpack.c.b16 %v4951, %v4949
      %v4956 = vpack.c.b16 %v4952, %v4950
      %v4962 = vsel %vm326, %v4921, 0
      %v4965 = vsel %vm326, %v4922, 0
      %v4968 = vsel %vm326, %v4923, 0
      %v4971 = vsel %vm326, %v4924, 0
      %v4974 = vsel %vm326, %v4925, 0
      %v4977 = vsel %vm326, %v4926, 0
      %v4980 = vsel %vm326, %v4927, 0
      %v4983 = vsel %vm326, %v4928, 0
      %v4986 = vsel %vm326, %v4929, 0
      %v4989 = vsel %vm326, %v4930, 0
      %v4992 = vsel %vm326, %v4931, 0
      %v4995 = vsel %vm326, %v4932, 0
      %v4998 = vsel %vm326, %v4933, 0
      %v5001 = vsel %vm326, %v4934, 0
      %v5004 = vsel %vm326, %v4935, 0
      %v5007 = vsel %vm326, %v4936, 0
      %5009 = vmatprep.subr.bf16.mxu0 0
      %5010 = vmatpush1.bf16.msra.mxu0 0
      %5011 = vmatprep.subr.bf16.mxu0 0
      %5012 = vmatpush1.bf16.msra.mxu0 0
      %5013 = vmatprep.subr.bf16.mxu0 0
      %5014 = vmatpush1.bf16.msra.mxu0 0
      %5015 = vmatprep.subr.bf16.mxu0 0
      %5016 = vmatpush1.bf16.msra.mxu0 0
      %5017 = vmatprep.subr.bf16.mxu0 0
      %5018 = vmatpush1.bf16.msra.mxu0 0
      %5019 = vmatprep.subr.bf16.mxu0 0
      %5020 = vmatpush1.bf16.msra.mxu0 0
      %5021 = vmatprep.subr.bf16.mxu0 %v4956
      %5022 = vmatpush1.bf16.msra.mxu0 %v4955
      %5023 = vmatprep.subr.bf16.mxu0 %v4954
      %5024 = vmatpush1.bf16.msra.mxu0 %v4953
      %5025 = vmatprep.subr.bf16.mxu0 0
      %5026 = vmatpush2.bf16.msra.mxu0 0
      %5027 = vmatprep.subr.bf16.mxu0 0
      %5028 = vmatpush2.bf16.msra.mxu0 0
      %5029 = vmatprep.subr.bf16.mxu0 0
      %5030 = vmatpush2.bf16.msra.mxu0 0
      %5031 = vmatprep.subr.bf16.mxu0 0
      %5032 = vmatpush2.bf16.msra.mxu0 0
      %5033 = vmatprep.subr.bf16.mxu0 0
      %5034 = vmatpush2.bf16.msra.mxu0 0
      %5035 = vmatprep.subr.bf16.mxu0 0
      %5036 = vmatpush2.bf16.msra.mxu0 0
      %5037 = vmatprep.subr.bf16.mxu0 0
      %5038 = vmatpush2.bf16.msra.mxu0 0
      %5039 = vmatprep.subr.bf16.mxu0 0
      %5040 = vmatpush2.bf16.msra.mxu0 0
      %5041 = vmatprep.mubr.bf16.mxu0 0
      %5042 = vmatmul.mubr.bf16.gmra.mxu0 %v4962
      %v5043 = vpop.f32.mrf.mxu0
      %v5044 = vadd.f32 0.0, %v5043
      %v5045 = vpop.f32.mrf.mxu0
      %v5046 = vadd.f32 0.0, %v5045
      %v5047 = vpop.f32.mrf.mxu0
      %v5048 = vadd.f32 0.0, %v5047
      %v5049 = vpop.f32.mrf.mxu0
      %v5050 = vadd.f32 0.0, %v5049
      %5051 = vmatprep.mubr.bf16.mxu0 0
      %5052 = vmatmul.mubr.bf16.gmra.mxu0 %v4965
      %v5053 = vpop.f32.mrf.mxu0
      %v5054 = vadd.f32 0.0, %v5053
      %v5055 = vpop.f32.mrf.mxu0
      %v5056 = vadd.f32 0.0, %v5055
      %v5057 = vpop.f32.mrf.mxu0
      %v5058 = vadd.f32 0.0, %v5057
      %v5059 = vpop.f32.mrf.mxu0
      %v5060 = vadd.f32 0.0, %v5059
      %5061 = vmatprep.mubr.bf16.mxu0 0
      %5062 = vmatmul.mubr.bf16.gmra.mxu0 %v4968
      %v5063 = vpop.f32.mrf.mxu0
      %v5064 = vadd.f32 0.0, %v5063
      %v5065 = vpop.f32.mrf.mxu0
      %v5066 = vadd.f32 0.0, %v5065
      %v5067 = vpop.f32.mrf.mxu0
      %v5068 = vadd.f32 0.0, %v5067
      %v5069 = vpop.f32.mrf.mxu0
      %v5070 = vadd.f32 0.0, %v5069
      %5071 = vmatprep.mubr.bf16.mxu0 0
      %5072 = vmatmul.mubr.bf16.gmra.mxu0 %v4971
      %v5073 = vpop.f32.mrf.mxu0
      %v5074 = vadd.f32 0.0, %v5073
      %v5075 = vpop.f32.mrf.mxu0
      %v5076 = vadd.f32 0.0, %v5075
      %v5077 = vpop.f32.mrf.mxu0
      %v5078 = vadd.f32 0.0, %v5077
      %v5079 = vpop.f32.mrf.mxu0
      %v5080 = vadd.f32 0.0, %v5079
      %5081 = vmatprep.mubr.bf16.mxu0 0
      %5082 = vmatmul.mubr.bf16.gmra.mxu0 %v4974
      %v5083 = vpop.f32.mrf.mxu0
      %v5084 = vadd.f32 0.0, %v5083
      %v5085 = vpop.f32.mrf.mxu0
      %v5086 = vadd.f32 0.0, %v5085
      %v5087 = vpop.f32.mrf.mxu0
      %v5088 = vadd.f32 0.0, %v5087
      %v5089 = vpop.f32.mrf.mxu0
      %v5090 = vadd.f32 0.0, %v5089
      %5091 = vmatprep.mubr.bf16.mxu0 0
      %5092 = vmatmul.mubr.bf16.gmra.mxu0 %v4977
      %v5093 = vpop.f32.mrf.mxu0
      %v5094 = vadd.f32 0.0, %v5093
      %v5095 = vpop.f32.mrf.mxu0
      %v5096 = vadd.f32 0.0, %v5095
      %v5097 = vpop.f32.mrf.mxu0
      %v5098 = vadd.f32 0.0, %v5097
      %v5099 = vpop.f32.mrf.mxu0
      %v5100 = vadd.f32 0.0, %v5099
      %5101 = vmatprep.mubr.bf16.mxu0 0
      %5102 = vmatmul.mubr.bf16.gmra.mxu0 %v4980
      %v5103 = vpop.f32.mrf.mxu0
      %v5104 = vadd.f32 0.0, %v5103
      %v5105 = vpop.f32.mrf.mxu0
      %v5106 = vadd.f32 0.0, %v5105
      %v5107 = vpop.f32.mrf.mxu0
      %v5108 = vadd.f32 0.0, %v5107
      %v5109 = vpop.f32.mrf.mxu0
      %v5110 = vadd.f32 0.0, %v5109
      %5111 = vmatprep.mubr.bf16.mxu0 0
      %5112 = vmatmul.mubr.bf16.gmra.mxu0 %v4983
      %v5113 = vpop.f32.mrf.mxu0
      %v5114 = vadd.f32 0.0, %v5113
      %v5115 = vpop.f32.mrf.mxu0
      %v5116 = vadd.f32 0.0, %v5115
      %v5117 = vpop.f32.mrf.mxu0
      %v5118 = vadd.f32 0.0, %v5117
      %v5119 = vpop.f32.mrf.mxu0
      %v5120 = vadd.f32 0.0, %v5119
      %5121 = vmatprep.mubr.bf16.mxu0 0
      %5122 = vmatmul.mubr.bf16.gmra.mxu0 %v4986
      %v5123 = vpop.f32.mrf.mxu0
      %v5124 = vadd.f32 0.0, %v5123
      %v5125 = vpop.f32.mrf.mxu0
      %v5126 = vadd.f32 0.0, %v5125
      %v5127 = vpop.f32.mrf.mxu0
      %v5128 = vadd.f32 0.0, %v5127
      %v5129 = vpop.f32.mrf.mxu0
      %v5130 = vadd.f32 0.0, %v5129
      %5131 = vmatprep.mubr.bf16.mxu0 0
      %5132 = vmatmul.mubr.bf16.gmra.mxu0 %v4989
      %v5133 = vpop.f32.mrf.mxu0
      %v5134 = vadd.f32 0.0, %v5133
      %v5135 = vpop.f32.mrf.mxu0
      %v5136 = vadd.f32 0.0, %v5135
      %v5137 = vpop.f32.mrf.mxu0
      %v5138 = vadd.f32 0.0, %v5137
      %v5139 = vpop.f32.mrf.mxu0
      %v5140 = vadd.f32 0.0, %v5139
      %5141 = vmatprep.mubr.bf16.mxu0 0
      %5142 = vmatmul.mubr.bf16.gmra.mxu0 %v4992
      %v5143 = vpop.f32.mrf.mxu0
      %v5144 = vadd.f32 0.0, %v5143
      %v5145 = vpop.f32.mrf.mxu0
      %v5146 = vadd.f32 0.0, %v5145
      %v5147 = vpop.f32.mrf.mxu0
      %v5148 = vadd.f32 0.0, %v5147
      %v5149 = vpop.f32.mrf.mxu0
      %v5150 = vadd.f32 0.0, %v5149
      %5151 = vmatprep.mubr.bf16.mxu0 0
      %5152 = vmatmul.mubr.bf16.gmra.mxu0 %v4995
      %v5153 = vpop.f32.mrf.mxu0
      %v5154 = vadd.f32 0.0, %v5153
      %v5155 = vpop.f32.mrf.mxu0
      %v5156 = vadd.f32 0.0, %v5155
      %v5157 = vpop.f32.mrf.mxu0
      %v5158 = vadd.f32 0.0, %v5157
      %v5159 = vpop.f32.mrf.mxu0
      %v5160 = vadd.f32 0.0, %v5159
      %5161 = vmatprep.mubr.bf16.mxu0 0
      %5162 = vmatmul.mubr.bf16.gmra.mxu0 %v4998
      %v5163 = vpop.f32.mrf.mxu0
      %v5164 = vadd.f32 0.0, %v5163
      %v5165 = vpop.f32.mrf.mxu0
      %v5166 = vadd.f32 0.0, %v5165
      %v5167 = vpop.f32.mrf.mxu0
      %v5168 = vadd.f32 0.0, %v5167
      %v5169 = vpop.f32.mrf.mxu0
      %v5170 = vadd.f32 0.0, %v5169
      %5171 = vmatprep.mubr.bf16.mxu0 0
      %5172 = vmatmul.mubr.bf16.gmra.mxu0 %v5001
      %v5173 = vpop.f32.mrf.mxu0
      %v5174 = vadd.f32 0.0, %v5173
      %v5175 = vpop.f32.mrf.mxu0
      %v5176 = vadd.f32 0.0, %v5175
      %v5177 = vpop.f32.mrf.mxu0
      %v5178 = vadd.f32 0.0, %v5177
      %v5179 = vpop.f32.mrf.mxu0
      %v5180 = vadd.f32 0.0, %v5179
      %5181 = vmatprep.mubr.bf16.mxu0 0
      %5182 = vmatmul.mubr.bf16.gmra.mxu0 %v5004
      %v5183 = vpop.f32.mrf.mxu0
      %v5184 = vadd.f32 0.0, %v5183
      %v5185 = vpop.f32.mrf.mxu0
      %v5186 = vadd.f32 0.0, %v5185
      %v5187 = vpop.f32.mrf.mxu0
      %v5188 = vadd.f32 0.0, %v5187
      %v5189 = vpop.f32.mrf.mxu0
      %v5190 = vadd.f32 0.0, %v5189
      %5191 = vmatprep.mubr.bf16.mxu0 0
      %5192 = vmatmul.mubr.bf16.gmra.mxu0 %v5007
      %v5193 = vpop.f32.mrf.mxu0
      %v5194 = vadd.f32 0.0, %v5193
      %v5195 = vpop.f32.mrf.mxu0
      %v5196 = vadd.f32 0.0, %v5195
      %v5197 = vpop.f32.mrf.mxu0
      %v5198 = vadd.f32 0.0, %v5197
      %v5199 = vpop.f32.mrf.mxu0
      %v5200 = vadd.f32 0.0, %v5199
      %5201 = vdwg.mxu0
      %v5202 = vadd.f32 %v4825, %v5044
      %v5203 = vadd.f32 %v4826, %v5046
      %v5204 = vadd.f32 %v4827, %v5048
      %v5205 = vadd.f32 %v4828, %v5050
      %v5206 = vadd.f32 %v4829, %v5054
      %v5207 = vadd.f32 %v4830, %v5056
      %v5208 = vadd.f32 %v4831, %v5058
      %v5209 = vadd.f32 %v4832, %v5060
      %v5210 = vadd.f32 %v4833, %v5064
      %v5211 = vadd.f32 %v4834, %v5066
      %v5212 = vadd.f32 %v4835, %v5068
      %v5213 = vadd.f32 %v4836, %v5070
      %v5214 = vadd.f32 %v4837, %v5074
      %v5215 = vadd.f32 %v4838, %v5076
      %v5216 = vadd.f32 %v4839, %v5078
      %v5217 = vadd.f32 %v4840, %v5080
      %v5218 = vadd.f32 %v4841, %v5084
      %v5219 = vadd.f32 %v4842, %v5086
      %v5220 = vadd.f32 %v4843, %v5088
      %v5221 = vadd.f32 %v4844, %v5090
      %v5222 = vadd.f32 %v4845, %v5094
      %v5223 = vadd.f32 %v4846, %v5096
      %v5224 = vadd.f32 %v4847, %v5098
      %v5225 = vadd.f32 %v4848, %v5100
      %v5226 = vadd.f32 %v4849, %v5104
      %v5227 = vadd.f32 %v4850, %v5106
      %v5228 = vadd.f32 %v4851, %v5108
      %v5229 = vadd.f32 %v4852, %v5110
      %v5230 = vadd.f32 %v4853, %v5114
      %v5231 = vadd.f32 %v4854, %v5116
      %v5232 = vadd.f32 %v4855, %v5118
      %v5233 = vadd.f32 %v4856, %v5120
      %v5234 = vadd.f32 %v4857, %v5124
      %v5235 = vadd.f32 %v4858, %v5126
      %v5236 = vadd.f32 %v4859, %v5128
      %v5237 = vadd.f32 %v4860, %v5130
      %v5238 = vadd.f32 %v4861, %v5134
      %v5239 = vadd.f32 %v4862, %v5136
      %v5240 = vadd.f32 %v4863, %v5138
      %v5241 = vadd.f32 %v4864, %v5140
      %v5242 = vadd.f32 %v4865, %v5144
      %v5243 = vadd.f32 %v4866, %v5146
      %v5244 = vadd.f32 %v4867, %v5148
      %v5245 = vadd.f32 %v4868, %v5150
      %v5246 = vadd.f32 %v4869, %v5154
      %v5247 = vadd.f32 %v4870, %v5156
      %v5248 = vadd.f32 %v4871, %v5158
      %v5249 = vadd.f32 %v4872, %v5160
      %v5250 = vadd.f32 %v4873, %v5164
      %v5251 = vadd.f32 %v4874, %v5166
      %v5252 = vadd.f32 %v4875, %v5168
      %v5253 = vadd.f32 %v4876, %v5170
      %v5254 = vadd.f32 %v4877, %v5174
      %v5255 = vadd.f32 %v4878, %v5176
      %v5256 = vadd.f32 %v4879, %v5178
      %v5257 = vadd.f32 %v4880, %v5180
      %v5258 = vadd.f32 %v4881, %v5184
      %v5259 = vadd.f32 %v4882, %v5186
      %v5260 = vadd.f32 %v4883, %v5188
      %v5261 = vadd.f32 %v4884, %v5190
      %v5262 = vadd.f32 %v4885, %v5194
      %v5263 = vadd.f32 %v4886, %v5196
      %v5264 = vadd.f32 %v4887, %v5198
      %v5265 = vadd.f32 %v4888, %v5200
      %s5266 = scalar_lea.vmem [#allocation3], 48
      %v5267 = vld [vmem:[%s5266] sm:$0xff]
      %v5268 = vld [vmem:[%s5266 + $0x8] sm:$0xff]
      %v5269 = vld [vmem:[%s5266 + $0x18] sm:$0xff]
      %v5270 = vld [vmem:[%s5266 + $0x20] sm:$0xff]
      %v5271 = vld [vmem:[%s5266 + $0x30] sm:$0xff]
      %v5272 = vld [vmem:[%s5266 + $0x38] sm:$0xff]
      %v5273 = vld [vmem:[%s5266 + $0x48] sm:$0xff]
      %v5274 = vld [vmem:[%s5266 + $0x50] sm:$0xff]
      %v5275 = vld [vmem:[%s5266 + $0x60] sm:$0xff]
      %v5276 = vld [vmem:[%s5266 + $0x68] sm:$0xff]
      %v5277 = vld [vmem:[%s5266 + $0x78] sm:$0xff]
      %v5278 = vld [vmem:[%s5266 + $0x80] sm:$0xff]
      %v5279 = vld [vmem:[%s5266 + $0x90] sm:$0xff]
      %v5280 = vld [vmem:[%s5266 + $0x98] sm:$0xff]
      %v5281 = vld [vmem:[%s5266 + $0xa8] sm:$0xff]
      %v5282 = vld [vmem:[%s5266 + $0xb0] sm:$0xff]
      %v5283 = vld [vmem:[%s5266 + $0xc0] sm:$0xff]
      %v5284 = vld [vmem:[%s5266 + $0xc8] sm:$0xff]
      %v5285 = vld [vmem:[%s5266 + $0xd8] sm:$0xff]
      %v5286 = vld [vmem:[%s5266 + $0xe0] sm:$0xff]
      %v5287 = vld [vmem:[%s5266 + $0xf0] sm:$0xff]
      %v5288 = vld [vmem:[%s5266 + $0xf8] sm:$0xff]
      %v5289 = vld [vmem:[%s5266 + $0x108] sm:$0xff]
      %v5290 = vld [vmem:[%s5266 + $0x110] sm:$0xff]
      %v5291 = vld [vmem:[%s5266 + $0x120] sm:$0xff]
      %v5292 = vld [vmem:[%s5266 + $0x128] sm:$0xff]
      %v5293 = vld [vmem:[%s5266 + $0x138] sm:$0xff]
      %v5294 = vld [vmem:[%s5266 + $0x140] sm:$0xff]
      %v5295 = vld [vmem:[%s5266 + $0x150] sm:$0xff]
      %v5296 = vld [vmem:[%s5266 + $0x158] sm:$0xff]
      %v5297 = vld [vmem:[%s5266 + $0x168] sm:$0xff]
      %v5298 = vld [vmem:[%s5266 + $0x170] sm:$0xff]
      %v5299 = vpack.c.bf16 %v5268, %v5267
      %v5300 = vpack.c.bf16 %v5270, %v5269
      %v5301 = vpack.c.bf16 %v5272, %v5271
      %v5302 = vpack.c.bf16 %v5274, %v5273
      %v5303 = vpack.c.bf16 %v5276, %v5275
      %v5304 = vpack.c.bf16 %v5278, %v5277
      %v5305 = vpack.c.bf16 %v5280, %v5279
      %v5306 = vpack.c.bf16 %v5282, %v5281
      %v5307 = vpack.c.bf16 %v5284, %v5283
      %v5308 = vpack.c.bf16 %v5286, %v5285
      %v5309 = vpack.c.bf16 %v5288, %v5287
      %v5310 = vpack.c.bf16 %v5290, %v5289
      %v5311 = vpack.c.bf16 %v5292, %v5291
      %v5312 = vpack.c.bf16 %v5294, %v5293
      %v5313 = vpack.c.bf16 %v5296, %v5295
      %v5314 = vpack.c.bf16 %v5298, %v5297
      %v5315 = vld [vmem:[%s3 + $0xc0] sm:$0xff]
      %v5316 = vld [vmem:[%s3 + $0xc8] sm:$0xff]
      %v5317 = vld [vmem:[%s3 + $0xd0] sm:$0xff]
      %v5318 = vld [vmem:[%s3 + $0xd8] sm:$0xff]
      %v5323 = vunpack.c.l.b16 %v5315
      %v5324 = vunpack.c.h.b16 %v5315
      %v5325 = vunpack.c.l.b16 %v5316
      %v5326 = vunpack.c.h.b16 %v5316
      %v5327 = vunpack.c.l.b16 %v5317
      %v5328 = vunpack.c.h.b16 %v5317
      %v5329 = vunpack.c.l.b16 %v5318
      %v5330 = vunpack.c.h.b16 %v5318
      %v5331 = vpack.c.b16 %v5325, %v5323
      %v5332 = vpack.c.b16 %v5326, %v5324
      %v5333 = vpack.c.b16 %v5329, %v5327
      %v5334 = vpack.c.b16 %v5330, %v5328
      %v5340 = vsel %vm326, %v5299, 0
      %v5343 = vsel %vm326, %v5300, 0
      %v5346 = vsel %vm326, %v5301, 0
      %v5349 = vsel %vm326, %v5302, 0
      %v5352 = vsel %vm326, %v5303, 0
      %v5355 = vsel %vm326, %v5304, 0
      %v5358 = vsel %vm326, %v5305, 0
      %v5361 = vsel %vm326, %v5306, 0
      %v5364 = vsel %vm326, %v5307, 0
      %v5367 = vsel %vm326, %v5308, 0
      %v5370 = vsel %vm326, %v5309, 0
      %v5373 = vsel %vm326, %v5310, 0
      %v5376 = vsel %vm326, %v5311, 0
      %v5379 = vsel %vm326, %v5312, 0
      %v5382 = vsel %vm326, %v5313, 0
      %v5385 = vsel %vm326, %v5314, 0
      %5387 = vmatprep.subr.bf16.mxu0 0
      %5388 = vmatpush1.bf16.msra.mxu0 0
      %5389 = vmatprep.subr.bf16.mxu0 0
      %5390 = vmatpush1.bf16.msra.mxu0 0
      %5391 = vmatprep.subr.bf16.mxu0 0
      %5392 = vmatpush1.bf16.msra.mxu0 0
      %5393 = vmatprep.subr.bf16.mxu0 0
      %5394 = vmatpush1.bf16.msra.mxu0 0
      %5395 = vmatprep.subr.bf16.mxu0 0
      %5396 = vmatpush1.bf16.msra.mxu0 0
      %5397 = vmatprep.subr.bf16.mxu0 0
      %5398 = vmatpush1.bf16.msra.mxu0 0
      %5399 = vmatprep.subr.bf16.mxu0 %v5334
      %5400 = vmatpush1.bf16.msra.mxu0 %v5333
      %5401 = vmatprep.subr.bf16.mxu0 %v5332
      %5402 = vmatpush1.bf16.msra.mxu0 %v5331
      %5403 = vmatprep.subr.bf16.mxu0 0
      %5404 = vmatpush2.bf16.msra.mxu0 0
      %5405 = vmatprep.subr.bf16.mxu0 0
      %5406 = vmatpush2.bf16.msra.mxu0 0
      %5407 = vmatprep.subr.bf16.mxu0 0
      %5408 = vmatpush2.bf16.msra.mxu0 0
      %5409 = vmatprep.subr.bf16.mxu0 0
      %5410 = vmatpush2.bf16.msra.mxu0 0
      %5411 = vmatprep.subr.bf16.mxu0 0
      %5412 = vmatpush2.bf16.msra.mxu0 0
      %5413 = vmatprep.subr.bf16.mxu0 0
      %5414 = vmatpush2.bf16.msra.mxu0 0
      %5415 = vmatprep.subr.bf16.mxu0 0
      %5416 = vmatpush2.bf16.msra.mxu0 0
      %5417 = vmatprep.subr.bf16.mxu0 0
      %5418 = vmatpush2.bf16.msra.mxu0 0
      %5419 = vmatprep.mubr.bf16.mxu0 0
      %5420 = vmatmul.mubr.bf16.gmra.mxu0 %v5340
      %v5421 = vpop.f32.mrf.mxu0
      %v5422 = vadd.f32 0.0, %v5421
      %v5423 = vpop.f32.mrf.mxu0
      %v5424 = vadd.f32 0.0, %v5423
      %v5425 = vpop.f32.mrf.mxu0
      %v5426 = vadd.f32 0.0, %v5425
      %v5427 = vpop.f32.mrf.mxu0
      %v5428 = vadd.f32 0.0, %v5427
      %5429 = vmatprep.mubr.bf16.mxu0 0
      %5430 = vmatmul.mubr.bf16.gmra.mxu0 %v5343
      %v5431 = vpop.f32.mrf.mxu0
      %v5432 = vadd.f32 0.0, %v5431
      %v5433 = vpop.f32.mrf.mxu0
      %v5434 = vadd.f32 0.0, %v5433
      %v5435 = vpop.f32.mrf.mxu0
      %v5436 = vadd.f32 0.0, %v5435
      %v5437 = vpop.f32.mrf.mxu0
      %v5438 = vadd.f32 0.0, %v5437
      %5439 = vmatprep.mubr.bf16.mxu0 0
      %5440 = vmatmul.mubr.bf16.gmra.mxu0 %v5346
      %v5441 = vpop.f32.mrf.mxu0
      %v5442 = vadd.f32 0.0, %v5441
      %v5443 = vpop.f32.mrf.mxu0
      %v5444 = vadd.f32 0.0, %v5443
      %v5445 = vpop.f32.mrf.mxu0
      %v5446 = vadd.f32 0.0, %v5445
      %v5447 = vpop.f32.mrf.mxu0
      %v5448 = vadd.f32 0.0, %v5447
      %5449 = vmatprep.mubr.bf16.mxu0 0
      %5450 = vmatmul.mubr.bf16.gmra.mxu0 %v5349
      %v5451 = vpop.f32.mrf.mxu0
      %v5452 = vadd.f32 0.0, %v5451
      %v5453 = vpop.f32.mrf.mxu0
      %v5454 = vadd.f32 0.0, %v5453
      %v5455 = vpop.f32.mrf.mxu0
      %v5456 = vadd.f32 0.0, %v5455
      %v5457 = vpop.f32.mrf.mxu0
      %v5458 = vadd.f32 0.0, %v5457
      %5459 = vmatprep.mubr.bf16.mxu0 0
      %5460 = vmatmul.mubr.bf16.gmra.mxu0 %v5352
      %v5461 = vpop.f32.mrf.mxu0
      %v5462 = vadd.f32 0.0, %v5461
      %v5463 = vpop.f32.mrf.mxu0
      %v5464 = vadd.f32 0.0, %v5463
      %v5465 = vpop.f32.mrf.mxu0
      %v5466 = vadd.f32 0.0, %v5465
      %v5467 = vpop.f32.mrf.mxu0
      %v5468 = vadd.f32 0.0, %v5467
      %5469 = vmatprep.mubr.bf16.mxu0 0
      %5470 = vmatmul.mubr.bf16.gmra.mxu0 %v5355
      %v5471 = vpop.f32.mrf.mxu0
      %v5472 = vadd.f32 0.0, %v5471
      %v5473 = vpop.f32.mrf.mxu0
      %v5474 = vadd.f32 0.0, %v5473
      %v5475 = vpop.f32.mrf.mxu0
      %v5476 = vadd.f32 0.0, %v5475
      %v5477 = vpop.f32.mrf.mxu0
      %v5478 = vadd.f32 0.0, %v5477
      %5479 = vmatprep.mubr.bf16.mxu0 0
      %5480 = vmatmul.mubr.bf16.gmra.mxu0 %v5358
      %v5481 = vpop.f32.mrf.mxu0
      %v5482 = vadd.f32 0.0, %v5481
      %v5483 = vpop.f32.mrf.mxu0
      %v5484 = vadd.f32 0.0, %v5483
      %v5485 = vpop.f32.mrf.mxu0
      %v5486 = vadd.f32 0.0, %v5485
      %v5487 = vpop.f32.mrf.mxu0
      %v5488 = vadd.f32 0.0, %v5487
      %5489 = vmatprep.mubr.bf16.mxu0 0
      %5490 = vmatmul.mubr.bf16.gmra.mxu0 %v5361
      %v5491 = vpop.f32.mrf.mxu0
      %v5492 = vadd.f32 0.0, %v5491
      %v5493 = vpop.f32.mrf.mxu0
      %v5494 = vadd.f32 0.0, %v5493
      %v5495 = vpop.f32.mrf.mxu0
      %v5496 = vadd.f32 0.0, %v5495
      %v5497 = vpop.f32.mrf.mxu0
      %v5498 = vadd.f32 0.0, %v5497
      %5499 = vmatprep.mubr.bf16.mxu0 0
      %5500 = vmatmul.mubr.bf16.gmra.mxu0 %v5364
      %v5501 = vpop.f32.mrf.mxu0
      %v5502 = vadd.f32 0.0, %v5501
      %v5503 = vpop.f32.mrf.mxu0
      %v5504 = vadd.f32 0.0, %v5503
      %v5505 = vpop.f32.mrf.mxu0
      %v5506 = vadd.f32 0.0, %v5505
      %v5507 = vpop.f32.mrf.mxu0
      %v5508 = vadd.f32 0.0, %v5507
      %5509 = vmatprep.mubr.bf16.mxu0 0
      %5510 = vmatmul.mubr.bf16.gmra.mxu0 %v5367
      %v5511 = vpop.f32.mrf.mxu0
      %v5512 = vadd.f32 0.0, %v5511
      %v5513 = vpop.f32.mrf.mxu0
      %v5514 = vadd.f32 0.0, %v5513
      %v5515 = vpop.f32.mrf.mxu0
      %v5516 = vadd.f32 0.0, %v5515
      %v5517 = vpop.f32.mrf.mxu0
      %v5518 = vadd.f32 0.0, %v5517
      %5519 = vmatprep.mubr.bf16.mxu0 0
      %5520 = vmatmul.mubr.bf16.gmra.mxu0 %v5370
      %v5521 = vpop.f32.mrf.mxu0
      %v5522 = vadd.f32 0.0, %v5521
      %v5523 = vpop.f32.mrf.mxu0
      %v5524 = vadd.f32 0.0, %v5523
      %v5525 = vpop.f32.mrf.mxu0
      %v5526 = vadd.f32 0.0, %v5525
      %v5527 = vpop.f32.mrf.mxu0
      %v5528 = vadd.f32 0.0, %v5527
      %5529 = vmatprep.mubr.bf16.mxu0 0
      %5530 = vmatmul.mubr.bf16.gmra.mxu0 %v5373
      %v5531 = vpop.f32.mrf.mxu0
      %v5532 = vadd.f32 0.0, %v5531
      %v5533 = vpop.f32.mrf.mxu0
      %v5534 = vadd.f32 0.0, %v5533
      %v5535 = vpop.f32.mrf.mxu0
      %v5536 = vadd.f32 0.0, %v5535
      %v5537 = vpop.f32.mrf.mxu0
      %v5538 = vadd.f32 0.0, %v5537
      %5539 = vmatprep.mubr.bf16.mxu0 0
      %5540 = vmatmul.mubr.bf16.gmra.mxu0 %v5376
      %v5541 = vpop.f32.mrf.mxu0
      %v5542 = vadd.f32 0.0, %v5541
      %v5543 = vpop.f32.mrf.mxu0
      %v5544 = vadd.f32 0.0, %v5543
      %v5545 = vpop.f32.mrf.mxu0
      %v5546 = vadd.f32 0.0, %v5545
      %v5547 = vpop.f32.mrf.mxu0
      %v5548 = vadd.f32 0.0, %v5547
      %5549 = vmatprep.mubr.bf16.mxu0 0
      %5550 = vmatmul.mubr.bf16.gmra.mxu0 %v5379
      %v5551 = vpop.f32.mrf.mxu0
      %v5552 = vadd.f32 0.0, %v5551
      %v5553 = vpop.f32.mrf.mxu0
      %v5554 = vadd.f32 0.0, %v5553
      %v5555 = vpop.f32.mrf.mxu0
      %v5556 = vadd.f32 0.0, %v5555
      %v5557 = vpop.f32.mrf.mxu0
      %v5558 = vadd.f32 0.0, %v5557
      %5559 = vmatprep.mubr.bf16.mxu0 0
      %5560 = vmatmul.mubr.bf16.gmra.mxu0 %v5382
      %v5561 = vpop.f32.mrf.mxu0
      %v5562 = vadd.f32 0.0, %v5561
      %v5563 = vpop.f32.mrf.mxu0
      %v5564 = vadd.f32 0.0, %v5563
      %v5565 = vpop.f32.mrf.mxu0
      %v5566 = vadd.f32 0.0, %v5565
      %v5567 = vpop.f32.mrf.mxu0
      %v5568 = vadd.f32 0.0, %v5567
      %5569 = vmatprep.mubr.bf16.mxu0 0
      %5570 = vmatmul.mubr.bf16.gmra.mxu0 %v5385
      %v5571 = vpop.f32.mrf.mxu0
      %v5572 = vadd.f32 0.0, %v5571
      %v5573 = vpop.f32.mrf.mxu0
      %v5574 = vadd.f32 0.0, %v5573
      %v5575 = vpop.f32.mrf.mxu0
      %v5576 = vadd.f32 0.0, %v5575
      %v5577 = vpop.f32.mrf.mxu0
      %v5578 = vadd.f32 0.0, %v5577
      %5579 = vdwg.mxu0
      %v5580 = vadd.f32 %v5202, %v5422
      %v5581 = vadd.f32 %v5203, %v5424
      %v5582 = vadd.f32 %v5204, %v5426
      %v5583 = vadd.f32 %v5205, %v5428
      %v5584 = vadd.f32 %v5206, %v5432
      %v5585 = vadd.f32 %v5207, %v5434
      %v5586 = vadd.f32 %v5208, %v5436
      %v5587 = vadd.f32 %v5209, %v5438
      %v5588 = vadd.f32 %v5210, %v5442
      %v5589 = vadd.f32 %v5211, %v5444
      %v5590 = vadd.f32 %v5212, %v5446
      %v5591 = vadd.f32 %v5213, %v5448
      %v5592 = vadd.f32 %v5214, %v5452
      %v5593 = vadd.f32 %v5215, %v5454
      %v5594 = vadd.f32 %v5216, %v5456
      %v5595 = vadd.f32 %v5217, %v5458
      %v5596 = vadd.f32 %v5218, %v5462
      %v5597 = vadd.f32 %v5219, %v5464
      %v5598 = vadd.f32 %v5220, %v5466
      %v5599 = vadd.f32 %v5221, %v5468
      %v5600 = vadd.f32 %v5222, %v5472
      %v5601 = vadd.f32 %v5223, %v5474
      %v5602 = vadd.f32 %v5224, %v5476
      %v5603 = vadd.f32 %v5225, %v5478
      %v5604 = vadd.f32 %v5226, %v5482
      %v5605 = vadd.f32 %v5227, %v5484
      %v5606 = vadd.f32 %v5228, %v5486
      %v5607 = vadd.f32 %v5229, %v5488
      %v5608 = vadd.f32 %v5230, %v5492
      %v5609 = vadd.f32 %v5231, %v5494
      %v5610 = vadd.f32 %v5232, %v5496
      %v5611 = vadd.f32 %v5233, %v5498
      %v5612 = vadd.f32 %v5234, %v5502
      %v5613 = vadd.f32 %v5235, %v5504
      %v5614 = vadd.f32 %v5236, %v5506
      %v5615 = vadd.f32 %v5237, %v5508
      %v5616 = vadd.f32 %v5238, %v5512
      %v5617 = vadd.f32 %v5239, %v5514
      %v5618 = vadd.f32 %v5240, %v5516
      %v5619 = vadd.f32 %v5241, %v5518
      %v5620 = vadd.f32 %v5242, %v5522
      %v5621 = vadd.f32 %v5243, %v5524
      %v5622 = vadd.f32 %v5244, %v5526
      %v5623 = vadd.f32 %v5245, %v5528
      %v5624 = vadd.f32 %v5246, %v5532
      %v5625 = vadd.f32 %v5247, %v5534
      %v5626 = vadd.f32 %v5248, %v5536
      %v5627 = vadd.f32 %v5249, %v5538
      %v5628 = vadd.f32 %v5250, %v5542
      %v5629 = vadd.f32 %v5251, %v5544
      %v5630 = vadd.f32 %v5252, %v5546
      %v5631 = vadd.f32 %v5253, %v5548
      %v5632 = vadd.f32 %v5254, %v5552
      %v5633 = vadd.f32 %v5255, %v5554
      %v5634 = vadd.f32 %v5256, %v5556
      %v5635 = vadd.f32 %v5257, %v5558
      %v5636 = vadd.f32 %v5258, %v5562
      %v5637 = vadd.f32 %v5259, %v5564
      %v5638 = vadd.f32 %v5260, %v5566
      %v5639 = vadd.f32 %v5261, %v5568
      %v5640 = vadd.f32 %v5262, %v5572
      %v5641 = vadd.f32 %v5263, %v5574
      %v5642 = vadd.f32 %v5264, %v5576
      %v5643 = vadd.f32 %v5265, %v5578
      %v5644 = vld [vmem:[%s5266 + $0x1] sm:$0xff]
      %v5645 = vld [vmem:[%s5266 + $0x9] sm:$0xff]
      %v5646 = vld [vmem:[%s5266 + $0x19] sm:$0xff]
      %v5647 = vld [vmem:[%s5266 + $0x21] sm:$0xff]
      %v5648 = vld [vmem:[%s5266 + $0x31] sm:$0xff]
      %v5649 = vld [vmem:[%s5266 + $0x39] sm:$0xff]
      %v5650 = vld [vmem:[%s5266 + $0x49] sm:$0xff]
      %v5651 = vld [vmem:[%s5266 + $0x51] sm:$0xff]
      %v5652 = vld [vmem:[%s5266 + $0x61] sm:$0xff]
      %v5653 = vld [vmem:[%s5266 + $0x69] sm:$0xff]
      %v5654 = vld [vmem:[%s5266 + $0x79] sm:$0xff]
      %v5655 = vld [vmem:[%s5266 + $0x81] sm:$0xff]
      %v5656 = vld [vmem:[%s5266 + $0x91] sm:$0xff]
      %v5657 = vld [vmem:[%s5266 + $0x99] sm:$0xff]
      %v5658 = vld [vmem:[%s5266 + $0xa9] sm:$0xff]
      %v5659 = vld [vmem:[%s5266 + $0xb1] sm:$0xff]
      %v5660 = vld [vmem:[%s5266 + $0xc1] sm:$0xff]
      %v5661 = vld [vmem:[%s5266 + $0xc9] sm:$0xff]
      %v5662 = vld [vmem:[%s5266 + $0xd9] sm:$0xff]
      %v5663 = vld [vmem:[%s5266 + $0xe1] sm:$0xff]
      %v5664 = vld [vmem:[%s5266 + $0xf1] sm:$0xff]
      %v5665 = vld [vmem:[%s5266 + $0xf9] sm:$0xff]
      %v5666 = vld [vmem:[%s5266 + $0x109] sm:$0xff]
      %v5667 = vld [vmem:[%s5266 + $0x111] sm:$0xff]
      %v5668 = vld [vmem:[%s5266 + $0x121] sm:$0xff]
      %v5669 = vld [vmem:[%s5266 + $0x129] sm:$0xff]
      %v5670 = vld [vmem:[%s5266 + $0x139] sm:$0xff]
      %v5671 = vld [vmem:[%s5266 + $0x141] sm:$0xff]
      %v5672 = vld [vmem:[%s5266 + $0x151] sm:$0xff]
      %v5673 = vld [vmem:[%s5266 + $0x159] sm:$0xff]
      %v5674 = vld [vmem:[%s5266 + $0x169] sm:$0xff]
      %v5675 = vld [vmem:[%s5266 + $0x171] sm:$0xff]
      %v5676 = vpack.c.bf16 %v5645, %v5644
      %v5677 = vpack.c.bf16 %v5647, %v5646
      %v5678 = vpack.c.bf16 %v5649, %v5648
      %v5679 = vpack.c.bf16 %v5651, %v5650
      %v5680 = vpack.c.bf16 %v5653, %v5652
      %v5681 = vpack.c.bf16 %v5655, %v5654
      %v5682 = vpack.c.bf16 %v5657, %v5656
      %v5683 = vpack.c.bf16 %v5659, %v5658
      %v5684 = vpack.c.bf16 %v5661, %v5660
      %v5685 = vpack.c.bf16 %v5663, %v5662
      %v5686 = vpack.c.bf16 %v5665, %v5664
      %v5687 = vpack.c.bf16 %v5667, %v5666
      %v5688 = vpack.c.bf16 %v5669, %v5668
      %v5689 = vpack.c.bf16 %v5671, %v5670
      %v5690 = vpack.c.bf16 %v5673, %v5672
      %v5691 = vpack.c.bf16 %v5675, %v5674
      %v5692 = vld [vmem:[%s3 + $0xe0] sm:$0xff]
      %v5693 = vld [vmem:[%s3 + $0xe8] sm:$0xff]
      %v5694 = vld [vmem:[%s3 + $0xf0] sm:$0xff]
      %v5695 = vld [vmem:[%s3 + $0xf8] sm:$0xff]
      %v5700 = vunpack.c.l.b16 %v5692
      %v5701 = vunpack.c.h.b16 %v5692
      %v5702 = vunpack.c.l.b16 %v5693
      %v5703 = vunpack.c.h.b16 %v5693
      %v5704 = vunpack.c.l.b16 %v5694
      %v5705 = vunpack.c.h.b16 %v5694
      %v5706 = vunpack.c.l.b16 %v5695
      %v5707 = vunpack.c.h.b16 %v5695
      %v5708 = vpack.c.b16 %v5702, %v5700
      %v5709 = vpack.c.b16 %v5703, %v5701
      %v5710 = vpack.c.b16 %v5706, %v5704
      %v5711 = vpack.c.b16 %v5707, %v5705
      %v5717 = vsel %vm326, %v5676, 0
      %v5720 = vsel %vm326, %v5677, 0
      %v5723 = vsel %vm326, %v5678, 0
      %v5726 = vsel %vm326, %v5679, 0
      %v5729 = vsel %vm326, %v5680, 0
      %v5732 = vsel %vm326, %v5681, 0
      %v5735 = vsel %vm326, %v5682, 0
      %v5738 = vsel %vm326, %v5683, 0
      %v5741 = vsel %vm326, %v5684, 0
      %v5744 = vsel %vm326, %v5685, 0
      %v5747 = vsel %vm326, %v5686, 0
      %v5750 = vsel %vm326, %v5687, 0
      %v5753 = vsel %vm326, %v5688, 0
      %v5756 = vsel %vm326, %v5689, 0
      %v5759 = vsel %vm326, %v5690, 0
      %v5762 = vsel %vm326, %v5691, 0
      %5764 = vmatprep.subr.bf16.mxu0 0
      %5765 = vmatpush1.bf16.msra.mxu0 0
      %5766 = vmatprep.subr.bf16.mxu0 0
      %5767 = vmatpush1.bf16.msra.mxu0 0
      %5768 = vmatprep.subr.bf16.mxu0 0
      %5769 = vmatpush1.bf16.msra.mxu0 0
      %5770 = vmatprep.subr.bf16.mxu0 0
      %5771 = vmatpush1.bf16.msra.mxu0 0
      %5772 = vmatprep.subr.bf16.mxu0 0
      %5773 = vmatpush1.bf16.msra.mxu0 0
      %5774 = vmatprep.subr.bf16.mxu0 0
      %5775 = vmatpush1.bf16.msra.mxu0 0
      %5776 = vmatprep.subr.bf16.mxu0 %v5711
      %5777 = vmatpush1.bf16.msra.mxu0 %v5710
      %5778 = vmatprep.subr.bf16.mxu0 %v5709
      %5779 = vmatpush1.bf16.msra.mxu0 %v5708
      %5780 = vmatprep.subr.bf16.mxu0 0
      %5781 = vmatpush2.bf16.msra.mxu0 0
      %5782 = vmatprep.subr.bf16.mxu0 0
      %5783 = vmatpush2.bf16.msra.mxu0 0
      %5784 = vmatprep.subr.bf16.mxu0 0
      %5785 = vmatpush2.bf16.msra.mxu0 0
      %5786 = vmatprep.subr.bf16.mxu0 0
      %5787 = vmatpush2.bf16.msra.mxu0 0
      %5788 = vmatprep.subr.bf16.mxu0 0
      %5789 = vmatpush2.bf16.msra.mxu0 0
      %5790 = vmatprep.subr.bf16.mxu0 0
      %5791 = vmatpush2.bf16.msra.mxu0 0
      %5792 = vmatprep.subr.bf16.mxu0 0
      %5793 = vmatpush2.bf16.msra.mxu0 0
      %5794 = vmatprep.subr.bf16.mxu0 0
      %5795 = vmatpush2.bf16.msra.mxu0 0
      %5796 = vmatprep.mubr.bf16.mxu0 0
      %5797 = vmatmul.mubr.bf16.gmra.mxu0 %v5717
      %v5798 = vpop.f32.mrf.mxu0
      %v5799 = vadd.f32 0.0, %v5798
      %v5800 = vpop.f32.mrf.mxu0
      %v5801 = vadd.f32 0.0, %v5800
      %v5802 = vpop.f32.mrf.mxu0
      %v5803 = vadd.f32 0.0, %v5802
      %v5804 = vpop.f32.mrf.mxu0
      %v5805 = vadd.f32 0.0, %v5804
      %5806 = vmatprep.mubr.bf16.mxu0 0
      %5807 = vmatmul.mubr.bf16.gmra.mxu0 %v5720
      %v5808 = vpop.f32.mrf.mxu0
      %v5809 = vadd.f32 0.0, %v5808
      %v5810 = vpop.f32.mrf.mxu0
      %v5811 = vadd.f32 0.0, %v5810
      %v5812 = vpop.f32.mrf.mxu0
      %v5813 = vadd.f32 0.0, %v5812
      %v5814 = vpop.f32.mrf.mxu0
      %v5815 = vadd.f32 0.0, %v5814
      %5816 = vmatprep.mubr.bf16.mxu0 0
      %5817 = vmatmul.mubr.bf16.gmra.mxu0 %v5723
      %v5818 = vpop.f32.mrf.mxu0
      %v5819 = vadd.f32 0.0, %v5818
      %v5820 = vpop.f32.mrf.mxu0
      %v5821 = vadd.f32 0.0, %v5820
      %v5822 = vpop.f32.mrf.mxu0
      %v5823 = vadd.f32 0.0, %v5822
      %v5824 = vpop.f32.mrf.mxu0
      %v5825 = vadd.f32 0.0, %v5824
      %5826 = vmatprep.mubr.bf16.mxu0 0
      %5827 = vmatmul.mubr.bf16.gmra.mxu0 %v5726
      %v5828 = vpop.f32.mrf.mxu0
      %v5829 = vadd.f32 0.0, %v5828
      %v5830 = vpop.f32.mrf.mxu0
      %v5831 = vadd.f32 0.0, %v5830
      %v5832 = vpop.f32.mrf.mxu0
      %v5833 = vadd.f32 0.0, %v5832
      %v5834 = vpop.f32.mrf.mxu0
      %v5835 = vadd.f32 0.0, %v5834
      %5836 = vmatprep.mubr.bf16.mxu0 0
      %5837 = vmatmul.mubr.bf16.gmra.mxu0 %v5729
      %v5838 = vpop.f32.mrf.mxu0
      %v5839 = vadd.f32 0.0, %v5838
      %v5840 = vpop.f32.mrf.mxu0
      %v5841 = vadd.f32 0.0, %v5840
      %v5842 = vpop.f32.mrf.mxu0
      %v5843 = vadd.f32 0.0, %v5842
      %v5844 = vpop.f32.mrf.mxu0
      %v5845 = vadd.f32 0.0, %v5844
      %5846 = vmatprep.mubr.bf16.mxu0 0
      %5847 = vmatmul.mubr.bf16.gmra.mxu0 %v5732
      %v5848 = vpop.f32.mrf.mxu0
      %v5849 = vadd.f32 0.0, %v5848
      %v5850 = vpop.f32.mrf.mxu0
      %v5851 = vadd.f32 0.0, %v5850
      %v5852 = vpop.f32.mrf.mxu0
      %v5853 = vadd.f32 0.0, %v5852
      %v5854 = vpop.f32.mrf.mxu0
      %v5855 = vadd.f32 0.0, %v5854
      %5856 = vmatprep.mubr.bf16.mxu0 0
      %5857 = vmatmul.mubr.bf16.gmra.mxu0 %v5735
      %v5858 = vpop.f32.mrf.mxu0
      %v5859 = vadd.f32 0.0, %v5858
      %v5860 = vpop.f32.mrf.mxu0
      %v5861 = vadd.f32 0.0, %v5860
      %v5862 = vpop.f32.mrf.mxu0
      %v5863 = vadd.f32 0.0, %v5862
      %v5864 = vpop.f32.mrf.mxu0
      %v5865 = vadd.f32 0.0, %v5864
      %5866 = vmatprep.mubr.bf16.mxu0 0
      %5867 = vmatmul.mubr.bf16.gmra.mxu0 %v5738
      %v5868 = vpop.f32.mrf.mxu0
      %v5869 = vadd.f32 0.0, %v5868
      %v5870 = vpop.f32.mrf.mxu0
      %v5871 = vadd.f32 0.0, %v5870
      %v5872 = vpop.f32.mrf.mxu0
      %v5873 = vadd.f32 0.0, %v5872
      %v5874 = vpop.f32.mrf.mxu0
      %v5875 = vadd.f32 0.0, %v5874
      %5876 = vmatprep.mubr.bf16.mxu0 0
      %5877 = vmatmul.mubr.bf16.gmra.mxu0 %v5741
      %v5878 = vpop.f32.mrf.mxu0
      %v5879 = vadd.f32 0.0, %v5878
      %v5880 = vpop.f32.mrf.mxu0
      %v5881 = vadd.f32 0.0, %v5880
      %v5882 = vpop.f32.mrf.mxu0
      %v5883 = vadd.f32 0.0, %v5882
      %v5884 = vpop.f32.mrf.mxu0
      %v5885 = vadd.f32 0.0, %v5884
      %5886 = vmatprep.mubr.bf16.mxu0 0
      %5887 = vmatmul.mubr.bf16.gmra.mxu0 %v5744
      %v5888 = vpop.f32.mrf.mxu0
      %v5889 = vadd.f32 0.0, %v5888
      %v5890 = vpop.f32.mrf.mxu0
      %v5891 = vadd.f32 0.0, %v5890
      %v5892 = vpop.f32.mrf.mxu0
      %v5893 = vadd.f32 0.0, %v5892
      %v5894 = vpop.f32.mrf.mxu0
      %v5895 = vadd.f32 0.0, %v5894
      %5896 = vmatprep.mubr.bf16.mxu0 0
      %5897 = vmatmul.mubr.bf16.gmra.mxu0 %v5747
      %v5898 = vpop.f32.mrf.mxu0
      %v5899 = vadd.f32 0.0, %v5898
      %v5900 = vpop.f32.mrf.mxu0
      %v5901 = vadd.f32 0.0, %v5900
      %v5902 = vpop.f32.mrf.mxu0
      %v5903 = vadd.f32 0.0, %v5902
      %v5904 = vpop.f32.mrf.mxu0
      %v5905 = vadd.f32 0.0, %v5904
      %5906 = vmatprep.mubr.bf16.mxu0 0
      %5907 = vmatmul.mubr.bf16.gmra.mxu0 %v5750
      %v5908 = vpop.f32.mrf.mxu0
      %v5909 = vadd.f32 0.0, %v5908
      %v5910 = vpop.f32.mrf.mxu0
      %v5911 = vadd.f32 0.0, %v5910
      %v5912 = vpop.f32.mrf.mxu0
      %v5913 = vadd.f32 0.0, %v5912
      %v5914 = vpop.f32.mrf.mxu0
      %v5915 = vadd.f32 0.0, %v5914
      %5916 = vmatprep.mubr.bf16.mxu0 0
      %5917 = vmatmul.mubr.bf16.gmra.mxu0 %v5753
      %v5918 = vpop.f32.mrf.mxu0
      %v5919 = vadd.f32 0.0, %v5918
      %v5920 = vpop.f32.mrf.mxu0
      %v5921 = vadd.f32 0.0, %v5920
      %v5922 = vpop.f32.mrf.mxu0
      %v5923 = vadd.f32 0.0, %v5922
      %v5924 = vpop.f32.mrf.mxu0
      %v5925 = vadd.f32 0.0, %v5924
      %5926 = vmatprep.mubr.bf16.mxu0 0
      %5927 = vmatmul.mubr.bf16.gmra.mxu0 %v5756
      %v5928 = vpop.f32.mrf.mxu0
      %v5929 = vadd.f32 0.0, %v5928
      %v5930 = vpop.f32.mrf.mxu0
      %v5931 = vadd.f32 0.0, %v5930
      %v5932 = vpop.f32.mrf.mxu0
      %v5933 = vadd.f32 0.0, %v5932
      %v5934 = vpop.f32.mrf.mxu0
      %v5935 = vadd.f32 0.0, %v5934
      %5936 = vmatprep.mubr.bf16.mxu0 0
      %5937 = vmatmul.mubr.bf16.gmra.mxu0 %v5759
      %v5938 = vpop.f32.mrf.mxu0
      %v5939 = vadd.f32 0.0, %v5938
      %v5940 = vpop.f32.mrf.mxu0
      %v5941 = vadd.f32 0.0, %v5940
      %v5942 = vpop.f32.mrf.mxu0
      %v5943 = vadd.f32 0.0, %v5942
      %v5944 = vpop.f32.mrf.mxu0
      %v5945 = vadd.f32 0.0, %v5944
      %5946 = vmatprep.mubr.bf16.mxu0 0
      %5947 = vmatmul.mubr.bf16.gmra.mxu0 %v5762
      %v5948 = vpop.f32.mrf.mxu0
      %v5949 = vadd.f32 0.0, %v5948
      %v5950 = vpop.f32.mrf.mxu0
      %v5951 = vadd.f32 0.0, %v5950
      %v5952 = vpop.f32.mrf.mxu0
      %v5953 = vadd.f32 0.0, %v5952
      %v5954 = vpop.f32.mrf.mxu0
      %v5955 = vadd.f32 0.0, %v5954
      %5956 = vdwg.mxu0
      %v5957 = vadd.f32 %v5580, %v5799
      %v5958 = vadd.f32 %v5581, %v5801
      %v5959 = vadd.f32 %v5582, %v5803
      %v5960 = vadd.f32 %v5583, %v5805
      %v5961 = vadd.f32 %v5584, %v5809
      %v5962 = vadd.f32 %v5585, %v5811
      %v5963 = vadd.f32 %v5586, %v5813
      %v5964 = vadd.f32 %v5587, %v5815
      %v5965 = vadd.f32 %v5588, %v5819
      %v5966 = vadd.f32 %v5589, %v5821
      %v5967 = vadd.f32 %v5590, %v5823
      %v5968 = vadd.f32 %v5591, %v5825
      %v5969 = vadd.f32 %v5592, %v5829
      %v5970 = vadd.f32 %v5593, %v5831
      %v5971 = vadd.f32 %v5594, %v5833
      %v5972 = vadd.f32 %v5595, %v5835
      %v5973 = vadd.f32 %v5596, %v5839
      %v5974 = vadd.f32 %v5597, %v5841
      %v5975 = vadd.f32 %v5598, %v5843
      %v5976 = vadd.f32 %v5599, %v5845
      %v5977 = vadd.f32 %v5600, %v5849
      %v5978 = vadd.f32 %v5601, %v5851
      %v5979 = vadd.f32 %v5602, %v5853
      %v5980 = vadd.f32 %v5603, %v5855
      %v5981 = vadd.f32 %v5604, %v5859
      %v5982 = vadd.f32 %v5605, %v5861
      %v5983 = vadd.f32 %v5606, %v5863
      %v5984 = vadd.f32 %v5607, %v5865
      %v5985 = vadd.f32 %v5608, %v5869
      %v5986 = vadd.f32 %v5609, %v5871
      %v5987 = vadd.f32 %v5610, %v5873
      %v5988 = vadd.f32 %v5611, %v5875
      %v5989 = vadd.f32 %v5612, %v5879
      %v5990 = vadd.f32 %v5613, %v5881
      %v5991 = vadd.f32 %v5614, %v5883
      %v5992 = vadd.f32 %v5615, %v5885
      %v5993 = vadd.f32 %v5616, %v5889
      %v5994 = vadd.f32 %v5617, %v5891
      %v5995 = vadd.f32 %v5618, %v5893
      %v5996 = vadd.f32 %v5619, %v5895
      %v5997 = vadd.f32 %v5620, %v5899
      %v5998 = vadd.f32 %v5621, %v5901
      %v5999 = vadd.f32 %v5622, %v5903
      %v6000 = vadd.f32 %v5623, %v5905
      %v6001 = vadd.f32 %v5624, %v5909
      %v6002 = vadd.f32 %v5625, %v5911
      %v6003 = vadd.f32 %v5626, %v5913
      %v6004 = vadd.f32 %v5627, %v5915
      %v6005 = vadd.f32 %v5628, %v5919
      %v6006 = vadd.f32 %v5629, %v5921
      %v6007 = vadd.f32 %v5630, %v5923
      %v6008 = vadd.f32 %v5631, %v5925
      %v6009 = vadd.f32 %v5632, %v5929
      %v6010 = vadd.f32 %v5633, %v5931
      %v6011 = vadd.f32 %v5634, %v5933
      %v6012 = vadd.f32 %v5635, %v5935
      %v6013 = vadd.f32 %v5636, %v5939
      %v6014 = vadd.f32 %v5637, %v5941
      %v6015 = vadd.f32 %v5638, %v5943
      %v6016 = vadd.f32 %v5639, %v5945
      %v6017 = vadd.f32 %v5640, %v5949
      %v6018 = vadd.f32 %v5641, %v5951
      %v6019 = vadd.f32 %v5642, %v5953
      %v6020 = vadd.f32 %v5643, %v5955
      %v6021 = vld [vmem:[%s5266 + $0x2] sm:$0xff]
      %v6022 = vld [vmem:[%s5266 + $0xa] sm:$0xff]
      %v6023 = vld [vmem:[%s5266 + $0x1a] sm:$0xff]
      %v6024 = vld [vmem:[%s5266 + $0x22] sm:$0xff]
      %v6025 = vld [vmem:[%s5266 + $0x32] sm:$0xff]
      %v6026 = vld [vmem:[%s5266 + $0x3a] sm:$0xff]
      %v6027 = vld [vmem:[%s5266 + $0x4a] sm:$0xff]
      %v6028 = vld [vmem:[%s5266 + $0x52] sm:$0xff]
      %v6029 = vld [vmem:[%s5266 + $0x62] sm:$0xff]
      %v6030 = vld [vmem:[%s5266 + $0x6a] sm:$0xff]
      %v6031 = vld [vmem:[%s5266 + $0x7a] sm:$0xff]
      %v6032 = vld [vmem:[%s5266 + $0x82] sm:$0xff]
      %v6033 = vld [vmem:[%s5266 + $0x92] sm:$0xff]
      %v6034 = vld [vmem:[%s5266 + $0x9a] sm:$0xff]
      %v6035 = vld [vmem:[%s5266 + $0xaa] sm:$0xff]
      %v6036 = vld [vmem:[%s5266 + $0xb2] sm:$0xff]
      %v6037 = vld [vmem:[%s5266 + $0xc2] sm:$0xff]
      %v6038 = vld [vmem:[%s5266 + $0xca] sm:$0xff]
      %v6039 = vld [vmem:[%s5266 + $0xda] sm:$0xff]
      %v6040 = vld [vmem:[%s5266 + $0xe2] sm:$0xff]
      %v6041 = vld [vmem:[%s5266 + $0xf2] sm:$0xff]
      %v6042 = vld [vmem:[%s5266 + $0xfa] sm:$0xff]
      %v6043 = vld [vmem:[%s5266 + $0x10a] sm:$0xff]
      %v6044 = vld [vmem:[%s5266 + $0x112] sm:$0xff]
      %v6045 = vld [vmem:[%s5266 + $0x122] sm:$0xff]
      %v6046 = vld [vmem:[%s5266 + $0x12a] sm:$0xff]
      %v6047 = vld [vmem:[%s5266 + $0x13a] sm:$0xff]
      %v6048 = vld [vmem:[%s5266 + $0x142] sm:$0xff]
      %v6049 = vld [vmem:[%s5266 + $0x152] sm:$0xff]
      %v6050 = vld [vmem:[%s5266 + $0x15a] sm:$0xff]
      %v6051 = vld [vmem:[%s5266 + $0x16a] sm:$0xff]
      %v6052 = vld [vmem:[%s5266 + $0x172] sm:$0xff]
      %v6053 = vpack.c.bf16 %v6022, %v6021
      %v6054 = vpack.c.bf16 %v6024, %v6023
      %v6055 = vpack.c.bf16 %v6026, %v6025
      %v6056 = vpack.c.bf16 %v6028, %v6027
      %v6057 = vpack.c.bf16 %v6030, %v6029
      %v6058 = vpack.c.bf16 %v6032, %v6031
      %v6059 = vpack.c.bf16 %v6034, %v6033
      %v6060 = vpack.c.bf16 %v6036, %v6035
      %v6061 = vpack.c.bf16 %v6038, %v6037
      %v6062 = vpack.c.bf16 %v6040, %v6039
      %v6063 = vpack.c.bf16 %v6042, %v6041
      %v6064 = vpack.c.bf16 %v6044, %v6043
      %v6065 = vpack.c.bf16 %v6046, %v6045
      %v6066 = vpack.c.bf16 %v6048, %v6047
      %v6067 = vpack.c.bf16 %v6050, %v6049
      %v6068 = vpack.c.bf16 %v6052, %v6051
      %v6069 = vld [vmem:[%s3 + $0x100] sm:$0xff]
      %v6070 = vld [vmem:[%s3 + $0x108] sm:$0xff]
      %v6071 = vld [vmem:[%s3 + $0x110] sm:$0xff]
      %v6072 = vld [vmem:[%s3 + $0x118] sm:$0xff]
      %v6077 = vunpack.c.l.b16 %v6069
      %v6078 = vunpack.c.h.b16 %v6069
      %v6079 = vunpack.c.l.b16 %v6070
      %v6080 = vunpack.c.h.b16 %v6070
      %v6081 = vunpack.c.l.b16 %v6071
      %v6082 = vunpack.c.h.b16 %v6071
      %v6083 = vunpack.c.l.b16 %v6072
      %v6084 = vunpack.c.h.b16 %v6072
      %v6085 = vpack.c.b16 %v6079, %v6077
      %v6086 = vpack.c.b16 %v6080, %v6078
      %v6087 = vpack.c.b16 %v6083, %v6081
      %v6088 = vpack.c.b16 %v6084, %v6082
      %v6094 = vsel %vm326, %v6053, 0
      %v6097 = vsel %vm326, %v6054, 0
      %v6100 = vsel %vm326, %v6055, 0
      %v6103 = vsel %vm326, %v6056, 0
      %v6106 = vsel %vm326, %v6057, 0
      %v6109 = vsel %vm326, %v6058, 0
      %v6112 = vsel %vm326, %v6059, 0
      %v6115 = vsel %vm326, %v6060, 0
      %v6118 = vsel %vm326, %v6061, 0
      %v6121 = vsel %vm326, %v6062, 0
      %v6124 = vsel %vm326, %v6063, 0
      %v6127 = vsel %vm326, %v6064, 0
      %v6130 = vsel %vm326, %v6065, 0
      %v6133 = vsel %vm326, %v6066, 0
      %v6136 = vsel %vm326, %v6067, 0
      %v6139 = vsel %vm326, %v6068, 0
      %6141 = vmatprep.subr.bf16.mxu0 0
      %6142 = vmatpush1.bf16.msra.mxu0 0
      %6143 = vmatprep.subr.bf16.mxu0 0
      %6144 = vmatpush1.bf16.msra.mxu0 0
      %6145 = vmatprep.subr.bf16.mxu0 0
      %6146 = vmatpush1.bf16.msra.mxu0 0
      %6147 = vmatprep.subr.bf16.mxu0 0
      %6148 = vmatpush1.bf16.msra.mxu0 0
      %6149 = vmatprep.subr.bf16.mxu0 0
      %6150 = vmatpush1.bf16.msra.mxu0 0
      %6151 = vmatprep.subr.bf16.mxu0 0
      %6152 = vmatpush1.bf16.msra.mxu0 0
      %6153 = vmatprep.subr.bf16.mxu0 %v6088
      %6154 = vmatpush1.bf16.msra.mxu0 %v6087
      %6155 = vmatprep.subr.bf16.mxu0 %v6086
      %6156 = vmatpush1.bf16.msra.mxu0 %v6085
      %6157 = vmatprep.subr.bf16.mxu0 0
      %6158 = vmatpush2.bf16.msra.mxu0 0
      %6159 = vmatprep.subr.bf16.mxu0 0
      %6160 = vmatpush2.bf16.msra.mxu0 0
      %6161 = vmatprep.subr.bf16.mxu0 0
      %6162 = vmatpush2.bf16.msra.mxu0 0
      %6163 = vmatprep.subr.bf16.mxu0 0
      %6164 = vmatpush2.bf16.msra.mxu0 0
      %6165 = vmatprep.subr.bf16.mxu0 0
      %6166 = vmatpush2.bf16.msra.mxu0 0
      %6167 = vmatprep.subr.bf16.mxu0 0
      %6168 = vmatpush2.bf16.msra.mxu0 0
      %6169 = vmatprep.subr.bf16.mxu0 0
      %6170 = vmatpush2.bf16.msra.mxu0 0
      %6171 = vmatprep.subr.bf16.mxu0 0
      %6172 = vmatpush2.bf16.msra.mxu0 0
      %6173 = vmatprep.mubr.bf16.mxu0 0
      %6174 = vmatmul.mubr.bf16.gmra.mxu0 %v6094
      %v6175 = vpop.f32.mrf.mxu0
      %v6176 = vadd.f32 0.0, %v6175
      %v6177 = vpop.f32.mrf.mxu0
      %v6178 = vadd.f32 0.0, %v6177
      %v6179 = vpop.f32.mrf.mxu0
      %v6180 = vadd.f32 0.0, %v6179
      %v6181 = vpop.f32.mrf.mxu0
      %v6182 = vadd.f32 0.0, %v6181
      %6183 = vmatprep.mubr.bf16.mxu0 0
      %6184 = vmatmul.mubr.bf16.gmra.mxu0 %v6097
      %v6185 = vpop.f32.mrf.mxu0
      %v6186 = vadd.f32 0.0, %v6185
      %v6187 = vpop.f32.mrf.mxu0
      %v6188 = vadd.f32 0.0, %v6187
      %v6189 = vpop.f32.mrf.mxu0
      %v6190 = vadd.f32 0.0, %v6189
      %v6191 = vpop.f32.mrf.mxu0
      %v6192 = vadd.f32 0.0, %v6191
      %6193 = vmatprep.mubr.bf16.mxu0 0
      %6194 = vmatmul.mubr.bf16.gmra.mxu0 %v6100
      %v6195 = vpop.f32.mrf.mxu0
      %v6196 = vadd.f32 0.0, %v6195
      %v6197 = vpop.f32.mrf.mxu0
      %v6198 = vadd.f32 0.0, %v6197
      %v6199 = vpop.f32.mrf.mxu0
      %v6200 = vadd.f32 0.0, %v6199
      %v6201 = vpop.f32.mrf.mxu0
      %v6202 = vadd.f32 0.0, %v6201
      %6203 = vmatprep.mubr.bf16.mxu0 0
      %6204 = vmatmul.mubr.bf16.gmra.mxu0 %v6103
      %v6205 = vpop.f32.mrf.mxu0
      %v6206 = vadd.f32 0.0, %v6205
      %v6207 = vpop.f32.mrf.mxu0
      %v6208 = vadd.f32 0.0, %v6207
      %v6209 = vpop.f32.mrf.mxu0
      %v6210 = vadd.f32 0.0, %v6209
      %v6211 = vpop.f32.mrf.mxu0
      %v6212 = vadd.f32 0.0, %v6211
      %6213 = vmatprep.mubr.bf16.mxu0 0
      %6214 = vmatmul.mubr.bf16.gmra.mxu0 %v6106
      %v6215 = vpop.f32.mrf.mxu0
      %v6216 = vadd.f32 0.0, %v6215
      %v6217 = vpop.f32.mrf.mxu0
      %v6218 = vadd.f32 0.0, %v6217
      %v6219 = vpop.f32.mrf.mxu0
      %v6220 = vadd.f32 0.0, %v6219
      %v6221 = vpop.f32.mrf.mxu0
      %v6222 = vadd.f32 0.0, %v6221
      %6223 = vmatprep.mubr.bf16.mxu0 0
      %6224 = vmatmul.mubr.bf16.gmra.mxu0 %v6109
      %v6225 = vpop.f32.mrf.mxu0
      %v6226 = vadd.f32 0.0, %v6225
      %v6227 = vpop.f32.mrf.mxu0
      %v6228 = vadd.f32 0.0, %v6227
      %v6229 = vpop.f32.mrf.mxu0
      %v6230 = vadd.f32 0.0, %v6229
      %v6231 = vpop.f32.mrf.mxu0
      %v6232 = vadd.f32 0.0, %v6231
      %6233 = vmatprep.mubr.bf16.mxu0 0
      %6234 = vmatmul.mubr.bf16.gmra.mxu0 %v6112
      %v6235 = vpop.f32.mrf.mxu0
      %v6236 = vadd.f32 0.0, %v6235
      %v6237 = vpop.f32.mrf.mxu0
      %v6238 = vadd.f32 0.0, %v6237
      %v6239 = vpop.f32.mrf.mxu0
      %v6240 = vadd.f32 0.0, %v6239
      %v6241 = vpop.f32.mrf.mxu0
      %v6242 = vadd.f32 0.0, %v6241
      %6243 = vmatprep.mubr.bf16.mxu0 0
      %6244 = vmatmul.mubr.bf16.gmra.mxu0 %v6115
      %v6245 = vpop.f32.mrf.mxu0
      %v6246 = vadd.f32 0.0, %v6245
      %v6247 = vpop.f32.mrf.mxu0
      %v6248 = vadd.f32 0.0, %v6247
      %v6249 = vpop.f32.mrf.mxu0
      %v6250 = vadd.f32 0.0, %v6249
      %v6251 = vpop.f32.mrf.mxu0
      %v6252 = vadd.f32 0.0, %v6251
      %6253 = vmatprep.mubr.bf16.mxu0 0
      %6254 = vmatmul.mubr.bf16.gmra.mxu0 %v6118
      %v6255 = vpop.f32.mrf.mxu0
      %v6256 = vadd.f32 0.0, %v6255
      %v6257 = vpop.f32.mrf.mxu0
      %v6258 = vadd.f32 0.0, %v6257
      %v6259 = vpop.f32.mrf.mxu0
      %v6260 = vadd.f32 0.0, %v6259
      %v6261 = vpop.f32.mrf.mxu0
      %v6262 = vadd.f32 0.0, %v6261
      %6263 = vmatprep.mubr.bf16.mxu0 0
      %6264 = vmatmul.mubr.bf16.gmra.mxu0 %v6121
      %v6265 = vpop.f32.mrf.mxu0
      %v6266 = vadd.f32 0.0, %v6265
      %v6267 = vpop.f32.mrf.mxu0
      %v6268 = vadd.f32 0.0, %v6267
      %v6269 = vpop.f32.mrf.mxu0
      %v6270 = vadd.f32 0.0, %v6269
      %v6271 = vpop.f32.mrf.mxu0
      %v6272 = vadd.f32 0.0, %v6271
      %6273 = vmatprep.mubr.bf16.mxu0 0
      %6274 = vmatmul.mubr.bf16.gmra.mxu0 %v6124
      %v6275 = vpop.f32.mrf.mxu0
      %v6276 = vadd.f32 0.0, %v6275
      %v6277 = vpop.f32.mrf.mxu0
      %v6278 = vadd.f32 0.0, %v6277
      %v6279 = vpop.f32.mrf.mxu0
      %v6280 = vadd.f32 0.0, %v6279
      %v6281 = vpop.f32.mrf.mxu0
      %v6282 = vadd.f32 0.0, %v6281
      %6283 = vmatprep.mubr.bf16.mxu0 0
      %6284 = vmatmul.mubr.bf16.gmra.mxu0 %v6127
      %v6285 = vpop.f32.mrf.mxu0
      %v6286 = vadd.f32 0.0, %v6285
      %v6287 = vpop.f32.mrf.mxu0
      %v6288 = vadd.f32 0.0, %v6287
      %v6289 = vpop.f32.mrf.mxu0
      %v6290 = vadd.f32 0.0, %v6289
      %v6291 = vpop.f32.mrf.mxu0
      %v6292 = vadd.f32 0.0, %v6291
      %6293 = vmatprep.mubr.bf16.mxu0 0
      %6294 = vmatmul.mubr.bf16.gmra.mxu0 %v6130
      %v6295 = vpop.f32.mrf.mxu0
      %v6296 = vadd.f32 0.0, %v6295
      %v6297 = vpop.f32.mrf.mxu0
      %v6298 = vadd.f32 0.0, %v6297
      %v6299 = vpop.f32.mrf.mxu0
      %v6300 = vadd.f32 0.0, %v6299
      %v6301 = vpop.f32.mrf.mxu0
      %v6302 = vadd.f32 0.0, %v6301
      %6303 = vmatprep.mubr.bf16.mxu0 0
      %6304 = vmatmul.mubr.bf16.gmra.mxu0 %v6133
      %v6305 = vpop.f32.mrf.mxu0
      %v6306 = vadd.f32 0.0, %v6305
      %v6307 = vpop.f32.mrf.mxu0
      %v6308 = vadd.f32 0.0, %v6307
      %v6309 = vpop.f32.mrf.mxu0
      %v6310 = vadd.f32 0.0, %v6309
      %v6311 = vpop.f32.mrf.mxu0
      %v6312 = vadd.f32 0.0, %v6311
      %6313 = vmatprep.mubr.bf16.mxu0 0
      %6314 = vmatmul.mubr.bf16.gmra.mxu0 %v6136
      %v6315 = vpop.f32.mrf.mxu0
      %v6316 = vadd.f32 0.0, %v6315
      %v6317 = vpop.f32.mrf.mxu0
      %v6318 = vadd.f32 0.0, %v6317
      %v6319 = vpop.f32.mrf.mxu0
      %v6320 = vadd.f32 0.0, %v6319
      %v6321 = vpop.f32.mrf.mxu0
      %v6322 = vadd.f32 0.0, %v6321
      %6323 = vmatprep.mubr.bf16.mxu0 0
      %6324 = vmatmul.mubr.bf16.gmra.mxu0 %v6139
      %v6325 = vpop.f32.mrf.mxu0
      %v6326 = vadd.f32 0.0, %v6325
      %v6327 = vpop.f32.mrf.mxu0
      %v6328 = vadd.f32 0.0, %v6327
      %v6329 = vpop.f32.mrf.mxu0
      %v6330 = vadd.f32 0.0, %v6329
      %v6331 = vpop.f32.mrf.mxu0
      %v6332 = vadd.f32 0.0, %v6331
      %6333 = vdwg.mxu0
      %v6334 = vadd.f32 %v5957, %v6176
      %v6335 = vadd.f32 %v5958, %v6178
      %v6336 = vadd.f32 %v5959, %v6180
      %v6337 = vadd.f32 %v5960, %v6182
      %v6338 = vadd.f32 %v5961, %v6186
      %v6339 = vadd.f32 %v5962, %v6188
      %v6340 = vadd.f32 %v5963, %v6190
      %v6341 = vadd.f32 %v5964, %v6192
      %v6342 = vadd.f32 %v5965, %v6196
      %v6343 = vadd.f32 %v5966, %v6198
      %v6344 = vadd.f32 %v5967, %v6200
      %v6345 = vadd.f32 %v5968, %v6202
      %v6346 = vadd.f32 %v5969, %v6206
      %v6347 = vadd.f32 %v5970, %v6208
      %v6348 = vadd.f32 %v5971, %v6210
      %v6349 = vadd.f32 %v5972, %v6212
      %v6350 = vadd.f32 %v5973, %v6216
      %v6351 = vadd.f32 %v5974, %v6218
      %v6352 = vadd.f32 %v5975, %v6220
      %v6353 = vadd.f32 %v5976, %v6222
      %v6354 = vadd.f32 %v5977, %v6226
      %v6355 = vadd.f32 %v5978, %v6228
      %v6356 = vadd.f32 %v5979, %v6230
      %v6357 = vadd.f32 %v5980, %v6232
      %v6358 = vadd.f32 %v5981, %v6236
      %v6359 = vadd.f32 %v5982, %v6238
      %v6360 = vadd.f32 %v5983, %v6240
      %v6361 = vadd.f32 %v5984, %v6242
      %v6362 = vadd.f32 %v5985, %v6246
      %v6363 = vadd.f32 %v5986, %v6248
      %v6364 = vadd.f32 %v5987, %v6250
      %v6365 = vadd.f32 %v5988, %v6252
      %v6366 = vadd.f32 %v5989, %v6256
      %v6367 = vadd.f32 %v5990, %v6258
      %v6368 = vadd.f32 %v5991, %v6260
      %v6369 = vadd.f32 %v5992, %v6262
      %v6370 = vadd.f32 %v5993, %v6266
      %v6371 = vadd.f32 %v5994, %v6268
      %v6372 = vadd.f32 %v5995, %v6270
      %v6373 = vadd.f32 %v5996, %v6272
      %v6374 = vadd.f32 %v5997, %v6276
      %v6375 = vadd.f32 %v5998, %v6278
      %v6376 = vadd.f32 %v5999, %v6280
      %v6377 = vadd.f32 %v6000, %v6282
      %v6378 = vadd.f32 %v6001, %v6286
      %v6379 = vadd.f32 %v6002, %v6288
      %v6380 = vadd.f32 %v6003, %v6290
      %v6381 = vadd.f32 %v6004, %v6292
      %v6382 = vadd.f32 %v6005, %v6296
      %v6383 = vadd.f32 %v6006, %v6298
      %v6384 = vadd.f32 %v6007, %v6300
      %v6385 = vadd.f32 %v6008, %v6302
      %v6386 = vadd.f32 %v6009, %v6306
      %v6387 = vadd.f32 %v6010, %v6308
      %v6388 = vadd.f32 %v6011, %v6310
      %v6389 = vadd.f32 %v6012, %v6312
      %v6390 = vadd.f32 %v6013, %v6316
      %v6391 = vadd.f32 %v6014, %v6318
      %v6392 = vadd.f32 %v6015, %v6320
      %v6393 = vadd.f32 %v6016, %v6322
      %v6394 = vadd.f32 %v6017, %v6326
      %v6395 = vadd.f32 %v6018, %v6328
      %v6396 = vadd.f32 %v6019, %v6330
      %v6397 = vadd.f32 %v6020, %v6332
      %v6398 = vld [vmem:[%s4] sm:$0x3]
      %v6400 = vlaneseq
      %v6401 = vshrl.u32 %v6400, 7
      %v6402 = vsub.s32 0, %v6401
      %v6403 = vrot.slane %v6398, %v6402
      %v6404 = vlaneseq
      %v6405 = vshrl.u32 %v6404, 7
      %v6406 = vsub.s32 1, %v6405
      %v6407 = vrot.slane %v6398, %v6406
      %v6410 = vadd.f32 %v6334, %v6403
      %v6411 = vadd.f32 %v6335, %v6407
      %v6412 = vadd.f32 %v6336, %v6403
      %v6413 = vadd.f32 %v6337, %v6407
      %v6414 = vadd.f32 %v6338, %v6403
      %v6415 = vadd.f32 %v6339, %v6407
      %v6416 = vadd.f32 %v6340, %v6403
      %v6417 = vadd.f32 %v6341, %v6407
      %v6418 = vadd.f32 %v6342, %v6403
      %v6419 = vadd.f32 %v6343, %v6407
      %v6420 = vadd.f32 %v6344, %v6403
      %v6421 = vadd.f32 %v6345, %v6407
      %v6422 = vadd.f32 %v6346, %v6403
      %v6423 = vadd.f32 %v6347, %v6407
      %v6424 = vadd.f32 %v6348, %v6403
      %v6425 = vadd.f32 %v6349, %v6407
      %v6426 = vadd.f32 %v6350, %v6403
      %v6427 = vadd.f32 %v6351, %v6407
      %v6428 = vadd.f32 %v6352, %v6403
      %v6429 = vadd.f32 %v6353, %v6407
      %v6430 = vadd.f32 %v6354, %v6403
      %v6431 = vadd.f32 %v6355, %v6407
      %v6432 = vadd.f32 %v6356, %v6403
      %v6433 = vadd.f32 %v6357, %v6407
      %v6434 = vadd.f32 %v6358, %v6403
      %v6435 = vadd.f32 %v6359, %v6407
      %v6436 = vadd.f32 %v6360, %v6403
      %v6437 = vadd.f32 %v6361, %v6407
      %v6438 = vadd.f32 %v6362, %v6403
      %v6439 = vadd.f32 %v6363, %v6407
      %v6440 = vadd.f32 %v6364, %v6403
      %v6441 = vadd.f32 %v6365, %v6407
      %v6442 = vadd.f32 %v6366, %v6403
      %v6443 = vadd.f32 %v6367, %v6407
      %v6444 = vadd.f32 %v6368, %v6403
      %v6445 = vadd.f32 %v6369, %v6407
      %v6446 = vadd.f32 %v6370, %v6403
      %v6447 = vadd.f32 %v6371, %v6407
      %v6448 = vadd.f32 %v6372, %v6403
      %v6449 = vadd.f32 %v6373, %v6407
      %v6450 = vadd.f32 %v6374, %v6403
      %v6451 = vadd.f32 %v6375, %v6407
      %v6452 = vadd.f32 %v6376, %v6403
      %v6453 = vadd.f32 %v6377, %v6407
      %v6454 = vadd.f32 %v6378, %v6403
      %v6455 = vadd.f32 %v6379, %v6407
      %v6456 = vadd.f32 %v6380, %v6403
      %v6457 = vadd.f32 %v6381, %v6407
      %v6458 = vadd.f32 %v6382, %v6403
      %v6459 = vadd.f32 %v6383, %v6407
      %v6460 = vadd.f32 %v6384, %v6403
      %v6461 = vadd.f32 %v6385, %v6407
      %v6462 = vadd.f32 %v6386, %v6403
      %v6463 = vadd.f32 %v6387, %v6407
      %v6464 = vadd.f32 %v6388, %v6403
      %v6465 = vadd.f32 %v6389, %v6407
      %v6466 = vadd.f32 %v6390, %v6403
      %v6467 = vadd.f32 %v6391, %v6407
      %v6468 = vadd.f32 %v6392, %v6403
      %v6469 = vadd.f32 %v6393, %v6407
      %v6470 = vadd.f32 %v6394, %v6403
      %v6471 = vadd.f32 %v6395, %v6407
      %v6472 = vadd.f32 %v6396, %v6403
      %v6473 = vadd.f32 %v6397, %v6407
      %v6474 = vmax.f32 %v6410, 0.0
      %v6475 = vmax.f32 %v6411, 0.0
      %v6476 = vmax.f32 %v6412, 0.0
      %v6477 = vmax.f32 %v6413, 0.0
      %v6478 = vmax.f32 %v6414, 0.0
      %v6479 = vmax.f32 %v6415, 0.0
      %v6480 = vmax.f32 %v6416, 0.0
      %v6481 = vmax.f32 %v6417, 0.0
      %v6482 = vmax.f32 %v6418, 0.0
      %v6483 = vmax.f32 %v6419, 0.0
      %v6484 = vmax.f32 %v6420, 0.0
      %v6485 = vmax.f32 %v6421, 0.0
      %v6486 = vmax.f32 %v6422, 0.0
      %v6487 = vmax.f32 %v6423, 0.0
      %v6488 = vmax.f32 %v6424, 0.0
      %v6489 = vmax.f32 %v6425, 0.0
      %v6490 = vmax.f32 %v6426, 0.0
      %v6491 = vmax.f32 %v6427, 0.0
      %v6492 = vmax.f32 %v6428, 0.0
      %v6493 = vmax.f32 %v6429, 0.0
      %v6494 = vmax.f32 %v6430, 0.0
      %v6495 = vmax.f32 %v6431, 0.0
      %v6496 = vmax.f32 %v6432, 0.0
      %v6497 = vmax.f32 %v6433, 0.0
      %v6498 = vmax.f32 %v6434, 0.0
      %v6499 = vmax.f32 %v6435, 0.0
      %v6500 = vmax.f32 %v6436, 0.0
      %v6501 = vmax.f32 %v6437, 0.0
      %v6502 = vmax.f32 %v6438, 0.0
      %v6503 = vmax.f32 %v6439, 0.0
      %v6504 = vmax.f32 %v6440, 0.0
      %v6505 = vmax.f32 %v6441, 0.0
      %v6506 = vmax.f32 %v6442, 0.0
      %v6507 = vmax.f32 %v6443, 0.0
      %v6508 = vmax.f32 %v6444, 0.0
      %v6509 = vmax.f32 %v6445, 0.0
      %v6510 = vmax.f32 %v6446, 0.0
      %v6511 = vmax.f32 %v6447, 0.0
      %v6512 = vmax.f32 %v6448, 0.0
      %v6513 = vmax.f32 %v6449, 0.0
      %v6514 = vmax.f32 %v6450, 0.0
      %v6515 = vmax.f32 %v6451, 0.0
      %v6516 = vmax.f32 %v6452, 0.0
      %v6517 = vmax.f32 %v6453, 0.0
      %v6518 = vmax.f32 %v6454, 0.0
      %v6519 = vmax.f32 %v6455, 0.0
      %v6520 = vmax.f32 %v6456, 0.0
      %v6521 = vmax.f32 %v6457, 0.0
      %v6522 = vmax.f32 %v6458, 0.0
      %v6523 = vmax.f32 %v6459, 0.0
      %v6524 = vmax.f32 %v6460, 0.0
      %v6525 = vmax.f32 %v6461, 0.0
      %v6526 = vmax.f32 %v6462, 0.0
      %v6527 = vmax.f32 %v6463, 0.0
      %v6528 = vmax.f32 %v6464, 0.0
      %v6529 = vmax.f32 %v6465, 0.0
      %v6530 = vmax.f32 %v6466, 0.0
      %v6531 = vmax.f32 %v6467, 0.0
      %v6532 = vmax.f32 %v6468, 0.0
      %v6533 = vmax.f32 %v6469, 0.0
      %v6534 = vmax.f32 %v6470, 0.0
      %v6535 = vmax.f32 %v6471, 0.0
      %v6536 = vmax.f32 %v6472, 0.0
      %v6537 = vmax.f32 %v6473, 0.0
      %v6538 = vpack.c.bf16 %v6476, %v6474
      %v6539 = vpack.c.bf16 %v6477, %v6475
      %v6540 = vpack.c.bf16 %v6480, %v6478
      %v6541 = vpack.c.bf16 %v6481, %v6479
      %v6542 = vpack.c.bf16 %v6484, %v6482
      %v6543 = vpack.c.bf16 %v6485, %v6483
      %v6544 = vpack.c.bf16 %v6488, %v6486
      %v6545 = vpack.c.bf16 %v6489, %v6487
      %v6546 = vpack.c.bf16 %v6492, %v6490
      %v6547 = vpack.c.bf16 %v6493, %v6491
      %v6548 = vpack.c.bf16 %v6496, %v6494
      %v6549 = vpack.c.bf16 %v6497, %v6495
      %v6550 = vpack.c.bf16 %v6500, %v6498
      %v6551 = vpack.c.bf16 %v6501, %v6499
      %v6552 = vpack.c.bf16 %v6504, %v6502
      %v6553 = vpack.c.bf16 %v6505, %v6503
      %v6554 = vpack.c.bf16 %v6508, %v6506
      %v6555 = vpack.c.bf16 %v6509, %v6507
      %v6556 = vpack.c.bf16 %v6512, %v6510
      %v6557 = vpack.c.bf16 %v6513, %v6511
      %v6558 = vpack.c.bf16 %v6516, %v6514
      %v6559 = vpack.c.bf16 %v6517, %v6515
      %v6560 = vpack.c.bf16 %v6520, %v6518
      %v6561 = vpack.c.bf16 %v6521, %v6519
      %v6562 = vpack.c.bf16 %v6524, %v6522
      %v6563 = vpack.c.bf16 %v6525, %v6523
      %v6564 = vpack.c.bf16 %v6528, %v6526
      %v6565 = vpack.c.bf16 %v6529, %v6527
      %v6566 = vpack.c.bf16 %v6532, %v6530
      %v6567 = vpack.c.bf16 %v6533, %v6531
      %v6568 = vpack.c.bf16 %v6536, %v6534
      %v6569 = vpack.c.bf16 %v6537, %v6535
      %v6570 = vld [vmem:[%s5] sm:$0xf]
      %v6571 = vld [vmem:[%s5 + $0x4] sm:$0xf]
      %v6572 = vld [vmem:[%s5 + $0x8] sm:$0xf]
      %v6573 = vld [vmem:[%s5 + $0xc] sm:$0xf]
      %v6574 = vld [vmem:[%s5 + $0x10] sm:$0xf]
      %v6575 = vld [vmem:[%s5 + $0x14] sm:$0xf]
      %v6576 = vld [vmem:[%s5 + $0x18] sm:$0xf]
      %v6577 = vld [vmem:[%s5 + $0x1c] sm:$0xf]
      %v6578 = vld [vmem:[%s5 + $0x20] sm:$0xf]
      %v6579 = vld [vmem:[%s5 + $0x24] sm:$0xf]
      %v6580 = vld [vmem:[%s5 + $0x28] sm:$0xf]
      %v6581 = vld [vmem:[%s5 + $0x2c] sm:$0xf]
      %v6582 = vld [vmem:[%s5 + $0x30] sm:$0xf]
      %v6583 = vld [vmem:[%s5 + $0x34] sm:$0xf]
      %v6584 = vld [vmem:[%s5 + $0x38] sm:$0xf]
      %v6585 = vld [vmem:[%s5 + $0x3c] sm:$0xf]
      %v6586 = vld [vmem:[%s5 + $0x40] sm:$0xf]
      %v6587 = vld [vmem:[%s5 + $0x44] sm:$0xf]
      %v6588 = vld [vmem:[%s5 + $0x48] sm:$0xf]
      %v6589 = vld [vmem:[%s5 + $0x4c] sm:$0xf]
      %v6590 = vld [vmem:[%s6] sm:$0x1]
      %v6592 = vlaneseq
      %v6593 = vshrl.u32 %v6592, 7
      %v6594 = vsub.s32 0, %v6593
      %v6595 = vrot.slane %v6590, %v6594
      %v6617 = vunpack.c.l.b16 %v6570
      %v6618 = vunpack.c.l.b16 %v6571
      %v6619 = vunpack.c.l.b16 %v6572
      %v6620 = vunpack.c.l.b16 %v6573
      %v6621 = vunpack.c.l.b16 %v6574
      %v6622 = vunpack.c.l.b16 %v6575
      %v6623 = vunpack.c.l.b16 %v6576
      %v6624 = vunpack.c.l.b16 %v6577
      %v6625 = vunpack.c.l.b16 %v6578
      %v6626 = vunpack.c.l.b16 %v6579
      %v6627 = vunpack.c.l.b16 %v6580
      %v6628 = vunpack.c.l.b16 %v6581
      %v6629 = vunpack.c.l.b16 %v6582
      %v6630 = vunpack.c.l.b16 %v6583
      %v6631 = vunpack.c.l.b16 %v6584
      %v6632 = vunpack.c.l.b16 %v6585
      %v6633 = vunpack.c.l.b16 %v6586
      %v6634 = vunpack.c.l.b16 %v6587
      %v6635 = vunpack.c.l.b16 %v6588
      %v6636 = vunpack.c.l.b16 %v6589
      %v6637 = vpack.c.b16 %v6618, %v6617
      %v6638 = vpack.c.b16 %v6620, %v6619
      %v6639 = vpack.c.b16 %v6622, %v6621
      %v6640 = vpack.c.b16 %v6624, %v6623
      %v6641 = vpack.c.b16 %v6626, %v6625
      %v6642 = vpack.c.b16 %v6628, %v6627
      %v6643 = vpack.c.b16 %v6630, %v6629
      %v6644 = vpack.c.b16 %v6632, %v6631
      %v6645 = vpack.c.b16 %v6634, %v6633
      %v6646 = vpack.c.b16 %v6636, %v6635
      %v6658 = vsel %vm326, %v6539, 0
      %v6661 = vsel %vm326, %v6541, 0
      %v6664 = vsel %vm326, %v6543, 0
      %v6667 = vsel %vm326, %v6545, 0
      %v6670 = vsel %vm326, %v6547, 0
      %v6673 = vsel %vm326, %v6549, 0
      %v6676 = vsel %vm326, %v6551, 0
      %v6679 = vsel %vm326, %v6553, 0
      %v6682 = vsel %vm326, %v6555, 0
      %v6685 = vsel %vm326, %v6557, 0
      %v6688 = vsel %vm326, %v6559, 0
      %v6691 = vsel %vm326, %v6561, 0
      %v6694 = vsel %vm326, %v6563, 0
      %v6697 = vsel %vm326, %v6565, 0
      %v6700 = vsel %vm326, %v6567, 0
      %v6703 = vsel %vm326, %v6569, 0
      %6705 = vmatprep.subr.bf16.mxu0 0
      %6706 = vmatpush1.bf16.msra.mxu0 %v6644
      %6707 = vmatprep.subr.bf16.mxu0 0
      %6708 = vmatpush1.bf16.msra.mxu0 %v6643
      %6709 = vmatprep.subr.bf16.mxu0 0
      %6710 = vmatpush1.bf16.msra.mxu0 %v6642
      %6711 = vmatprep.subr.bf16.mxu0 0
      %6712 = vmatpush1.bf16.msra.mxu0 %v6641
      %6713 = vmatprep.subr.bf16.mxu0 0
      %6714 = vmatpush1.bf16.msra.mxu0 %v6640
      %6715 = vmatprep.subr.bf16.mxu0 0
      %6716 = vmatpush1.bf16.msra.mxu0 %v6639
      %6717 = vmatprep.subr.bf16.mxu0 0
      %6718 = vmatpush1.bf16.msra.mxu0 %v6638
      %6719 = vmatprep.subr.bf16.mxu0 0
      %6720 = vmatpush1.bf16.msra.mxu0 %v6637
      %6721 = vmatprep.subr.bf16.mxu0 0
      %6722 = vmatpush2.bf16.msra.mxu0 0
      %6723 = vmatprep.subr.bf16.mxu0 0
      %6724 = vmatpush2.bf16.msra.mxu0 0
      %6725 = vmatprep.subr.bf16.mxu0 0
      %6726 = vmatpush2.bf16.msra.mxu0 0
      %6727 = vmatprep.subr.bf16.mxu0 0
      %6728 = vmatpush2.bf16.msra.mxu0 0
      %6729 = vmatprep.subr.bf16.mxu0 0
      %6730 = vmatpush2.bf16.msra.mxu0 0
      %6731 = vmatprep.subr.bf16.mxu0 0
      %6732 = vmatpush2.bf16.msra.mxu0 0
      %6733 = vmatprep.subr.bf16.mxu0 0
      %6734 = vmatpush2.bf16.msra.mxu0 %v6646
      %6735 = vmatprep.subr.bf16.mxu0 0
      %6736 = vmatpush2.bf16.msra.mxu0 %v6645
      %6737 = vmatprep.mubr.bf16.mxu0 %v6658
      %6738 = vmatmul.mubr.bf16.gmra.mxu0 %v6538
      %v6739 = vpop.f32.mrf.mxu0
      %v6740 = vadd.f32 %v6595, %v6739
      %v6741 = vpop.f32.mrf.mxu0
      %v6742 = vpop.f32.mrf.mxu0
      %v6743 = vadd.f32 %v6595, %v6742
      %v6744 = vpop.f32.mrf.mxu0
      %6745 = vmatprep.mubr.bf16.mxu0 %v6661
      %6746 = vmatmul.mubr.bf16.gmra.mxu0 %v6540
      %v6747 = vpop.f32.mrf.mxu0
      %v6748 = vadd.f32 %v6595, %v6747
      %v6749 = vpop.f32.mrf.mxu0
      %v6750 = vpop.f32.mrf.mxu0
      %v6751 = vadd.f32 %v6595, %v6750
      %v6752 = vpop.f32.mrf.mxu0
      %6753 = vmatprep.mubr.bf16.mxu0 %v6664
      %6754 = vmatmul.mubr.bf16.gmra.mxu0 %v6542
      %v6755 = vpop.f32.mrf.mxu0
      %v6756 = vadd.f32 %v6595, %v6755
      %v6757 = vpop.f32.mrf.mxu0
      %v6758 = vpop.f32.mrf.mxu0
      %v6759 = vadd.f32 %v6595, %v6758
      %v6760 = vpop.f32.mrf.mxu0
      %6761 = vmatprep.mubr.bf16.mxu0 %v6667
      %6762 = vmatmul.mubr.bf16.gmra.mxu0 %v6544
      %v6763 = vpop.f32.mrf.mxu0
      %v6764 = vadd.f32 %v6595, %v6763
      %v6765 = vpop.f32.mrf.mxu0
      %v6766 = vpop.f32.mrf.mxu0
      %v6767 = vadd.f32 %v6595, %v6766
      %v6768 = vpop.f32.mrf.mxu0
      %6769 = vmatprep.mubr.bf16.mxu0 %v6670
      %6770 = vmatmul.mubr.bf16.gmra.mxu0 %v6546
      %v6771 = vpop.f32.mrf.mxu0
      %v6772 = vadd.f32 %v6595, %v6771
      %v6773 = vpop.f32.mrf.mxu0
      %v6774 = vpop.f32.mrf.mxu0
      %v6775 = vadd.f32 %v6595, %v6774
      %v6776 = vpop.f32.mrf.mxu0
      %6777 = vmatprep.mubr.bf16.mxu0 %v6673
      %6778 = vmatmul.mubr.bf16.gmra.mxu0 %v6548
      %v6779 = vpop.f32.mrf.mxu0
      %v6780 = vadd.f32 %v6595, %v6779
      %v6781 = vpop.f32.mrf.mxu0
      %v6782 = vpop.f32.mrf.mxu0
      %v6783 = vadd.f32 %v6595, %v6782
      %v6784 = vpop.f32.mrf.mxu0
      %6785 = vmatprep.mubr.bf16.mxu0 %v6676
      %6786 = vmatmul.mubr.bf16.gmra.mxu0 %v6550
      %v6787 = vpop.f32.mrf.mxu0
      %v6788 = vadd.f32 %v6595, %v6787
      %v6789 = vpop.f32.mrf.mxu0
      %v6790 = vpop.f32.mrf.mxu0
      %v6791 = vadd.f32 %v6595, %v6790
      %v6792 = vpop.f32.mrf.mxu0
      %6793 = vmatprep.mubr.bf16.mxu0 %v6679
      %6794 = vmatmul.mubr.bf16.gmra.mxu0 %v6552
      %v6795 = vpop.f32.mrf.mxu0
      %v6796 = vadd.f32 %v6595, %v6795
      %v6797 = vpop.f32.mrf.mxu0
      %v6798 = vpop.f32.mrf.mxu0
      %v6799 = vadd.f32 %v6595, %v6798
      %v6800 = vpop.f32.mrf.mxu0
      %6801 = vmatprep.mubr.bf16.mxu0 %v6682
      %6802 = vmatmul.mubr.bf16.gmra.mxu0 %v6554
      %v6803 = vpop.f32.mrf.mxu0
      %v6804 = vadd.f32 %v6595, %v6803
      %v6805 = vpop.f32.mrf.mxu0
      %v6806 = vpop.f32.mrf.mxu0
      %v6807 = vadd.f32 %v6595, %v6806
      %v6808 = vpop.f32.mrf.mxu0
      %6809 = vmatprep.mubr.bf16.mxu0 %v6685
      %6810 = vmatmul.mubr.bf16.gmra.mxu0 %v6556
      %v6811 = vpop.f32.mrf.mxu0
      %v6812 = vadd.f32 %v6595, %v6811
      %v6813 = vpop.f32.mrf.mxu0
      %v6814 = vpop.f32.mrf.mxu0
      %v6815 = vadd.f32 %v6595, %v6814
      %v6816 = vpop.f32.mrf.mxu0
      %6817 = vmatprep.mubr.bf16.mxu0 %v6688
      %6818 = vmatmul.mubr.bf16.gmra.mxu0 %v6558
      %v6819 = vpop.f32.mrf.mxu0
      %v6820 = vadd.f32 %v6595, %v6819
      %v6821 = vpop.f32.mrf.mxu0
      %v6822 = vpop.f32.mrf.mxu0
      %v6823 = vadd.f32 %v6595, %v6822
      %v6824 = vpop.f32.mrf.mxu0
      %6825 = vmatprep.mubr.bf16.mxu0 %v6691
      %6826 = vmatmul.mubr.bf16.gmra.mxu0 %v6560
      %v6827 = vpop.f32.mrf.mxu0
      %v6828 = vadd.f32 %v6595, %v6827
      %v6829 = vpop.f32.mrf.mxu0
      %v6830 = vpop.f32.mrf.mxu0
      %v6831 = vadd.f32 %v6595, %v6830
      %v6832 = vpop.f32.mrf.mxu0
      %6833 = vmatprep.mubr.bf16.mxu0 %v6694
      %6834 = vmatmul.mubr.bf16.gmra.mxu0 %v6562
      %v6835 = vpop.f32.mrf.mxu0
      %v6836 = vadd.f32 %v6595, %v6835
      %v6837 = vpop.f32.mrf.mxu0
      %v6838 = vpop.f32.mrf.mxu0
      %v6839 = vadd.f32 %v6595, %v6838
      %v6840 = vpop.f32.mrf.mxu0
      %6841 = vmatprep.mubr.bf16.mxu0 %v6697
      %6842 = vmatmul.mubr.bf16.gmra.mxu0 %v6564
      %v6843 = vpop.f32.mrf.mxu0
      %v6844 = vadd.f32 %v6595, %v6843
      %v6845 = vpop.f32.mrf.mxu0
      %v6846 = vpop.f32.mrf.mxu0
      %v6847 = vadd.f32 %v6595, %v6846
      %v6848 = vpop.f32.mrf.mxu0
      %6849 = vmatprep.mubr.bf16.mxu0 %v6700
      %6850 = vmatmul.mubr.bf16.gmra.mxu0 %v6566
      %v6851 = vpop.f32.mrf.mxu0
      %v6852 = vadd.f32 %v6595, %v6851
      %v6853 = vpop.f32.mrf.mxu0
      %v6854 = vpop.f32.mrf.mxu0
      %v6855 = vadd.f32 %v6595, %v6854
      %v6856 = vpop.f32.mrf.mxu0
      %6857 = vmatprep.mubr.bf16.mxu0 %v6703
      %6858 = vmatmul.mubr.bf16.gmra.mxu0 %v6568
      %v6859 = vpop.f32.mrf.mxu0
      %v6860 = vadd.f32 %v6595, %v6859
      %v6861 = vpop.f32.mrf.mxu0
      %v6862 = vpop.f32.mrf.mxu0
      %v6863 = vadd.f32 %v6595, %v6862
      %v6864 = vpop.f32.mrf.mxu0
      %6865 = vdwg.mxu0
      %6866 = vxpose.xlu0.b32.start [1/16] %v6740, 128
      %6867 = vxpose.xlu0.b32.cont [2/16] %v6743, 128
      %6868 = vxpose.xlu0.b32.cont [3/16] %v6748, 128
      %6869 = vxpose.xlu0.b32.cont [4/16] %v6751, 128
      %6870 = vxpose.xlu0.b32.cont [5/16] %v6756, 128
      %6871 = vxpose.xlu0.b32.cont [6/16] %v6759, 128
      %6872 = vxpose.xlu0.b32.cont [7/16] %v6764, 128
      %6873 = vxpose.xlu0.b32.cont [8/16] %v6767, 128
      %6874 = vxpose.xlu0.b32.cont [9/16] %v6772, 128
      %6875 = vxpose.xlu0.b32.cont [10/16] %v6775, 128
      %6876 = vxpose.xlu0.b32.cont [11/16] %v6780, 128
      %6877 = vxpose.xlu0.b32.cont [12/16] %v6783, 128
      %6878 = vxpose.xlu0.b32.cont [13/16] %v6788, 128
      %6879 = vxpose.xlu0.b32.cont [14/16] %v6791, 128
      %6880 = vxpose.xlu0.b32.cont [15/16] %v6796, 128
      %6881 = vxpose.xlu0.b32.end [16/16] %v6799, 128
      %v6882 = vpop.trf.xlu0
      %v6883 = vpop.trf.xlu0
      %v6884 = vpop.trf.xlu0
      %v6885 = vpop.trf.xlu0
      %v6886 = vpop.trf.xlu0
      %v6887 = vpop.trf.xlu0
      %v6888 = vpop.trf.xlu0
      %v6889 = vpop.trf.xlu0
      %v6890 = vpop.trf.xlu0
      %v6891 = vpop.trf.xlu0
      %v6892 = vpop.trf.xlu0
      %v6893 = vpop.trf.xlu0
      %v6894 = vpop.trf.xlu0
      %v6895 = vpop.trf.xlu0
      %v6896 = vpop.trf.xlu0
      %v6897 = vpop.trf.xlu0
      %6898 = vxpose.xlu0.b32.start [1/16] %v6804, 128
      %6899 = vxpose.xlu0.b32.cont [2/16] %v6807, 128
      %6900 = vxpose.xlu0.b32.cont [3/16] %v6812, 128
      %6901 = vxpose.xlu0.b32.cont [4/16] %v6815, 128
      %6902 = vxpose.xlu0.b32.cont [5/16] %v6820, 128
      %6903 = vxpose.xlu0.b32.cont [6/16] %v6823, 128
      %6904 = vxpose.xlu0.b32.cont [7/16] %v6828, 128
      %6905 = vxpose.xlu0.b32.cont [8/16] %v6831, 128
      %6906 = vxpose.xlu0.b32.cont [9/16] %v6836, 128
      %6907 = vxpose.xlu0.b32.cont [10/16] %v6839, 128
      %6908 = vxpose.xlu0.b32.cont [11/16] %v6844, 128
      %6909 = vxpose.xlu0.b32.cont [12/16] %v6847, 128
      %6910 = vxpose.xlu0.b32.cont [13/16] %v6852, 128
      %6911 = vxpose.xlu0.b32.cont [14/16] %v6855, 128
      %6912 = vxpose.xlu0.b32.cont [15/16] %v6860, 128
      %6913 = vxpose.xlu0.b32.end [16/16] %v6863, 128
      %v6914 = vpop.trf.xlu0
      %v6915 = vpop.trf.xlu0
      %v6916 = vpop.trf.xlu0
      %v6917 = vpop.trf.xlu0
      %v6918 = vpop.trf.xlu0
      %v6919 = vpop.trf.xlu0
      %v6920 = vpop.trf.xlu0
      %v6921 = vpop.trf.xlu0
      %v6922 = vpop.trf.xlu0
      %v6923 = vpop.trf.xlu0
      %v6924 = vpop.trf.xlu0
      %v6925 = vpop.trf.xlu0
      %v6926 = vpop.trf.xlu0
      %v6927 = vpop.trf.xlu0
      %v6928 = vpop.trf.xlu0
      %v6929 = vpop.trf.xlu0
      %6930 = vst [vmem:[%s278] sm:$0xff] %v6882
      %6931 = vst [vmem:[%s278 + $0x8] sm:$0xff] %v6914
      %6932 = vst [vmem:[%s278 + $0x10] sm:$0xff] %v6883
      %6933 = vst [vmem:[%s278 + $0x18] sm:$0xff] %v6915
      %6934 = vst [vmem:[%s278 + $0x20] sm:$0xff] %v6884
      %6935 = vst [vmem:[%s278 + $0x28] sm:$0xff] %v6916
      %6936 = vst [vmem:[%s278 + $0x30] sm:$0x1f] %v6885
      %6937 = vst [vmem:[%s278 + $0x38] sm:$0x1f] %v6917
      %p6938 = scmp.lt.s32.totalorder %s18, 1
      %s6939 = scalar_select %p6938, %s18, 1
      %s6940 = smul.addr %s6939, 8
      %s6941 = smul.addr %s6940, 8
      %s6942 = scalar_lea.vmem %s7, %s6941
      // Predicated region
      $region49: #{simple_model_forward.1} parent=47 // pred_check
        %p6943 = pneg %p188
      $region50: #{simple_model_forward.1} parent=47 // pred_check_branch
        %6945 = sbr.rel (%p6943) target = $region52
      $region51: #{simple_model_forward.1} parent=47 // pred_region
        _
      $region52: #{simple_model_forward.1} parent=47 // pred_fallthru
        _
    $region48: #{simple_model_forward.1} parent=5 // pred_fallthru
      _
    %p6946 = scmp.le.s32.totalorder 2, %s13
    // Predicated region
    $region53: #{simple_model_forward.1} parent=5 // pred_check
      %p6947 = pneg %p6946
    $region54: #{simple_model_forward.1} parent=5 // pred_check_branch
      %6949 = sbr.rel (%p6947) target = $region56
    $region55: #{simple_model_forward.1} parent=5 // pred_region
      %s6950 = ssub.s32 %s13, 2
      // Predicated region
      $region57: #{simple_model_forward.1} parent=55 // pred_check
        %p6951 = pneg %p194
      $region58: #{simple_model_forward.1} parent=55 // pred_check_branch
        %6953 = sbr.rel (%p6951) target = $region60
      $region59: #{simple_model_forward.1} parent=55 // pred_region
        %p6954 = scmp.lt.s32.totalorder %s19, 1
        %s6955 = scalar_select %p6954, %s19, 1
        %s6956 = smul.addr %s6955, 8
        %s6957 = smul.addr %s6956, 8
        %s6958 = scalar_lea.vmem %s7, %s6957
      $region60: #{simple_model_forward.1} parent=55 // pred_fallthru
        _
    $region56: #{simple_model_forward.1} parent=5 // pred_fallthru
      _
  $region6: #{simple_model_forward.1} parent=0 // loop_footer
    %s17 = sadd.s32 1, %s13
  $region7: #{simple_model_forward.1} parent=0 // loop_footer_branch
    %12 = sbr.rel target = $region3
  $region8: #{simple_model_forward.1} parent=0 // loop_exit
    _

</llo_original>
